<compile_context>
chip_gen: v5e
topology: v5e:2x2
jax: 0.10.0
libtpu: 0.0.40
codegen_flags: <defaults>
</compile_context>

<pallas_src>
import math
import functools

import jax
import jax.numpy as jnp
from jax import lax
from jax.experimental import pallas as pl
from jax.experimental.pallas import tpu as pltpu


# ----------------------------- in-kernel helpers -----------------------------

def _ln(z, g, b):
    # PyTorch LayerNorm: biased variance, eps=1e-5, elementwise affine
    mean = jnp.mean(z, axis=-1, keepdims=True)
    zc = z - mean
    var = jnp.mean(zc * zc, axis=-1, keepdims=True)
    return zc * lax.rsqrt(var + 1e-5) * g + b


# ----------------------------- fused forward kernel -----------------------------

def _fused_kernel(
    # activations / constants
    src_ref, mask_ref, pe_ref,
    # input embedding (TransformerModel.encoder Linear)
    ew_ref, eb_ref,
    # encoder layers (stacked over leading nlayers axis)
    e_qkvw_ref, e_qkvb_ref, e_wo_ref, e_bo_ref, e_n1g_ref, e_n1b_ref,
    e_w1_ref, e_b1_ref, e_w2_ref, e_b2_ref, e_n2g_ref, e_n2b_ref,
    # encoder output projection (TransformerModel.decoder Linear)
    mw_ref, mb_ref,
    # decoder layers (stacked over leading nlayers axis)
    d_saqkvw_ref, d_saqkvb_ref, d_sawo_ref, d_sabo_ref, d_n1g_ref, d_n1b_ref,
    d_cawq_ref, d_cabq_ref, d_cawkv_ref, d_cabkv_ref, d_cawo_ref, d_cabo_ref,
    d_n2g_ref, d_n2b_ref,
    d_w1_ref, d_b1_ref, d_w2_ref, d_b2_ref, d_n3g_ref, d_n3b_ref,
    # final projection (padded to a 128-lane multiple)
    ow_ref, ob_ref,
    # output
    o_ref,
    # scratch: lane-contiguous per-head context slab
    ctx_ref,
    *, B, S, nhead, nlayers):
    E = ew_ref.shape[1]
    Hd = E // nhead
    att_scale = 1.0 / math.sqrt(Hd)

    def mha(q_all, k_all, v_all, key_bias, wo, bo):
        """q_all/k_all/v_all: [B*S, E]; key_bias: [B, S] additive or None -> [B*S, E]."""
        for b in range(B):                                   # static unroll (tiny B)
            r0 = b * S
            q = q_all[r0:r0 + S, :]
            k = k_all[r0:r0 + S, :]
            v = v_all[r0:r0 + S, :]
            bias = None if key_bias is None else key_bias[b:b + 1, :]   # [1, S]
            for h in range(nhead):                            # static unroll (tiny nhead)
                lo, hi = h * Hd, (h + 1) * Hd
                s = lax.dot_general(q[:, lo:hi], k[:, lo:hi],
                                    (((1,), (1,)), ((), ())),
                                    preferred_element_type=jnp.float32) * att_scale
                if bias is not None:
                    s = s + bias
                s = s - jnp.max(s, axis=-1, keepdims=True)
                p = jnp.exp(s)
                p = p * pl.reciprocal(jnp.sum(p, axis=-1, keepdims=True), approx=True)
                ctx_ref[r0:r0 + S, lo:hi] = jnp.dot(p, v[:, lo:hi],
                                                    preferred_element_type=jnp.float32)
        # single lane-dense out-projection over all rows & heads (M = B*S, K = E)
        return jnp.dot(ctx_ref[...], wo, preferred_element_type=jnp.float32) + bo

    # ---- TransformerModel encoder side: Linear -> *sqrt(d_model) -> +pos-enc ----
    x = jnp.dot(src_ref[...], ew_ref[...], preferred_element_type=jnp.float32) + eb_ref[...]
    x = x * math.sqrt(E) + pe_ref[...]
    # TODO(synk): dropout (p=0.01 / 0.1) is stochastic; implemented as identity (inference).
    key_bias = mask_ref[...] * (-1e9)                         # [B, S] additive key bias

    # ---- encoder layers (post-norm, relu) ----
    for l in range(nlayers):
        qkv = jnp.dot(x, e_qkvw_ref[l], preferred_element_type=jnp.float32) + e_qkvb_ref[l]
        attn = mha(qkv[:, 0:E], qkv[:, E:2 * E], qkv[:, 2 * E:3 * E], key_bias,
                   e_wo_ref[l], e_bo_ref[l])
        x = _ln(x + attn, e_n1g_ref[l], e_n1b_ref[l])
        hid = jnp.maximum(jnp.dot(x, e_w1_ref[l], preferred_element_type=jnp.float32)
                          + e_b1_ref[l], 0.0)
        ff = jnp.dot(hid, e_w2_ref[l], preferred_element_type=jnp.float32) + e_b2_ref[l]
        x = _ln(x + ff, e_n2g_ref[l], e_n2b_ref[l])

    mem = x
    # TransformerModel.decoder: Linear(d_model, emsize)
    y = jnp.dot(mem, mw_ref[...], preferred_element_type=jnp.float32) + mb_ref[...]

    # ---- decoder layers (reference forward passes no masks) ----
    for l in range(nlayers):
        qkv = jnp.dot(y, d_saqkvw_ref[l], preferred_element_type=jnp.float32) + d_saqkvb_ref[l]
        sa = mha(qkv[:, 0:E], qkv[:, E:2 * E], qkv[:, 2 * E:3 * E], None,
                 d_sawo_ref[l], d_sabo_ref[l])
        y = _ln(y + sa, d_n1g_ref[l], d_n1b_ref[l])

        q_all = jnp.dot(y, d_cawq_ref[l], preferred_element_type=jnp.float32) + d_cabq_ref[l]
        kv = jnp.dot(mem, d_cawkv_ref[l], preferred_element_type=jnp.float32) + d_cabkv_ref[l]
        ca = mha(q_all, kv[:, 0:E], kv[:, E:2 * E], None, d_cawo_ref[l], d_cabo_ref[l])
        y = _ln(y + ca, d_n2g_ref[l], d_n2b_ref[l])

        hid = jnp.maximum(jnp.dot(y, d_w1_ref[l], preferred_element_type=jnp.float32)
                          + d_b1_ref[l], 0.0)
        ff = jnp.dot(hid, d_w2_ref[l], preferred_element_type=jnp.float32) + d_b2_ref[l]
        y = _ln(y + ff, d_n3g_ref[l], d_n3b_ref[l])

    # ---- final Linear(d_model, 749): padded to 768 lanes (unmasked vst), sliced outside ----
    o_ref[...] = jnp.dot(y, ow_ref[...], preferred_element_type=jnp.float32) + ob_ref[...]


# ----------------------------- forward (glue) -----------------------------

def positional_encoding(max_len, d_model):
    position = jnp.arange(max_len, dtype=jnp.float32)[:, None]
    div_term = jnp.exp(jnp.arange(0, d_model, 2, dtype=jnp.float32)
                       * (-math.log(10000.0) / d_model))
    pe = jnp.zeros((max_len, 1, d_model), jnp.float32)
    pe = pe.at[:, 0, 0::2].set(jnp.sin(position * div_term))
    pe = pe.at[:, 0, 1::2].set(jnp.cos(position * div_term))
    return pe


def transformer_autoencoder_forward(params, hp, src, src_key_padding_mask):
    """src: [B, S, D] float32; src_key_padding_mask: [B, S] bool (True = pad).
    Returns [B, S, output_size]."""
    B, S, D = src.shape
    E = params["enc_in_w"].shape[1]
    nhead, nlayers = hp["nhead"], hp["nlayers"]
    out_pad_width = params["dec_out_w"].shape[1]

    # flatten batch into the matmul M dimension; tile pos-enc to match rows
    src_flat = src.reshape(B * S, D)
    mask_f = src_key_padding_mask.astype(jnp.float32)
    pe = jnp.tile(params["pe"][:S, 0, :], (B, 1))             # [B*S, E]

    enc, dec = params["enc"], params["dec"]
    operands = (
        src_flat, mask_f, pe,
        params["enc_in_w"], params["enc_in_b"],
        enc["qkv_w"], enc["qkv_b"], enc["wo"], enc["bo"], enc["n1_g"], enc["n1_b"],
        enc["ff_w1"], enc["ff_b1"], enc["ff_w2"], enc["ff_b2"], enc["n2_g"], enc["n2_b"],
        params["enc_out_w"], params["enc_out_b"],
        dec["sa_qkv_w"], dec["sa_qkv_b"], dec["sa_wo"], dec["sa_bo"], dec["n1_g"], dec["n1_b"],
        dec["ca_wq"], dec["ca_bq"], dec["ca_wkv"], dec["ca_bkv"], dec["ca_wo"], dec["ca_bo"],
        dec["n2_g"], dec["n2_b"],
        dec["ff_w1"], dec["ff_b1"], dec["ff_w2"], dec["ff_b2"], dec["n3_g"], dec["n3_b"],
        params["dec_out_w"], params["dec_out_b"],
    )

    kernel = functools.partial(_fused_kernel, B=B, S=S, nhead=nhead, nlayers=nlayers)
    out = pl.pallas_call(
        kernel,
        out_shape=jax.ShapeDtypeStruct((B * S, out_pad_width), jnp.float32),
        scratch_shapes=[pltpu.VMEM((B * S, E), jnp.float32)],
    )(*operands)

    return out.reshape(B, S, out_pad_width)[..., : hp["output_size"]]


# ----------------------------- deterministic init -----------------------------

def init_params(seed, d_model, nhead, d_hid, nlayers, D, emsize, output_size, max_len=5000):
    keys = iter(jax.random.split(jax.random.PRNGKey(seed), 64))
    E, H, L = d_model, d_hid, nlayers

    def rnd(shape, scale=0.05):
        return jax.random.normal(next(keys), shape, jnp.float32) * scale

    def uni(shape, a=0.1):
        return jax.random.uniform(next(keys), shape, jnp.float32, -a, a)

    ones = lambda s: jnp.ones(s, jnp.float32)
    zeros = lambda s: jnp.zeros(s, jnp.float32)

    n_pad = (-output_size) % 128                               # 749 -> 768 lane-dense
    dec_out_w = rnd((E, output_size))
    dec_out_b = rnd((1, output_size))

    return dict(
        enc_in_w=uni((D, E)), enc_in_b=rnd((1, E)),            # nn.Linear(D, d_model)
        pe=positional_encoding(max_len, E),
        enc=dict(                                              # stacked over nlayers
            qkv_w=rnd((L, E, 3 * E)), qkv_b=rnd((L, 1, 3 * E)),   # packed [Wq|Wk|Wv]
            wo=rnd((L, E, E)), bo=rnd((L, 1, E)),
            n1_g=ones((L, 1, E)), n1_b=zeros((L, 1, E)),
            ff_w1=rnd((L, E, H)), ff_b1=rnd((L, 1, H)),
            ff_w2=rnd((L, H, E)), ff_b2=rnd((L, 1, E)),
            n2_g=ones((L, 1, E)), n2_b=zeros((L, 1, E)),
        ),
        enc_out_w=uni((E, emsize)), enc_out_b=zeros((1, emsize)),
        dec=dict(                                              # stacked over nlayers
            sa_qkv_w=rnd((L, E, 3 * E)), sa_qkv_b=rnd((L, 1, 3 * E)),
            sa_wo=rnd((L, E, E)), sa_bo=rnd((L, 1, E)),
            n1_g=ones((L, 1, E)), n1_b=zeros((L, 1, E)),
            ca_wq=rnd((L, E, E)), ca_bq=rnd((L, 1, E)),
            ca_wkv=rnd((L, E, 2 * E)), ca_bkv=rnd((L, 1, 2 * E)),  # packed [Wk|Wv]
            ca_wo=rnd((L, E, E)), ca_bo=rnd((L, 1, E)),
            n2_g=ones((L, 1, E)), n2_b=zeros((L, 1, E)),
            ff_w1=rnd((L, E, H)), ff_b1=rnd((L, 1, H)),
            ff_w2=rnd((L, H, E)), ff_b2=rnd((L, 1, E)),
            n3_g=ones((L, 1, E)), n3_b=zeros((L, 1, E)),
        ),
        dec_out_w=jnp.pad(dec_out_w, ((0, 0), (0, n_pad))),
        dec_out_b=jnp.pad(dec_out_b, ((0, 0), (0, n_pad))),
    )


# ----------------------------- main -----------------------------

if __name__ == "__main__":
    # small, forward-consistent hyperparameters. d_model/emsize/d_hid chosen as 128 so all
    # activation lane dims are full vregs (lane-dense loads/stores); emsize == d_model is
    # required by the reference forward (decoder self-attends on the encoder output).
    d_model, nhead, d_hid, nlayers = 128, 4, 128, 2
    D, emsize, output_size = 64, 128, 749
    B, S = 2, 8

    hp = dict(nhead=nhead, nlayers=nlayers, output_size=output_size)
    params = init_params(0, d_model, nhead, d_hid, nlayers, D, emsize, output_size)

    key = jax.random.PRNGKey(0)
    k_src, _ = jax.random.split(key)
    src = jax.random.normal(k_src, (B, S, D), jnp.float32)
    # key-padding mask (True = padded position); last token of batch 1 is padding.
    src_mask = jnp.zeros((B, S), dtype=bool).at[1, S - 1].set(True)

    fwd = jax.jit(lambda p, s, m: transformer_autoencoder_forward(p, hp, s, m))
    out = jax.block_until_ready(fwd(params, src, src_mask))

    assert out.shape == (B, S, output_size), out.shape
    assert bool(jnp.all(jnp.isfinite(out)))
    print("KERNEL_OK")
</pallas_src>

<mosaic_0001>
module attributes {stable_mosaic.version = 11 : i64} {
  func.func @_fused_kernel(%arg0: memref<16x64xf32, #tpu.memory_space<vmem>>, %arg1: memref<2x8xf32, #tpu.memory_space<vmem>>, %arg2: memref<16x128xf32, #tpu.memory_space<vmem>>, %arg3: memref<64x128xf32, #tpu.memory_space<vmem>>, %arg4: memref<1x128xf32, #tpu.memory_space<vmem>>, %arg5: memref<2x128x384xf32, #tpu.memory_space<vmem>>, %arg6: memref<2x1x384xf32, #tpu.memory_space<vmem>>, %arg7: memref<2x128x128xf32, #tpu.memory_space<vmem>>, %arg8: memref<2x1x128xf32, #tpu.memory_space<vmem>>, %arg9: memref<2x1x128xf32, #tpu.memory_space<vmem>>, %arg10: memref<2x1x128xf32, #tpu.memory_space<vmem>>, %arg11: memref<2x128x128xf32, #tpu.memory_space<vmem>>, %arg12: memref<2x1x128xf32, #tpu.memory_space<vmem>>, %arg13: memref<2x128x128xf32, #tpu.memory_space<vmem>>, %arg14: memref<2x1x128xf32, #tpu.memory_space<vmem>>, %arg15: memref<2x1x128xf32, #tpu.memory_space<vmem>>, %arg16: memref<2x1x128xf32, #tpu.memory_space<vmem>>, %arg17: memref<128x128xf32, #tpu.memory_space<vmem>>, %arg18: memref<1x128xf32, #tpu.memory_space<vmem>>, %arg19: memref<2x128x384xf32, #tpu.memory_space<vmem>>, %arg20: memref<2x1x384xf32, #tpu.memory_space<vmem>>, %arg21: memref<2x128x128xf32, #tpu.memory_space<vmem>>, %arg22: memref<2x1x128xf32, #tpu.memory_space<vmem>>, %arg23: memref<2x1x128xf32, #tpu.memory_space<vmem>>, %arg24: memref<2x1x128xf32, #tpu.memory_space<vmem>>, %arg25: memref<2x128x128xf32, #tpu.memory_space<vmem>>, %arg26: memref<2x1x128xf32, #tpu.memory_space<vmem>>, %arg27: memref<2x128x256xf32, #tpu.memory_space<vmem>>, %arg28: memref<2x1x256xf32, #tpu.memory_space<vmem>>, %arg29: memref<2x128x128xf32, #tpu.memory_space<vmem>>, %arg30: memref<2x1x128xf32, #tpu.memory_space<vmem>>, %arg31: memref<2x1x128xf32, #tpu.memory_space<vmem>>, %arg32: memref<2x1x128xf32, #tpu.memory_space<vmem>>, %arg33: memref<2x128x128xf32, #tpu.memory_space<vmem>>, %arg34: memref<2x1x128xf32, #tpu.memory_space<vmem>>, %arg35: memref<2x128x128xf32, #tpu.memory_space<vmem>>, %arg36: memref<2x1x128xf32, #tpu.memory_space<vmem>>, %arg37: memref<2x1x128xf32, #tpu.memory_space<vmem>>, %arg38: memref<2x1x128xf32, #tpu.memory_space<vmem>>, %arg39: memref<128x768xf32, #tpu.memory_space<vmem>>, %arg40: memref<1x768xf32, #tpu.memory_space<vmem>>, %arg41: memref<16x768xf32, #tpu.memory_space<vmem>>, %arg42: memref<16x128xf32, #tpu.memory_space<vmem>>) attributes {dimension_semantics = [], scalar_prefetch = 0 : i64, scratch_operands = 1 : i64, tpu.core_type = #tpu.core_type<tc>} {
    %c0 = arith.constant 0 : index
    %c0_0 = arith.constant 0 : index
    %0 = vector.load %arg0[%c0, %c0_0] : memref<16x64xf32, #tpu.memory_space<vmem>>, vector<16x64xf32>
    %c0_1 = arith.constant 0 : index
    %c0_2 = arith.constant 0 : index
    %1 = vector.load %arg3[%c0_1, %c0_2] : memref<64x128xf32, #tpu.memory_space<vmem>>, vector<64x128xf32>
    %cst = arith.constant dense<0.000000e+00> : vector<16x128xf32>
    %2 = tpu.matmul %0, %1, %cst {dimension_numbers = #tpu.dot_dimension_numbers<[1], [0], [0], [1], [0, 0, 1, 1], [], []>} : vector<16x64xf32>, vector<64x128xf32>, vector<16x128xf32> -> vector<16x128xf32>
    %c0_3 = arith.constant 0 : index
    %c0_4 = arith.constant 0 : index
    %3 = vector.load %arg4[%c0_3, %c0_4] : memref<1x128xf32, #tpu.memory_space<vmem>>, vector<1x128xf32>
    %4 = vector.broadcast %3 : vector<1x128xf32> to vector<16x128xf32>
    %5 = arith.addf %2, %4 : vector<16x128xf32>
    %cst_5 = arith.constant 11.3137083 : f32
    %6 = vector.broadcast %cst_5 : f32 to vector<16x128xf32>
    %7 = arith.mulf %5, %6 : vector<16x128xf32>
    %c0_6 = arith.constant 0 : index
    %c0_7 = arith.constant 0 : index
    %8 = vector.load %arg2[%c0_6, %c0_7] : memref<16x128xf32, #tpu.memory_space<vmem>>, vector<16x128xf32>
    %9 = arith.addf %7, %8 : vector<16x128xf32>
    %c0_8 = arith.constant 0 : index
    %c0_9 = arith.constant 0 : index
    %10 = vector.load %arg1[%c0_8, %c0_9] : memref<2x8xf32, #tpu.memory_space<vmem>>, vector<2x8xf32>
    %cst_10 = arith.constant -1.000000e+09 : f32
    %11 = vector.broadcast %cst_10 : f32 to vector<2x8xf32>
    %12 = arith.mulf %10, %11 : vector<2x8xf32>
    %c0_11 = arith.constant 0 : index
    %c0_12 = arith.constant 0 : index
    %c0_13 = arith.constant 0 : index
    %13 = vector.load %arg5[%c0_11, %c0_12, %c0_13] : memref<2x128x384xf32, #tpu.memory_space<vmem>>, vector<1x128x384xf32>
    %14 = vector.shape_cast %13 : vector<1x128x384xf32> to vector<128x384xf32>
    %cst_14 = arith.constant dense<0.000000e+00> : vector<16x384xf32>
    %15 = tpu.matmul %9, %14, %cst_14 {dimension_numbers = #tpu.dot_dimension_numbers<[1], [0], [0], [1], [0, 0, 1, 1], [], []>} : vector<16x128xf32>, vector<128x384xf32>, vector<16x384xf32> -> vector<16x384xf32>
    %c0_15 = arith.constant 0 : index
    %c0_16 = arith.constant 0 : index
    %c0_17 = arith.constant 0 : index
    %16 = vector.load %arg6[%c0_15, %c0_16, %c0_17] : memref<2x1x384xf32, #tpu.memory_space<vmem>>, vector<1x1x384xf32>
    %17 = vector.shape_cast %16 : vector<1x1x384xf32> to vector<1x384xf32>
    %18 = vector.broadcast %17 : vector<1x384xf32> to vector<16x384xf32>
    %19 = arith.addf %15, %18 : vector<16x384xf32>
    %20 = vector.extract_strided_slice %19 {offsets = [0, 0], sizes = [16, 128], strides = [1, 1]} : vector<16x384xf32> to vector<16x128xf32>
    %21 = vector.extract_strided_slice %19 {offsets = [0, 128], sizes = [16, 128], strides = [1, 1]} : vector<16x384xf32> to vector<16x128xf32>
    %22 = vector.extract_strided_slice %19 {offsets = [0, 256], sizes = [16, 128], strides = [1, 1]} : vector<16x384xf32> to vector<16x128xf32>
    %c0_18 = arith.constant 0 : index
    %c0_19 = arith.constant 0 : index
    %c0_20 = arith.constant 0 : index
    %23 = vector.load %arg7[%c0_18, %c0_19, %c0_20] : memref<2x128x128xf32, #tpu.memory_space<vmem>>, vector<1x128x128xf32>
    %24 = vector.shape_cast %23 : vector<1x128x128xf32> to vector<128x128xf32>
    %c0_21 = arith.constant 0 : index
    %c0_22 = arith.constant 0 : index
    %c0_23 = arith.constant 0 : index
    %25 = vector.load %arg8[%c0_21, %c0_22, %c0_23] : memref<2x1x128xf32, #tpu.memory_space<vmem>>, vector<1x1x128xf32>
    %26 = vector.shape_cast %25 : vector<1x1x128xf32> to vector<1x128xf32>
    %27 = vector.extract_strided_slice %20 {offsets = [0, 0], sizes = [8, 128], strides = [1, 1]} : vector<16x128xf32> to vector<8x128xf32>
    %28 = vector.extract_strided_slice %21 {offsets = [0, 0], sizes = [8, 128], strides = [1, 1]} : vector<16x128xf32> to vector<8x128xf32>
    %29 = vector.extract_strided_slice %22 {offsets = [0, 0], sizes = [8, 128], strides = [1, 1]} : vector<16x128xf32> to vector<8x128xf32>
    %30 = vector.extract_strided_slice %12 {offsets = [0, 0], sizes = [1, 8], strides = [1, 1]} : vector<2x8xf32> to vector<1x8xf32>
    %31 = vector.extract_strided_slice %27 {offsets = [0, 0], sizes = [8, 32], strides = [1, 1]} : vector<8x128xf32> to vector<8x32xf32>
    %32 = vector.extract_strided_slice %28 {offsets = [0, 0], sizes = [8, 32], strides = [1, 1]} : vector<8x128xf32> to vector<8x32xf32>
    %cst_24 = arith.constant dense<0.000000e+00> : vector<8x8xf32>
    %33 = tpu.matmul %31, %32, %cst_24 {dimension_numbers = #tpu.dot_dimension_numbers<[1], [1], [0], [0], [0, 0, 1, 0], [], []>} : vector<8x32xf32>, vector<8x32xf32>, vector<8x8xf32> -> vector<8x8xf32>
    %cst_25 = arith.constant 0.176776692 : f32
    %34 = vector.broadcast %cst_25 : f32 to vector<8x8xf32>
    %35 = arith.mulf %33, %34 : vector<8x8xf32>
    %36 = vector.broadcast %30 : vector<1x8xf32> to vector<8x8xf32>
    %37 = arith.addf %35, %36 : vector<8x8xf32>
    %cst_26 = arith.constant dense<0xFF800000> : vector<8xf32>
    %38 = vector.multi_reduction <maximumf>, %37, %cst_26 [1] : vector<8x8xf32> to vector<8xf32>
    %39 = vector.shape_cast %38 : vector<8xf32> to vector<8x1xf32>
    %40 = vector.broadcast %39 : vector<8x1xf32> to vector<8x8xf32>
    %41 = arith.subf %37, %40 : vector<8x8xf32>
    %42 = math.exp %41 : vector<8x8xf32>
    %cst_27 = arith.constant dense<0.000000e+00> : vector<8xf32>
    %43 = vector.multi_reduction <add>, %42, %cst_27 [1] : vector<8x8xf32> to vector<8xf32>
    %44 = vector.shape_cast %43 : vector<8xf32> to vector<8x1xf32>
    %45 = tpu.reciprocal %44 {approx = true} : vector<8x1xf32> -> vector<8x1xf32>
    %46 = vector.broadcast %45 : vector<8x1xf32> to vector<8x8xf32>
    %47 = arith.mulf %42, %46 : vector<8x8xf32>
    %48 = vector.extract_strided_slice %29 {offsets = [0, 0], sizes = [8, 32], strides = [1, 1]} : vector<8x128xf32> to vector<8x32xf32>
    %cst_28 = arith.constant dense<0.000000e+00> : vector<8x32xf32>
    %49 = tpu.matmul %47, %48, %cst_28 {dimension_numbers = #tpu.dot_dimension_numbers<[1], [0], [0], [1], [0, 0, 1, 1], [], []>} : vector<8x8xf32>, vector<8x32xf32>, vector<8x32xf32> -> vector<8x32xf32>
    %c0_29 = arith.constant 0 : index
    %c0_30 = arith.constant 0 : index
    %50 = vector.load %arg42[%c0_29, %c0_30] : memref<16x128xf32, #tpu.memory_space<vmem>>, vector<8x32xf32>
    tpu.vector_store %arg42[%c0_29, %c0_30], %49 {strides = array<i32>} : memref<16x128xf32, #tpu.memory_space<vmem>>, vector<8x32xf32>,
    %51 = vector.extract_strided_slice %27 {offsets = [0, 32], sizes = [8, 32], strides = [1, 1]} : vector<8x128xf32> to vector<8x32xf32>
    %52 = vector.extract_strided_slice %28 {offsets = [0, 32], sizes = [8, 32], strides = [1, 1]} : vector<8x128xf32> to vector<8x32xf32>
    %cst_31 = arith.constant dense<0.000000e+00> : vector<8x8xf32>
    %53 = tpu.matmul %51, %52, %cst_31 {dimension_numbers = #tpu.dot_dimension_numbers<[1], [1], [0], [0], [0, 0, 1, 0], [], []>} : vector<8x32xf32>, vector<8x32xf32>, vector<8x8xf32> -> vector<8x8xf32>
    %cst_32 = arith.constant 0.176776692 : f32
    %54 = vector.broadcast %cst_32 : f32 to vector<8x8xf32>
    %55 = arith.mulf %53, %54 : vector<8x8xf32>
    %56 = vector.broadcast %30 : vector<1x8xf32> to vector<8x8xf32>
    %57 = arith.addf %55, %56 : vector<8x8xf32>
    %cst_33 = arith.constant dense<0xFF800000> : vector<8xf32>
    %58 = vector.multi_reduction <maximumf>, %57, %cst_33 [1] : vector<8x8xf32> to vector<8xf32>
    %59 = vector.shape_cast %58 : vector<8xf32> to vector<8x1xf32>
    %60 = vector.broadcast %59 : vector<8x1xf32> to vector<8x8xf32>
    %61 = arith.subf %57, %60 : vector<8x8xf32>
    %62 = math.exp %61 : vector<8x8xf32>
    %cst_34 = arith.constant dense<0.000000e+00> : vector<8xf32>
    %63 = vector.multi_reduction <add>, %62, %cst_34 [1] : vector<8x8xf32> to vector<8xf32>
    %64 = vector.shape_cast %63 : vector<8xf32> to vector<8x1xf32>
    %65 = tpu.reciprocal %64 {approx = true} : vector<8x1xf32> -> vector<8x1xf32>
    %66 = vector.broadcast %65 : vector<8x1xf32> to vector<8x8xf32>
    %67 = arith.mulf %62, %66 : vector<8x8xf32>
    %68 = vector.extract_strided_slice %29 {offsets = [0, 32], sizes = [8, 32], strides = [1, 1]} : vector<8x128xf32> to vector<8x32xf32>
    %cst_35 = arith.constant dense<0.000000e+00> : vector<8x32xf32>
    %69 = tpu.matmul %67, %68, %cst_35 {dimension_numbers = #tpu.dot_dimension_numbers<[1], [0], [0], [1], [0, 0, 1, 1], [], []>} : vector<8x8xf32>, vector<8x32xf32>, vector<8x32xf32> -> vector<8x32xf32>
    %c0_36 = arith.constant 0 : index
    %c32 = arith.constant 32 : index
    %70 = vector.load %arg42[%c0_36, %c32] : memref<16x128xf32, #tpu.memory_space<vmem>>, vector<8x32xf32>
    tpu.vector_store %arg42[%c0_36, %c32], %69 {strides = array<i32>} : memref<16x128xf32, #tpu.memory_space<vmem>>, vector<8x32xf32>,
    %71 = vector.extract_strided_slice %27 {offsets = [0, 64], sizes = [8, 32], strides = [1, 1]} : vector<8x128xf32> to vector<8x32xf32>
    %72 = vector.extract_strided_slice %28 {offsets = [0, 64], sizes = [8, 32], strides = [1, 1]} : vector<8x128xf32> to vector<8x32xf32>
    %cst_37 = arith.constant dense<0.000000e+00> : vector<8x8xf32>
    %73 = tpu.matmul %71, %72, %cst_37 {dimension_numbers = #tpu.dot_dimension_numbers<[1], [1], [0], [0], [0, 0, 1, 0], [], []>} : vector<8x32xf32>, vector<8x32xf32>, vector<8x8xf32> -> vector<8x8xf32>
    %cst_38 = arith.constant 0.176776692 : f32
    %74 = vector.broadcast %cst_38 : f32 to vector<8x8xf32>
    %75 = arith.mulf %73, %74 : vector<8x8xf32>
    %76 = vector.broadcast %30 : vector<1x8xf32> to vector<8x8xf32>
    %77 = arith.addf %75, %76 : vector<8x8xf32>
    %cst_39 = arith.constant dense<0xFF800000> : vector<8xf32>
    %78 = vector.multi_reduction <maximumf>, %77, %cst_39 [1] : vector<8x8xf32> to vector<8xf32>
    %79 = vector.shape_cast %78 : vector<8xf32> to vector<8x1xf32>
    %80 = vector.broadcast %79 : vector<8x1xf32> to vector<8x8xf32>
    %81 = arith.subf %77, %80 : vector<8x8xf32>
    %82 = math.exp %81 : vector<8x8xf32>
    %cst_40 = arith.constant dense<0.000000e+00> : vector<8xf32>
    %83 = vector.multi_reduction <add>, %82, %cst_40 [1] : vector<8x8xf32> to vector<8xf32>
    %84 = vector.shape_cast %83 : vector<8xf32> to vector<8x1xf32>
    %85 = tpu.reciprocal %84 {approx = true} : vector<8x1xf32> -> vector<8x1xf32>
    %86 = vector.broadcast %85 : vector<8x1xf32> to vector<8x8xf32>
    %87 = arith.mulf %82, %86 : vector<8x8xf32>
    %88 = vector.extract_strided_slice %29 {offsets = [0, 64], sizes = [8, 32], strides = [1, 1]} : vector<8x128xf32> to vector<8x32xf32>
    %cst_41 = arith.constant dense<0.000000e+00> : vector<8x32xf32>
    %89 = tpu.matmul %87, %88, %cst_41 {dimension_numbers = #tpu.dot_dimension_numbers<[1], [0], [0], [1], [0, 0, 1, 1], [], []>} : vector<8x8xf32>, vector<8x32xf32>, vector<8x32xf32> -> vector<8x32xf32>
    %c0_42 = arith.constant 0 : index
    %c64 = arith.constant 64 : index
    %90 = vector.load %arg42[%c0_42, %c64] : memref<16x128xf32, #tpu.memory_space<vmem>>, vector<8x32xf32>
    tpu.vector_store %arg42[%c0_42, %c64], %89 {strides = array<i32>} : memref<16x128xf32, #tpu.memory_space<vmem>>, vector<8x32xf32>,
    %91 = vector.extract_strided_slice %27 {offsets = [0, 96], sizes = [8, 32], strides = [1, 1]} : vector<8x128xf32> to vector<8x32xf32>
    %92 = vector.extract_strided_slice %28 {offsets = [0, 96], sizes = [8, 32], strides = [1, 1]} : vector<8x128xf32> to vector<8x32xf32>
    %cst_43 = arith.constant dense<0.000000e+00> : vector<8x8xf32>
    %93 = tpu.matmul %91, %92, %cst_43 {dimension_numbers = #tpu.dot_dimension_numbers<[1], [1], [0], [0], [0, 0, 1, 0], [], []>} : vector<8x32xf32>, vector<8x32xf32>, vector<8x8xf32> -> vector<8x8xf32>
    %cst_44 = arith.constant 0.176776692 : f32
    %94 = vector.broadcast %cst_44 : f32 to vector<8x8xf32>
    %95 = arith.mulf %93, %94 : vector<8x8xf32>
    %96 = vector.broadcast %30 : vector<1x8xf32> to vector<8x8xf32>
    %97 = arith.addf %95, %96 : vector<8x8xf32>
    %cst_45 = arith.constant dense<0xFF800000> : vector<8xf32>
    %98 = vector.multi_reduction <maximumf>, %97, %cst_45 [1] : vector<8x8xf32> to vector<8xf32>
    %99 = vector.shape_cast %98 : vector<8xf32> to vector<8x1xf32>
    %100 = vector.broadcast %99 : vector<8x1xf32> to vector<8x8xf32>
    %101 = arith.subf %97, %100 : vector<8x8xf32>
    %102 = math.exp %101 : vector<8x8xf32>
    %cst_46 = arith.constant dense<0.000000e+00> : vector<8xf32>
    %103 = vector.multi_reduction <add>, %102, %cst_46 [1] : vector<8x8xf32> to vector<8xf32>
    %104 = vector.shape_cast %103 : vector<8xf32> to vector<8x1xf32>
    %105 = tpu.reciprocal %104 {approx = true} : vector<8x1xf32> -> vector<8x1xf32>
    %106 = vector.broadcast %105 : vector<8x1xf32> to vector<8x8xf32>
    %107 = arith.mulf %102, %106 : vector<8x8xf32>
    %108 = vector.extract_strided_slice %29 {offsets = [0, 96], sizes = [8, 32], strides = [1, 1]} : vector<8x128xf32> to vector<8x32xf32>
    %cst_47 = arith.constant dense<0.000000e+00> : vector<8x32xf32>
    %109 = tpu.matmul %107, %108, %cst_47 {dimension_numbers = #tpu.dot_dimension_numbers<[1], [0], [0], [1], [0, 0, 1, 1], [], []>} : vector<8x8xf32>, vector<8x32xf32>, vector<8x32xf32> -> vector<8x32xf32>
    %c0_48 = arith.constant 0 : index
    %c96 = arith.constant 96 : index
    %110 = vector.load %arg42[%c0_48, %c96] : memref<16x128xf32, #tpu.memory_space<vmem>>, vector<8x32xf32>
    tpu.vector_store %arg42[%c0_48, %c96], %109 {strides = array<i32>} : memref<16x128xf32, #tpu.memory_space<vmem>>, vector<8x32xf32>,
    %111 = vector.extract_strided_slice %20 {offsets = [8, 0], sizes = [8, 128], strides = [1, 1]} : vector<16x128xf32> to vector<8x128xf32>
    %112 = vector.extract_strided_slice %21 {offsets = [8, 0], sizes = [8, 128], strides = [1, 1]} : vector<16x128xf32> to vector<8x128xf32>
    %113 = vector.extract_strided_slice %22 {offsets = [8, 0], sizes = [8, 128], strides = [1, 1]} : vector<16x128xf32> to vector<8x128xf32>
    %114 = vector.extract_strided_slice %12 {offsets = [1, 0], sizes = [1, 8], strides = [1, 1]} : vector<2x8xf32> to vector<1x8xf32>
    %115 = vector.extract_strided_slice %111 {offsets = [0, 0], sizes = [8, 32], strides = [1, 1]} : vector<8x128xf32> to vector<8x32xf32>
    %116 = vector.extract_strided_slice %112 {offsets = [0, 0], sizes = [8, 32], strides = [1, 1]} : vector<8x128xf32> to vector<8x32xf32>
    %cst_49 = arith.constant dense<0.000000e+00> : vector<8x8xf32>
    %117 = tpu.matmul %115, %116, %cst_49 {dimension_numbers = #tpu.dot_dimension_numbers<[1], [1], [0], [0], [0, 0, 1, 0], [], []>} : vector<8x32xf32>, vector<8x32xf32>, vector<8x8xf32> -> vector<8x8xf32>
    %cst_50 = arith.constant 0.176776692 : f32
    %118 = vector.broadcast %cst_50 : f32 to vector<8x8xf32>
    %119 = arith.mulf %117, %118 : vector<8x8xf32>
    %120 = vector.broadcast %114 : vector<1x8xf32> to vector<8x8xf32>
    %121 = arith.addf %119, %120 : vector<8x8xf32>
    %cst_51 = arith.constant dense<0xFF800000> : vector<8xf32>
    %122 = vector.multi_reduction <maximumf>, %121, %cst_51 [1] : vector<8x8xf32> to vector<8xf32>
    %123 = vector.shape_cast %122 : vector<8xf32> to vector<8x1xf32>
    %124 = vector.broadcast %123 : vector<8x1xf32> to vector<8x8xf32>
    %125 = arith.subf %121, %124 : vector<8x8xf32>
    %126 = math.exp %125 : vector<8x8xf32>
    %cst_52 = arith.constant dense<0.000000e+00> : vector<8xf32>
    %127 = vector.multi_reduction <add>, %126, %cst_52 [1] : vector<8x8xf32> to vector<8xf32>
    %128 = vector.shape_cast %127 : vector<8xf32> to vector<8x1xf32>
    %129 = tpu.reciprocal %128 {approx = true} : vector<8x1xf32> -> vector<8x1xf32>
    %130 = vector.broadcast %129 : vector<8x1xf32> to vector<8x8xf32>
    %131 = arith.mulf %126, %130 : vector<8x8xf32>
    %132 = vector.extract_strided_slice %113 {offsets = [0, 0], sizes = [8, 32], strides = [1, 1]} : vector<8x128xf32> to vector<8x32xf32>
    %cst_53 = arith.constant dense<0.000000e+00> : vector<8x32xf32>
    %133 = tpu.matmul %131, %132, %cst_53 {dimension_numbers = #tpu.dot_dimension_numbers<[1], [0], [0], [1], [0, 0, 1, 1], [], []>} : vector<8x8xf32>, vector<8x32xf32>, vector<8x32xf32> -> vector<8x32xf32>
    %c8 = arith.constant 8 : index
    %c0_54 = arith.constant 0 : index
    %134 = vector.load %arg42[%c8, %c0_54] : memref<16x128xf32, #tpu.memory_space<vmem>>, vector<8x32xf32>
    tpu.vector_store %arg42[%c8, %c0_54], %133 {strides = array<i32>} : memref<16x128xf32, #tpu.memory_space<vmem>>, vector<8x32xf32>,
    %135 = vector.extract_strided_slice %111 {offsets = [0, 32], sizes = [8, 32], strides = [1, 1]} : vector<8x128xf32> to vector<8x32xf32>
    %136 = vector.extract_strided_slice %112 {offsets = [0, 32], sizes = [8, 32], strides = [1, 1]} : vector<8x128xf32> to vector<8x32xf32>
    %cst_55 = arith.constant dense<0.000000e+00> : vector<8x8xf32>
    %137 = tpu.matmul %135, %136, %cst_55 {dimension_numbers = #tpu.dot_dimension_numbers<[1], [1], [0], [0], [0, 0, 1, 0], [], []>} : vector<8x32xf32>, vector<8x32xf32>, vector<8x8xf32> -> vector<8x8xf32>
    %cst_56 = arith.constant 0.176776692 : f32
    %138 = vector.broadcast %cst_56 : f32 to vector<8x8xf32>
    %139 = arith.mulf %137, %138 : vector<8x8xf32>
    %140 = vector.broadcast %114 : vector<1x8xf32> to vector<8x8xf32>
    %141 = arith.addf %139, %140 : vector<8x8xf32>
    %cst_57 = arith.constant dense<0xFF800000> : vector<8xf32>
    %142 = vector.multi_reduction <maximumf>, %141, %cst_57 [1] : vector<8x8xf32> to vector<8xf32>
    %143 = vector.shape_cast %142 : vector<8xf32> to vector<8x1xf32>
    %144 = vector.broadcast %143 : vector<8x1xf32> to vector<8x8xf32>
    %145 = arith.subf %141, %144 : vector<8x8xf32>
    %146 = math.exp %145 : vector<8x8xf32>
    %cst_58 = arith.constant dense<0.000000e+00> : vector<8xf32>
    %147 = vector.multi_reduction <add>, %146, %cst_58 [1] : vector<8x8xf32> to vector<8xf32>
    %148 = vector.shape_cast %147 : vector<8xf32> to vector<8x1xf32>
    %149 = tpu.reciprocal %148 {approx = true} : vector<8x1xf32> -> vector<8x1xf32>
    %150 = vector.broadcast %149 : vector<8x1xf32> to vector<8x8xf32>
    %151 = arith.mulf %146, %150 : vector<8x8xf32>
    %152 = vector.extract_strided_slice %113 {offsets = [0, 32], sizes = [8, 32], strides = [1, 1]} : vector<8x128xf32> to vector<8x32xf32>
    %cst_59 = arith.constant dense<0.000000e+00> : vector<8x32xf32>
    %153 = tpu.matmul %151, %152, %cst_59 {dimension_numbers = #tpu.dot_dimension_numbers<[1], [0], [0], [1], [0, 0, 1, 1], [], []>} : vector<8x8xf32>, vector<8x32xf32>, vector<8x32xf32> -> vector<8x32xf32>
    %c8_60 = arith.constant 8 : index
    %c32_61 = arith.constant 32 : index
    %154 = vector.load %arg42[%c8_60, %c32_61] : memref<16x128xf32, #tpu.memory_space<vmem>>, vector<8x32xf32>
    tpu.vector_store %arg42[%c8_60, %c32_61], %153 {strides = array<i32>} : memref<16x128xf32, #tpu.memory_space<vmem>>, vector<8x32xf32>,
    %155 = vector.extract_strided_slice %111 {offsets = [0, 64], sizes = [8, 32], strides = [1, 1]} : vector<8x128xf32> to vector<8x32xf32>
    %156 = vector.extract_strided_slice %112 {offsets = [0, 64], sizes = [8, 32], strides = [1, 1]} : vector<8x128xf32> to vector<8x32xf32>
    %cst_62 = arith.constant dense<0.000000e+00> : vector<8x8xf32>
    %157 = tpu.matmul %155, %156, %cst_62 {dimension_numbers = #tpu.dot_dimension_numbers<[1], [1], [0], [0], [0, 0, 1, 0], [], []>} : vector<8x32xf32>, vector<8x32xf32>, vector<8x8xf32> -> vector<8x8xf32>
    %cst_63 = arith.constant 0.176776692 : f32
    %158 = vector.broadcast %cst_63 : f32 to vector<8x8xf32>
    %159 = arith.mulf %157, %158 : vector<8x8xf32>
    %160 = vector.broadcast %114 : vector<1x8xf32> to vector<8x8xf32>
    %161 = arith.addf %159, %160 : vector<8x8xf32>
    %cst_64 = arith.constant dense<0xFF800000> : vector<8xf32>
    %162 = vector.multi_reduction <maximumf>, %161, %cst_64 [1] : vector<8x8xf32> to vector<8xf32>
    %163 = vector.shape_cast %162 : vector<8xf32> to vector<8x1xf32>
    %164 = vector.broadcast %163 : vector<8x1xf32> to vector<8x8xf32>
    %165 = arith.subf %161, %164 : vector<8x8xf32>
    %166 = math.exp %165 : vector<8x8xf32>
    %cst_65 = arith.constant dense<0.000000e+00> : vector<8xf32>
    %167 = vector.multi_reduction <add>, %166, %cst_65 [1] : vector<8x8xf32> to vector<8xf32>
    %168 = vector.shape_cast %167 : vector<8xf32> to vector<8x1xf32>
    %169 = tpu.reciprocal %168 {approx = true} : vector<8x1xf32> -> vector<8x1xf32>
    %170 = vector.broadcast %169 : vector<8x1xf32> to vector<8x8xf32>
    %171 = arith.mulf %166, %170 : vector<8x8xf32>
    %172 = vector.extract_strided_slice %113 {offsets = [0, 64], sizes = [8, 32], strides = [1, 1]} : vector<8x128xf32> to vector<8x32xf32>
    %cst_66 = arith.constant dense<0.000000e+00> : vector<8x32xf32>
    %173 = tpu.matmul %171, %172, %cst_66 {dimension_numbers = #tpu.dot_dimension_numbers<[1], [0], [0], [1], [0, 0, 1, 1], [], []>} : vector<8x8xf32>, vector<8x32xf32>, vector<8x32xf32> -> vector<8x32xf32>
    %c8_67 = arith.constant 8 : index
    %c64_68 = arith.constant 64 : index
    %174 = vector.load %arg42[%c8_67, %c64_68] : memref<16x128xf32, #tpu.memory_space<vmem>>, vector<8x32xf32>
    tpu.vector_store %arg42[%c8_67, %c64_68], %173 {strides = array<i32>} : memref<16x128xf32, #tpu.memory_space<vmem>>, vector<8x32xf32>,
    %175 = vector.extract_strided_slice %111 {offsets = [0, 96], sizes = [8, 32], strides = [1, 1]} : vector<8x128xf32> to vector<8x32xf32>
    %176 = vector.extract_strided_slice %112 {offsets = [0, 96], sizes = [8, 32], strides = [1, 1]} : vector<8x128xf32> to vector<8x32xf32>
    %cst_69 = arith.constant dense<0.000000e+00> : vector<8x8xf32>
    %177 = tpu.matmul %175, %176, %cst_69 {dimension_numbers = #tpu.dot_dimension_numbers<[1], [1], [0], [0], [0, 0, 1, 0], [], []>} : vector<8x32xf32>, vector<8x32xf32>, vector<8x8xf32> -> vector<8x8xf32>
    %cst_70 = arith.constant 0.176776692 : f32
    %178 = vector.broadcast %cst_70 : f32 to vector<8x8xf32>
    %179 = arith.mulf %177, %178 : vector<8x8xf32>
    %180 = vector.broadcast %114 : vector<1x8xf32> to vector<8x8xf32>
    %181 = arith.addf %179, %180 : vector<8x8xf32>
    %cst_71 = arith.constant dense<0xFF800000> : vector<8xf32>
    %182 = vector.multi_reduction <maximumf>, %181, %cst_71 [1] : vector<8x8xf32> to vector<8xf32>
    %183 = vector.shape_cast %182 : vector<8xf32> to vector<8x1xf32>
    %184 = vector.broadcast %183 : vector<8x1xf32> to vector<8x8xf32>
    %185 = arith.subf %181, %184 : vector<8x8xf32>
    %186 = math.exp %185 : vector<8x8xf32>
    %cst_72 = arith.constant dense<0.000000e+00> : vector<8xf32>
    %187 = vector.multi_reduction <add>, %186, %cst_72 [1] : vector<8x8xf32> to vector<8xf32>
    %188 = vector.shape_cast %187 : vector<8xf32> to vector<8x1xf32>
    %189 = tpu.reciprocal %188 {approx = true} : vector<8x1xf32> -> vector<8x1xf32>
    %190 = vector.broadcast %189 : vector<8x1xf32> to vector<8x8xf32>
    %191 = arith.mulf %186, %190 : vector<8x8xf32>
    %192 = vector.extract_strided_slice %113 {offsets = [0, 96], sizes = [8, 32], strides = [1, 1]} : vector<8x128xf32> to vector<8x32xf32>
    %cst_73 = arith.constant dense<0.000000e+00> : vector<8x32xf32>
    %193 = tpu.matmul %191, %192, %cst_73 {dimension_numbers = #tpu.dot_dimension_numbers<[1], [0], [0], [1], [0, 0, 1, 1], [], []>} : vector<8x8xf32>, vector<8x32xf32>, vector<8x32xf32> -> vector<8x32xf32>
    %c8_74 = arith.constant 8 : index
    %c96_75 = arith.constant 96 : index
    %194 = vector.load %arg42[%c8_74, %c96_75] : memref<16x128xf32, #tpu.memory_space<vmem>>, vector<8x32xf32>
    tpu.vector_store %arg42[%c8_74, %c96_75], %193 {strides = array<i32>} : memref<16x128xf32, #tpu.memory_space<vmem>>, vector<8x32xf32>,
    %c0_76 = arith.constant 0 : index
    %c0_77 = arith.constant 0 : index
    %195 = vector.load %arg42[%c0_76, %c0_77] : memref<16x128xf32, #tpu.memory_space<vmem>>, vector<16x128xf32>
    %cst_78 = arith.constant dense<0.000000e+00> : vector<16x128xf32>
    %196 = tpu.matmul %195, %24, %cst_78 {dimension_numbers = #tpu.dot_dimension_numbers<[1], [0], [0], [1], [0, 0, 1, 1], [], []>} : vector<16x128xf32>, vector<128x128xf32>, vector<16x128xf32> -> vector<16x128xf32>
    %197 = vector.broadcast %26 : vector<1x128xf32> to vector<16x128xf32>
    %198 = arith.addf %196, %197 : vector<16x128xf32>
    %199 = arith.addf %9, %198 : vector<16x128xf32>
    %c0_79 = arith.constant 0 : index
    %c0_80 = arith.constant 0 : index
    %c0_81 = arith.constant 0 : index
    %200 = vector.load %arg9[%c0_79, %c0_80, %c0_81] : memref<2x1x128xf32, #tpu.memory_space<vmem>>, vector<1x1x128xf32>
    %201 = vector.shape_cast %200 : vector<1x1x128xf32> to vector<1x128xf32>
    %c0_82 = arith.constant 0 : index
    %c0_83 = arith.constant 0 : index
    %c0_84 = arith.constant 0 : index
    %202 = vector.load %arg10[%c0_82, %c0_83, %c0_84] : memref<2x1x128xf32, #tpu.memory_space<vmem>>, vector<1x1x128xf32>
    %203 = vector.shape_cast %202 : vector<1x1x128xf32> to vector<1x128xf32>
    %cst_85 = arith.constant dense<0.000000e+00> : vector<16xf32>
    %204 = vector.multi_reduction <add>, %199, %cst_85 [1] : vector<16x128xf32> to vector<16xf32>
    %205 = vector.shape_cast %204 : vector<16xf32> to vector<16x1xf32>
    %cst_86 = arith.constant 1.280000e+02 : f32
    %206 = vector.broadcast %cst_86 : f32 to vector<16x1xf32>
    %207 = arith.divf %205, %206 : vector<16x1xf32>
    %208 = vector.broadcast %207 : vector<16x1xf32> to vector<16x128xf32>
    %209 = arith.subf %199, %208 : vector<16x128xf32>
    %210 = arith.mulf %209, %209 : vector<16x128xf32>
    %cst_87 = arith.constant dense<0.000000e+00> : vector<16xf32>
    %211 = vector.multi_reduction <add>, %210, %cst_87 [1] : vector<16x128xf32> to vector<16xf32>
    %212 = vector.shape_cast %211 : vector<16xf32> to vector<16x1xf32>
    %cst_88 = arith.constant 1.280000e+02 : f32
    %213 = vector.broadcast %cst_88 : f32 to vector<16x1xf32>
    %214 = arith.divf %212, %213 : vector<16x1xf32>
    %cst_89 = arith.constant 9.99999974E-6 : f32
    %215 = vector.broadcast %cst_89 : f32 to vector<16x1xf32>
    %216 = arith.addf %214, %215 : vector<16x1xf32>
    %217 = math.rsqrt %216 : vector<16x1xf32>
    %218 = vector.broadcast %217 : vector<16x1xf32> to vector<16x128xf32>
    %219 = arith.mulf %209, %218 : vector<16x128xf32>
    %220 = vector.broadcast %201 : vector<1x128xf32> to vector<16x128xf32>
    %221 = arith.mulf %219, %220 : vector<16x128xf32>
    %222 = vector.broadcast %203 : vector<1x128xf32> to vector<16x128xf32>
    %223 = arith.addf %221, %222 : vector<16x128xf32>
    %c0_90 = arith.constant 0 : index
    %c0_91 = arith.constant 0 : index
    %c0_92 = arith.constant 0 : index
    %224 = vector.load %arg11[%c0_90, %c0_91, %c0_92] : memref<2x128x128xf32, #tpu.memory_space<vmem>>, vector<1x128x128xf32>
    %225 = vector.shape_cast %224 : vector<1x128x128xf32> to vector<128x128xf32>
    %cst_93 = arith.constant dense<0.000000e+00> : vector<16x128xf32>
    %226 = tpu.matmul %223, %225, %cst_93 {dimension_numbers = #tpu.dot_dimension_numbers<[1], [0], [0], [1], [0, 0, 1, 1], [], []>} : vector<16x128xf32>, vector<128x128xf32>, vector<16x128xf32> -> vector<16x128xf32>
    %c0_94 = arith.constant 0 : index
    %c0_95 = arith.constant 0 : index
    %c0_96 = arith.constant 0 : index
    %227 = vector.load %arg12[%c0_94, %c0_95, %c0_96] : memref<2x1x128xf32, #tpu.memory_space<vmem>>, vector<1x1x128xf32>
    %228 = vector.shape_cast %227 : vector<1x1x128xf32> to vector<1x128xf32>
    %229 = vector.broadcast %228 : vector<1x128xf32> to vector<16x128xf32>
    %230 = arith.addf %226, %229 : vector<16x128xf32>
    %cst_97 = arith.constant 0.000000e+00 : f32
    %231 = vector.broadcast %cst_97 : f32 to vector<16x128xf32>
    %232 = arith.maximumf %230, %231 : vector<16x128xf32>
    %c0_98 = arith.constant 0 : index
    %c0_99 = arith.constant 0 : index
    %c0_100 = arith.constant 0 : index
    %233 = vector.load %arg13[%c0_98, %c0_99, %c0_100] : memref<2x128x128xf32, #tpu.memory_space<vmem>>, vector<1x128x128xf32>
    %234 = vector.shape_cast %233 : vector<1x128x128xf32> to vector<128x128xf32>
    %cst_101 = arith.constant dense<0.000000e+00> : vector<16x128xf32>
    %235 = tpu.matmul %232, %234, %cst_101 {dimension_numbers = #tpu.dot_dimension_numbers<[1], [0], [0], [1], [0, 0, 1, 1], [], []>} : vector<16x128xf32>, vector<128x128xf32>, vector<16x128xf32> -> vector<16x128xf32>
    %c0_102 = arith.constant 0 : index
    %c0_103 = arith.constant 0 : index
    %c0_104 = arith.constant 0 : index
    %236 = vector.load %arg14[%c0_102, %c0_103, %c0_104] : memref<2x1x128xf32, #tpu.memory_space<vmem>>, vector<1x1x128xf32>
    %237 = vector.shape_cast %236 : vector<1x1x128xf32> to vector<1x128xf32>
    %238 = vector.broadcast %237 : vector<1x128xf32> to vector<16x128xf32>
    %239 = arith.addf %235, %238 : vector<16x128xf32>
    %240 = arith.addf %223, %239 : vector<16x128xf32>
    %c0_105 = arith.constant 0 : index
    %c0_106 = arith.constant 0 : index
    %c0_107 = arith.constant 0 : index
    %241 = vector.load %arg15[%c0_105, %c0_106, %c0_107] : memref<2x1x128xf32, #tpu.memory_space<vmem>>, vector<1x1x128xf32>
    %242 = vector.shape_cast %241 : vector<1x1x128xf32> to vector<1x128xf32>
    %c0_108 = arith.constant 0 : index
    %c0_109 = arith.constant 0 : index
    %c0_110 = arith.constant 0 : index
    %243 = vector.load %arg16[%c0_108, %c0_109, %c0_110] : memref<2x1x128xf32, #tpu.memory_space<vmem>>, vector<1x1x128xf32>
    %244 = vector.shape_cast %243 : vector<1x1x128xf32> to vector<1x128xf32>
    %cst_111 = arith.constant dense<0.000000e+00> : vector<16xf32>
    %245 = vector.multi_reduction <add>, %240, %cst_111 [1] : vector<16x128xf32> to vector<16xf32>
    %246 = vector.shape_cast %245 : vector<16xf32> to vector<16x1xf32>
    %cst_112 = arith.constant 1.280000e+02 : f32
    %247 = vector.broadcast %cst_112 : f32 to vector<16x1xf32>
    %248 = arith.divf %246, %247 : vector<16x1xf32>
    %249 = vector.broadcast %248 : vector<16x1xf32> to vector<16x128xf32>
    %250 = arith.subf %240, %249 : vector<16x128xf32>
    %251 = arith.mulf %250, %250 : vector<16x128xf32>
    %cst_113 = arith.constant dense<0.000000e+00> : vector<16xf32>
    %252 = vector.multi_reduction <add>, %251, %cst_113 [1] : vector<16x128xf32> to vector<16xf32>
    %253 = vector.shape_cast %252 : vector<16xf32> to vector<16x1xf32>
    %cst_114 = arith.constant 1.280000e+02 : f32
    %254 = vector.broadcast %cst_114 : f32 to vector<16x1xf32>
    %255 = arith.divf %253, %254 : vector<16x1xf32>
    %cst_115 = arith.constant 9.99999974E-6 : f32
    %256 = vector.broadcast %cst_115 : f32 to vector<16x1xf32>
    %257 = arith.addf %255, %256 : vector<16x1xf32>
    %258 = math.rsqrt %257 : vector<16x1xf32>
    %259 = vector.broadcast %258 : vector<16x1xf32> to vector<16x128xf32>
    %260 = arith.mulf %250, %259 : vector<16x128xf32>
    %261 = vector.broadcast %242 : vector<1x128xf32> to vector<16x128xf32>
    %262 = arith.mulf %260, %261 : vector<16x128xf32>
    %263 = vector.broadcast %244 : vector<1x128xf32> to vector<16x128xf32>
    %264 = arith.addf %262, %263 : vector<16x128xf32>
    %c1 = arith.constant 1 : index
    %c0_116 = arith.constant 0 : index
    %c0_117 = arith.constant 0 : index
    %265 = vector.load %arg5[%c1, %c0_116, %c0_117] : memref<2x128x384xf32, #tpu.memory_space<vmem>>, vector<1x128x384xf32>
    %266 = vector.shape_cast %265 : vector<1x128x384xf32> to vector<128x384xf32>
    %cst_118 = arith.constant dense<0.000000e+00> : vector<16x384xf32>
    %267 = tpu.matmul %264, %266, %cst_118 {dimension_numbers = #tpu.dot_dimension_numbers<[1], [0], [0], [1], [0, 0, 1, 1], [], []>} : vector<16x128xf32>, vector<128x384xf32>, vector<16x384xf32> -> vector<16x384xf32>
    %c1_119 = arith.constant 1 : index
    %c0_120 = arith.constant 0 : index
    %c0_121 = arith.constant 0 : index
    %268 = vector.load %arg6[%c1_119, %c0_120, %c0_121] : memref<2x1x384xf32, #tpu.memory_space<vmem>>, vector<1x1x384xf32>
    %269 = vector.shape_cast %268 : vector<1x1x384xf32> to vector<1x384xf32>
    %270 = vector.broadcast %269 : vector<1x384xf32> to vector<16x384xf32>
    %271 = arith.addf %267, %270 : vector<16x384xf32>
    %272 = vector.extract_strided_slice %271 {offsets = [0, 0], sizes = [16, 128], strides = [1, 1]} : vector<16x384xf32> to vector<16x128xf32>
    %273 = vector.extract_strided_slice %271 {offsets = [0, 128], sizes = [16, 128], strides = [1, 1]} : vector<16x384xf32> to vector<16x128xf32>
    %274 = vector.extract_strided_slice %271 {offsets = [0, 256], sizes = [16, 128], strides = [1, 1]} : vector<16x384xf32> to vector<16x128xf32>
    %c1_122 = arith.constant 1 : index
    %c0_123 = arith.constant 0 : index
    %c0_124 = arith.constant 0 : index
    %275 = vector.load %arg7[%c1_122, %c0_123, %c0_124] : memref<2x128x128xf32, #tpu.memory_space<vmem>>, vector<1x128x128xf32>
    %276 = vector.shape_cast %275 : vector<1x128x128xf32> to vector<128x128xf32>
    %c1_125 = arith.constant 1 : index
    %c0_126 = arith.constant 0 : index
    %c0_127 = arith.constant 0 : index
    %277 = vector.load %arg8[%c1_125, %c0_126, %c0_127] : memref<2x1x128xf32, #tpu.memory_space<vmem>>, vector<1x1x128xf32>
    %278 = vector.shape_cast %277 : vector<1x1x128xf32> to vector<1x128xf32>
    %279 = vector.extract_strided_slice %272 {offsets = [0, 0], sizes = [8, 128], strides = [1, 1]} : vector<16x128xf32> to vector<8x128xf32>
    %280 = vector.extract_strided_slice %273 {offsets = [0, 0], sizes = [8, 128], strides = [1, 1]} : vector<16x128xf32> to vector<8x128xf32>
    %281 = vector.extract_strided_slice %274 {offsets = [0, 0], sizes = [8, 128], strides = [1, 1]} : vector<16x128xf32> to vector<8x128xf32>
    %282 = vector.extract_strided_slice %12 {offsets = [0, 0], sizes = [1, 8], strides = [1, 1]} : vector<2x8xf32> to vector<1x8xf32>
    %283 = vector.extract_strided_slice %279 {offsets = [0, 0], sizes = [8, 32], strides = [1, 1]} : vector<8x128xf32> to vector<8x32xf32>
    %284 = vector.extract_strided_slice %280 {offsets = [0, 0], sizes = [8, 32], strides = [1, 1]} : vector<8x128xf32> to vector<8x32xf32>
    %cst_128 = arith.constant dense<0.000000e+00> : vector<8x8xf32>
    %285 = tpu.matmul %283, %284, %cst_128 {dimension_numbers = #tpu.dot_dimension_numbers<[1], [1], [0], [0], [0, 0, 1, 0], [], []>} : vector<8x32xf32>, vector<8x32xf32>, vector<8x8xf32> -> vector<8x8xf32>
    %cst_129 = arith.constant 0.176776692 : f32
    %286 = vector.broadcast %cst_129 : f32 to vector<8x8xf32>
    %287 = arith.mulf %285, %286 : vector<8x8xf32>
    %288 = vector.broadcast %282 : vector<1x8xf32> to vector<8x8xf32>
    %289 = arith.addf %287, %288 : vector<8x8xf32>
    %cst_130 = arith.constant dense<0xFF800000> : vector<8xf32>
    %290 = vector.multi_reduction <maximumf>, %289, %cst_130 [1] : vector<8x8xf32> to vector<8xf32>
    %291 = vector.shape_cast %290 : vector<8xf32> to vector<8x1xf32>
    %292 = vector.broadcast %291 : vector<8x1xf32> to vector<8x8xf32>
    %293 = arith.subf %289, %292 : vector<8x8xf32>
    %294 = math.exp %293 : vector<8x8xf32>
    %cst_131 = arith.constant dense<0.000000e+00> : vector<8xf32>
    %295 = vector.multi_reduction <add>, %294, %cst_131 [1] : vector<8x8xf32> to vector<8xf32>
    %296 = vector.shape_cast %295 : vector<8xf32> to vector<8x1xf32>
    %297 = tpu.reciprocal %296 {approx = true} : vector<8x1xf32> -> vector<8x1xf32>
    %298 = vector.broadcast %297 : vector<8x1xf32> to vector<8x8xf32>
    %299 = arith.mulf %294, %298 : vector<8x8xf32>
    %300 = vector.extract_strided_slice %281 {offsets = [0, 0], sizes = [8, 32], strides = [1, 1]} : vector<8x128xf32> to vector<8x32xf32>
    %cst_132 = arith.constant dense<0.000000e+00> : vector<8x32xf32>
    %301 = tpu.matmul %299, %300, %cst_132 {dimension_numbers = #tpu.dot_dimension_numbers<[1], [0], [0], [1], [0, 0, 1, 1], [], []>} : vector<8x8xf32>, vector<8x32xf32>, vector<8x32xf32> -> vector<8x32xf32>
    %c0_133 = arith.constant 0 : index
    %c0_134 = arith.constant 0 : index
    %302 = vector.load %arg42[%c0_133, %c0_134] : memref<16x128xf32, #tpu.memory_space<vmem>>, vector<8x32xf32>
    tpu.vector_store %arg42[%c0_133, %c0_134], %301 {strides = array<i32>} : memref<16x128xf32, #tpu.memory_space<vmem>>, vector<8x32xf32>,
    %303 = vector.extract_strided_slice %279 {offsets = [0, 32], sizes = [8, 32], strides = [1, 1]} : vector<8x128xf32> to vector<8x32xf32>
    %304 = vector.extract_strided_slice %280 {offsets = [0, 32], sizes = [8, 32], strides = [1, 1]} : vector<8x128xf32> to vector<8x32xf32>
    %cst_135 = arith.constant dense<0.000000e+00> : vector<8x8xf32>
    %305 = tpu.matmul %303, %304, %cst_135 {dimension_numbers = #tpu.dot_dimension_numbers<[1], [1], [0], [0], [0, 0, 1, 0], [], []>} : vector<8x32xf32>, vector<8x32xf32>, vector<8x8xf32> -> vector<8x8xf32>
    %cst_136 = arith.constant 0.176776692 : f32
    %306 = vector.broadcast %cst_136 : f32 to vector<8x8xf32>
    %307 = arith.mulf %305, %306 : vector<8x8xf32>
    %308 = vector.broadcast %282 : vector<1x8xf32> to vector<8x8xf32>
    %309 = arith.addf %307, %308 : vector<8x8xf32>
    %cst_137 = arith.constant dense<0xFF800000> : vector<8xf32>
    %310 = vector.multi_reduction <maximumf>, %309, %cst_137 [1] : vector<8x8xf32> to vector<8xf32>
    %311 = vector.shape_cast %310 : vector<8xf32> to vector<8x1xf32>
    %312 = vector.broadcast %311 : vector<8x1xf32> to vector<8x8xf32>
    %313 = arith.subf %309, %312 : vector<8x8xf32>
    %314 = math.exp %313 : vector<8x8xf32>
    %cst_138 = arith.constant dense<0.000000e+00> : vector<8xf32>
    %315 = vector.multi_reduction <add>, %314, %cst_138 [1] : vector<8x8xf32> to vector<8xf32>
    %316 = vector.shape_cast %315 : vector<8xf32> to vector<8x1xf32>
    %317 = tpu.reciprocal %316 {approx = true} : vector<8x1xf32> -> vector<8x1xf32>
    %318 = vector.broadcast %317 : vector<8x1xf32> to vector<8x8xf32>
    %319 = arith.mulf %314, %318 : vector<8x8xf32>
    %320 = vector.extract_strided_slice %281 {offsets = [0, 32], sizes = [8, 32], strides = [1, 1]} : vector<8x128xf32> to vector<8x32xf32>
    %cst_139 = arith.constant dense<0.000000e+00> : vector<8x32xf32>
    %321 = tpu.matmul %319, %320, %cst_139 {dimension_numbers = #tpu.dot_dimension_numbers<[1], [0], [0], [1], [0, 0, 1, 1], [], []>} : vector<8x8xf32>, vector<8x32xf32>, vector<8x32xf32> -> vector<8x32xf32>
    %c0_140 = arith.constant 0 : index
    %c32_141 = arith.constant 32 : index
    %322 = vector.load %arg42[%c0_140, %c32_141] : memref<16x128xf32, #tpu.memory_space<vmem>>, vector<8x32xf32>
    tpu.vector_store %arg42[%c0_140, %c32_141], %321 {strides = array<i32>} : memref<16x128xf32, #tpu.memory_space<vmem>>, vector<8x32xf32>,
    %323 = vector.extract_strided_slice %279 {offsets = [0, 64], sizes = [8, 32], strides = [1, 1]} : vector<8x128xf32> to vector<8x32xf32>
    %324 = vector.extract_strided_slice %280 {offsets = [0, 64], sizes = [8, 32], strides = [1, 1]} : vector<8x128xf32> to vector<8x32xf32>
    %cst_142 = arith.constant dense<0.000000e+00> : vector<8x8xf32>
    %325 = tpu.matmul %323, %324, %cst_142 {dimension_numbers = #tpu.dot_dimension_numbers<[1], [1], [0], [0], [0, 0, 1, 0], [], []>} : vector<8x32xf32>, vector<8x32xf32>, vector<8x8xf32> -> vector<8x8xf32>
    %cst_143 = arith.constant 0.176776692 : f32
    %326 = vector.broadcast %cst_143 : f32 to vector<8x8xf32>
    %327 = arith.mulf %325, %326 : vector<8x8xf32>
    %328 = vector.broadcast %282 : vector<1x8xf32> to vector<8x8xf32>
    %329 = arith.addf %327, %328 : vector<8x8xf32>
    %cst_144 = arith.constant dense<0xFF800000> : vector<8xf32>
    %330 = vector.multi_reduction <maximumf>, %329, %cst_144 [1] : vector<8x8xf32> to vector<8xf32>
    %331 = vector.shape_cast %330 : vector<8xf32> to vector<8x1xf32>
    %332 = vector.broadcast %331 : vector<8x1xf32> to vector<8x8xf32>
    %333 = arith.subf %329, %332 : vector<8x8xf32>
    %334 = math.exp %333 : vector<8x8xf32>
    %cst_145 = arith.constant dense<0.000000e+00> : vector<8xf32>
    %335 = vector.multi_reduction <add>, %334, %cst_145 [1] : vector<8x8xf32> to vector<8xf32>
    %336 = vector.shape_cast %335 : vector<8xf32> to vector<8x1xf32>
    %337 = tpu.reciprocal %336 {approx = true} : vector<8x1xf32> -> vector<8x1xf32>
    %338 = vector.broadcast %337 : vector<8x1xf32> to vector<8x8xf32>
    %339 = arith.mulf %334, %338 : vector<8x8xf32>
    %340 = vector.extract_strided_slice %281 {offsets = [0, 64], sizes = [8, 32], strides = [1, 1]} : vector<8x128xf32> to vector<8x32xf32>
    %cst_146 = arith.constant dense<0.000000e+00> : vector<8x32xf32>
    %341 = tpu.matmul %339, %340, %cst_146 {dimension_numbers = #tpu.dot_dimension_numbers<[1], [0], [0], [1], [0, 0, 1, 1], [], []>} : vector<8x8xf32>, vector<8x32xf32>, vector<8x32xf32> -> vector<8x32xf32>
    %c0_147 = arith.constant 0 : index
    %c64_148 = arith.constant 64 : index
    %342 = vector.load %arg42[%c0_147, %c64_148] : memref<16x128xf32, #tpu.memory_space<vmem>>, vector<8x32xf32>
    tpu.vector_store %arg42[%c0_147, %c64_148], %341 {strides = array<i32>} : memref<16x128xf32, #tpu.memory_space<vmem>>, vector<8x32xf32>,
    %343 = vector.extract_strided_slice %279 {offsets = [0, 96], sizes = [8, 32], strides = [1, 1]} : vector<8x128xf32> to vector<8x32xf32>
    %344 = vector.extract_strided_slice %280 {offsets = [0, 96], sizes = [8, 32], strides = [1, 1]} : vector<8x128xf32> to vector<8x32xf32>
    %cst_149 = arith.constant dense<0.000000e+00> : vector<8x8xf32>
    %345 = tpu.matmul %343, %344, %cst_149 {dimension_numbers = #tpu.dot_dimension_numbers<[1], [1], [0], [0], [0, 0, 1, 0], [], []>} : vector<8x32xf32>, vector<8x32xf32>, vector<8x8xf32> -> vector<8x8xf32>
    %cst_150 = arith.constant 0.176776692 : f32
    %346 = vector.broadcast %cst_150 : f32 to vector<8x8xf32>
    %347 = arith.mulf %345, %346 : vector<8x8xf32>
    %348 = vector.broadcast %282 : vector<1x8xf32> to vector<8x8xf32>
    %349 = arith.addf %347, %348 : vector<8x8xf32>
    %cst_151 = arith.constant dense<0xFF800000> : vector<8xf32>
    %350 = vector.multi_reduction <maximumf>, %349, %cst_151 [1] : vector<8x8xf32> to vector<8xf32>
    %351 = vector.shape_cast %350 : vector<8xf32> to vector<8x1xf32>
    %352 = vector.broadcast %351 : vector<8x1xf32> to vector<8x8xf32>
    %353 = arith.subf %349, %352 : vector<8x8xf32>
    %354 = math.exp %353 : vector<8x8xf32>
    %cst_152 = arith.constant dense<0.000000e+00> : vector<8xf32>
    %355 = vector.multi_reduction <add>, %354, %cst_152 [1] : vector<8x8xf32> to vector<8xf32>
    %356 = vector.shape_cast %355 : vector<8xf32> to vector<8x1xf32>
    %357 = tpu.reciprocal %356 {approx = true} : vector<8x1xf32> -> vector<8x1xf32>
    %358 = vector.broadcast %357 : vector<8x1xf32> to vector<8x8xf32>
    %359 = arith.mulf %354, %358 : vector<8x8xf32>
    %360 = vector.extract_strided_slice %281 {offsets = [0, 96], sizes = [8, 32], strides = [1, 1]} : vector<8x128xf32> to vector<8x32xf32>
    %cst_153 = arith.constant dense<0.000000e+00> : vector<8x32xf32>
    %361 = tpu.matmul %359, %360, %cst_153 {dimension_numbers = #tpu.dot_dimension_numbers<[1], [0], [0], [1], [0, 0, 1, 1], [], []>} : vector<8x8xf32>, vector<8x32xf32>, vector<8x32xf32> -> vector<8x32xf32>
    %c0_154 = arith.constant 0 : index
    %c96_155 = arith.constant 96 : index
    %362 = vector.load %arg42[%c0_154, %c96_155] : memref<16x128xf32, #tpu.memory_space<vmem>>, vector<8x32xf32>
    tpu.vector_store %arg42[%c0_154, %c96_155], %361 {strides = array<i32>} : memref<16x128xf32, #tpu.memory_space<vmem>>, vector<8x32xf32>,
    %363 = vector.extract_strided_slice %272 {offsets = [8, 0], sizes = [8, 128], strides = [1, 1]} : vector<16x128xf32> to vector<8x128xf32>
    %364 = vector.extract_strided_slice %273 {offsets = [8, 0], sizes = [8, 128], strides = [1, 1]} : vector<16x128xf32> to vector<8x128xf32>
    %365 = vector.extract_strided_slice %274 {offsets = [8, 0], sizes = [8, 128], strides = [1, 1]} : vector<16x128xf32> to vector<8x128xf32>
    %366 = vector.extract_strided_slice %12 {offsets = [1, 0], sizes = [1, 8], strides = [1, 1]} : vector<2x8xf32> to vector<1x8xf32>
    %367 = vector.extract_strided_slice %363 {offsets = [0, 0], sizes = [8, 32], strides = [1, 1]} : vector<8x128xf32> to vector<8x32xf32>
    %368 = vector.extract_strided_slice %364 {offsets = [0, 0], sizes = [8, 32], strides = [1, 1]} : vector<8x128xf32> to vector<8x32xf32>
    %cst_156 = arith.constant dense<0.000000e+00> : vector<8x8xf32>
    %369 = tpu.matmul %367, %368, %cst_156 {dimension_numbers = #tpu.dot_dimension_numbers<[1], [1], [0], [0], [0, 0, 1, 0], [], []>} : vector<8x32xf32>, vector<8x32xf32>, vector<8x8xf32> -> vector<8x8xf32>
    %cst_157 = arith.constant 0.176776692 : f32
    %370 = vector.broadcast %cst_157 : f32 to vector<8x8xf32>
    %371 = arith.mulf %369, %370 : vector<8x8xf32>
    %372 = vector.broadcast %366 : vector<1x8xf32> to vector<8x8xf32>
    %373 = arith.addf %371, %372 : vector<8x8xf32>
    %cst_158 = arith.constant dense<0xFF800000> : vector<8xf32>
    %374 = vector.multi_reduction <maximumf>, %373, %cst_158 [1] : vector<8x8xf32> to vector<8xf32>
    %375 = vector.shape_cast %374 : vector<8xf32> to vector<8x1xf32>
    %376 = vector.broadcast %375 : vector<8x1xf32> to vector<8x8xf32>
    %377 = arith.subf %373, %376 : vector<8x8xf32>
    %378 = math.exp %377 : vector<8x8xf32>
    %cst_159 = arith.constant dense<0.000000e+00> : vector<8xf32>
    %379 = vector.multi_reduction <add>, %378, %cst_159 [1] : vector<8x8xf32> to vector<8xf32>
    %380 = vector.shape_cast %379 : vector<8xf32> to vector<8x1xf32>
    %381 = tpu.reciprocal %380 {approx = true} : vector<8x1xf32> -> vector<8x1xf32>
    %382 = vector.broadcast %381 : vector<8x1xf32> to vector<8x8xf32>
    %383 = arith.mulf %378, %382 : vector<8x8xf32>
    %384 = vector.extract_strided_slice %365 {offsets = [0, 0], sizes = [8, 32], strides = [1, 1]} : vector<8x128xf32> to vector<8x32xf32>
    %cst_160 = arith.constant dense<0.000000e+00> : vector<8x32xf32>
    %385 = tpu.matmul %383, %384, %cst_160 {dimension_numbers = #tpu.dot_dimension_numbers<[1], [0], [0], [1], [0, 0, 1, 1], [], []>} : vector<8x8xf32>, vector<8x32xf32>, vector<8x32xf32> -> vector<8x32xf32>
    %c8_161 = arith.constant 8 : index
    %c0_162 = arith.constant 0 : index
    %386 = vector.load %arg42[%c8_161, %c0_162] : memref<16x128xf32, #tpu.memory_space<vmem>>, vector<8x32xf32>
    tpu.vector_store %arg42[%c8_161, %c0_162], %385 {strides = array<i32>} : memref<16x128xf32, #tpu.memory_space<vmem>>, vector<8x32xf32>,
    %387 = vector.extract_strided_slice %363 {offsets = [0, 32], sizes = [8, 32], strides = [1, 1]} : vector<8x128xf32> to vector<8x32xf32>
    %388 = vector.extract_strided_slice %364 {offsets = [0, 32], sizes = [8, 32], strides = [1, 1]} : vector<8x128xf32> to vector<8x32xf32>
    %cst_163 = arith.constant dense<0.000000e+00> : vector<8x8xf32>
    %389 = tpu.matmul %387, %388, %cst_163 {dimension_numbers = #tpu.dot_dimension_numbers<[1], [1], [0], [0], [0, 0, 1, 0], [], []>} : vector<8x32xf32>, vector<8x32xf32>, vector<8x8xf32> -> vector<8x8xf32>
    %cst_164 = arith.constant 0.176776692 : f32
    %390 = vector.broadcast %cst_164 : f32 to vector<8x8xf32>
    %391 = arith.mulf %389, %390 : vector<8x8xf32>
    %392 = vector.broadcast %366 : vector<1x8xf32> to vector<8x8xf32>
    %393 = arith.addf %391, %392 : vector<8x8xf32>
    %cst_165 = arith.constant dense<0xFF800000> : vector<8xf32>
    %394 = vector.multi_reduction <maximumf>, %393, %cst_165 [1] : vector<8x8xf32> to vector<8xf32>
    %395 = vector.shape_cast %394 : vector<8xf32> to vector<8x1xf32>
    %396 = vector.broadcast %395 : vector<8x1xf32> to vector<8x8xf32>
    %397 = arith.subf %393, %396 : vector<8x8xf32>
    %398 = math.exp %397 : vector<8x8xf32>
    %cst_166 = arith.constant dense<0.000000e+00> : vector<8xf32>
    %399 = vector.multi_reduction <add>, %398, %cst_166 [1] : vector<8x8xf32> to vector<8xf32>
    %400 = vector.shape_cast %399 : vector<8xf32> to vector<8x1xf32>
    %401 = tpu.reciprocal %400 {approx = true} : vector<8x1xf32> -> vector<8x1xf32>
    %402 = vector.broadcast %401 : vector<8x1xf32> to vector<8x8xf32>
    %403 = arith.mulf %398, %402 : vector<8x8xf32>
    %404 = vector.extract_strided_slice %365 {offsets = [0, 32], sizes = [8, 32], strides = [1, 1]} : vector<8x128xf32> to vector<8x32xf32>
    %cst_167 = arith.constant dense<0.000000e+00> : vector<8x32xf32>
    %405 = tpu.matmul %403, %404, %cst_167 {dimension_numbers = #tpu.dot_dimension_numbers<[1], [0], [0], [1], [0, 0, 1, 1], [], []>} : vector<8x8xf32>, vector<8x32xf32>, vector<8x32xf32> -> vector<8x32xf32>
    %c8_168 = arith.constant 8 : index
    %c32_169 = arith.constant 32 : index
    %406 = vector.load %arg42[%c8_168, %c32_169] : memref<16x128xf32, #tpu.memory_space<vmem>>, vector<8x32xf32>
    tpu.vector_store %arg42[%c8_168, %c32_169], %405 {strides = array<i32>} : memref<16x128xf32, #tpu.memory_space<vmem>>, vector<8x32xf32>,
    %407 = vector.extract_strided_slice %363 {offsets = [0, 64], sizes = [8, 32], strides = [1, 1]} : vector<8x128xf32> to vector<8x32xf32>
    %408 = vector.extract_strided_slice %364 {offsets = [0, 64], sizes = [8, 32], strides = [1, 1]} : vector<8x128xf32> to vector<8x32xf32>
    %cst_170 = arith.constant dense<0.000000e+00> : vector<8x8xf32>
    %409 = tpu.matmul %407, %408, %cst_170 {dimension_numbers = #tpu.dot_dimension_numbers<[1], [1], [0], [0], [0, 0, 1, 0], [], []>} : vector<8x32xf32>, vector<8x32xf32>, vector<8x8xf32> -> vector<8x8xf32>
    %cst_171 = arith.constant 0.176776692 : f32
    %410 = vector.broadcast %cst_171 : f32 to vector<8x8xf32>
    %411 = arith.mulf %409, %410 : vector<8x8xf32>
    %412 = vector.broadcast %366 : vector<1x8xf32> to vector<8x8xf32>
    %413 = arith.addf %411, %412 : vector<8x8xf32>
    %cst_172 = arith.constant dense<0xFF800000> : vector<8xf32>
    %414 = vector.multi_reduction <maximumf>, %413, %cst_172 [1] : vector<8x8xf32> to vector<8xf32>
    %415 = vector.shape_cast %414 : vector<8xf32> to vector<8x1xf32>
    %416 = vector.broadcast %415 : vector<8x1xf32> to vector<8x8xf32>
    %417 = arith.subf %413, %416 : vector<8x8xf32>
    %418 = math.exp %417 : vector<8x8xf32>
    %cst_173 = arith.constant dense<0.000000e+00> : vector<8xf32>
    %419 = vector.multi_reduction <add>, %418, %cst_173 [1] : vector<8x8xf32> to vector<8xf32>
    %420 = vector.shape_cast %419 : vector<8xf32> to vector<8x1xf32>
    %421 = tpu.reciprocal %420 {approx = true} : vector<8x1xf32> -> vector<8x1xf32>
    %422 = vector.broadcast %421 : vector<8x1xf32> to vector<8x8xf32>
    %423 = arith.mulf %418, %422 : vector<8x8xf32>
    %424 = vector.extract_strided_slice %365 {offsets = [0, 64], sizes = [8, 32], strides = [1, 1]} : vector<8x128xf32> to vector<8x32xf32>
    %cst_174 = arith.constant dense<0.000000e+00> : vector<8x32xf32>
    %425 = tpu.matmul %423, %424, %cst_174 {dimension_numbers = #tpu.dot_dimension_numbers<[1], [0], [0], [1], [0, 0, 1, 1], [], []>} : vector<8x8xf32>, vector<8x32xf32>, vector<8x32xf32> -> vector<8x32xf32>
    %c8_175 = arith.constant 8 : index
    %c64_176 = arith.constant 64 : index
    %426 = vector.load %arg42[%c8_175, %c64_176] : memref<16x128xf32, #tpu.memory_space<vmem>>, vector<8x32xf32>
    tpu.vector_store %arg42[%c8_175, %c64_176], %425 {strides = array<i32>} : memref<16x128xf32, #tpu.memory_space<vmem>>, vector<8x32xf32>,
    %427 = vector.extract_strided_slice %363 {offsets = [0, 96], sizes = [8, 32], strides = [1, 1]} : vector<8x128xf32> to vector<8x32xf32>
    %428 = vector.extract_strided_slice %364 {offsets = [0, 96], sizes = [8, 32], strides = [1, 1]} : vector<8x128xf32> to vector<8x32xf32>
    %cst_177 = arith.constant dense<0.000000e+00> : vector<8x8xf32>
    %429 = tpu.matmul %427, %428, %cst_177 {dimension_numbers = #tpu.dot_dimension_numbers<[1], [1], [0], [0], [0, 0, 1, 0], [], []>} : vector<8x32xf32>, vector<8x32xf32>, vector<8x8xf32> -> vector<8x8xf32>
    %cst_178 = arith.constant 0.176776692 : f32
    %430 = vector.broadcast %cst_178 : f32 to vector<8x8xf32>
    %431 = arith.mulf %429, %430 : vector<8x8xf32>
    %432 = vector.broadcast %366 : vector<1x8xf32> to vector<8x8xf32>
    %433 = arith.addf %431, %432 : vector<8x8xf32>
    %cst_179 = arith.constant dense<0xFF800000> : vector<8xf32>
    %434 = vector.multi_reduction <maximumf>, %433, %cst_179 [1] : vector<8x8xf32> to vector<8xf32>
    %435 = vector.shape_cast %434 : vector<8xf32> to vector<8x1xf32>
    %436 = vector.broadcast %435 : vector<8x1xf32> to vector<8x8xf32>
    %437 = arith.subf %433, %436 : vector<8x8xf32>
    %438 = math.exp %437 : vector<8x8xf32>
    %cst_180 = arith.constant dense<0.000000e+00> : vector<8xf32>
    %439 = vector.multi_reduction <add>, %438, %cst_180 [1] : vector<8x8xf32> to vector<8xf32>
    %440 = vector.shape_cast %439 : vector<8xf32> to vector<8x1xf32>
    %441 = tpu.reciprocal %440 {approx = true} : vector<8x1xf32> -> vector<8x1xf32>
    %442 = vector.broadcast %441 : vector<8x1xf32> to vector<8x8xf32>
    %443 = arith.mulf %438, %442 : vector<8x8xf32>
    %444 = vector.extract_strided_slice %365 {offsets = [0, 96], sizes = [8, 32], strides = [1, 1]} : vector<8x128xf32> to vector<8x32xf32>
    %cst_181 = arith.constant dense<0.000000e+00> : vector<8x32xf32>
    %445 = tpu.matmul %443, %444, %cst_181 {dimension_numbers = #tpu.dot_dimension_numbers<[1], [0], [0], [1], [0, 0, 1, 1], [], []>} : vector<8x8xf32>, vector<8x32xf32>, vector<8x32xf32> -> vector<8x32xf32>
    %c8_182 = arith.constant 8 : index
    %c96_183 = arith.constant 96 : index
    %446 = vector.load %arg42[%c8_182, %c96_183] : memref<16x128xf32, #tpu.memory_space<vmem>>, vector<8x32xf32>
    tpu.vector_store %arg42[%c8_182, %c96_183], %445 {strides = array<i32>} : memref<16x128xf32, #tpu.memory_space<vmem>>, vector<8x32xf32>,
    %c0_184 = arith.constant 0 : index
    %c0_185 = arith.constant 0 : index
    %447 = vector.load %arg42[%c0_184, %c0_185] : memref<16x128xf32, #tpu.memory_space<vmem>>, vector<16x128xf32>
    %cst_186 = arith.constant dense<0.000000e+00> : vector<16x128xf32>
    %448 = tpu.matmul %447, %276, %cst_186 {dimension_numbers = #tpu.dot_dimension_numbers<[1], [0], [0], [1], [0, 0, 1, 1], [], []>} : vector<16x128xf32>, vector<128x128xf32>, vector<16x128xf32> -> vector<16x128xf32>
    %449 = vector.broadcast %278 : vector<1x128xf32> to vector<16x128xf32>
    %450 = arith.addf %448, %449 : vector<16x128xf32>
    %451 = arith.addf %264, %450 : vector<16x128xf32>
    %c1_187 = arith.constant 1 : index
    %c0_188 = arith.constant 0 : index
    %c0_189 = arith.constant 0 : index
    %452 = vector.load %arg9[%c1_187, %c0_188, %c0_189] : memref<2x1x128xf32, #tpu.memory_space<vmem>>, vector<1x1x128xf32>
    %453 = vector.shape_cast %452 : vector<1x1x128xf32> to vector<1x128xf32>
    %c1_190 = arith.constant 1 : index
    %c0_191 = arith.constant 0 : index
    %c0_192 = arith.constant 0 : index
    %454 = vector.load %arg10[%c1_190, %c0_191, %c0_192] : memref<2x1x128xf32, #tpu.memory_space<vmem>>, vector<1x1x128xf32>
    %455 = vector.shape_cast %454 : vector<1x1x128xf32> to vector<1x128xf32>
    %cst_193 = arith.constant dense<0.000000e+00> : vector<16xf32>
    %456 = vector.multi_reduction <add>, %451, %cst_193 [1] : vector<16x128xf32> to vector<16xf32>
    %457 = vector.shape_cast %456 : vector<16xf32> to vector<16x1xf32>
    %cst_194 = arith.constant 1.280000e+02 : f32
    %458 = vector.broadcast %cst_194 : f32 to vector<16x1xf32>
    %459 = arith.divf %457, %458 : vector<16x1xf32>
    %460 = vector.broadcast %459 : vector<16x1xf32> to vector<16x128xf32>
    %461 = arith.subf %451, %460 : vector<16x128xf32>
    %462 = arith.mulf %461, %461 : vector<16x128xf32>
    %cst_195 = arith.constant dense<0.000000e+00> : vector<16xf32>
    %463 = vector.multi_reduction <add>, %462, %cst_195 [1] : vector<16x128xf32> to vector<16xf32>
    %464 = vector.shape_cast %463 : vector<16xf32> to vector<16x1xf32>
    %cst_196 = arith.constant 1.280000e+02 : f32
    %465 = vector.broadcast %cst_196 : f32 to vector<16x1xf32>
    %466 = arith.divf %464, %465 : vector<16x1xf32>
    %cst_197 = arith.constant 9.99999974E-6 : f32
    %467 = vector.broadcast %cst_197 : f32 to vector<16x1xf32>
    %468 = arith.addf %466, %467 : vector<16x1xf32>
    %469 = math.rsqrt %468 : vector<16x1xf32>
    %470 = vector.broadcast %469 : vector<16x1xf32> to vector<16x128xf32>
    %471 = arith.mulf %461, %470 : vector<16x128xf32>
    %472 = vector.broadcast %453 : vector<1x128xf32> to vector<16x128xf32>
    %473 = arith.mulf %471, %472 : vector<16x128xf32>
    %474 = vector.broadcast %455 : vector<1x128xf32> to vector<16x128xf32>
    %475 = arith.addf %473, %474 : vector<16x128xf32>
    %c1_198 = arith.constant 1 : index
    %c0_199 = arith.constant 0 : index
    %c0_200 = arith.constant 0 : index
    %476 = vector.load %arg11[%c1_198, %c0_199, %c0_200] : memref<2x128x128xf32, #tpu.memory_space<vmem>>, vector<1x128x128xf32>
    %477 = vector.shape_cast %476 : vector<1x128x128xf32> to vector<128x128xf32>
    %cst_201 = arith.constant dense<0.000000e+00> : vector<16x128xf32>
    %478 = tpu.matmul %475, %477, %cst_201 {dimension_numbers = #tpu.dot_dimension_numbers<[1], [0], [0], [1], [0, 0, 1, 1], [], []>} : vector<16x128xf32>, vector<128x128xf32>, vector<16x128xf32> -> vector<16x128xf32>
    %c1_202 = arith.constant 1 : index
    %c0_203 = arith.constant 0 : index
    %c0_204 = arith.constant 0 : index
    %479 = vector.load %arg12[%c1_202, %c0_203, %c0_204] : memref<2x1x128xf32, #tpu.memory_space<vmem>>, vector<1x1x128xf32>
    %480 = vector.shape_cast %479 : vector<1x1x128xf32> to vector<1x128xf32>
    %481 = vector.broadcast %480 : vector<1x128xf32> to vector<16x128xf32>
    %482 = arith.addf %478, %481 : vector<16x128xf32>
    %cst_205 = arith.constant 0.000000e+00 : f32
    %483 = vector.broadcast %cst_205 : f32 to vector<16x128xf32>
    %484 = arith.maximumf %482, %483 : vector<16x128xf32>
    %c1_206 = arith.constant 1 : index
    %c0_207 = arith.constant 0 : index
    %c0_208 = arith.constant 0 : index
    %485 = vector.load %arg13[%c1_206, %c0_207, %c0_208] : memref<2x128x128xf32, #tpu.memory_space<vmem>>, vector<1x128x128xf32>
    %486 = vector.shape_cast %485 : vector<1x128x128xf32> to vector<128x128xf32>
    %cst_209 = arith.constant dense<0.000000e+00> : vector<16x128xf32>
    %487 = tpu.matmul %484, %486, %cst_209 {dimension_numbers = #tpu.dot_dimension_numbers<[1], [0], [0], [1], [0, 0, 1, 1], [], []>} : vector<16x128xf32>, vector<128x128xf32>, vector<16x128xf32> -> vector<16x128xf32>
    %c1_210 = arith.constant 1 : index
    %c0_211 = arith.constant 0 : index
    %c0_212 = arith.constant 0 : index
    %488 = vector.load %arg14[%c1_210, %c0_211, %c0_212] : memref<2x1x128xf32, #tpu.memory_space<vmem>>, vector<1x1x128xf32>
    %489 = vector.shape_cast %488 : vector<1x1x128xf32> to vector<1x128xf32>
    %490 = vector.broadcast %489 : vector<1x128xf32> to vector<16x128xf32>
    %491 = arith.addf %487, %490 : vector<16x128xf32>
    %492 = arith.addf %475, %491 : vector<16x128xf32>
    %c1_213 = arith.constant 1 : index
    %c0_214 = arith.constant 0 : index
    %c0_215 = arith.constant 0 : index
    %493 = vector.load %arg15[%c1_213, %c0_214, %c0_215] : memref<2x1x128xf32, #tpu.memory_space<vmem>>, vector<1x1x128xf32>
    %494 = vector.shape_cast %493 : vector<1x1x128xf32> to vector<1x128xf32>
    %c1_216 = arith.constant 1 : index
    %c0_217 = arith.constant 0 : index
    %c0_218 = arith.constant 0 : index
    %495 = vector.load %arg16[%c1_216, %c0_217, %c0_218] : memref<2x1x128xf32, #tpu.memory_space<vmem>>, vector<1x1x128xf32>
    %496 = vector.shape_cast %495 : vector<1x1x128xf32> to vector<1x128xf32>
    %cst_219 = arith.constant dense<0.000000e+00> : vector<16xf32>
    %497 = vector.multi_reduction <add>, %492, %cst_219 [1] : vector<16x128xf32> to vector<16xf32>
    %498 = vector.shape_cast %497 : vector<16xf32> to vector<16x1xf32>
    %cst_220 = arith.constant 1.280000e+02 : f32
    %499 = vector.broadcast %cst_220 : f32 to vector<16x1xf32>
    %500 = arith.divf %498, %499 : vector<16x1xf32>
    %501 = vector.broadcast %500 : vector<16x1xf32> to vector<16x128xf32>
    %502 = arith.subf %492, %501 : vector<16x128xf32>
    %503 = arith.mulf %502, %502 : vector<16x128xf32>
    %cst_221 = arith.constant dense<0.000000e+00> : vector<16xf32>
    %504 = vector.multi_reduction <add>, %503, %cst_221 [1] : vector<16x128xf32> to vector<16xf32>
    %505 = vector.shape_cast %504 : vector<16xf32> to vector<16x1xf32>
    %cst_222 = arith.constant 1.280000e+02 : f32
    %506 = vector.broadcast %cst_222 : f32 to vector<16x1xf32>
    %507 = arith.divf %505, %506 : vector<16x1xf32>
    %cst_223 = arith.constant 9.99999974E-6 : f32
    %508 = vector.broadcast %cst_223 : f32 to vector<16x1xf32>
    %509 = arith.addf %507, %508 : vector<16x1xf32>
    %510 = math.rsqrt %509 : vector<16x1xf32>
    %511 = vector.broadcast %510 : vector<16x1xf32> to vector<16x128xf32>
    %512 = arith.mulf %502, %511 : vector<16x128xf32>
    %513 = vector.broadcast %494 : vector<1x128xf32> to vector<16x128xf32>
    %514 = arith.mulf %512, %513 : vector<16x128xf32>
    %515 = vector.broadcast %496 : vector<1x128xf32> to vector<16x128xf32>
    %516 = arith.addf %514, %515 : vector<16x128xf32>
    %c0_224 = arith.constant 0 : index
    %c0_225 = arith.constant 0 : index
    %517 = vector.load %arg17[%c0_224, %c0_225] : memref<128x128xf32, #tpu.memory_space<vmem>>, vector<128x128xf32>
    %cst_226 = arith.constant dense<0.000000e+00> : vector<16x128xf32>
    %518 = tpu.matmul %516, %517, %cst_226 {dimension_numbers = #tpu.dot_dimension_numbers<[1], [0], [0], [1], [0, 0, 1, 1], [], []>} : vector<16x128xf32>, vector<128x128xf32>, vector<16x128xf32> -> vector<16x128xf32>
    %c0_227 = arith.constant 0 : index
    %c0_228 = arith.constant 0 : index
    %519 = vector.load %arg18[%c0_227, %c0_228] : memref<1x128xf32, #tpu.memory_space<vmem>>, vector<1x128xf32>
    %520 = vector.broadcast %519 : vector<1x128xf32> to vector<16x128xf32>
    %521 = arith.addf %518, %520 : vector<16x128xf32>
    %c0_229 = arith.constant 0 : index
    %c0_230 = arith.constant 0 : index
    %c0_231 = arith.constant 0 : index
    %522 = vector.load %arg19[%c0_229, %c0_230, %c0_231] : memref<2x128x384xf32, #tpu.memory_space<vmem>>, vector<1x128x384xf32>
    %523 = vector.shape_cast %522 : vector<1x128x384xf32> to vector<128x384xf32>
    %cst_232 = arith.constant dense<0.000000e+00> : vector<16x384xf32>
    %524 = tpu.matmul %521, %523, %cst_232 {dimension_numbers = #tpu.dot_dimension_numbers<[1], [0], [0], [1], [0, 0, 1, 1], [], []>} : vector<16x128xf32>, vector<128x384xf32>, vector<16x384xf32> -> vector<16x384xf32>
    %c0_233 = arith.constant 0 : index
    %c0_234 = arith.constant 0 : index
    %c0_235 = arith.constant 0 : index
    %525 = vector.load %arg20[%c0_233, %c0_234, %c0_235] : memref<2x1x384xf32, #tpu.memory_space<vmem>>, vector<1x1x384xf32>
    %526 = vector.shape_cast %525 : vector<1x1x384xf32> to vector<1x384xf32>
    %527 = vector.broadcast %526 : vector<1x384xf32> to vector<16x384xf32>
    %528 = arith.addf %524, %527 : vector<16x384xf32>
    %529 = vector.extract_strided_slice %528 {offsets = [0, 0], sizes = [16, 128], strides = [1, 1]} : vector<16x384xf32> to vector<16x128xf32>
    %530 = vector.extract_strided_slice %528 {offsets = [0, 128], sizes = [16, 128], strides = [1, 1]} : vector<16x384xf32> to vector<16x128xf32>
    %531 = vector.extract_strided_slice %528 {offsets = [0, 256], sizes = [16, 128], strides = [1, 1]} : vector<16x384xf32> to vector<16x128xf32>
    %c0_236 = arith.constant 0 : index
    %c0_237 = arith.constant 0 : index
    %c0_238 = arith.constant 0 : index
    %532 = vector.load %arg21[%c0_236, %c0_237, %c0_238] : memref<2x128x128xf32, #tpu.memory_space<vmem>>, vector<1x128x128xf32>
    %533 = vector.shape_cast %532 : vector<1x128x128xf32> to vector<128x128xf32>
    %c0_239 = arith.constant 0 : index
    %c0_240 = arith.constant 0 : index
    %c0_241 = arith.constant 0 : index
    %534 = vector.load %arg22[%c0_239, %c0_240, %c0_241] : memref<2x1x128xf32, #tpu.memory_space<vmem>>, vector<1x1x128xf32>
    %535 = vector.shape_cast %534 : vector<1x1x128xf32> to vector<1x128xf32>
    %536 = vector.extract_strided_slice %529 {offsets = [0, 0], sizes = [8, 128], strides = [1, 1]} : vector<16x128xf32> to vector<8x128xf32>
    %537 = vector.extract_strided_slice %530 {offsets = [0, 0], sizes = [8, 128], strides = [1, 1]} : vector<16x128xf32> to vector<8x128xf32>
    %538 = vector.extract_strided_slice %531 {offsets = [0, 0], sizes = [8, 128], strides = [1, 1]} : vector<16x128xf32> to vector<8x128xf32>
    %539 = vector.extract_strided_slice %536 {offsets = [0, 0], sizes = [8, 32], strides = [1, 1]} : vector<8x128xf32> to vector<8x32xf32>
    %540 = vector.extract_strided_slice %537 {offsets = [0, 0], sizes = [8, 32], strides = [1, 1]} : vector<8x128xf32> to vector<8x32xf32>
    %cst_242 = arith.constant dense<0.000000e+00> : vector<8x8xf32>
    %541 = tpu.matmul %539, %540, %cst_242 {dimension_numbers = #tpu.dot_dimension_numbers<[1], [1], [0], [0], [0, 0, 1, 0], [], []>} : vector<8x32xf32>, vector<8x32xf32>, vector<8x8xf32> -> vector<8x8xf32>
    %cst_243 = arith.constant 0.176776692 : f32
    %542 = vector.broadcast %cst_243 : f32 to vector<8x8xf32>
    %543 = arith.mulf %541, %542 : vector<8x8xf32>
    %cst_244 = arith.constant dense<0xFF800000> : vector<8xf32>
    %544 = vector.multi_reduction <maximumf>, %543, %cst_244 [1] : vector<8x8xf32> to vector<8xf32>
    %545 = vector.shape_cast %544 : vector<8xf32> to vector<8x1xf32>
    %546 = vector.broadcast %545 : vector<8x1xf32> to vector<8x8xf32>
    %547 = arith.subf %543, %546 : vector<8x8xf32>
    %548 = math.exp %547 : vector<8x8xf32>
    %cst_245 = arith.constant dense<0.000000e+00> : vector<8xf32>
    %549 = vector.multi_reduction <add>, %548, %cst_245 [1] : vector<8x8xf32> to vector<8xf32>
    %550 = vector.shape_cast %549 : vector<8xf32> to vector<8x1xf32>
    %551 = tpu.reciprocal %550 {approx = true} : vector<8x1xf32> -> vector<8x1xf32>
    %552 = vector.broadcast %551 : vector<8x1xf32> to vector<8x8xf32>
    %553 = arith.mulf %548, %552 : vector<8x8xf32>
    %554 = vector.extract_strided_slice %538 {offsets = [0, 0], sizes = [8, 32], strides = [1, 1]} : vector<8x128xf32> to vector<8x32xf32>
    %cst_246 = arith.constant dense<0.000000e+00> : vector<8x32xf32>
    %555 = tpu.matmul %553, %554, %cst_246 {dimension_numbers = #tpu.dot_dimension_numbers<[1], [0], [0], [1], [0, 0, 1, 1], [], []>} : vector<8x8xf32>, vector<8x32xf32>, vector<8x32xf32> -> vector<8x32xf32>
    %c0_247 = arith.constant 0 : index
    %c0_248 = arith.constant 0 : index
    %556 = vector.load %arg42[%c0_247, %c0_248] : memref<16x128xf32, #tpu.memory_space<vmem>>, vector<8x32xf32>
    tpu.vector_store %arg42[%c0_247, %c0_248], %555 {strides = array<i32>} : memref<16x128xf32, #tpu.memory_space<vmem>>, vector<8x32xf32>,
    %557 = vector.extract_strided_slice %536 {offsets = [0, 32], sizes = [8, 32], strides = [1, 1]} : vector<8x128xf32> to vector<8x32xf32>
    %558 = vector.extract_strided_slice %537 {offsets = [0, 32], sizes = [8, 32], strides = [1, 1]} : vector<8x128xf32> to vector<8x32xf32>
    %cst_249 = arith.constant dense<0.000000e+00> : vector<8x8xf32>
    %559 = tpu.matmul %557, %558, %cst_249 {dimension_numbers = #tpu.dot_dimension_numbers<[1], [1], [0], [0], [0, 0, 1, 0], [], []>} : vector<8x32xf32>, vector<8x32xf32>, vector<8x8xf32> -> vector<8x8xf32>
    %cst_250 = arith.constant 0.176776692 : f32
    %560 = vector.broadcast %cst_250 : f32 to vector<8x8xf32>
    %561 = arith.mulf %559, %560 : vector<8x8xf32>
    %cst_251 = arith.constant dense<0xFF800000> : vector<8xf32>
    %562 = vector.multi_reduction <maximumf>, %561, %cst_251 [1] : vector<8x8xf32> to vector<8xf32>
    %563 = vector.shape_cast %562 : vector<8xf32> to vector<8x1xf32>
    %564 = vector.broadcast %563 : vector<8x1xf32> to vector<8x8xf32>
    %565 = arith.subf %561, %564 : vector<8x8xf32>
    %566 = math.exp %565 : vector<8x8xf32>
    %cst_252 = arith.constant dense<0.000000e+00> : vector<8xf32>
    %567 = vector.multi_reduction <add>, %566, %cst_252 [1] : vector<8x8xf32> to vector<8xf32>
    %568 = vector.shape_cast %567 : vector<8xf32> to vector<8x1xf32>
    %569 = tpu.reciprocal %568 {approx = true} : vector<8x1xf32> -> vector<8x1xf32>
    %570 = vector.broadcast %569 : vector<8x1xf32> to vector<8x8xf32>
    %571 = arith.mulf %566, %570 : vector<8x8xf32>
    %572 = vector.extract_strided_slice %538 {offsets = [0, 32], sizes = [8, 32], strides = [1, 1]} : vector<8x128xf32> to vector<8x32xf32>
    %cst_253 = arith.constant dense<0.000000e+00> : vector<8x32xf32>
    %573 = tpu.matmul %571, %572, %cst_253 {dimension_numbers = #tpu.dot_dimension_numbers<[1], [0], [0], [1], [0, 0, 1, 1], [], []>} : vector<8x8xf32>, vector<8x32xf32>, vector<8x32xf32> -> vector<8x32xf32>
    %c0_254 = arith.constant 0 : index
    %c32_255 = arith.constant 32 : index
    %574 = vector.load %arg42[%c0_254, %c32_255] : memref<16x128xf32, #tpu.memory_space<vmem>>, vector<8x32xf32>
    tpu.vector_store %arg42[%c0_254, %c32_255], %573 {strides = array<i32>} : memref<16x128xf32, #tpu.memory_space<vmem>>, vector<8x32xf32>,
    %575 = vector.extract_strided_slice %536 {offsets = [0, 64], sizes = [8, 32], strides = [1, 1]} : vector<8x128xf32> to vector<8x32xf32>
    %576 = vector.extract_strided_slice %537 {offsets = [0, 64], sizes = [8, 32], strides = [1, 1]} : vector<8x128xf32> to vector<8x32xf32>
    %cst_256 = arith.constant dense<0.000000e+00> : vector<8x8xf32>
    %577 = tpu.matmul %575, %576, %cst_256 {dimension_numbers = #tpu.dot_dimension_numbers<[1], [1], [0], [0], [0, 0, 1, 0], [], []>} : vector<8x32xf32>, vector<8x32xf32>, vector<8x8xf32> -> vector<8x8xf32>
    %cst_257 = arith.constant 0.176776692 : f32
    %578 = vector.broadcast %cst_257 : f32 to vector<8x8xf32>
    %579 = arith.mulf %577, %578 : vector<8x8xf32>
    %cst_258 = arith.constant dense<0xFF800000> : vector<8xf32>
    %580 = vector.multi_reduction <maximumf>, %579, %cst_258 [1] : vector<8x8xf32> to vector<8xf32>
    %581 = vector.shape_cast %580 : vector<8xf32> to vector<8x1xf32>
    %582 = vector.broadcast %581 : vector<8x1xf32> to vector<8x8xf32>
    %583 = arith.subf %579, %582 : vector<8x8xf32>
    %584 = math.exp %583 : vector<8x8xf32>
    %cst_259 = arith.constant dense<0.000000e+00> : vector<8xf32>
    %585 = vector.multi_reduction <add>, %584, %cst_259 [1] : vector<8x8xf32> to vector<8xf32>
    %586 = vector.shape_cast %585 : vector<8xf32> to vector<8x1xf32>
    %587 = tpu.reciprocal %586 {approx = true} : vector<8x1xf32> -> vector<8x1xf32>
    %588 = vector.broadcast %587 : vector<8x1xf32> to vector<8x8xf32>
    %589 = arith.mulf %584, %588 : vector<8x8xf32>
    %590 = vector.extract_strided_slice %538 {offsets = [0, 64], sizes = [8, 32], strides = [1, 1]} : vector<8x128xf32> to vector<8x32xf32>
    %cst_260 = arith.constant dense<0.000000e+00> : vector<8x32xf32>
    %591 = tpu.matmul %589, %590, %cst_260 {dimension_numbers = #tpu.dot_dimension_numbers<[1], [0], [0], [1], [0, 0, 1, 1], [], []>} : vector<8x8xf32>, vector<8x32xf32>, vector<8x32xf32> -> vector<8x32xf32>
    %c0_261 = arith.constant 0 : index
    %c64_262 = arith.constant 64 : index
    %592 = vector.load %arg42[%c0_261, %c64_262] : memref<16x128xf32, #tpu.memory_space<vmem>>, vector<8x32xf32>
    tpu.vector_store %arg42[%c0_261, %c64_262], %591 {strides = array<i32>} : memref<16x128xf32, #tpu.memory_space<vmem>>, vector<8x32xf32>,
    %593 = vector.extract_strided_slice %536 {offsets = [0, 96], sizes = [8, 32], strides = [1, 1]} : vector<8x128xf32> to vector<8x32xf32>
    %594 = vector.extract_strided_slice %537 {offsets = [0, 96], sizes = [8, 32], strides = [1, 1]} : vector<8x128xf32> to vector<8x32xf32>
    %cst_263 = arith.constant dense<0.000000e+00> : vector<8x8xf32>
    %595 = tpu.matmul %593, %594, %cst_263 {dimension_numbers = #tpu.dot_dimension_numbers<[1], [1], [0], [0], [0, 0, 1, 0], [], []>} : vector<8x32xf32>, vector<8x32xf32>, vector<8x8xf32> -> vector<8x8xf32>
    %cst_264 = arith.constant 0.176776692 : f32
    %596 = vector.broadcast %cst_264 : f32 to vector<8x8xf32>
    %597 = arith.mulf %595, %596 : vector<8x8xf32>
    %cst_265 = arith.constant dense<0xFF800000> : vector<8xf32>
    %598 = vector.multi_reduction <maximumf>, %597, %cst_265 [1] : vector<8x8xf32> to vector<8xf32>
    %599 = vector.shape_cast %598 : vector<8xf32> to vector<8x1xf32>
    %600 = vector.broadcast %599 : vector<8x1xf32> to vector<8x8xf32>
    %601 = arith.subf %597, %600 : vector<8x8xf32>
    %602 = math.exp %601 : vector<8x8xf32>
    %cst_266 = arith.constant dense<0.000000e+00> : vector<8xf32>
    %603 = vector.multi_reduction <add>, %602, %cst_266 [1] : vector<8x8xf32> to vector<8xf32>
    %604 = vector.shape_cast %603 : vector<8xf32> to vector<8x1xf32>
    %605 = tpu.reciprocal %604 {approx = true} : vector<8x1xf32> -> vector<8x1xf32>
    %606 = vector.broadcast %605 : vector<8x1xf32> to vector<8x8xf32>
    %607 = arith.mulf %602, %606 : vector<8x8xf32>
    %608 = vector.extract_strided_slice %538 {offsets = [0, 96], sizes = [8, 32], strides = [1, 1]} : vector<8x128xf32> to vector<8x32xf32>
    %cst_267 = arith.constant dense<0.000000e+00> : vector<8x32xf32>
    %609 = tpu.matmul %607, %608, %cst_267 {dimension_numbers = #tpu.dot_dimension_numbers<[1], [0], [0], [1], [0, 0, 1, 1], [], []>} : vector<8x8xf32>, vector<8x32xf32>, vector<8x32xf32> -> vector<8x32xf32>
    %c0_268 = arith.constant 0 : index
    %c96_269 = arith.constant 96 : index
    %610 = vector.load %arg42[%c0_268, %c96_269] : memref<16x128xf32, #tpu.memory_space<vmem>>, vector<8x32xf32>
    tpu.vector_store %arg42[%c0_268, %c96_269], %609 {strides = array<i32>} : memref<16x128xf32, #tpu.memory_space<vmem>>, vector<8x32xf32>,
    %611 = vector.extract_strided_slice %529 {offsets = [8, 0], sizes = [8, 128], strides = [1, 1]} : vector<16x128xf32> to vector<8x128xf32>
    %612 = vector.extract_strided_slice %530 {offsets = [8, 0], sizes = [8, 128], strides = [1, 1]} : vector<16x128xf32> to vector<8x128xf32>
    %613 = vector.extract_strided_slice %531 {offsets = [8, 0], sizes = [8, 128], strides = [1, 1]} : vector<16x128xf32> to vector<8x128xf32>
    %614 = vector.extract_strided_slice %611 {offsets = [0, 0], sizes = [8, 32], strides = [1, 1]} : vector<8x128xf32> to vector<8x32xf32>
    %615 = vector.extract_strided_slice %612 {offsets = [0, 0], sizes = [8, 32], strides = [1, 1]} : vector<8x128xf32> to vector<8x32xf32>
    %cst_270 = arith.constant dense<0.000000e+00> : vector<8x8xf32>
    %616 = tpu.matmul %614, %615, %cst_270 {dimension_numbers = #tpu.dot_dimension_numbers<[1], [1], [0], [0], [0, 0, 1, 0], [], []>} : vector<8x32xf32>, vector<8x32xf32>, vector<8x8xf32> -> vector<8x8xf32>
    %cst_271 = arith.constant 0.176776692 : f32
    %617 = vector.broadcast %cst_271 : f32 to vector<8x8xf32>
    %618 = arith.mulf %616, %617 : vector<8x8xf32>
    %cst_272 = arith.constant dense<0xFF800000> : vector<8xf32>
    %619 = vector.multi_reduction <maximumf>, %618, %cst_272 [1] : vector<8x8xf32> to vector<8xf32>
    %620 = vector.shape_cast %619 : vector<8xf32> to vector<8x1xf32>
    %621 = vector.broadcast %620 : vector<8x1xf32> to vector<8x8xf32>
    %622 = arith.subf %618, %621 : vector<8x8xf32>
    %623 = math.exp %622 : vector<8x8xf32>
    %cst_273 = arith.constant dense<0.000000e+00> : vector<8xf32>
    %624 = vector.multi_reduction <add>, %623, %cst_273 [1] : vector<8x8xf32> to vector<8xf32>
    %625 = vector.shape_cast %624 : vector<8xf32> to vector<8x1xf32>
    %626 = tpu.reciprocal %625 {approx = true} : vector<8x1xf32> -> vector<8x1xf32>
    %627 = vector.broadcast %626 : vector<8x1xf32> to vector<8x8xf32>
    %628 = arith.mulf %623, %627 : vector<8x8xf32>
    %629 = vector.extract_strided_slice %613 {offsets = [0, 0], sizes = [8, 32], strides = [1, 1]} : vector<8x128xf32> to vector<8x32xf32>
    %cst_274 = arith.constant dense<0.000000e+00> : vector<8x32xf32>
    %630 = tpu.matmul %628, %629, %cst_274 {dimension_numbers = #tpu.dot_dimension_numbers<[1], [0], [0], [1], [0, 0, 1, 1], [], []>} : vector<8x8xf32>, vector<8x32xf32>, vector<8x32xf32> -> vector<8x32xf32>
    %c8_275 = arith.constant 8 : index
    %c0_276 = arith.constant 0 : index
    %631 = vector.load %arg42[%c8_275, %c0_276] : memref<16x128xf32, #tpu.memory_space<vmem>>, vector<8x32xf32>
    tpu.vector_store %arg42[%c8_275, %c0_276], %630 {strides = array<i32>} : memref<16x128xf32, #tpu.memory_space<vmem>>, vector<8x32xf32>,
    %632 = vector.extract_strided_slice %611 {offsets = [0, 32], sizes = [8, 32], strides = [1, 1]} : vector<8x128xf32> to vector<8x32xf32>
    %633 = vector.extract_strided_slice %612 {offsets = [0, 32], sizes = [8, 32], strides = [1, 1]} : vector<8x128xf32> to vector<8x32xf32>
    %cst_277 = arith.constant dense<0.000000e+00> : vector<8x8xf32>
    %634 = tpu.matmul %632, %633, %cst_277 {dimension_numbers = #tpu.dot_dimension_numbers<[1], [1], [0], [0], [0, 0, 1, 0], [], []>} : vector<8x32xf32>, vector<8x32xf32>, vector<8x8xf32> -> vector<8x8xf32>
    %cst_278 = arith.constant 0.176776692 : f32
    %635 = vector.broadcast %cst_278 : f32 to vector<8x8xf32>
    %636 = arith.mulf %634, %635 : vector<8x8xf32>
    %cst_279 = arith.constant dense<0xFF800000> : vector<8xf32>
    %637 = vector.multi_reduction <maximumf>, %636, %cst_279 [1] : vector<8x8xf32> to vector<8xf32>
    %638 = vector.shape_cast %637 : vector<8xf32> to vector<8x1xf32>
    %639 = vector.broadcast %638 : vector<8x1xf32> to vector<8x8xf32>
    %640 = arith.subf %636, %639 : vector<8x8xf32>
    %641 = math.exp %640 : vector<8x8xf32>
    %cst_280 = arith.constant dense<0.000000e+00> : vector<8xf32>
    %642 = vector.multi_reduction <add>, %641, %cst_280 [1] : vector<8x8xf32> to vector<8xf32>
    %643 = vector.shape_cast %642 : vector<8xf32> to vector<8x1xf32>
    %644 = tpu.reciprocal %643 {approx = true} : vector<8x1xf32> -> vector<8x1xf32>
    %645 = vector.broadcast %644 : vector<8x1xf32> to vector<8x8xf32>
    %646 = arith.mulf %641, %645 : vector<8x8xf32>
    %647 = vector.extract_strided_slice %613 {offsets = [0, 32], sizes = [8, 32], strides = [1, 1]} : vector<8x128xf32> to vector<8x32xf32>
    %cst_281 = arith.constant dense<0.000000e+00> : vector<8x32xf32>
    %648 = tpu.matmul %646, %647, %cst_281 {dimension_numbers = #tpu.dot_dimension_numbers<[1], [0], [0], [1], [0, 0, 1, 1], [], []>} : vector<8x8xf32>, vector<8x32xf32>, vector<8x32xf32> -> vector<8x32xf32>
    %c8_282 = arith.constant 8 : index
    %c32_283 = arith.constant 32 : index
    %649 = vector.load %arg42[%c8_282, %c32_283] : memref<16x128xf32, #tpu.memory_space<vmem>>, vector<8x32xf32>
    tpu.vector_store %arg42[%c8_282, %c32_283], %648 {strides = array<i32>} : memref<16x128xf32, #tpu.memory_space<vmem>>, vector<8x32xf32>,
    %650 = vector.extract_strided_slice %611 {offsets = [0, 64], sizes = [8, 32], strides = [1, 1]} : vector<8x128xf32> to vector<8x32xf32>
    %651 = vector.extract_strided_slice %612 {offsets = [0, 64], sizes = [8, 32], strides = [1, 1]} : vector<8x128xf32> to vector<8x32xf32>
    %cst_284 = arith.constant dense<0.000000e+00> : vector<8x8xf32>
    %652 = tpu.matmul %650, %651, %cst_284 {dimension_numbers = #tpu.dot_dimension_numbers<[1], [1], [0], [0], [0, 0, 1, 0], [], []>} : vector<8x32xf32>, vector<8x32xf32>, vector<8x8xf32> -> vector<8x8xf32>
    %cst_285 = arith.constant 0.176776692 : f32
    %653 = vector.broadcast %cst_285 : f32 to vector<8x8xf32>
    %654 = arith.mulf %652, %653 : vector<8x8xf32>
    %cst_286 = arith.constant dense<0xFF800000> : vector<8xf32>
    %655 = vector.multi_reduction <maximumf>, %654, %cst_286 [1] : vector<8x8xf32> to vector<8xf32>
    %656 = vector.shape_cast %655 : vector<8xf32> to vector<8x1xf32>
    %657 = vector.broadcast %656 : vector<8x1xf32> to vector<8x8xf32>
    %658 = arith.subf %654, %657 : vector<8x8xf32>
    %659 = math.exp %658 : vector<8x8xf32>
    %cst_287 = arith.constant dense<0.000000e+00> : vector<8xf32>
    %660 = vector.multi_reduction <add>, %659, %cst_287 [1] : vector<8x8xf32> to vector<8xf32>
    %661 = vector.shape_cast %660 : vector<8xf32> to vector<8x1xf32>
    %662 = tpu.reciprocal %661 {approx = true} : vector<8x1xf32> -> vector<8x1xf32>
    %663 = vector.broadcast %662 : vector<8x1xf32> to vector<8x8xf32>
    %664 = arith.mulf %659, %663 : vector<8x8xf32>
    %665 = vector.extract_strided_slice %613 {offsets = [0, 64], sizes = [8, 32], strides = [1, 1]} : vector<8x128xf32> to vector<8x32xf32>
    %cst_288 = arith.constant dense<0.000000e+00> : vector<8x32xf32>
    %666 = tpu.matmul %664, %665, %cst_288 {dimension_numbers = #tpu.dot_dimension_numbers<[1], [0], [0], [1], [0, 0, 1, 1], [], []>} : vector<8x8xf32>, vector<8x32xf32>, vector<8x32xf32> -> vector<8x32xf32>
    %c8_289 = arith.constant 8 : index
    %c64_290 = arith.constant 64 : index
    %667 = vector.load %arg42[%c8_289, %c64_290] : memref<16x128xf32, #tpu.memory_space<vmem>>, vector<8x32xf32>
    tpu.vector_store %arg42[%c8_289, %c64_290], %666 {strides = array<i32>} : memref<16x128xf32, #tpu.memory_space<vmem>>, vector<8x32xf32>,
    %668 = vector.extract_strided_slice %611 {offsets = [0, 96], sizes = [8, 32], strides = [1, 1]} : vector<8x128xf32> to vector<8x32xf32>
    %669 = vector.extract_strided_slice %612 {offsets = [0, 96], sizes = [8, 32], strides = [1, 1]} : vector<8x128xf32> to vector<8x32xf32>
    %cst_291 = arith.constant dense<0.000000e+00> : vector<8x8xf32>
    %670 = tpu.matmul %668, %669, %cst_291 {dimension_numbers = #tpu.dot_dimension_numbers<[1], [1], [0], [0], [0, 0, 1, 0], [], []>} : vector<8x32xf32>, vector<8x32xf32>, vector<8x8xf32> -> vector<8x8xf32>
    %cst_292 = arith.constant 0.176776692 : f32
    %671 = vector.broadcast %cst_292 : f32 to vector<8x8xf32>
    %672 = arith.mulf %670, %671 : vector<8x8xf32>
    %cst_293 = arith.constant dense<0xFF800000> : vector<8xf32>
    %673 = vector.multi_reduction <maximumf>, %672, %cst_293 [1] : vector<8x8xf32> to vector<8xf32>
    %674 = vector.shape_cast %673 : vector<8xf32> to vector<8x1xf32>
    %675 = vector.broadcast %674 : vector<8x1xf32> to vector<8x8xf32>
    %676 = arith.subf %672, %675 : vector<8x8xf32>
    %677 = math.exp %676 : vector<8x8xf32>
    %cst_294 = arith.constant dense<0.000000e+00> : vector<8xf32>
    %678 = vector.multi_reduction <add>, %677, %cst_294 [1] : vector<8x8xf32> to vector<8xf32>
    %679 = vector.shape_cast %678 : vector<8xf32> to vector<8x1xf32>
    %680 = tpu.reciprocal %679 {approx = true} : vector<8x1xf32> -> vector<8x1xf32>
    %681 = vector.broadcast %680 : vector<8x1xf32> to vector<8x8xf32>
    %682 = arith.mulf %677, %681 : vector<8x8xf32>
    %683 = vector.extract_strided_slice %613 {offsets = [0, 96], sizes = [8, 32], strides = [1, 1]} : vector<8x128xf32> to vector<8x32xf32>
    %cst_295 = arith.constant dense<0.000000e+00> : vector<8x32xf32>
    %684 = tpu.matmul %682, %683, %cst_295 {dimension_numbers = #tpu.dot_dimension_numbers<[1], [0], [0], [1], [0, 0, 1, 1], [], []>} : vector<8x8xf32>, vector<8x32xf32>, vector<8x32xf32> -> vector<8x32xf32>
    %c8_296 = arith.constant 8 : index
    %c96_297 = arith.constant 96 : index
    %685 = vector.load %arg42[%c8_296, %c96_297] : memref<16x128xf32, #tpu.memory_space<vmem>>, vector<8x32xf32>
    tpu.vector_store %arg42[%c8_296, %c96_297], %684 {strides = array<i32>} : memref<16x128xf32, #tpu.memory_space<vmem>>, vector<8x32xf32>,
    %c0_298 = arith.constant 0 : index
    %c0_299 = arith.constant 0 : index
    %686 = vector.load %arg42[%c0_298, %c0_299] : memref<16x128xf32, #tpu.memory_space<vmem>>, vector<16x128xf32>
    %cst_300 = arith.constant dense<0.000000e+00> : vector<16x128xf32>
    %687 = tpu.matmul %686, %533, %cst_300 {dimension_numbers = #tpu.dot_dimension_numbers<[1], [0], [0], [1], [0, 0, 1, 1], [], []>} : vector<16x128xf32>, vector<128x128xf32>, vector<16x128xf32> -> vector<16x128xf32>
    %688 = vector.broadcast %535 : vector<1x128xf32> to vector<16x128xf32>
    %689 = arith.addf %687, %688 : vector<16x128xf32>
    %690 = arith.addf %521, %689 : vector<16x128xf32>
    %c0_301 = arith.constant 0 : index
    %c0_302 = arith.constant 0 : index
    %c0_303 = arith.constant 0 : index
    %691 = vector.load %arg23[%c0_301, %c0_302, %c0_303] : memref<2x1x128xf32, #tpu.memory_space<vmem>>, vector<1x1x128xf32>
    %692 = vector.shape_cast %691 : vector<1x1x128xf32> to vector<1x128xf32>
    %c0_304 = arith.constant 0 : index
    %c0_305 = arith.constant 0 : index
    %c0_306 = arith.constant 0 : index
    %693 = vector.load %arg24[%c0_304, %c0_305, %c0_306] : memref<2x1x128xf32, #tpu.memory_space<vmem>>, vector<1x1x128xf32>
    %694 = vector.shape_cast %693 : vector<1x1x128xf32> to vector<1x128xf32>
    %cst_307 = arith.constant dense<0.000000e+00> : vector<16xf32>
    %695 = vector.multi_reduction <add>, %690, %cst_307 [1] : vector<16x128xf32> to vector<16xf32>
    %696 = vector.shape_cast %695 : vector<16xf32> to vector<16x1xf32>
    %cst_308 = arith.constant 1.280000e+02 : f32
    %697 = vector.broadcast %cst_308 : f32 to vector<16x1xf32>
    %698 = arith.divf %696, %697 : vector<16x1xf32>
    %699 = vector.broadcast %698 : vector<16x1xf32> to vector<16x128xf32>
    %700 = arith.subf %690, %699 : vector<16x128xf32>
    %701 = arith.mulf %700, %700 : vector<16x128xf32>
    %cst_309 = arith.constant dense<0.000000e+00> : vector<16xf32>
    %702 = vector.multi_reduction <add>, %701, %cst_309 [1] : vector<16x128xf32> to vector<16xf32>
    %703 = vector.shape_cast %702 : vector<16xf32> to vector<16x1xf32>
    %cst_310 = arith.constant 1.280000e+02 : f32
    %704 = vector.broadcast %cst_310 : f32 to vector<16x1xf32>
    %705 = arith.divf %703, %704 : vector<16x1xf32>
    %cst_311 = arith.constant 9.99999974E-6 : f32
    %706 = vector.broadcast %cst_311 : f32 to vector<16x1xf32>
    %707 = arith.addf %705, %706 : vector<16x1xf32>
    %708 = math.rsqrt %707 : vector<16x1xf32>
    %709 = vector.broadcast %708 : vector<16x1xf32> to vector<16x128xf32>
    %710 = arith.mulf %700, %709 : vector<16x128xf32>
    %711 = vector.broadcast %692 : vector<1x128xf32> to vector<16x128xf32>
    %712 = arith.mulf %710, %711 : vector<16x128xf32>
    %713 = vector.broadcast %694 : vector<1x128xf32> to vector<16x128xf32>
    %714 = arith.addf %712, %713 : vector<16x128xf32>
    %c0_312 = arith.constant 0 : index
    %c0_313 = arith.constant 0 : index
    %c0_314 = arith.constant 0 : index
    %715 = vector.load %arg25[%c0_312, %c0_313, %c0_314] : memref<2x128x128xf32, #tpu.memory_space<vmem>>, vector<1x128x128xf32>
    %716 = vector.shape_cast %715 : vector<1x128x128xf32> to vector<128x128xf32>
    %cst_315 = arith.constant dense<0.000000e+00> : vector<16x128xf32>
    %717 = tpu.matmul %714, %716, %cst_315 {dimension_numbers = #tpu.dot_dimension_numbers<[1], [0], [0], [1], [0, 0, 1, 1], [], []>} : vector<16x128xf32>, vector<128x128xf32>, vector<16x128xf32> -> vector<16x128xf32>
    %c0_316 = arith.constant 0 : index
    %c0_317 = arith.constant 0 : index
    %c0_318 = arith.constant 0 : index
    %718 = vector.load %arg26[%c0_316, %c0_317, %c0_318] : memref<2x1x128xf32, #tpu.memory_space<vmem>>, vector<1x1x128xf32>
    %719 = vector.shape_cast %718 : vector<1x1x128xf32> to vector<1x128xf32>
    %720 = vector.broadcast %719 : vector<1x128xf32> to vector<16x128xf32>
    %721 = arith.addf %717, %720 : vector<16x128xf32>
    %c0_319 = arith.constant 0 : index
    %c0_320 = arith.constant 0 : index
    %c0_321 = arith.constant 0 : index
    %722 = vector.load %arg27[%c0_319, %c0_320, %c0_321] : memref<2x128x256xf32, #tpu.memory_space<vmem>>, vector<1x128x256xf32>
    %723 = vector.shape_cast %722 : vector<1x128x256xf32> to vector<128x256xf32>
    %cst_322 = arith.constant dense<0.000000e+00> : vector<16x256xf32>
    %724 = tpu.matmul %516, %723, %cst_322 {dimension_numbers = #tpu.dot_dimension_numbers<[1], [0], [0], [1], [0, 0, 1, 1], [], []>} : vector<16x128xf32>, vector<128x256xf32>, vector<16x256xf32> -> vector<16x256xf32>
    %c0_323 = arith.constant 0 : index
    %c0_324 = arith.constant 0 : index
    %c0_325 = arith.constant 0 : index
    %725 = vector.load %arg28[%c0_323, %c0_324, %c0_325] : memref<2x1x256xf32, #tpu.memory_space<vmem>>, vector<1x1x256xf32>
    %726 = vector.shape_cast %725 : vector<1x1x256xf32> to vector<1x256xf32>
    %727 = vector.broadcast %726 : vector<1x256xf32> to vector<16x256xf32>
    %728 = arith.addf %724, %727 : vector<16x256xf32>
    %729 = vector.extract_strided_slice %728 {offsets = [0, 0], sizes = [16, 128], strides = [1, 1]} : vector<16x256xf32> to vector<16x128xf32>
    %730 = vector.extract_strided_slice %728 {offsets = [0, 128], sizes = [16, 128], strides = [1, 1]} : vector<16x256xf32> to vector<16x128xf32>
    %c0_326 = arith.constant 0 : index
    %c0_327 = arith.constant 0 : index
    %c0_328 = arith.constant 0 : index
    %731 = vector.load %arg29[%c0_326, %c0_327, %c0_328] : memref<2x128x128xf32, #tpu.memory_space<vmem>>, vector<1x128x128xf32>
    %732 = vector.shape_cast %731 : vector<1x128x128xf32> to vector<128x128xf32>
    %c0_329 = arith.constant 0 : index
    %c0_330 = arith.constant 0 : index
    %c0_331 = arith.constant 0 : index
    %733 = vector.load %arg30[%c0_329, %c0_330, %c0_331] : memref<2x1x128xf32, #tpu.memory_space<vmem>>, vector<1x1x128xf32>
    %734 = vector.shape_cast %733 : vector<1x1x128xf32> to vector<1x128xf32>
    %735 = vector.extract_strided_slice %721 {offsets = [0, 0], sizes = [8, 128], strides = [1, 1]} : vector<16x128xf32> to vector<8x128xf32>
    %736 = vector.extract_strided_slice %729 {offsets = [0, 0], sizes = [8, 128], strides = [1, 1]} : vector<16x128xf32> to vector<8x128xf32>
    %737 = vector.extract_strided_slice %730 {offsets = [0, 0], sizes = [8, 128], strides = [1, 1]} : vector<16x128xf32> to vector<8x128xf32>
    %738 = vector.extract_strided_slice %735 {offsets = [0, 0], sizes = [8, 32], strides = [1, 1]} : vector<8x128xf32> to vector<8x32xf32>
    %739 = vector.extract_strided_slice %736 {offsets = [0, 0], sizes = [8, 32], strides = [1, 1]} : vector<8x128xf32> to vector<8x32xf32>
    %cst_332 = arith.constant dense<0.000000e+00> : vector<8x8xf32>
    %740 = tpu.matmul %738, %739, %cst_332 {dimension_numbers = #tpu.dot_dimension_numbers<[1], [1], [0], [0], [0, 0, 1, 0], [], []>} : vector<8x32xf32>, vector<8x32xf32>, vector<8x8xf32> -> vector<8x8xf32>
    %cst_333 = arith.constant 0.176776692 : f32
    %741 = vector.broadcast %cst_333 : f32 to vector<8x8xf32>
    %742 = arith.mulf %740, %741 : vector<8x8xf32>
    %cst_334 = arith.constant dense<0xFF800000> : vector<8xf32>
    %743 = vector.multi_reduction <maximumf>, %742, %cst_334 [1] : vector<8x8xf32> to vector<8xf32>
    %744 = vector.shape_cast %743 : vector<8xf32> to vector<8x1xf32>
    %745 = vector.broadcast %744 : vector<8x1xf32> to vector<8x8xf32>
    %746 = arith.subf %742, %745 : vector<8x8xf32>
    %747 = math.exp %746 : vector<8x8xf32>
    %cst_335 = arith.constant dense<0.000000e+00> : vector<8xf32>
    %748 = vector.multi_reduction <add>, %747, %cst_335 [1] : vector<8x8xf32> to vector<8xf32>
    %749 = vector.shape_cast %748 : vector<8xf32> to vector<8x1xf32>
    %750 = tpu.reciprocal %749 {approx = true} : vector<8x1xf32> -> vector<8x1xf32>
    %751 = vector.broadcast %750 : vector<8x1xf32> to vector<8x8xf32>
    %752 = arith.mulf %747, %751 : vector<8x8xf32>
    %753 = vector.extract_strided_slice %737 {offsets = [0, 0], sizes = [8, 32], strides = [1, 1]} : vector<8x128xf32> to vector<8x32xf32>
    %cst_336 = arith.constant dense<0.000000e+00> : vector<8x32xf32>
    %754 = tpu.matmul %752, %753, %cst_336 {dimension_numbers = #tpu.dot_dimension_numbers<[1], [0], [0], [1], [0, 0, 1, 1], [], []>} : vector<8x8xf32>, vector<8x32xf32>, vector<8x32xf32> -> vector<8x32xf32>
    %c0_337 = arith.constant 0 : index
    %c0_338 = arith.constant 0 : index
    %755 = vector.load %arg42[%c0_337, %c0_338] : memref<16x128xf32, #tpu.memory_space<vmem>>, vector<8x32xf32>
    tpu.vector_store %arg42[%c0_337, %c0_338], %754 {strides = array<i32>} : memref<16x128xf32, #tpu.memory_space<vmem>>, vector<8x32xf32>,
    %756 = vector.extract_strided_slice %735 {offsets = [0, 32], sizes = [8, 32], strides = [1, 1]} : vector<8x128xf32> to vector<8x32xf32>
    %757 = vector.extract_strided_slice %736 {offsets = [0, 32], sizes = [8, 32], strides = [1, 1]} : vector<8x128xf32> to vector<8x32xf32>
    %cst_339 = arith.constant dense<0.000000e+00> : vector<8x8xf32>
    %758 = tpu.matmul %756, %757, %cst_339 {dimension_numbers = #tpu.dot_dimension_numbers<[1], [1], [0], [0], [0, 0, 1, 0], [], []>} : vector<8x32xf32>, vector<8x32xf32>, vector<8x8xf32> -> vector<8x8xf32>
    %cst_340 = arith.constant 0.176776692 : f32
    %759 = vector.broadcast %cst_340 : f32 to vector<8x8xf32>
    %760 = arith.mulf %758, %759 : vector<8x8xf32>
    %cst_341 = arith.constant dense<0xFF800000> : vector<8xf32>
    %761 = vector.multi_reduction <maximumf>, %760, %cst_341 [1] : vector<8x8xf32> to vector<8xf32>
    %762 = vector.shape_cast %761 : vector<8xf32> to vector<8x1xf32>
    %763 = vector.broadcast %762 : vector<8x1xf32> to vector<8x8xf32>
    %764 = arith.subf %760, %763 : vector<8x8xf32>
    %765 = math.exp %764 : vector<8x8xf32>
    %cst_342 = arith.constant dense<0.000000e+00> : vector<8xf32>
    %766 = vector.multi_reduction <add>, %765, %cst_342 [1] : vector<8x8xf32> to vector<8xf32>
    %767 = vector.shape_cast %766 : vector<8xf32> to vector<8x1xf32>
    %768 = tpu.reciprocal %767 {approx = true} : vector<8x1xf32> -> vector<8x1xf32>
    %769 = vector.broadcast %768 : vector<8x1xf32> to vector<8x8xf32>
    %770 = arith.mulf %765, %769 : vector<8x8xf32>
    %771 = vector.extract_strided_slice %737 {offsets = [0, 32], sizes = [8, 32], strides = [1, 1]} : vector<8x128xf32> to vector<8x32xf32>
    %cst_343 = arith.constant dense<0.000000e+00> : vector<8x32xf32>
    %772 = tpu.matmul %770, %771, %cst_343 {dimension_numbers = #tpu.dot_dimension_numbers<[1], [0], [0], [1], [0, 0, 1, 1], [], []>} : vector<8x8xf32>, vector<8x32xf32>, vector<8x32xf32> -> vector<8x32xf32>
    %c0_344 = arith.constant 0 : index
    %c32_345 = arith.constant 32 : index
    %773 = vector.load %arg42[%c0_344, %c32_345] : memref<16x128xf32, #tpu.memory_space<vmem>>, vector<8x32xf32>
    tpu.vector_store %arg42[%c0_344, %c32_345], %772 {strides = array<i32>} : memref<16x128xf32, #tpu.memory_space<vmem>>, vector<8x32xf32>,
    %774 = vector.extract_strided_slice %735 {offsets = [0, 64], sizes = [8, 32], strides = [1, 1]} : vector<8x128xf32> to vector<8x32xf32>
    %775 = vector.extract_strided_slice %736 {offsets = [0, 64], sizes = [8, 32], strides = [1, 1]} : vector<8x128xf32> to vector<8x32xf32>
    %cst_346 = arith.constant dense<0.000000e+00> : vector<8x8xf32>
    %776 = tpu.matmul %774, %775, %cst_346 {dimension_numbers = #tpu.dot_dimension_numbers<[1], [1], [0], [0], [0, 0, 1, 0], [], []>} : vector<8x32xf32>, vector<8x32xf32>, vector<8x8xf32> -> vector<8x8xf32>
    %cst_347 = arith.constant 0.176776692 : f32
    %777 = vector.broadcast %cst_347 : f32 to vector<8x8xf32>
    %778 = arith.mulf %776, %777 : vector<8x8xf32>
    %cst_348 = arith.constant dense<0xFF800000> : vector<8xf32>
    %779 = vector.multi_reduction <maximumf>, %778, %cst_348 [1] : vector<8x8xf32> to vector<8xf32>
    %780 = vector.shape_cast %779 : vector<8xf32> to vector<8x1xf32>
    %781 = vector.broadcast %780 : vector<8x1xf32> to vector<8x8xf32>
    %782 = arith.subf %778, %781 : vector<8x8xf32>
    %783 = math.exp %782 : vector<8x8xf32>
    %cst_349 = arith.constant dense<0.000000e+00> : vector<8xf32>
    %784 = vector.multi_reduction <add>, %783, %cst_349 [1] : vector<8x8xf32> to vector<8xf32>
    %785 = vector.shape_cast %784 : vector<8xf32> to vector<8x1xf32>
    %786 = tpu.reciprocal %785 {approx = true} : vector<8x1xf32> -> vector<8x1xf32>
    %787 = vector.broadcast %786 : vector<8x1xf32> to vector<8x8xf32>
    %788 = arith.mulf %783, %787 : vector<8x8xf32>
    %789 = vector.extract_strided_slice %737 {offsets = [0, 64], sizes = [8, 32], strides = [1, 1]} : vector<8x128xf32> to vector<8x32xf32>
    %cst_350 = arith.constant dense<0.000000e+00> : vector<8x32xf32>
    %790 = tpu.matmul %788, %789, %cst_350 {dimension_numbers = #tpu.dot_dimension_numbers<[1], [0], [0], [1], [0, 0, 1, 1], [], []>} : vector<8x8xf32>, vector<8x32xf32>, vector<8x32xf32> -> vector<8x32xf32>
    %c0_351 = arith.constant 0 : index
    %c64_352 = arith.constant 64 : index
    %791 = vector.load %arg42[%c0_351, %c64_352] : memref<16x128xf32, #tpu.memory_space<vmem>>, vector<8x32xf32>
    tpu.vector_store %arg42[%c0_351, %c64_352], %790 {strides = array<i32>} : memref<16x128xf32, #tpu.memory_space<vmem>>, vector<8x32xf32>,
    %792 = vector.extract_strided_slice %735 {offsets = [0, 96], sizes = [8, 32], strides = [1, 1]} : vector<8x128xf32> to vector<8x32xf32>
    %793 = vector.extract_strided_slice %736 {offsets = [0, 96], sizes = [8, 32], strides = [1, 1]} : vector<8x128xf32> to vector<8x32xf32>
    %cst_353 = arith.constant dense<0.000000e+00> : vector<8x8xf32>
    %794 = tpu.matmul %792, %793, %cst_353 {dimension_numbers = #tpu.dot_dimension_numbers<[1], [1], [0], [0], [0, 0, 1, 0], [], []>} : vector<8x32xf32>, vector<8x32xf32>, vector<8x8xf32> -> vector<8x8xf32>
    %cst_354 = arith.constant 0.176776692 : f32
    %795 = vector.broadcast %cst_354 : f32 to vector<8x8xf32>
    %796 = arith.mulf %794, %795 : vector<8x8xf32>
    %cst_355 = arith.constant dense<0xFF800000> : vector<8xf32>
    %797 = vector.multi_reduction <maximumf>, %796, %cst_355 [1] : vector<8x8xf32> to vector<8xf32>
    %798 = vector.shape_cast %797 : vector<8xf32> to vector<8x1xf32>
    %799 = vector.broadcast %798 : vector<8x1xf32> to vector<8x8xf32>
    %800 = arith.subf %796, %799 : vector<8x8xf32>
    %801 = math.exp %800 : vector<8x8xf32>
    %cst_356 = arith.constant dense<0.000000e+00> : vector<8xf32>
    %802 = vector.multi_reduction <add>, %801, %cst_356 [1] : vector<8x8xf32> to vector<8xf32>
    %803 = vector.shape_cast %802 : vector<8xf32> to vector<8x1xf32>
    %804 = tpu.reciprocal %803 {approx = true} : vector<8x1xf32> -> vector<8x1xf32>
    %805 = vector.broadcast %804 : vector<8x1xf32> to vector<8x8xf32>
    %806 = arith.mulf %801, %805 : vector<8x8xf32>
    %807 = vector.extract_strided_slice %737 {offsets = [0, 96], sizes = [8, 32], strides = [1, 1]} : vector<8x128xf32> to vector<8x32xf32>
    %cst_357 = arith.constant dense<0.000000e+00> : vector<8x32xf32>
    %808 = tpu.matmul %806, %807, %cst_357 {dimension_numbers = #tpu.dot_dimension_numbers<[1], [0], [0], [1], [0, 0, 1, 1], [], []>} : vector<8x8xf32>, vector<8x32xf32>, vector<8x32xf32> -> vector<8x32xf32>
    %c0_358 = arith.constant 0 : index
    %c96_359 = arith.constant 96 : index
    %809 = vector.load %arg42[%c0_358, %c96_359] : memref<16x128xf32, #tpu.memory_space<vmem>>, vector<8x32xf32>
    tpu.vector_store %arg42[%c0_358, %c96_359], %808 {strides = array<i32>} : memref<16x128xf32, #tpu.memory_space<vmem>>, vector<8x32xf32>,
    %810 = vector.extract_strided_slice %721 {offsets = [8, 0], sizes = [8, 128], strides = [1, 1]} : vector<16x128xf32> to vector<8x128xf32>
    %811 = vector.extract_strided_slice %729 {offsets = [8, 0], sizes = [8, 128], strides = [1, 1]} : vector<16x128xf32> to vector<8x128xf32>
    %812 = vector.extract_strided_slice %730 {offsets = [8, 0], sizes = [8, 128], strides = [1, 1]} : vector<16x128xf32> to vector<8x128xf32>
    %813 = vector.extract_strided_slice %810 {offsets = [0, 0], sizes = [8, 32], strides = [1, 1]} : vector<8x128xf32> to vector<8x32xf32>
    %814 = vector.extract_strided_slice %811 {offsets = [0, 0], sizes = [8, 32], strides = [1, 1]} : vector<8x128xf32> to vector<8x32xf32>
    %cst_360 = arith.constant dense<0.000000e+00> : vector<8x8xf32>
    %815 = tpu.matmul %813, %814, %cst_360 {dimension_numbers = #tpu.dot_dimension_numbers<[1], [1], [0], [0], [0, 0, 1, 0], [], []>} : vector<8x32xf32>, vector<8x32xf32>, vector<8x8xf32> -> vector<8x8xf32>
    %cst_361 = arith.constant 0.176776692 : f32
    %816 = vector.broadcast %cst_361 : f32 to vector<8x8xf32>
    %817 = arith.mulf %815, %816 : vector<8x8xf32>
    %cst_362 = arith.constant dense<0xFF800000> : vector<8xf32>
    %818 = vector.multi_reduction <maximumf>, %817, %cst_362 [1] : vector<8x8xf32> to vector<8xf32>
    %819 = vector.shape_cast %818 : vector<8xf32> to vector<8x1xf32>
    %820 = vector.broadcast %819 : vector<8x1xf32> to vector<8x8xf32>
    %821 = arith.subf %817, %820 : vector<8x8xf32>
    %822 = math.exp %821 : vector<8x8xf32>
    %cst_363 = arith.constant dense<0.000000e+00> : vector<8xf32>
    %823 = vector.multi_reduction <add>, %822, %cst_363 [1] : vector<8x8xf32> to vector<8xf32>
    %824 = vector.shape_cast %823 : vector<8xf32> to vector<8x1xf32>
    %825 = tpu.reciprocal %824 {approx = true} : vector<8x1xf32> -> vector<8x1xf32>
    %826 = vector.broadcast %825 : vector<8x1xf32> to vector<8x8xf32>
    %827 = arith.mulf %822, %826 : vector<8x8xf32>
    %828 = vector.extract_strided_slice %812 {offsets = [0, 0], sizes = [8, 32], strides = [1, 1]} : vector<8x128xf32> to vector<8x32xf32>
    %cst_364 = arith.constant dense<0.000000e+00> : vector<8x32xf32>
    %829 = tpu.matmul %827, %828, %cst_364 {dimension_numbers = #tpu.dot_dimension_numbers<[1], [0], [0], [1], [0, 0, 1, 1], [], []>} : vector<8x8xf32>, vector<8x32xf32>, vector<8x32xf32> -> vector<8x32xf32>
    %c8_365 = arith.constant 8 : index
    %c0_366 = arith.constant 0 : index
    %830 = vector.load %arg42[%c8_365, %c0_366] : memref<16x128xf32, #tpu.memory_space<vmem>>, vector<8x32xf32>
    tpu.vector_store %arg42[%c8_365, %c0_366], %829 {strides = array<i32>} : memref<16x128xf32, #tpu.memory_space<vmem>>, vector<8x32xf32>,
    %831 = vector.extract_strided_slice %810 {offsets = [0, 32], sizes = [8, 32], strides = [1, 1]} : vector<8x128xf32> to vector<8x32xf32>
    %832 = vector.extract_strided_slice %811 {offsets = [0, 32], sizes = [8, 32], strides = [1, 1]} : vector<8x128xf32> to vector<8x32xf32>
    %cst_367 = arith.constant dense<0.000000e+00> : vector<8x8xf32>
    %833 = tpu.matmul %831, %832, %cst_367 {dimension_numbers = #tpu.dot_dimension_numbers<[1], [1], [0], [0], [0, 0, 1, 0], [], []>} : vector<8x32xf32>, vector<8x32xf32>, vector<8x8xf32> -> vector<8x8xf32>
    %cst_368 = arith.constant 0.176776692 : f32
    %834 = vector.broadcast %cst_368 : f32 to vector<8x8xf32>
    %835 = arith.mulf %833, %834 : vector<8x8xf32>
    %cst_369 = arith.constant dense<0xFF800000> : vector<8xf32>
    %836 = vector.multi_reduction <maximumf>, %835, %cst_369 [1] : vector<8x8xf32> to vector<8xf32>
    %837 = vector.shape_cast %836 : vector<8xf32> to vector<8x1xf32>
    %838 = vector.broadcast %837 : vector<8x1xf32> to vector<8x8xf32>
    %839 = arith.subf %835, %838 : vector<8x8xf32>
    %840 = math.exp %839 : vector<8x8xf32>
    %cst_370 = arith.constant dense<0.000000e+00> : vector<8xf32>
    %841 = vector.multi_reduction <add>, %840, %cst_370 [1] : vector<8x8xf32> to vector<8xf32>
    %842 = vector.shape_cast %841 : vector<8xf32> to vector<8x1xf32>
    %843 = tpu.reciprocal %842 {approx = true} : vector<8x1xf32> -> vector<8x1xf32>
    %844 = vector.broadcast %843 : vector<8x1xf32> to vector<8x8xf32>
    %845 = arith.mulf %840, %844 : vector<8x8xf32>
    %846 = vector.extract_strided_slice %812 {offsets = [0, 32], sizes = [8, 32], strides = [1, 1]} : vector<8x128xf32> to vector<8x32xf32>
    %cst_371 = arith.constant dense<0.000000e+00> : vector<8x32xf32>
    %847 = tpu.matmul %845, %846, %cst_371 {dimension_numbers = #tpu.dot_dimension_numbers<[1], [0], [0], [1], [0, 0, 1, 1], [], []>} : vector<8x8xf32>, vector<8x32xf32>, vector<8x32xf32> -> vector<8x32xf32>
    %c8_372 = arith.constant 8 : index
    %c32_373 = arith.constant 32 : index
    %848 = vector.load %arg42[%c8_372, %c32_373] : memref<16x128xf32, #tpu.memory_space<vmem>>, vector<8x32xf32>
    tpu.vector_store %arg42[%c8_372, %c32_373], %847 {strides = array<i32>} : memref<16x128xf32, #tpu.memory_space<vmem>>, vector<8x32xf32>,
    %849 = vector.extract_strided_slice %810 {offsets = [0, 64], sizes = [8, 32], strides = [1, 1]} : vector<8x128xf32> to vector<8x32xf32>
    %850 = vector.extract_strided_slice %811 {offsets = [0, 64], sizes = [8, 32], strides = [1, 1]} : vector<8x128xf32> to vector<8x32xf32>
    %cst_374 = arith.constant dense<0.000000e+00> : vector<8x8xf32>
    %851 = tpu.matmul %849, %850, %cst_374 {dimension_numbers = #tpu.dot_dimension_numbers<[1], [1], [0], [0], [0, 0, 1, 0], [], []>} : vector<8x32xf32>, vector<8x32xf32>, vector<8x8xf32> -> vector<8x8xf32>
    %cst_375 = arith.constant 0.176776692 : f32
    %852 = vector.broadcast %cst_375 : f32 to vector<8x8xf32>
    %853 = arith.mulf %851, %852 : vector<8x8xf32>
    %cst_376 = arith.constant dense<0xFF800000> : vector<8xf32>
    %854 = vector.multi_reduction <maximumf>, %853, %cst_376 [1] : vector<8x8xf32> to vector<8xf32>
    %855 = vector.shape_cast %854 : vector<8xf32> to vector<8x1xf32>
    %856 = vector.broadcast %855 : vector<8x1xf32> to vector<8x8xf32>
    %857 = arith.subf %853, %856 : vector<8x8xf32>
    %858 = math.exp %857 : vector<8x8xf32>
    %cst_377 = arith.constant dense<0.000000e+00> : vector<8xf32>
    %859 = vector.multi_reduction <add>, %858, %cst_377 [1] : vector<8x8xf32> to vector<8xf32>
    %860 = vector.shape_cast %859 : vector<8xf32> to vector<8x1xf32>
    %861 = tpu.reciprocal %860 {approx = true} : vector<8x1xf32> -> vector<8x1xf32>
    %862 = vector.broadcast %861 : vector<8x1xf32> to vector<8x8xf32>
    %863 = arith.mulf %858, %862 : vector<8x8xf32>
    %864 = vector.extract_strided_slice %812 {offsets = [0, 64], sizes = [8, 32], strides = [1, 1]} : vector<8x128xf32> to vector<8x32xf32>
    %cst_378 = arith.constant dense<0.000000e+00> : vector<8x32xf32>
    %865 = tpu.matmul %863, %864, %cst_378 {dimension_numbers = #tpu.dot_dimension_numbers<[1], [0], [0], [1], [0, 0, 1, 1], [], []>} : vector<8x8xf32>, vector<8x32xf32>, vector<8x32xf32> -> vector<8x32xf32>
    %c8_379 = arith.constant 8 : index
    %c64_380 = arith.constant 64 : index
    %866 = vector.load %arg42[%c8_379, %c64_380] : memref<16x128xf32, #tpu.memory_space<vmem>>, vector<8x32xf32>
    tpu.vector_store %arg42[%c8_379, %c64_380], %865 {strides = array<i32>} : memref<16x128xf32, #tpu.memory_space<vmem>>, vector<8x32xf32>,
    %867 = vector.extract_strided_slice %810 {offsets = [0, 96], sizes = [8, 32], strides = [1, 1]} : vector<8x128xf32> to vector<8x32xf32>
    %868 = vector.extract_strided_slice %811 {offsets = [0, 96], sizes = [8, 32], strides = [1, 1]} : vector<8x128xf32> to vector<8x32xf32>
    %cst_381 = arith.constant dense<0.000000e+00> : vector<8x8xf32>
    %869 = tpu.matmul %867, %868, %cst_381 {dimension_numbers = #tpu.dot_dimension_numbers<[1], [1], [0], [0], [0, 0, 1, 0], [], []>} : vector<8x32xf32>, vector<8x32xf32>, vector<8x8xf32> -> vector<8x8xf32>
    %cst_382 = arith.constant 0.176776692 : f32
    %870 = vector.broadcast %cst_382 : f32 to vector<8x8xf32>
    %871 = arith.mulf %869, %870 : vector<8x8xf32>
    %cst_383 = arith.constant dense<0xFF800000> : vector<8xf32>
    %872 = vector.multi_reduction <maximumf>, %871, %cst_383 [1] : vector<8x8xf32> to vector<8xf32>
    %873 = vector.shape_cast %872 : vector<8xf32> to vector<8x1xf32>
    %874 = vector.broadcast %873 : vector<8x1xf32> to vector<8x8xf32>
    %875 = arith.subf %871, %874 : vector<8x8xf32>
    %876 = math.exp %875 : vector<8x8xf32>
    %cst_384 = arith.constant dense<0.000000e+00> : vector<8xf32>
    %877 = vector.multi_reduction <add>, %876, %cst_384 [1] : vector<8x8xf32> to vector<8xf32>
    %878 = vector.shape_cast %877 : vector<8xf32> to vector<8x1xf32>
    %879 = tpu.reciprocal %878 {approx = true} : vector<8x1xf32> -> vector<8x1xf32>
    %880 = vector.broadcast %879 : vector<8x1xf32> to vector<8x8xf32>
    %881 = arith.mulf %876, %880 : vector<8x8xf32>
    %882 = vector.extract_strided_slice %812 {offsets = [0, 96], sizes = [8, 32], strides = [1, 1]} : vector<8x128xf32> to vector<8x32xf32>
    %cst_385 = arith.constant dense<0.000000e+00> : vector<8x32xf32>
    %883 = tpu.matmul %881, %882, %cst_385 {dimension_numbers = #tpu.dot_dimension_numbers<[1], [0], [0], [1], [0, 0, 1, 1], [], []>} : vector<8x8xf32>, vector<8x32xf32>, vector<8x32xf32> -> vector<8x32xf32>
    %c8_386 = arith.constant 8 : index
    %c96_387 = arith.constant 96 : index
    %884 = vector.load %arg42[%c8_386, %c96_387] : memref<16x128xf32, #tpu.memory_space<vmem>>, vector<8x32xf32>
    tpu.vector_store %arg42[%c8_386, %c96_387], %883 {strides = array<i32>} : memref<16x128xf32, #tpu.memory_space<vmem>>, vector<8x32xf32>,
    %c0_388 = arith.constant 0 : index
    %c0_389 = arith.constant 0 : index
    %885 = vector.load %arg42[%c0_388, %c0_389] : memref<16x128xf32, #tpu.memory_space<vmem>>, vector<16x128xf32>
    %cst_390 = arith.constant dense<0.000000e+00> : vector<16x128xf32>
    %886 = tpu.matmul %885, %732, %cst_390 {dimension_numbers = #tpu.dot_dimension_numbers<[1], [0], [0], [1], [0, 0, 1, 1], [], []>} : vector<16x128xf32>, vector<128x128xf32>, vector<16x128xf32> -> vector<16x128xf32>
    %887 = vector.broadcast %734 : vector<1x128xf32> to vector<16x128xf32>
    %888 = arith.addf %886, %887 : vector<16x128xf32>
    %889 = arith.addf %714, %888 : vector<16x128xf32>
    %c0_391 = arith.constant 0 : index
    %c0_392 = arith.constant 0 : index
    %c0_393 = arith.constant 0 : index
    %890 = vector.load %arg31[%c0_391, %c0_392, %c0_393] : memref<2x1x128xf32, #tpu.memory_space<vmem>>, vector<1x1x128xf32>
    %891 = vector.shape_cast %890 : vector<1x1x128xf32> to vector<1x128xf32>
    %c0_394 = arith.constant 0 : index
    %c0_395 = arith.constant 0 : index
    %c0_396 = arith.constant 0 : index
    %892 = vector.load %arg32[%c0_394, %c0_395, %c0_396] : memref<2x1x128xf32, #tpu.memory_space<vmem>>, vector<1x1x128xf32>
    %893 = vector.shape_cast %892 : vector<1x1x128xf32> to vector<1x128xf32>
    %cst_397 = arith.constant dense<0.000000e+00> : vector<16xf32>
    %894 = vector.multi_reduction <add>, %889, %cst_397 [1] : vector<16x128xf32> to vector<16xf32>
    %895 = vector.shape_cast %894 : vector<16xf32> to vector<16x1xf32>
    %cst_398 = arith.constant 1.280000e+02 : f32
    %896 = vector.broadcast %cst_398 : f32 to vector<16x1xf32>
    %897 = arith.divf %895, %896 : vector<16x1xf32>
    %898 = vector.broadcast %897 : vector<16x1xf32> to vector<16x128xf32>
    %899 = arith.subf %889, %898 : vector<16x128xf32>
    %900 = arith.mulf %899, %899 : vector<16x128xf32>
    %cst_399 = arith.constant dense<0.000000e+00> : vector<16xf32>
    %901 = vector.multi_reduction <add>, %900, %cst_399 [1] : vector<16x128xf32> to vector<16xf32>
    %902 = vector.shape_cast %901 : vector<16xf32> to vector<16x1xf32>
    %cst_400 = arith.constant 1.280000e+02 : f32
    %903 = vector.broadcast %cst_400 : f32 to vector<16x1xf32>
    %904 = arith.divf %902, %903 : vector<16x1xf32>
    %cst_401 = arith.constant 9.99999974E-6 : f32
    %905 = vector.broadcast %cst_401 : f32 to vector<16x1xf32>
    %906 = arith.addf %904, %905 : vector<16x1xf32>
    %907 = math.rsqrt %906 : vector<16x1xf32>
    %908 = vector.broadcast %907 : vector<16x1xf32> to vector<16x128xf32>
    %909 = arith.mulf %899, %908 : vector<16x128xf32>
    %910 = vector.broadcast %891 : vector<1x128xf32> to vector<16x128xf32>
    %911 = arith.mulf %909, %910 : vector<16x128xf32>
    %912 = vector.broadcast %893 : vector<1x128xf32> to vector<16x128xf32>
    %913 = arith.addf %911, %912 : vector<16x128xf32>
    %c0_402 = arith.constant 0 : index
    %c0_403 = arith.constant 0 : index
    %c0_404 = arith.constant 0 : index
    %914 = vector.load %arg33[%c0_402, %c0_403, %c0_404] : memref<2x128x128xf32, #tpu.memory_space<vmem>>, vector<1x128x128xf32>
    %915 = vector.shape_cast %914 : vector<1x128x128xf32> to vector<128x128xf32>
    %cst_405 = arith.constant dense<0.000000e+00> : vector<16x128xf32>
    %916 = tpu.matmul %913, %915, %cst_405 {dimension_numbers = #tpu.dot_dimension_numbers<[1], [0], [0], [1], [0, 0, 1, 1], [], []>} : vector<16x128xf32>, vector<128x128xf32>, vector<16x128xf32> -> vector<16x128xf32>
    %c0_406 = arith.constant 0 : index
    %c0_407 = arith.constant 0 : index
    %c0_408 = arith.constant 0 : index
    %917 = vector.load %arg34[%c0_406, %c0_407, %c0_408] : memref<2x1x128xf32, #tpu.memory_space<vmem>>, vector<1x1x128xf32>
    %918 = vector.shape_cast %917 : vector<1x1x128xf32> to vector<1x128xf32>
    %919 = vector.broadcast %918 : vector<1x128xf32> to vector<16x128xf32>
    %920 = arith.addf %916, %919 : vector<16x128xf32>
    %cst_409 = arith.constant 0.000000e+00 : f32
    %921 = vector.broadcast %cst_409 : f32 to vector<16x128xf32>
    %922 = arith.maximumf %920, %921 : vector<16x128xf32>
    %c0_410 = arith.constant 0 : index
    %c0_411 = arith.constant 0 : index
    %c0_412 = arith.constant 0 : index
    %923 = vector.load %arg35[%c0_410, %c0_411, %c0_412] : memref<2x128x128xf32, #tpu.memory_space<vmem>>, vector<1x128x128xf32>
    %924 = vector.shape_cast %923 : vector<1x128x128xf32> to vector<128x128xf32>
    %cst_413 = arith.constant dense<0.000000e+00> : vector<16x128xf32>
    %925 = tpu.matmul %922, %924, %cst_413 {dimension_numbers = #tpu.dot_dimension_numbers<[1], [0], [0], [1], [0, 0, 1, 1], [], []>} : vector<16x128xf32>, vector<128x128xf32>, vector<16x128xf32> -> vector<16x128xf32>
    %c0_414 = arith.constant 0 : index
    %c0_415 = arith.constant 0 : index
    %c0_416 = arith.constant 0 : index
    %926 = vector.load %arg36[%c0_414, %c0_415, %c0_416] : memref<2x1x128xf32, #tpu.memory_space<vmem>>, vector<1x1x128xf32>
    %927 = vector.shape_cast %926 : vector<1x1x128xf32> to vector<1x128xf32>
    %928 = vector.broadcast %927 : vector<1x128xf32> to vector<16x128xf32>
    %929 = arith.addf %925, %928 : vector<16x128xf32>
    %930 = arith.addf %913, %929 : vector<16x128xf32>
    %c0_417 = arith.constant 0 : index
    %c0_418 = arith.constant 0 : index
    %c0_419 = arith.constant 0 : index
    %931 = vector.load %arg37[%c0_417, %c0_418, %c0_419] : memref<2x1x128xf32, #tpu.memory_space<vmem>>, vector<1x1x128xf32>
    %932 = vector.shape_cast %931 : vector<1x1x128xf32> to vector<1x128xf32>
    %c0_420 = arith.constant 0 : index
    %c0_421 = arith.constant 0 : index
    %c0_422 = arith.constant 0 : index
    %933 = vector.load %arg38[%c0_420, %c0_421, %c0_422] : memref<2x1x128xf32, #tpu.memory_space<vmem>>, vector<1x1x128xf32>
    %934 = vector.shape_cast %933 : vector<1x1x128xf32> to vector<1x128xf32>
    %cst_423 = arith.constant dense<0.000000e+00> : vector<16xf32>
    %935 = vector.multi_reduction <add>, %930, %cst_423 [1] : vector<16x128xf32> to vector<16xf32>
    %936 = vector.shape_cast %935 : vector<16xf32> to vector<16x1xf32>
    %cst_424 = arith.constant 1.280000e+02 : f32
    %937 = vector.broadcast %cst_424 : f32 to vector<16x1xf32>
    %938 = arith.divf %936, %937 : vector<16x1xf32>
    %939 = vector.broadcast %938 : vector<16x1xf32> to vector<16x128xf32>
    %940 = arith.subf %930, %939 : vector<16x128xf32>
    %941 = arith.mulf %940, %940 : vector<16x128xf32>
    %cst_425 = arith.constant dense<0.000000e+00> : vector<16xf32>
    %942 = vector.multi_reduction <add>, %941, %cst_425 [1] : vector<16x128xf32> to vector<16xf32>
    %943 = vector.shape_cast %942 : vector<16xf32> to vector<16x1xf32>
    %cst_426 = arith.constant 1.280000e+02 : f32
    %944 = vector.broadcast %cst_426 : f32 to vector<16x1xf32>
    %945 = arith.divf %943, %944 : vector<16x1xf32>
    %cst_427 = arith.constant 9.99999974E-6 : f32
    %946 = vector.broadcast %cst_427 : f32 to vector<16x1xf32>
    %947 = arith.addf %945, %946 : vector<16x1xf32>
    %948 = math.rsqrt %947 : vector<16x1xf32>
    %949 = vector.broadcast %948 : vector<16x1xf32> to vector<16x128xf32>
    %950 = arith.mulf %940, %949 : vector<16x128xf32>
    %951 = vector.broadcast %932 : vector<1x128xf32> to vector<16x128xf32>
    %952 = arith.mulf %950, %951 : vector<16x128xf32>
    %953 = vector.broadcast %934 : vector<1x128xf32> to vector<16x128xf32>
    %954 = arith.addf %952, %953 : vector<16x128xf32>
    %c1_428 = arith.constant 1 : index
    %c0_429 = arith.constant 0 : index
    %c0_430 = arith.constant 0 : index
    %955 = vector.load %arg19[%c1_428, %c0_429, %c0_430] : memref<2x128x384xf32, #tpu.memory_space<vmem>>, vector<1x128x384xf32>
    %956 = vector.shape_cast %955 : vector<1x128x384xf32> to vector<128x384xf32>
    %cst_431 = arith.constant dense<0.000000e+00> : vector<16x384xf32>
    %957 = tpu.matmul %954, %956, %cst_431 {dimension_numbers = #tpu.dot_dimension_numbers<[1], [0], [0], [1], [0, 0, 1, 1], [], []>} : vector<16x128xf32>, vector<128x384xf32>, vector<16x384xf32> -> vector<16x384xf32>
    %c1_432 = arith.constant 1 : index
    %c0_433 = arith.constant 0 : index
    %c0_434 = arith.constant 0 : index
    %958 = vector.load %arg20[%c1_432, %c0_433, %c0_434] : memref<2x1x384xf32, #tpu.memory_space<vmem>>, vector<1x1x384xf32>
    %959 = vector.shape_cast %958 : vector<1x1x384xf32> to vector<1x384xf32>
    %960 = vector.broadcast %959 : vector<1x384xf32> to vector<16x384xf32>
    %961 = arith.addf %957, %960 : vector<16x384xf32>
    %962 = vector.extract_strided_slice %961 {offsets = [0, 0], sizes = [16, 128], strides = [1, 1]} : vector<16x384xf32> to vector<16x128xf32>
    %963 = vector.extract_strided_slice %961 {offsets = [0, 128], sizes = [16, 128], strides = [1, 1]} : vector<16x384xf32> to vector<16x128xf32>
    %964 = vector.extract_strided_slice %961 {offsets = [0, 256], sizes = [16, 128], strides = [1, 1]} : vector<16x384xf32> to vector<16x128xf32>
    %c1_435 = arith.constant 1 : index
    %c0_436 = arith.constant 0 : index
    %c0_437 = arith.constant 0 : index
    %965 = vector.load %arg21[%c1_435, %c0_436, %c0_437] : memref<2x128x128xf32, #tpu.memory_space<vmem>>, vector<1x128x128xf32>
    %966 = vector.shape_cast %965 : vector<1x128x128xf32> to vector<128x128xf32>
    %c1_438 = arith.constant 1 : index
    %c0_439 = arith.constant 0 : index
    %c0_440 = arith.constant 0 : index
    %967 = vector.load %arg22[%c1_438, %c0_439, %c0_440] : memref<2x1x128xf32, #tpu.memory_space<vmem>>, vector<1x1x128xf32>
    %968 = vector.shape_cast %967 : vector<1x1x128xf32> to vector<1x128xf32>
    %969 = vector.extract_strided_slice %962 {offsets = [0, 0], sizes = [8, 128], strides = [1, 1]} : vector<16x128xf32> to vector<8x128xf32>
    %970 = vector.extract_strided_slice %963 {offsets = [0, 0], sizes = [8, 128], strides = [1, 1]} : vector<16x128xf32> to vector<8x128xf32>
    %971 = vector.extract_strided_slice %964 {offsets = [0, 0], sizes = [8, 128], strides = [1, 1]} : vector<16x128xf32> to vector<8x128xf32>
    %972 = vector.extract_strided_slice %969 {offsets = [0, 0], sizes = [8, 32], strides = [1, 1]} : vector<8x128xf32> to vector<8x32xf32>
    %973 = vector.extract_strided_slice %970 {offsets = [0, 0], sizes = [8, 32], strides = [1, 1]} : vector<8x128xf32> to vector<8x32xf32>
    %cst_441 = arith.constant dense<0.000000e+00> : vector<8x8xf32>
    %974 = tpu.matmul %972, %973, %cst_441 {dimension_numbers = #tpu.dot_dimension_numbers<[1], [1], [0], [0], [0, 0, 1, 0], [], []>} : vector<8x32xf32>, vector<8x32xf32>, vector<8x8xf32> -> vector<8x8xf32>
    %cst_442 = arith.constant 0.176776692 : f32
    %975 = vector.broadcast %cst_442 : f32 to vector<8x8xf32>
    %976 = arith.mulf %974, %975 : vector<8x8xf32>
    %cst_443 = arith.constant dense<0xFF800000> : vector<8xf32>
    %977 = vector.multi_reduction <maximumf>, %976, %cst_443 [1] : vector<8x8xf32> to vector<8xf32>
    %978 = vector.shape_cast %977 : vector<8xf32> to vector<8x1xf32>
    %979 = vector.broadcast %978 : vector<8x1xf32> to vector<8x8xf32>
    %980 = arith.subf %976, %979 : vector<8x8xf32>
    %981 = math.exp %980 : vector<8x8xf32>
    %cst_444 = arith.constant dense<0.000000e+00> : vector<8xf32>
    %982 = vector.multi_reduction <add>, %981, %cst_444 [1] : vector<8x8xf32> to vector<8xf32>
    %983 = vector.shape_cast %982 : vector<8xf32> to vector<8x1xf32>
    %984 = tpu.reciprocal %983 {approx = true} : vector<8x1xf32> -> vector<8x1xf32>
    %985 = vector.broadcast %984 : vector<8x1xf32> to vector<8x8xf32>
    %986 = arith.mulf %981, %985 : vector<8x8xf32>
    %987 = vector.extract_strided_slice %971 {offsets = [0, 0], sizes = [8, 32], strides = [1, 1]} : vector<8x128xf32> to vector<8x32xf32>
    %cst_445 = arith.constant dense<0.000000e+00> : vector<8x32xf32>
    %988 = tpu.matmul %986, %987, %cst_445 {dimension_numbers = #tpu.dot_dimension_numbers<[1], [0], [0], [1], [0, 0, 1, 1], [], []>} : vector<8x8xf32>, vector<8x32xf32>, vector<8x32xf32> -> vector<8x32xf32>
    %c0_446 = arith.constant 0 : index
    %c0_447 = arith.constant 0 : index
    %989 = vector.load %arg42[%c0_446, %c0_447] : memref<16x128xf32, #tpu.memory_space<vmem>>, vector<8x32xf32>
    tpu.vector_store %arg42[%c0_446, %c0_447], %988 {strides = array<i32>} : memref<16x128xf32, #tpu.memory_space<vmem>>, vector<8x32xf32>,
    %990 = vector.extract_strided_slice %969 {offsets = [0, 32], sizes = [8, 32], strides = [1, 1]} : vector<8x128xf32> to vector<8x32xf32>
    %991 = vector.extract_strided_slice %970 {offsets = [0, 32], sizes = [8, 32], strides = [1, 1]} : vector<8x128xf32> to vector<8x32xf32>
    %cst_448 = arith.constant dense<0.000000e+00> : vector<8x8xf32>
    %992 = tpu.matmul %990, %991, %cst_448 {dimension_numbers = #tpu.dot_dimension_numbers<[1], [1], [0], [0], [0, 0, 1, 0], [], []>} : vector<8x32xf32>, vector<8x32xf32>, vector<8x8xf32> -> vector<8x8xf32>
    %cst_449 = arith.constant 0.176776692 : f32
    %993 = vector.broadcast %cst_449 : f32 to vector<8x8xf32>
    %994 = arith.mulf %992, %993 : vector<8x8xf32>
    %cst_450 = arith.constant dense<0xFF800000> : vector<8xf32>
    %995 = vector.multi_reduction <maximumf>, %994, %cst_450 [1] : vector<8x8xf32> to vector<8xf32>
    %996 = vector.shape_cast %995 : vector<8xf32> to vector<8x1xf32>
    %997 = vector.broadcast %996 : vector<8x1xf32> to vector<8x8xf32>
    %998 = arith.subf %994, %997 : vector<8x8xf32>
    %999 = math.exp %998 : vector<8x8xf32>
    %cst_451 = arith.constant dense<0.000000e+00> : vector<8xf32>
    %1000 = vector.multi_reduction <add>, %999, %cst_451 [1] : vector<8x8xf32> to vector<8xf32>
    %1001 = vector.shape_cast %1000 : vector<8xf32> to vector<8x1xf32>
    %1002 = tpu.reciprocal %1001 {approx = true} : vector<8x1xf32> -> vector<8x1xf32>
    %1003 = vector.broadcast %1002 : vector<8x1xf32> to vector<8x8xf32>
    %1004 = arith.mulf %999, %1003 : vector<8x8xf32>
    %1005 = vector.extract_strided_slice %971 {offsets = [0, 32], sizes = [8, 32], strides = [1, 1]} : vector<8x128xf32> to vector<8x32xf32>
    %cst_452 = arith.constant dense<0.000000e+00> : vector<8x32xf32>
    %1006 = tpu.matmul %1004, %1005, %cst_452 {dimension_numbers = #tpu.dot_dimension_numbers<[1], [0], [0], [1], [0, 0, 1, 1], [], []>} : vector<8x8xf32>, vector<8x32xf32>, vector<8x32xf32> -> vector<8x32xf32>
    %c0_453 = arith.constant 0 : index
    %c32_454 = arith.constant 32 : index
    %1007 = vector.load %arg42[%c0_453, %c32_454] : memref<16x128xf32, #tpu.memory_space<vmem>>, vector<8x32xf32>
    tpu.vector_store %arg42[%c0_453, %c32_454], %1006 {strides = array<i32>} : memref<16x128xf32, #tpu.memory_space<vmem>>, vector<8x32xf32>,
    %1008 = vector.extract_strided_slice %969 {offsets = [0, 64], sizes = [8, 32], strides = [1, 1]} : vector<8x128xf32> to vector<8x32xf32>
    %1009 = vector.extract_strided_slice %970 {offsets = [0, 64], sizes = [8, 32], strides = [1, 1]} : vector<8x128xf32> to vector<8x32xf32>
    %cst_455 = arith.constant dense<0.000000e+00> : vector<8x8xf32>
    %1010 = tpu.matmul %1008, %1009, %cst_455 {dimension_numbers = #tpu.dot_dimension_numbers<[1], [1], [0], [0], [0, 0, 1, 0], [], []>} : vector<8x32xf32>, vector<8x32xf32>, vector<8x8xf32> -> vector<8x8xf32>
    %cst_456 = arith.constant 0.176776692 : f32
    %1011 = vector.broadcast %cst_456 : f32 to vector<8x8xf32>
    %1012 = arith.mulf %1010, %1011 : vector<8x8xf32>
    %cst_457 = arith.constant dense<0xFF800000> : vector<8xf32>
    %1013 = vector.multi_reduction <maximumf>, %1012, %cst_457 [1] : vector<8x8xf32> to vector<8xf32>
    %1014 = vector.shape_cast %1013 : vector<8xf32> to vector<8x1xf32>
    %1015 = vector.broadcast %1014 : vector<8x1xf32> to vector<8x8xf32>
    %1016 = arith.subf %1012, %1015 : vector<8x8xf32>
    %1017 = math.exp %1016 : vector<8x8xf32>
    %cst_458 = arith.constant dense<0.000000e+00> : vector<8xf32>
    %1018 = vector.multi_reduction <add>, %1017, %cst_458 [1] : vector<8x8xf32> to vector<8xf32>
    %1019 = vector.shape_cast %1018 : vector<8xf32> to vector<8x1xf32>
    %1020 = tpu.reciprocal %1019 {approx = true} : vector<8x1xf32> -> vector<8x1xf32>
    %1021 = vector.broadcast %1020 : vector<8x1xf32> to vector<8x8xf32>
    %1022 = arith.mulf %1017, %1021 : vector<8x8xf32>
    %1023 = vector.extract_strided_slice %971 {offsets = [0, 64], sizes = [8, 32], strides = [1, 1]} : vector<8x128xf32> to vector<8x32xf32>
    %cst_459 = arith.constant dense<0.000000e+00> : vector<8x32xf32>
    %1024 = tpu.matmul %1022, %1023, %cst_459 {dimension_numbers = #tpu.dot_dimension_numbers<[1], [0], [0], [1], [0, 0, 1, 1], [], []>} : vector<8x8xf32>, vector<8x32xf32>, vector<8x32xf32> -> vector<8x32xf32>
    %c0_460 = arith.constant 0 : index
    %c64_461 = arith.constant 64 : index
    %1025 = vector.load %arg42[%c0_460, %c64_461] : memref<16x128xf32, #tpu.memory_space<vmem>>, vector<8x32xf32>
    tpu.vector_store %arg42[%c0_460, %c64_461], %1024 {strides = array<i32>} : memref<16x128xf32, #tpu.memory_space<vmem>>, vector<8x32xf32>,
    %1026 = vector.extract_strided_slice %969 {offsets = [0, 96], sizes = [8, 32], strides = [1, 1]} : vector<8x128xf32> to vector<8x32xf32>
    %1027 = vector.extract_strided_slice %970 {offsets = [0, 96], sizes = [8, 32], strides = [1, 1]} : vector<8x128xf32> to vector<8x32xf32>
    %cst_462 = arith.constant dense<0.000000e+00> : vector<8x8xf32>
    %1028 = tpu.matmul %1026, %1027, %cst_462 {dimension_numbers = #tpu.dot_dimension_numbers<[1], [1], [0], [0], [0, 0, 1, 0], [], []>} : vector<8x32xf32>, vector<8x32xf32>, vector<8x8xf32> -> vector<8x8xf32>
    %cst_463 = arith.constant 0.176776692 : f32
    %1029 = vector.broadcast %cst_463 : f32 to vector<8x8xf32>
    %1030 = arith.mulf %1028, %1029 : vector<8x8xf32>
    %cst_464 = arith.constant dense<0xFF800000> : vector<8xf32>
    %1031 = vector.multi_reduction <maximumf>, %1030, %cst_464 [1] : vector<8x8xf32> to vector<8xf32>
    %1032 = vector.shape_cast %1031 : vector<8xf32> to vector<8x1xf32>
    %1033 = vector.broadcast %1032 : vector<8x1xf32> to vector<8x8xf32>
    %1034 = arith.subf %1030, %1033 : vector<8x8xf32>
    %1035 = math.exp %1034 : vector<8x8xf32>
    %cst_465 = arith.constant dense<0.000000e+00> : vector<8xf32>
    %1036 = vector.multi_reduction <add>, %1035, %cst_465 [1] : vector<8x8xf32> to vector<8xf32>
    %1037 = vector.shape_cast %1036 : vector<8xf32> to vector<8x1xf32>
    %1038 = tpu.reciprocal %1037 {approx = true} : vector<8x1xf32> -> vector<8x1xf32>
    %1039 = vector.broadcast %1038 : vector<8x1xf32> to vector<8x8xf32>
    %1040 = arith.mulf %1035, %1039 : vector<8x8xf32>
    %1041 = vector.extract_strided_slice %971 {offsets = [0, 96], sizes = [8, 32], strides = [1, 1]} : vector<8x128xf32> to vector<8x32xf32>
    %cst_466 = arith.constant dense<0.000000e+00> : vector<8x32xf32>
    %1042 = tpu.matmul %1040, %1041, %cst_466 {dimension_numbers = #tpu.dot_dimension_numbers<[1], [0], [0], [1], [0, 0, 1, 1], [], []>} : vector<8x8xf32>, vector<8x32xf32>, vector<8x32xf32> -> vector<8x32xf32>
    %c0_467 = arith.constant 0 : index
    %c96_468 = arith.constant 96 : index
    %1043 = vector.load %arg42[%c0_467, %c96_468] : memref<16x128xf32, #tpu.memory_space<vmem>>, vector<8x32xf32>
    tpu.vector_store %arg42[%c0_467, %c96_468], %1042 {strides = array<i32>} : memref<16x128xf32, #tpu.memory_space<vmem>>, vector<8x32xf32>,
    %1044 = vector.extract_strided_slice %962 {offsets = [8, 0], sizes = [8, 128], strides = [1, 1]} : vector<16x128xf32> to vector<8x128xf32>
    %1045 = vector.extract_strided_slice %963 {offsets = [8, 0], sizes = [8, 128], strides = [1, 1]} : vector<16x128xf32> to vector<8x128xf32>
    %1046 = vector.extract_strided_slice %964 {offsets = [8, 0], sizes = [8, 128], strides = [1, 1]} : vector<16x128xf32> to vector<8x128xf32>
    %1047 = vector.extract_strided_slice %1044 {offsets = [0, 0], sizes = [8, 32], strides = [1, 1]} : vector<8x128xf32> to vector<8x32xf32>
    %1048 = vector.extract_strided_slice %1045 {offsets = [0, 0], sizes = [8, 32], strides = [1, 1]} : vector<8x128xf32> to vector<8x32xf32>
    %cst_469 = arith.constant dense<0.000000e+00> : vector<8x8xf32>
    %1049 = tpu.matmul %1047, %1048, %cst_469 {dimension_numbers = #tpu.dot_dimension_numbers<[1], [1], [0], [0], [0, 0, 1, 0], [], []>} : vector<8x32xf32>, vector<8x32xf32>, vector<8x8xf32> -> vector<8x8xf32>
    %cst_470 = arith.constant 0.176776692 : f32
    %1050 = vector.broadcast %cst_470 : f32 to vector<8x8xf32>
    %1051 = arith.mulf %1049, %1050 : vector<8x8xf32>
    %cst_471 = arith.constant dense<0xFF800000> : vector<8xf32>
    %1052 = vector.multi_reduction <maximumf>, %1051, %cst_471 [1] : vector<8x8xf32> to vector<8xf32>
    %1053 = vector.shape_cast %1052 : vector<8xf32> to vector<8x1xf32>
    %1054 = vector.broadcast %1053 : vector<8x1xf32> to vector<8x8xf32>
    %1055 = arith.subf %1051, %1054 : vector<8x8xf32>
    %1056 = math.exp %1055 : vector<8x8xf32>
    %cst_472 = arith.constant dense<0.000000e+00> : vector<8xf32>
    %1057 = vector.multi_reduction <add>, %1056, %cst_472 [1] : vector<8x8xf32> to vector<8xf32>
    %1058 = vector.shape_cast %1057 : vector<8xf32> to vector<8x1xf32>
    %1059 = tpu.reciprocal %1058 {approx = true} : vector<8x1xf32> -> vector<8x1xf32>
    %1060 = vector.broadcast %1059 : vector<8x1xf32> to vector<8x8xf32>
    %1061 = arith.mulf %1056, %1060 : vector<8x8xf32>
    %1062 = vector.extract_strided_slice %1046 {offsets = [0, 0], sizes = [8, 32], strides = [1, 1]} : vector<8x128xf32> to vector<8x32xf32>
    %cst_473 = arith.constant dense<0.000000e+00> : vector<8x32xf32>
    %1063 = tpu.matmul %1061, %1062, %cst_473 {dimension_numbers = #tpu.dot_dimension_numbers<[1], [0], [0], [1], [0, 0, 1, 1], [], []>} : vector<8x8xf32>, vector<8x32xf32>, vector<8x32xf32> -> vector<8x32xf32>
    %c8_474 = arith.constant 8 : index
    %c0_475 = arith.constant 0 : index
    %1064 = vector.load %arg42[%c8_474, %c0_475] : memref<16x128xf32, #tpu.memory_space<vmem>>, vector<8x32xf32>
    tpu.vector_store %arg42[%c8_474, %c0_475], %1063 {strides = array<i32>} : memref<16x128xf32, #tpu.memory_space<vmem>>, vector<8x32xf32>,
    %1065 = vector.extract_strided_slice %1044 {offsets = [0, 32], sizes = [8, 32], strides = [1, 1]} : vector<8x128xf32> to vector<8x32xf32>
    %1066 = vector.extract_strided_slice %1045 {offsets = [0, 32], sizes = [8, 32], strides = [1, 1]} : vector<8x128xf32> to vector<8x32xf32>
    %cst_476 = arith.constant dense<0.000000e+00> : vector<8x8xf32>
    %1067 = tpu.matmul %1065, %1066, %cst_476 {dimension_numbers = #tpu.dot_dimension_numbers<[1], [1], [0], [0], [0, 0, 1, 0], [], []>} : vector<8x32xf32>, vector<8x32xf32>, vector<8x8xf32> -> vector<8x8xf32>
    %cst_477 = arith.constant 0.176776692 : f32
    %1068 = vector.broadcast %cst_477 : f32 to vector<8x8xf32>
    %1069 = arith.mulf %1067, %1068 : vector<8x8xf32>
    %cst_478 = arith.constant dense<0xFF800000> : vector<8xf32>
    %1070 = vector.multi_reduction <maximumf>, %1069, %cst_478 [1] : vector<8x8xf32> to vector<8xf32>
    %1071 = vector.shape_cast %1070 : vector<8xf32> to vector<8x1xf32>
    %1072 = vector.broadcast %1071 : vector<8x1xf32> to vector<8x8xf32>
    %1073 = arith.subf %1069, %1072 : vector<8x8xf32>
    %1074 = math.exp %1073 : vector<8x8xf32>
    %cst_479 = arith.constant dense<0.000000e+00> : vector<8xf32>
    %1075 = vector.multi_reduction <add>, %1074, %cst_479 [1] : vector<8x8xf32> to vector<8xf32>
    %1076 = vector.shape_cast %1075 : vector<8xf32> to vector<8x1xf32>
    %1077 = tpu.reciprocal %1076 {approx = true} : vector<8x1xf32> -> vector<8x1xf32>
    %1078 = vector.broadcast %1077 : vector<8x1xf32> to vector<8x8xf32>
    %1079 = arith.mulf %1074, %1078 : vector<8x8xf32>
    %1080 = vector.extract_strided_slice %1046 {offsets = [0, 32], sizes = [8, 32], strides = [1, 1]} : vector<8x128xf32> to vector<8x32xf32>
    %cst_480 = arith.constant dense<0.000000e+00> : vector<8x32xf32>
    %1081 = tpu.matmul %1079, %1080, %cst_480 {dimension_numbers = #tpu.dot_dimension_numbers<[1], [0], [0], [1], [0, 0, 1, 1], [], []>} : vector<8x8xf32>, vector<8x32xf32>, vector<8x32xf32> -> vector<8x32xf32>
    %c8_481 = arith.constant 8 : index
    %c32_482 = arith.constant 32 : index
    %1082 = vector.load %arg42[%c8_481, %c32_482] : memref<16x128xf32, #tpu.memory_space<vmem>>, vector<8x32xf32>
    tpu.vector_store %arg42[%c8_481, %c32_482], %1081 {strides = array<i32>} : memref<16x128xf32, #tpu.memory_space<vmem>>, vector<8x32xf32>,
    %1083 = vector.extract_strided_slice %1044 {offsets = [0, 64], sizes = [8, 32], strides = [1, 1]} : vector<8x128xf32> to vector<8x32xf32>
    %1084 = vector.extract_strided_slice %1045 {offsets = [0, 64], sizes = [8, 32], strides = [1, 1]} : vector<8x128xf32> to vector<8x32xf32>
    %cst_483 = arith.constant dense<0.000000e+00> : vector<8x8xf32>
    %1085 = tpu.matmul %1083, %1084, %cst_483 {dimension_numbers = #tpu.dot_dimension_numbers<[1], [1], [0], [0], [0, 0, 1, 0], [], []>} : vector<8x32xf32>, vector<8x32xf32>, vector<8x8xf32> -> vector<8x8xf32>
    %cst_484 = arith.constant 0.176776692 : f32
    %1086 = vector.broadcast %cst_484 : f32 to vector<8x8xf32>
    %1087 = arith.mulf %1085, %1086 : vector<8x8xf32>
    %cst_485 = arith.constant dense<0xFF800000> : vector<8xf32>
    %1088 = vector.multi_reduction <maximumf>, %1087, %cst_485 [1] : vector<8x8xf32> to vector<8xf32>
    %1089 = vector.shape_cast %1088 : vector<8xf32> to vector<8x1xf32>
    %1090 = vector.broadcast %1089 : vector<8x1xf32> to vector<8x8xf32>
    %1091 = arith.subf %1087, %1090 : vector<8x8xf32>
    %1092 = math.exp %1091 : vector<8x8xf32>
    %cst_486 = arith.constant dense<0.000000e+00> : vector<8xf32>
    %1093 = vector.multi_reduction <add>, %1092, %cst_486 [1] : vector<8x8xf32> to vector<8xf32>
    %1094 = vector.shape_cast %1093 : vector<8xf32> to vector<8x1xf32>
    %1095 = tpu.reciprocal %1094 {approx = true} : vector<8x1xf32> -> vector<8x1xf32>
    %1096 = vector.broadcast %1095 : vector<8x1xf32> to vector<8x8xf32>
    %1097 = arith.mulf %1092, %1096 : vector<8x8xf32>
    %1098 = vector.extract_strided_slice %1046 {offsets = [0, 64], sizes = [8, 32], strides = [1, 1]} : vector<8x128xf32> to vector<8x32xf32>
    %cst_487 = arith.constant dense<0.000000e+00> : vector<8x32xf32>
    %1099 = tpu.matmul %1097, %1098, %cst_487 {dimension_numbers = #tpu.dot_dimension_numbers<[1], [0], [0], [1], [0, 0, 1, 1], [], []>} : vector<8x8xf32>, vector<8x32xf32>, vector<8x32xf32> -> vector<8x32xf32>
    %c8_488 = arith.constant 8 : index
    %c64_489 = arith.constant 64 : index
    %1100 = vector.load %arg42[%c8_488, %c64_489] : memref<16x128xf32, #tpu.memory_space<vmem>>, vector<8x32xf32>
    tpu.vector_store %arg42[%c8_488, %c64_489], %1099 {strides = array<i32>} : memref<16x128xf32, #tpu.memory_space<vmem>>, vector<8x32xf32>,
    %1101 = vector.extract_strided_slice %1044 {offsets = [0, 96], sizes = [8, 32], strides = [1, 1]} : vector<8x128xf32> to vector<8x32xf32>
    %1102 = vector.extract_strided_slice %1045 {offsets = [0, 96], sizes = [8, 32], strides = [1, 1]} : vector<8x128xf32> to vector<8x32xf32>
    %cst_490 = arith.constant dense<0.000000e+00> : vector<8x8xf32>
    %1103 = tpu.matmul %1101, %1102, %cst_490 {dimension_numbers = #tpu.dot_dimension_numbers<[1], [1], [0], [0], [0, 0, 1, 0], [], []>} : vector<8x32xf32>, vector<8x32xf32>, vector<8x8xf32> -> vector<8x8xf32>
    %cst_491 = arith.constant 0.176776692 : f32
    %1104 = vector.broadcast %cst_491 : f32 to vector<8x8xf32>
    %1105 = arith.mulf %1103, %1104 : vector<8x8xf32>
    %cst_492 = arith.constant dense<0xFF800000> : vector<8xf32>
    %1106 = vector.multi_reduction <maximumf>, %1105, %cst_492 [1] : vector<8x8xf32> to vector<8xf32>
    %1107 = vector.shape_cast %1106 : vector<8xf32> to vector<8x1xf32>
    %1108 = vector.broadcast %1107 : vector<8x1xf32> to vector<8x8xf32>
    %1109 = arith.subf %1105, %1108 : vector<8x8xf32>
    %1110 = math.exp %1109 : vector<8x8xf32>
    %cst_493 = arith.constant dense<0.000000e+00> : vector<8xf32>
    %1111 = vector.multi_reduction <add>, %1110, %cst_493 [1] : vector<8x8xf32> to vector<8xf32>
    %1112 = vector.shape_cast %1111 : vector<8xf32> to vector<8x1xf32>
    %1113 = tpu.reciprocal %1112 {approx = true} : vector<8x1xf32> -> vector<8x1xf32>
    %1114 = vector.broadcast %1113 : vector<8x1xf32> to vector<8x8xf32>
    %1115 = arith.mulf %1110, %1114 : vector<8x8xf32>
    %1116 = vector.extract_strided_slice %1046 {offsets = [0, 96], sizes = [8, 32], strides = [1, 1]} : vector<8x128xf32> to vector<8x32xf32>
    %cst_494 = arith.constant dense<0.000000e+00> : vector<8x32xf32>
    %1117 = tpu.matmul %1115, %1116, %cst_494 {dimension_numbers = #tpu.dot_dimension_numbers<[1], [0], [0], [1], [0, 0, 1, 1], [], []>} : vector<8x8xf32>, vector<8x32xf32>, vector<8x32xf32> -> vector<8x32xf32>
    %c8_495 = arith.constant 8 : index
    %c96_496 = arith.constant 96 : index
    %1118 = vector.load %arg42[%c8_495, %c96_496] : memref<16x128xf32, #tpu.memory_space<vmem>>, vector<8x32xf32>
    tpu.vector_store %arg42[%c8_495, %c96_496], %1117 {strides = array<i32>} : memref<16x128xf32, #tpu.memory_space<vmem>>, vector<8x32xf32>,
    %c0_497 = arith.constant 0 : index
    %c0_498 = arith.constant 0 : index
    %1119 = vector.load %arg42[%c0_497, %c0_498] : memref<16x128xf32, #tpu.memory_space<vmem>>, vector<16x128xf32>
    %cst_499 = arith.constant dense<0.000000e+00> : vector<16x128xf32>
    %1120 = tpu.matmul %1119, %966, %cst_499 {dimension_numbers = #tpu.dot_dimension_numbers<[1], [0], [0], [1], [0, 0, 1, 1], [], []>} : vector<16x128xf32>, vector<128x128xf32>, vector<16x128xf32> -> vector<16x128xf32>
    %1121 = vector.broadcast %968 : vector<1x128xf32> to vector<16x128xf32>
    %1122 = arith.addf %1120, %1121 : vector<16x128xf32>
    %1123 = arith.addf %954, %1122 : vector<16x128xf32>
    %c1_500 = arith.constant 1 : index
    %c0_501 = arith.constant 0 : index
    %c0_502 = arith.constant 0 : index
    %1124 = vector.load %arg23[%c1_500, %c0_501, %c0_502] : memref<2x1x128xf32, #tpu.memory_space<vmem>>, vector<1x1x128xf32>
    %1125 = vector.shape_cast %1124 : vector<1x1x128xf32> to vector<1x128xf32>
    %c1_503 = arith.constant 1 : index
    %c0_504 = arith.constant 0 : index
    %c0_505 = arith.constant 0 : index
    %1126 = vector.load %arg24[%c1_503, %c0_504, %c0_505] : memref<2x1x128xf32, #tpu.memory_space<vmem>>, vector<1x1x128xf32>
    %1127 = vector.shape_cast %1126 : vector<1x1x128xf32> to vector<1x128xf32>
    %cst_506 = arith.constant dense<0.000000e+00> : vector<16xf32>
    %1128 = vector.multi_reduction <add>, %1123, %cst_506 [1] : vector<16x128xf32> to vector<16xf32>
    %1129 = vector.shape_cast %1128 : vector<16xf32> to vector<16x1xf32>
    %cst_507 = arith.constant 1.280000e+02 : f32
    %1130 = vector.broadcast %cst_507 : f32 to vector<16x1xf32>
    %1131 = arith.divf %1129, %1130 : vector<16x1xf32>
    %1132 = vector.broadcast %1131 : vector<16x1xf32> to vector<16x128xf32>
    %1133 = arith.subf %1123, %1132 : vector<16x128xf32>
    %1134 = arith.mulf %1133, %1133 : vector<16x128xf32>
    %cst_508 = arith.constant dense<0.000000e+00> : vector<16xf32>
    %1135 = vector.multi_reduction <add>, %1134, %cst_508 [1] : vector<16x128xf32> to vector<16xf32>
    %1136 = vector.shape_cast %1135 : vector<16xf32> to vector<16x1xf32>
    %cst_509 = arith.constant 1.280000e+02 : f32
    %1137 = vector.broadcast %cst_509 : f32 to vector<16x1xf32>
    %1138 = arith.divf %1136, %1137 : vector<16x1xf32>
    %cst_510 = arith.constant 9.99999974E-6 : f32
    %1139 = vector.broadcast %cst_510 : f32 to vector<16x1xf32>
    %1140 = arith.addf %1138, %1139 : vector<16x1xf32>
    %1141 = math.rsqrt %1140 : vector<16x1xf32>
    %1142 = vector.broadcast %1141 : vector<16x1xf32> to vector<16x128xf32>
    %1143 = arith.mulf %1133, %1142 : vector<16x128xf32>
    %1144 = vector.broadcast %1125 : vector<1x128xf32> to vector<16x128xf32>
    %1145 = arith.mulf %1143, %1144 : vector<16x128xf32>
    %1146 = vector.broadcast %1127 : vector<1x128xf32> to vector<16x128xf32>
    %1147 = arith.addf %1145, %1146 : vector<16x128xf32>
    %c1_511 = arith.constant 1 : index
    %c0_512 = arith.constant 0 : index
    %c0_513 = arith.constant 0 : index
    %1148 = vector.load %arg25[%c1_511, %c0_512, %c0_513] : memref<2x128x128xf32, #tpu.memory_space<vmem>>, vector<1x128x128xf32>
    %1149 = vector.shape_cast %1148 : vector<1x128x128xf32> to vector<128x128xf32>
    %cst_514 = arith.constant dense<0.000000e+00> : vector<16x128xf32>
    %1150 = tpu.matmul %1147, %1149, %cst_514 {dimension_numbers = #tpu.dot_dimension_numbers<[1], [0], [0], [1], [0, 0, 1, 1], [], []>} : vector<16x128xf32>, vector<128x128xf32>, vector<16x128xf32> -> vector<16x128xf32>
    %c1_515 = arith.constant 1 : index
    %c0_516 = arith.constant 0 : index
    %c0_517 = arith.constant 0 : index
    %1151 = vector.load %arg26[%c1_515, %c0_516, %c0_517] : memref<2x1x128xf32, #tpu.memory_space<vmem>>, vector<1x1x128xf32>
    %1152 = vector.shape_cast %1151 : vector<1x1x128xf32> to vector<1x128xf32>
    %1153 = vector.broadcast %1152 : vector<1x128xf32> to vector<16x128xf32>
    %1154 = arith.addf %1150, %1153 : vector<16x128xf32>
    %c1_518 = arith.constant 1 : index
    %c0_519 = arith.constant 0 : index
    %c0_520 = arith.constant 0 : index
    %1155 = vector.load %arg27[%c1_518, %c0_519, %c0_520] : memref<2x128x256xf32, #tpu.memory_space<vmem>>, vector<1x128x256xf32>
    %1156 = vector.shape_cast %1155 : vector<1x128x256xf32> to vector<128x256xf32>
    %cst_521 = arith.constant dense<0.000000e+00> : vector<16x256xf32>
    %1157 = tpu.matmul %516, %1156, %cst_521 {dimension_numbers = #tpu.dot_dimension_numbers<[1], [0], [0], [1], [0, 0, 1, 1], [], []>} : vector<16x128xf32>, vector<128x256xf32>, vector<16x256xf32> -> vector<16x256xf32>
    %c1_522 = arith.constant 1 : index
    %c0_523 = arith.constant 0 : index
    %c0_524 = arith.constant 0 : index
    %1158 = vector.load %arg28[%c1_522, %c0_523, %c0_524] : memref<2x1x256xf32, #tpu.memory_space<vmem>>, vector<1x1x256xf32>
    %1159 = vector.shape_cast %1158 : vector<1x1x256xf32> to vector<1x256xf32>
    %1160 = vector.broadcast %1159 : vector<1x256xf32> to vector<16x256xf32>
    %1161 = arith.addf %1157, %1160 : vector<16x256xf32>
    %1162 = vector.extract_strided_slice %1161 {offsets = [0, 0], sizes = [16, 128], strides = [1, 1]} : vector<16x256xf32> to vector<16x128xf32>
    %1163 = vector.extract_strided_slice %1161 {offsets = [0, 128], sizes = [16, 128], strides = [1, 1]} : vector<16x256xf32> to vector<16x128xf32>
    %c1_525 = arith.constant 1 : index
    %c0_526 = arith.constant 0 : index
    %c0_527 = arith.constant 0 : index
    %1164 = vector.load %arg29[%c1_525, %c0_526, %c0_527] : memref<2x128x128xf32, #tpu.memory_space<vmem>>, vector<1x128x128xf32>
    %1165 = vector.shape_cast %1164 : vector<1x128x128xf32> to vector<128x128xf32>
    %c1_528 = arith.constant 1 : index
    %c0_529 = arith.constant 0 : index
    %c0_530 = arith.constant 0 : index
    %1166 = vector.load %arg30[%c1_528, %c0_529, %c0_530] : memref<2x1x128xf32, #tpu.memory_space<vmem>>, vector<1x1x128xf32>
    %1167 = vector.shape_cast %1166 : vector<1x1x128xf32> to vector<1x128xf32>
    %1168 = vector.extract_strided_slice %1154 {offsets = [0, 0], sizes = [8, 128], strides = [1, 1]} : vector<16x128xf32> to vector<8x128xf32>
    %1169 = vector.extract_strided_slice %1162 {offsets = [0, 0], sizes = [8, 128], strides = [1, 1]} : vector<16x128xf32> to vector<8x128xf32>
    %1170 = vector.extract_strided_slice %1163 {offsets = [0, 0], sizes = [8, 128], strides = [1, 1]} : vector<16x128xf32> to vector<8x128xf32>
    %1171 = vector.extract_strided_slice %1168 {offsets = [0, 0], sizes = [8, 32], strides = [1, 1]} : vector<8x128xf32> to vector<8x32xf32>
    %1172 = vector.extract_strided_slice %1169 {offsets = [0, 0], sizes = [8, 32], strides = [1, 1]} : vector<8x128xf32> to vector<8x32xf32>
    %cst_531 = arith.constant dense<0.000000e+00> : vector<8x8xf32>
    %1173 = tpu.matmul %1171, %1172, %cst_531 {dimension_numbers = #tpu.dot_dimension_numbers<[1], [1], [0], [0], [0, 0, 1, 0], [], []>} : vector<8x32xf32>, vector<8x32xf32>, vector<8x8xf32> -> vector<8x8xf32>
    %cst_532 = arith.constant 0.176776692 : f32
    %1174 = vector.broadcast %cst_532 : f32 to vector<8x8xf32>
    %1175 = arith.mulf %1173, %1174 : vector<8x8xf32>
    %cst_533 = arith.constant dense<0xFF800000> : vector<8xf32>
    %1176 = vector.multi_reduction <maximumf>, %1175, %cst_533 [1] : vector<8x8xf32> to vector<8xf32>
    %1177 = vector.shape_cast %1176 : vector<8xf32> to vector<8x1xf32>
    %1178 = vector.broadcast %1177 : vector<8x1xf32> to vector<8x8xf32>
    %1179 = arith.subf %1175, %1178 : vector<8x8xf32>
    %1180 = math.exp %1179 : vector<8x8xf32>
    %cst_534 = arith.constant dense<0.000000e+00> : vector<8xf32>
    %1181 = vector.multi_reduction <add>, %1180, %cst_534 [1] : vector<8x8xf32> to vector<8xf32>
    %1182 = vector.shape_cast %1181 : vector<8xf32> to vector<8x1xf32>
    %1183 = tpu.reciprocal %1182 {approx = true} : vector<8x1xf32> -> vector<8x1xf32>
    %1184 = vector.broadcast %1183 : vector<8x1xf32> to vector<8x8xf32>
    %1185 = arith.mulf %1180, %1184 : vector<8x8xf32>
    %1186 = vector.extract_strided_slice %1170 {offsets = [0, 0], sizes = [8, 32], strides = [1, 1]} : vector<8x128xf32> to vector<8x32xf32>
    %cst_535 = arith.constant dense<0.000000e+00> : vector<8x32xf32>
    %1187 = tpu.matmul %1185, %1186, %cst_535 {dimension_numbers = #tpu.dot_dimension_numbers<[1], [0], [0], [1], [0, 0, 1, 1], [], []>} : vector<8x8xf32>, vector<8x32xf32>, vector<8x32xf32> -> vector<8x32xf32>
    %c0_536 = arith.constant 0 : index
    %c0_537 = arith.constant 0 : index
    %1188 = vector.load %arg42[%c0_536, %c0_537] : memref<16x128xf32, #tpu.memory_space<vmem>>, vector<8x32xf32>
    tpu.vector_store %arg42[%c0_536, %c0_537], %1187 {strides = array<i32>} : memref<16x128xf32, #tpu.memory_space<vmem>>, vector<8x32xf32>,
    %1189 = vector.extract_strided_slice %1168 {offsets = [0, 32], sizes = [8, 32], strides = [1, 1]} : vector<8x128xf32> to vector<8x32xf32>
    %1190 = vector.extract_strided_slice %1169 {offsets = [0, 32], sizes = [8, 32], strides = [1, 1]} : vector<8x128xf32> to vector<8x32xf32>
    %cst_538 = arith.constant dense<0.000000e+00> : vector<8x8xf32>
    %1191 = tpu.matmul %1189, %1190, %cst_538 {dimension_numbers = #tpu.dot_dimension_numbers<[1], [1], [0], [0], [0, 0, 1, 0], [], []>} : vector<8x32xf32>, vector<8x32xf32>, vector<8x8xf32> -> vector<8x8xf32>
    %cst_539 = arith.constant 0.176776692 : f32
    %1192 = vector.broadcast %cst_539 : f32 to vector<8x8xf32>
    %1193 = arith.mulf %1191, %1192 : vector<8x8xf32>
    %cst_540 = arith.constant dense<0xFF800000> : vector<8xf32>
    %1194 = vector.multi_reduction <maximumf>, %1193, %cst_540 [1] : vector<8x8xf32> to vector<8xf32>
    %1195 = vector.shape_cast %1194 : vector<8xf32> to vector<8x1xf32>
    %1196 = vector.broadcast %1195 : vector<8x1xf32> to vector<8x8xf32>
    %1197 = arith.subf %1193, %1196 : vector<8x8xf32>
    %1198 = math.exp %1197 : vector<8x8xf32>
    %cst_541 = arith.constant dense<0.000000e+00> : vector<8xf32>
    %1199 = vector.multi_reduction <add>, %1198, %cst_541 [1] : vector<8x8xf32> to vector<8xf32>
    %1200 = vector.shape_cast %1199 : vector<8xf32> to vector<8x1xf32>
    %1201 = tpu.reciprocal %1200 {approx = true} : vector<8x1xf32> -> vector<8x1xf32>
    %1202 = vector.broadcast %1201 : vector<8x1xf32> to vector<8x8xf32>
    %1203 = arith.mulf %1198, %1202 : vector<8x8xf32>
    %1204 = vector.extract_strided_slice %1170 {offsets = [0, 32], sizes = [8, 32], strides = [1, 1]} : vector<8x128xf32> to vector<8x32xf32>
    %cst_542 = arith.constant dense<0.000000e+00> : vector<8x32xf32>
    %1205 = tpu.matmul %1203, %1204, %cst_542 {dimension_numbers = #tpu.dot_dimension_numbers<[1], [0], [0], [1], [0, 0, 1, 1], [], []>} : vector<8x8xf32>, vector<8x32xf32>, vector<8x32xf32> -> vector<8x32xf32>
    %c0_543 = arith.constant 0 : index
    %c32_544 = arith.constant 32 : index
    %1206 = vector.load %arg42[%c0_543, %c32_544] : memref<16x128xf32, #tpu.memory_space<vmem>>, vector<8x32xf32>
    tpu.vector_store %arg42[%c0_543, %c32_544], %1205 {strides = array<i32>} : memref<16x128xf32, #tpu.memory_space<vmem>>, vector<8x32xf32>,
    %1207 = vector.extract_strided_slice %1168 {offsets = [0, 64], sizes = [8, 32], strides = [1, 1]} : vector<8x128xf32> to vector<8x32xf32>
    %1208 = vector.extract_strided_slice %1169 {offsets = [0, 64], sizes = [8, 32], strides = [1, 1]} : vector<8x128xf32> to vector<8x32xf32>
    %cst_545 = arith.constant dense<0.000000e+00> : vector<8x8xf32>
    %1209 = tpu.matmul %1207, %1208, %cst_545 {dimension_numbers = #tpu.dot_dimension_numbers<[1], [1], [0], [0], [0, 0, 1, 0], [], []>} : vector<8x32xf32>, vector<8x32xf32>, vector<8x8xf32> -> vector<8x8xf32>
    %cst_546 = arith.constant 0.176776692 : f32
    %1210 = vector.broadcast %cst_546 : f32 to vector<8x8xf32>
    %1211 = arith.mulf %1209, %1210 : vector<8x8xf32>
    %cst_547 = arith.constant dense<0xFF800000> : vector<8xf32>
    %1212 = vector.multi_reduction <maximumf>, %1211, %cst_547 [1] : vector<8x8xf32> to vector<8xf32>
    %1213 = vector.shape_cast %1212 : vector<8xf32> to vector<8x1xf32>
    %1214 = vector.broadcast %1213 : vector<8x1xf32> to vector<8x8xf32>
    %1215 = arith.subf %1211, %1214 : vector<8x8xf32>
    %1216 = math.exp %1215 : vector<8x8xf32>
    %cst_548 = arith.constant dense<0.000000e+00> : vector<8xf32>
    %1217 = vector.multi_reduction <add>, %1216, %cst_548 [1] : vector<8x8xf32> to vector<8xf32>
    %1218 = vector.shape_cast %1217 : vector<8xf32> to vector<8x1xf32>
    %1219 = tpu.reciprocal %1218 {approx = true} : vector<8x1xf32> -> vector<8x1xf32>
    %1220 = vector.broadcast %1219 : vector<8x1xf32> to vector<8x8xf32>
    %1221 = arith.mulf %1216, %1220 : vector<8x8xf32>
    %1222 = vector.extract_strided_slice %1170 {offsets = [0, 64], sizes = [8, 32], strides = [1, 1]} : vector<8x128xf32> to vector<8x32xf32>
    %cst_549 = arith.constant dense<0.000000e+00> : vector<8x32xf32>
    %1223 = tpu.matmul %1221, %1222, %cst_549 {dimension_numbers = #tpu.dot_dimension_numbers<[1], [0], [0], [1], [0, 0, 1, 1], [], []>} : vector<8x8xf32>, vector<8x32xf32>, vector<8x32xf32> -> vector<8x32xf32>
    %c0_550 = arith.constant 0 : index
    %c64_551 = arith.constant 64 : index
    %1224 = vector.load %arg42[%c0_550, %c64_551] : memref<16x128xf32, #tpu.memory_space<vmem>>, vector<8x32xf32>
    tpu.vector_store %arg42[%c0_550, %c64_551], %1223 {strides = array<i32>} : memref<16x128xf32, #tpu.memory_space<vmem>>, vector<8x32xf32>,
    %1225 = vector.extract_strided_slice %1168 {offsets = [0, 96], sizes = [8, 32], strides = [1, 1]} : vector<8x128xf32> to vector<8x32xf32>
    %1226 = vector.extract_strided_slice %1169 {offsets = [0, 96], sizes = [8, 32], strides = [1, 1]} : vector<8x128xf32> to vector<8x32xf32>
    %cst_552 = arith.constant dense<0.000000e+00> : vector<8x8xf32>
    %1227 = tpu.matmul %1225, %1226, %cst_552 {dimension_numbers = #tpu.dot_dimension_numbers<[1], [1], [0], [0], [0, 0, 1, 0], [], []>} : vector<8x32xf32>, vector<8x32xf32>, vector<8x8xf32> -> vector<8x8xf32>
    %cst_553 = arith.constant 0.176776692 : f32
    %1228 = vector.broadcast %cst_553 : f32 to vector<8x8xf32>
    %1229 = arith.mulf %1227, %1228 : vector<8x8xf32>
    %cst_554 = arith.constant dense<0xFF800000> : vector<8xf32>
    %1230 = vector.multi_reduction <maximumf>, %1229, %cst_554 [1] : vector<8x8xf32> to vector<8xf32>
    %1231 = vector.shape_cast %1230 : vector<8xf32> to vector<8x1xf32>
    %1232 = vector.broadcast %1231 : vector<8x1xf32> to vector<8x8xf32>
    %1233 = arith.subf %1229, %1232 : vector<8x8xf32>
    %1234 = math.exp %1233 : vector<8x8xf32>
    %cst_555 = arith.constant dense<0.000000e+00> : vector<8xf32>
    %1235 = vector.multi_reduction <add>, %1234, %cst_555 [1] : vector<8x8xf32> to vector<8xf32>
    %1236 = vector.shape_cast %1235 : vector<8xf32> to vector<8x1xf32>
    %1237 = tpu.reciprocal %1236 {approx = true} : vector<8x1xf32> -> vector<8x1xf32>
    %1238 = vector.broadcast %1237 : vector<8x1xf32> to vector<8x8xf32>
    %1239 = arith.mulf %1234, %1238 : vector<8x8xf32>
    %1240 = vector.extract_strided_slice %1170 {offsets = [0, 96], sizes = [8, 32], strides = [1, 1]} : vector<8x128xf32> to vector<8x32xf32>
    %cst_556 = arith.constant dense<0.000000e+00> : vector<8x32xf32>
    %1241 = tpu.matmul %1239, %1240, %cst_556 {dimension_numbers = #tpu.dot_dimension_numbers<[1], [0], [0], [1], [0, 0, 1, 1], [], []>} : vector<8x8xf32>, vector<8x32xf32>, vector<8x32xf32> -> vector<8x32xf32>
    %c0_557 = arith.constant 0 : index
    %c96_558 = arith.constant 96 : index
    %1242 = vector.load %arg42[%c0_557, %c96_558] : memref<16x128xf32, #tpu.memory_space<vmem>>, vector<8x32xf32>
    tpu.vector_store %arg42[%c0_557, %c96_558], %1241 {strides = array<i32>} : memref<16x128xf32, #tpu.memory_space<vmem>>, vector<8x32xf32>,
    %1243 = vector.extract_strided_slice %1154 {offsets = [8, 0], sizes = [8, 128], strides = [1, 1]} : vector<16x128xf32> to vector<8x128xf32>
    %1244 = vector.extract_strided_slice %1162 {offsets = [8, 0], sizes = [8, 128], strides = [1, 1]} : vector<16x128xf32> to vector<8x128xf32>
    %1245 = vector.extract_strided_slice %1163 {offsets = [8, 0], sizes = [8, 128], strides = [1, 1]} : vector<16x128xf32> to vector<8x128xf32>
    %1246 = vector.extract_strided_slice %1243 {offsets = [0, 0], sizes = [8, 32], strides = [1, 1]} : vector<8x128xf32> to vector<8x32xf32>
    %1247 = vector.extract_strided_slice %1244 {offsets = [0, 0], sizes = [8, 32], strides = [1, 1]} : vector<8x128xf32> to vector<8x32xf32>
    %cst_559 = arith.constant dense<0.000000e+00> : vector<8x8xf32>
    %1248 = tpu.matmul %1246, %1247, %cst_559 {dimension_numbers = #tpu.dot_dimension_numbers<[1], [1], [0], [0], [0, 0, 1, 0], [], []>} : vector<8x32xf32>, vector<8x32xf32>, vector<8x8xf32> -> vector<8x8xf32>
    %cst_560 = arith.constant 0.176776692 : f32
    %1249 = vector.broadcast %cst_560 : f32 to vector<8x8xf32>
    %1250 = arith.mulf %1248, %1249 : vector<8x8xf32>
    %cst_561 = arith.constant dense<0xFF800000> : vector<8xf32>
    %1251 = vector.multi_reduction <maximumf>, %1250, %cst_561 [1] : vector<8x8xf32> to vector<8xf32>
    %1252 = vector.shape_cast %1251 : vector<8xf32> to vector<8x1xf32>
    %1253 = vector.broadcast %1252 : vector<8x1xf32> to vector<8x8xf32>
    %1254 = arith.subf %1250, %1253 : vector<8x8xf32>
    %1255 = math.exp %1254 : vector<8x8xf32>
    %cst_562 = arith.constant dense<0.000000e+00> : vector<8xf32>
    %1256 = vector.multi_reduction <add>, %1255, %cst_562 [1] : vector<8x8xf32> to vector<8xf32>
    %1257 = vector.shape_cast %1256 : vector<8xf32> to vector<8x1xf32>
    %1258 = tpu.reciprocal %1257 {approx = true} : vector<8x1xf32> -> vector<8x1xf32>
    %1259 = vector.broadcast %1258 : vector<8x1xf32> to vector<8x8xf32>
    %1260 = arith.mulf %1255, %1259 : vector<8x8xf32>
    %1261 = vector.extract_strided_slice %1245 {offsets = [0, 0], sizes = [8, 32], strides = [1, 1]} : vector<8x128xf32> to vector<8x32xf32>
    %cst_563 = arith.constant dense<0.000000e+00> : vector<8x32xf32>
    %1262 = tpu.matmul %1260, %1261, %cst_563 {dimension_numbers = #tpu.dot_dimension_numbers<[1], [0], [0], [1], [0, 0, 1, 1], [], []>} : vector<8x8xf32>, vector<8x32xf32>, vector<8x32xf32> -> vector<8x32xf32>
    %c8_564 = arith.constant 8 : index
    %c0_565 = arith.constant 0 : index
    %1263 = vector.load %arg42[%c8_564, %c0_565] : memref<16x128xf32, #tpu.memory_space<vmem>>, vector<8x32xf32>
    tpu.vector_store %arg42[%c8_564, %c0_565], %1262 {strides = array<i32>} : memref<16x128xf32, #tpu.memory_space<vmem>>, vector<8x32xf32>,
    %1264 = vector.extract_strided_slice %1243 {offsets = [0, 32], sizes = [8, 32], strides = [1, 1]} : vector<8x128xf32> to vector<8x32xf32>
    %1265 = vector.extract_strided_slice %1244 {offsets = [0, 32], sizes = [8, 32], strides = [1, 1]} : vector<8x128xf32> to vector<8x32xf32>
    %cst_566 = arith.constant dense<0.000000e+00> : vector<8x8xf32>
    %1266 = tpu.matmul %1264, %1265, %cst_566 {dimension_numbers = #tpu.dot_dimension_numbers<[1], [1], [0], [0], [0, 0, 1, 0], [], []>} : vector<8x32xf32>, vector<8x32xf32>, vector<8x8xf32> -> vector<8x8xf32>
    %cst_567 = arith.constant 0.176776692 : f32
    %1267 = vector.broadcast %cst_567 : f32 to vector<8x8xf32>
    %1268 = arith.mulf %1266, %1267 : vector<8x8xf32>
    %cst_568 = arith.constant dense<0xFF800000> : vector<8xf32>
    %1269 = vector.multi_reduction <maximumf>, %1268, %cst_568 [1] : vector<8x8xf32> to vector<8xf32>
    %1270 = vector.shape_cast %1269 : vector<8xf32> to vector<8x1xf32>
    %1271 = vector.broadcast %1270 : vector<8x1xf32> to vector<8x8xf32>
    %1272 = arith.subf %1268, %1271 : vector<8x8xf32>
    %1273 = math.exp %1272 : vector<8x8xf32>
    %cst_569 = arith.constant dense<0.000000e+00> : vector<8xf32>
    %1274 = vector.multi_reduction <add>, %1273, %cst_569 [1] : vector<8x8xf32> to vector<8xf32>
    %1275 = vector.shape_cast %1274 : vector<8xf32> to vector<8x1xf32>
    %1276 = tpu.reciprocal %1275 {approx = true} : vector<8x1xf32> -> vector<8x1xf32>
    %1277 = vector.broadcast %1276 : vector<8x1xf32> to vector<8x8xf32>
    %1278 = arith.mulf %1273, %1277 : vector<8x8xf32>
    %1279 = vector.extract_strided_slice %1245 {offsets = [0, 32], sizes = [8, 32], strides = [1, 1]} : vector<8x128xf32> to vector<8x32xf32>
    %cst_570 = arith.constant dense<0.000000e+00> : vector<8x32xf32>
    %1280 = tpu.matmul %1278, %1279, %cst_570 {dimension_numbers = #tpu.dot_dimension_numbers<[1], [0], [0], [1], [0, 0, 1, 1], [], []>} : vector<8x8xf32>, vector<8x32xf32>, vector<8x32xf32> -> vector<8x32xf32>
    %c8_571 = arith.constant 8 : index
    %c32_572 = arith.constant 32 : index
    %1281 = vector.load %arg42[%c8_571, %c32_572] : memref<16x128xf32, #tpu.memory_space<vmem>>, vector<8x32xf32>
    tpu.vector_store %arg42[%c8_571, %c32_572], %1280 {strides = array<i32>} : memref<16x128xf32, #tpu.memory_space<vmem>>, vector<8x32xf32>,
    %1282 = vector.extract_strided_slice %1243 {offsets = [0, 64], sizes = [8, 32], strides = [1, 1]} : vector<8x128xf32> to vector<8x32xf32>
    %1283 = vector.extract_strided_slice %1244 {offsets = [0, 64], sizes = [8, 32], strides = [1, 1]} : vector<8x128xf32> to vector<8x32xf32>
    %cst_573 = arith.constant dense<0.000000e+00> : vector<8x8xf32>
    %1284 = tpu.matmul %1282, %1283, %cst_573 {dimension_numbers = #tpu.dot_dimension_numbers<[1], [1], [0], [0], [0, 0, 1, 0], [], []>} : vector<8x32xf32>, vector<8x32xf32>, vector<8x8xf32> -> vector<8x8xf32>
    %cst_574 = arith.constant 0.176776692 : f32
    %1285 = vector.broadcast %cst_574 : f32 to vector<8x8xf32>
    %1286 = arith.mulf %1284, %1285 : vector<8x8xf32>
    %cst_575 = arith.constant dense<0xFF800000> : vector<8xf32>
    %1287 = vector.multi_reduction <maximumf>, %1286, %cst_575 [1] : vector<8x8xf32> to vector<8xf32>
    %1288 = vector.shape_cast %1287 : vector<8xf32> to vector<8x1xf32>
    %1289 = vector.broadcast %1288 : vector<8x1xf32> to vector<8x8xf32>
    %1290 = arith.subf %1286, %1289 : vector<8x8xf32>
    %1291 = math.exp %1290 : vector<8x8xf32>
    %cst_576 = arith.constant dense<0.000000e+00> : vector<8xf32>
    %1292 = vector.multi_reduction <add>, %1291, %cst_576 [1] : vector<8x8xf32> to vector<8xf32>
    %1293 = vector.shape_cast %1292 : vector<8xf32> to vector<8x1xf32>
    %1294 = tpu.reciprocal %1293 {approx = true} : vector<8x1xf32> -> vector<8x1xf32>
    %1295 = vector.broadcast %1294 : vector<8x1xf32> to vector<8x8xf32>
    %1296 = arith.mulf %1291, %1295 : vector<8x8xf32>
    %1297 = vector.extract_strided_slice %1245 {offsets = [0, 64], sizes = [8, 32], strides = [1, 1]} : vector<8x128xf32> to vector<8x32xf32>
    %cst_577 = arith.constant dense<0.000000e+00> : vector<8x32xf32>
    %1298 = tpu.matmul %1296, %1297, %cst_577 {dimension_numbers = #tpu.dot_dimension_numbers<[1], [0], [0], [1], [0, 0, 1, 1], [], []>} : vector<8x8xf32>, vector<8x32xf32>, vector<8x32xf32> -> vector<8x32xf32>
    %c8_578 = arith.constant 8 : index
    %c64_579 = arith.constant 64 : index
    %1299 = vector.load %arg42[%c8_578, %c64_579] : memref<16x128xf32, #tpu.memory_space<vmem>>, vector<8x32xf32>
    tpu.vector_store %arg42[%c8_578, %c64_579], %1298 {strides = array<i32>} : memref<16x128xf32, #tpu.memory_space<vmem>>, vector<8x32xf32>,
    %1300 = vector.extract_strided_slice %1243 {offsets = [0, 96], sizes = [8, 32], strides = [1, 1]} : vector<8x128xf32> to vector<8x32xf32>
    %1301 = vector.extract_strided_slice %1244 {offsets = [0, 96], sizes = [8, 32], strides = [1, 1]} : vector<8x128xf32> to vector<8x32xf32>
    %cst_580 = arith.constant dense<0.000000e+00> : vector<8x8xf32>
    %1302 = tpu.matmul %1300, %1301, %cst_580 {dimension_numbers = #tpu.dot_dimension_numbers<[1], [1], [0], [0], [0, 0, 1, 0], [], []>} : vector<8x32xf32>, vector<8x32xf32>, vector<8x8xf32> -> vector<8x8xf32>
    %cst_581 = arith.constant 0.176776692 : f32
    %1303 = vector.broadcast %cst_581 : f32 to vector<8x8xf32>
    %1304 = arith.mulf %1302, %1303 : vector<8x8xf32>
    %cst_582 = arith.constant dense<0xFF800000> : vector<8xf32>
    %1305 = vector.multi_reduction <maximumf>, %1304, %cst_582 [1] : vector<8x8xf32> to vector<8xf32>
    %1306 = vector.shape_cast %1305 : vector<8xf32> to vector<8x1xf32>
    %1307 = vector.broadcast %1306 : vector<8x1xf32> to vector<8x8xf32>
    %1308 = arith.subf %1304, %1307 : vector<8x8xf32>
    %1309 = math.exp %1308 : vector<8x8xf32>
    %cst_583 = arith.constant dense<0.000000e+00> : vector<8xf32>
    %1310 = vector.multi_reduction <add>, %1309, %cst_583 [1] : vector<8x8xf32> to vector<8xf32>
    %1311 = vector.shape_cast %1310 : vector<8xf32> to vector<8x1xf32>
    %1312 = tpu.reciprocal %1311 {approx = true} : vector<8x1xf32> -> vector<8x1xf32>
    %1313 = vector.broadcast %1312 : vector<8x1xf32> to vector<8x8xf32>
    %1314 = arith.mulf %1309, %1313 : vector<8x8xf32>
    %1315 = vector.extract_strided_slice %1245 {offsets = [0, 96], sizes = [8, 32], strides = [1, 1]} : vector<8x128xf32> to vector<8x32xf32>
    %cst_584 = arith.constant dense<0.000000e+00> : vector<8x32xf32>
    %1316 = tpu.matmul %1314, %1315, %cst_584 {dimension_numbers = #tpu.dot_dimension_numbers<[1], [0], [0], [1], [0, 0, 1, 1], [], []>} : vector<8x8xf32>, vector<8x32xf32>, vector<8x32xf32> -> vector<8x32xf32>
    %c8_585 = arith.constant 8 : index
    %c96_586 = arith.constant 96 : index
    %1317 = vector.load %arg42[%c8_585, %c96_586] : memref<16x128xf32, #tpu.memory_space<vmem>>, vector<8x32xf32>
    tpu.vector_store %arg42[%c8_585, %c96_586], %1316 {strides = array<i32>} : memref<16x128xf32, #tpu.memory_space<vmem>>, vector<8x32xf32>,
    %c0_587 = arith.constant 0 : index
    %c0_588 = arith.constant 0 : index
    %1318 = vector.load %arg42[%c0_587, %c0_588] : memref<16x128xf32, #tpu.memory_space<vmem>>, vector<16x128xf32>
    %cst_589 = arith.constant dense<0.000000e+00> : vector<16x128xf32>
    %1319 = tpu.matmul %1318, %1165, %cst_589 {dimension_numbers = #tpu.dot_dimension_numbers<[1], [0], [0], [1], [0, 0, 1, 1], [], []>} : vector<16x128xf32>, vector<128x128xf32>, vector<16x128xf32> -> vector<16x128xf32>
    %1320 = vector.broadcast %1167 : vector<1x128xf32> to vector<16x128xf32>
    %1321 = arith.addf %1319, %1320 : vector<16x128xf32>
    %1322 = arith.addf %1147, %1321 : vector<16x128xf32>
    %c1_590 = arith.constant 1 : index
    %c0_591 = arith.constant 0 : index
    %c0_592 = arith.constant 0 : index
    %1323 = vector.load %arg31[%c1_590, %c0_591, %c0_592] : memref<2x1x128xf32, #tpu.memory_space<vmem>>, vector<1x1x128xf32>
    %1324 = vector.shape_cast %1323 : vector<1x1x128xf32> to vector<1x128xf32>
    %c1_593 = arith.constant 1 : index
    %c0_594 = arith.constant 0 : index
    %c0_595 = arith.constant 0 : index
    %1325 = vector.load %arg32[%c1_593, %c0_594, %c0_595] : memref<2x1x128xf32, #tpu.memory_space<vmem>>, vector<1x1x128xf32>
    %1326 = vector.shape_cast %1325 : vector<1x1x128xf32> to vector<1x128xf32>
    %cst_596 = arith.constant dense<0.000000e+00> : vector<16xf32>
    %1327 = vector.multi_reduction <add>, %1322, %cst_596 [1] : vector<16x128xf32> to vector<16xf32>
    %1328 = vector.shape_cast %1327 : vector<16xf32> to vector<16x1xf32>
    %cst_597 = arith.constant 1.280000e+02 : f32
    %1329 = vector.broadcast %cst_597 : f32 to vector<16x1xf32>
    %1330 = arith.divf %1328, %1329 : vector<16x1xf32>
    %1331 = vector.broadcast %1330 : vector<16x1xf32> to vector<16x128xf32>
    %1332 = arith.subf %1322, %1331 : vector<16x128xf32>
    %1333 = arith.mulf %1332, %1332 : vector<16x128xf32>
    %cst_598 = arith.constant dense<0.000000e+00> : vector<16xf32>
    %1334 = vector.multi_reduction <add>, %1333, %cst_598 [1] : vector<16x128xf32> to vector<16xf32>
    %1335 = vector.shape_cast %1334 : vector<16xf32> to vector<16x1xf32>
    %cst_599 = arith.constant 1.280000e+02 : f32
    %1336 = vector.broadcast %cst_599 : f32 to vector<16x1xf32>
    %1337 = arith.divf %1335, %1336 : vector<16x1xf32>
    %cst_600 = arith.constant 9.99999974E-6 : f32
    %1338 = vector.broadcast %cst_600 : f32 to vector<16x1xf32>
    %1339 = arith.addf %1337, %1338 : vector<16x1xf32>
    %1340 = math.rsqrt %1339 : vector<16x1xf32>
    %1341 = vector.broadcast %1340 : vector<16x1xf32> to vector<16x128xf32>
    %1342 = arith.mulf %1332, %1341 : vector<16x128xf32>
    %1343 = vector.broadcast %1324 : vector<1x128xf32> to vector<16x128xf32>
    %1344 = arith.mulf %1342, %1343 : vector<16x128xf32>
    %1345 = vector.broadcast %1326 : vector<1x128xf32> to vector<16x128xf32>
    %1346 = arith.addf %1344, %1345 : vector<16x128xf32>
    %c1_601 = arith.constant 1 : index
    %c0_602 = arith.constant 0 : index
    %c0_603 = arith.constant 0 : index
    %1347 = vector.load %arg33[%c1_601, %c0_602, %c0_603] : memref<2x128x128xf32, #tpu.memory_space<vmem>>, vector<1x128x128xf32>
    %1348 = vector.shape_cast %1347 : vector<1x128x128xf32> to vector<128x128xf32>
    %cst_604 = arith.constant dense<0.000000e+00> : vector<16x128xf32>
    %1349 = tpu.matmul %1346, %1348, %cst_604 {dimension_numbers = #tpu.dot_dimension_numbers<[1], [0], [0], [1], [0, 0, 1, 1], [], []>} : vector<16x128xf32>, vector<128x128xf32>, vector<16x128xf32> -> vector<16x128xf32>
    %c1_605 = arith.constant 1 : index
    %c0_606 = arith.constant 0 : index
    %c0_607 = arith.constant 0 : index
    %1350 = vector.load %arg34[%c1_605, %c0_606, %c0_607] : memref<2x1x128xf32, #tpu.memory_space<vmem>>, vector<1x1x128xf32>
    %1351 = vector.shape_cast %1350 : vector<1x1x128xf32> to vector<1x128xf32>
    %1352 = vector.broadcast %1351 : vector<1x128xf32> to vector<16x128xf32>
    %1353 = arith.addf %1349, %1352 : vector<16x128xf32>
    %cst_608 = arith.constant 0.000000e+00 : f32
    %1354 = vector.broadcast %cst_608 : f32 to vector<16x128xf32>
    %1355 = arith.maximumf %1353, %1354 : vector<16x128xf32>
    %c1_609 = arith.constant 1 : index
    %c0_610 = arith.constant 0 : index
    %c0_611 = arith.constant 0 : index
    %1356 = vector.load %arg35[%c1_609, %c0_610, %c0_611] : memref<2x128x128xf32, #tpu.memory_space<vmem>>, vector<1x128x128xf32>
    %1357 = vector.shape_cast %1356 : vector<1x128x128xf32> to vector<128x128xf32>
    %cst_612 = arith.constant dense<0.000000e+00> : vector<16x128xf32>
    %1358 = tpu.matmul %1355, %1357, %cst_612 {dimension_numbers = #tpu.dot_dimension_numbers<[1], [0], [0], [1], [0, 0, 1, 1], [], []>} : vector<16x128xf32>, vector<128x128xf32>, vector<16x128xf32> -> vector<16x128xf32>
    %c1_613 = arith.constant 1 : index
    %c0_614 = arith.constant 0 : index
    %c0_615 = arith.constant 0 : index
    %1359 = vector.load %arg36[%c1_613, %c0_614, %c0_615] : memref<2x1x128xf32, #tpu.memory_space<vmem>>, vector<1x1x128xf32>
    %1360 = vector.shape_cast %1359 : vector<1x1x128xf32> to vector<1x128xf32>
    %1361 = vector.broadcast %1360 : vector<1x128xf32> to vector<16x128xf32>
    %1362 = arith.addf %1358, %1361 : vector<16x128xf32>
    %1363 = arith.addf %1346, %1362 : vector<16x128xf32>
    %c1_616 = arith.constant 1 : index
    %c0_617 = arith.constant 0 : index
    %c0_618 = arith.constant 0 : index
    %1364 = vector.load %arg37[%c1_616, %c0_617, %c0_618] : memref<2x1x128xf32, #tpu.memory_space<vmem>>, vector<1x1x128xf32>
    %1365 = vector.shape_cast %1364 : vector<1x1x128xf32> to vector<1x128xf32>
    %c1_619 = arith.constant 1 : index
    %c0_620 = arith.constant 0 : index
    %c0_621 = arith.constant 0 : index
    %1366 = vector.load %arg38[%c1_619, %c0_620, %c0_621] : memref<2x1x128xf32, #tpu.memory_space<vmem>>, vector<1x1x128xf32>
    %1367 = vector.shape_cast %1366 : vector<1x1x128xf32> to vector<1x128xf32>
    %cst_622 = arith.constant dense<0.000000e+00> : vector<16xf32>
    %1368 = vector.multi_reduction <add>, %1363, %cst_622 [1] : vector<16x128xf32> to vector<16xf32>
    %1369 = vector.shape_cast %1368 : vector<16xf32> to vector<16x1xf32>
    %cst_623 = arith.constant 1.280000e+02 : f32
    %1370 = vector.broadcast %cst_623 : f32 to vector<16x1xf32>
    %1371 = arith.divf %1369, %1370 : vector<16x1xf32>
    %1372 = vector.broadcast %1371 : vector<16x1xf32> to vector<16x128xf32>
    %1373 = arith.subf %1363, %1372 : vector<16x128xf32>
    %1374 = arith.mulf %1373, %1373 : vector<16x128xf32>
    %cst_624 = arith.constant dense<0.000000e+00> : vector<16xf32>
    %1375 = vector.multi_reduction <add>, %1374, %cst_624 [1] : vector<16x128xf32> to vector<16xf32>
    %1376 = vector.shape_cast %1375 : vector<16xf32> to vector<16x1xf32>
    %cst_625 = arith.constant 1.280000e+02 : f32
    %1377 = vector.broadcast %cst_625 : f32 to vector<16x1xf32>
    %1378 = arith.divf %1376, %1377 : vector<16x1xf32>
    %cst_626 = arith.constant 9.99999974E-6 : f32
    %1379 = vector.broadcast %cst_626 : f32 to vector<16x1xf32>
    %1380 = arith.addf %1378, %1379 : vector<16x1xf32>
    %1381 = math.rsqrt %1380 : vector<16x1xf32>
    %1382 = vector.broadcast %1381 : vector<16x1xf32> to vector<16x128xf32>
    %1383 = arith.mulf %1373, %1382 : vector<16x128xf32>
    %1384 = vector.broadcast %1365 : vector<1x128xf32> to vector<16x128xf32>
    %1385 = arith.mulf %1383, %1384 : vector<16x128xf32>
    %1386 = vector.broadcast %1367 : vector<1x128xf32> to vector<16x128xf32>
    %1387 = arith.addf %1385, %1386 : vector<16x128xf32>
    %c0_627 = arith.constant 0 : index
    %c0_628 = arith.constant 0 : index
    %1388 = vector.load %arg39[%c0_627, %c0_628] : memref<128x768xf32, #tpu.memory_space<vmem>>, vector<128x768xf32>
    %cst_629 = arith.constant dense<0.000000e+00> : vector<16x768xf32>
    %1389 = tpu.matmul %1387, %1388, %cst_629 {dimension_numbers = #tpu.dot_dimension_numbers<[1], [0], [0], [1], [0, 0, 1, 1], [], []>} : vector<16x128xf32>, vector<128x768xf32>, vector<16x768xf32> -> vector<16x768xf32>
    %c0_630 = arith.constant 0 : index
    %c0_631 = arith.constant 0 : index
    %1390 = vector.load %arg40[%c0_630, %c0_631] : memref<1x768xf32, #tpu.memory_space<vmem>>, vector<1x768xf32>
    %1391 = vector.broadcast %1390 : vector<1x768xf32> to vector<16x768xf32>
    %1392 = arith.addf %1389, %1391 : vector<16x768xf32>
    %c0_632 = arith.constant 0 : index
    %c0_633 = arith.constant 0 : index
    %1393 = vector.load %arg41[%c0_632, %c0_633] : memref<16x768xf32, #tpu.memory_space<vmem>>, vector<16x768xf32>
    tpu.vector_store %arg41[%c0_632, %c0_633], %1392 {strides = array<i32>} : memref<16x768xf32, #tpu.memory_space<vmem>>, vector<16x768xf32>,
    return
  }
}

</mosaic_0001>

<llo_original>
// kernel: _lambda_.1
$region0: #{_lambda_.1}
  #allocation0 [shape = 'u32[]', space=smem, size = 0x4, offset = 0x4, fixed_abs, tag = 'smem constant byte address 0x4 - core index']
  #allocation1 [shape = 'u32[72,128]{1,0:T(1,128)}', space=vmem, size = 0x9000, scoped, tag = 'internal scratch']
  #allocation2 [shape = 'f32[16,128]{1,0:T(8,128)}', space=vmem, size = 0x2000, scoped, tag = 'scratch operand']
  %s0 = inlined_call_operand.smem [shape: u32[42], index: -1, kind: input, shape index: {}]
  %s1 = sld [smem:[%s0]]
  %s2 = scalar_lea.smem %s0, 1
  %s3 = sld [smem:[%s2]]
  %s4 = scalar_lea.smem %s0, 2
  %s5 = sld [smem:[%s4]]
  %s6 = scalar_lea.smem %s0, 3
  %s7 = sld [smem:[%s6]]
  %s8 = scalar_lea.smem %s0, 4
  %s9 = sld [smem:[%s8]]
  %s10 = scalar_lea.smem %s0, 5
  %s11 = sld [smem:[%s10]]
  %s12 = scalar_lea.smem %s0, 6
  %s13 = sld [smem:[%s12]]
  %s14 = scalar_lea.smem %s0, 7
  %s15 = sld [smem:[%s14]]
  %s16 = scalar_lea.smem %s0, 8
  %s17 = sld [smem:[%s16]]
  %s18 = scalar_lea.smem %s0, 9
  %s19 = sld [smem:[%s18]]
  %s20 = scalar_lea.smem %s0, 10
  %s21 = sld [smem:[%s20]]
  %s22 = scalar_lea.smem %s0, 11
  %s23 = sld [smem:[%s22]]
  %s24 = scalar_lea.smem %s0, 12
  %s25 = sld [smem:[%s24]]
  %s26 = scalar_lea.smem %s0, 13
  %s27 = sld [smem:[%s26]]
  %s28 = scalar_lea.smem %s0, 14
  %s29 = sld [smem:[%s28]]
  %s30 = scalar_lea.smem %s0, 15
  %s31 = sld [smem:[%s30]]
  %s32 = scalar_lea.smem %s0, 16
  %s33 = sld [smem:[%s32]]
  %s34 = scalar_lea.smem %s0, 17
  %s35 = sld [smem:[%s34]]
  %s36 = scalar_lea.smem %s0, 18
  %s37 = sld [smem:[%s36]]
  %s38 = scalar_lea.smem %s0, 19
  %s39 = sld [smem:[%s38]]
  %s40 = scalar_lea.smem %s0, 20
  %s41 = sld [smem:[%s40]]
  %s42 = scalar_lea.smem %s0, 21
  %s43 = sld [smem:[%s42]]
  %s44 = scalar_lea.smem %s0, 22
  %s45 = sld [smem:[%s44]]
  %s46 = scalar_lea.smem %s0, 23
  %s47 = sld [smem:[%s46]]
  %s48 = scalar_lea.smem %s0, 24
  %s49 = sld [smem:[%s48]]
  %s50 = scalar_lea.smem %s0, 25
  %s51 = sld [smem:[%s50]]
  %s52 = scalar_lea.smem %s0, 26
  %s53 = sld [smem:[%s52]]
  %s54 = scalar_lea.smem %s0, 27
  %s55 = sld [smem:[%s54]]
  %s56 = scalar_lea.smem %s0, 28
  %s57 = sld [smem:[%s56]]
  %s58 = scalar_lea.smem %s0, 29
  %s59 = sld [smem:[%s58]]
  %s60 = scalar_lea.smem %s0, 30
  %s61 = sld [smem:[%s60]]
  %s62 = scalar_lea.smem %s0, 31
  %s63 = sld [smem:[%s62]]
  %s64 = scalar_lea.smem %s0, 32
  %s65 = sld [smem:[%s64]]
  %s66 = scalar_lea.smem %s0, 33
  %s67 = sld [smem:[%s66]]
  %s68 = scalar_lea.smem %s0, 34
  %s69 = sld [smem:[%s68]]
  %s70 = scalar_lea.smem %s0, 35
  %s71 = sld [smem:[%s70]]
  %s72 = scalar_lea.smem %s0, 36
  %s73 = sld [smem:[%s72]]
  %s74 = scalar_lea.smem %s0, 37
  %s75 = sld [smem:[%s74]]
  %s76 = scalar_lea.smem %s0, 38
  %s77 = sld [smem:[%s76]]
  %s78 = scalar_lea.smem %s0, 39
  %s79 = sld [smem:[%s78]]
  %s80 = scalar_lea.smem %s0, 40
  %s81 = sld [smem:[%s80]]
  %s82 = scalar_lea.smem %s0, 41
  %s83 = sld [smem:[%s82]]
  %s84 = sld [smem:[#allocation0]]
  $region330: #{_lambda_.1} parent=0
    _
  %s86 = ssub.s32 1, %s84
  %s87 = scalar_select 0, %s86, %s84
  $region1: #{_lambda_.1} parent=0
    #allocation3 [shape = 'u8[8192]{0}', space=vmem, size = 0x2000, scoped, tag = 'input window, operand 0, single buffered']
    #allocation4 [shape = 's32[1]{0}', space=sflag, size = 0x4, scoped, tag = 'scoped memory for _lambda_.1']
    #allocation5 [shape = 's32[1]{0}', space=sflag, size = 0x4, scoped, tag = 'scoped memory for _lambda_.1']
    #allocation6 [shape = 'u8[32768]{0}', space=vmem, size = 0x8000, scoped, tag = 'input window, operand 3, single buffered']
    #allocation7 [shape = 's32[1]{0}', space=sflag, size = 0x4, scoped, tag = 'scoped memory for _lambda_.1']
    #allocation8 [shape = 'u8[512]{0}', space=vmem, size = 0x400, scoped, tag = 'input window, operand 4, single buffered']
    #allocation9 [shape = 'u8[393216]{0}', space=vmem, size = 0x60000, scoped, tag = 'input window, operand 5, single buffered']
    #allocation10 [shape = 's32[1]{0}', space=sflag, size = 0x4, scoped, tag = 'scoped memory for _lambda_.1']
    #allocation11 [shape = 'u8[3072]{0}', space=vmem, size = 0xc00, scoped, tag = 'input window, operand 6, single buffered']
    #allocation12 [shape = 'u8[131072]{0}', space=vmem, size = 0x20000, scoped, tag = 'input window, operand 7, single buffered']
    #allocation13 [shape = 's32[1]{0}', space=sflag, size = 0x4, scoped, tag = 'scoped memory for _lambda_.1']
    #allocation14 [shape = 'u8[1024]{0}', space=vmem, size = 0x400, scoped, tag = 'input window, operand 8, single buffered']
    #allocation15 [shape = 'u8[1024]{0}', space=vmem, size = 0x400, scoped, tag = 'input window, operand 9, single buffered']
    #allocation16 [shape = 's32[1]{0}', space=sflag, size = 0x4, scoped, tag = 'scoped memory for _lambda_.1']
    #allocation17 [shape = 'u8[1024]{0}', space=vmem, size = 0x400, scoped, tag = 'input window, operand 10, single buffered']
    #allocation18 [shape = 'u8[131072]{0}', space=vmem, size = 0x20000, scoped, tag = 'input window, operand 11, single buffered']
    #allocation19 [shape = 's32[1]{0}', space=sflag, size = 0x4, scoped, tag = 'scoped memory for _lambda_.1']
    #allocation20 [shape = 'u8[1024]{0}', space=vmem, size = 0x400, scoped, tag = 'input window, operand 12, single buffered']
    #allocation21 [shape = 'u8[131072]{0}', space=vmem, size = 0x20000, scoped, tag = 'input window, operand 13, single buffered']
    #allocation22 [shape = 's32[1]{0}', space=sflag, size = 0x4, scoped, tag = 'scoped memory for _lambda_.1']
    #allocation23 [shape = 'u8[1024]{0}', space=vmem, size = 0x400, scoped, tag = 'input window, operand 14, single buffered']
    #allocation24 [shape = 'u8[1024]{0}', space=vmem, size = 0x400, scoped, tag = 'input window, operand 15, single buffered']
    #allocation25 [shape = 's32[1]{0}', space=sflag, size = 0x4, scoped, tag = 'scoped memory for _lambda_.1']
    #allocation26 [shape = 'u8[1024]{0}', space=vmem, size = 0x400, scoped, tag = 'input window, operand 16, single buffered']
    #allocation27 [shape = 'u8[65536]{0}', space=vmem, size = 0x10000, scoped, tag = 'input window, operand 17, single buffered']
    #allocation28 [shape = 's32[1]{0}', space=sflag, size = 0x4, scoped, tag = 'scoped memory for _lambda_.1']
    #allocation29 [shape = 'u8[512]{0}', space=vmem, size = 0x400, scoped, tag = 'input window, operand 18, single buffered']
    #allocation30 [shape = 'u8[393216]{0}', space=vmem, size = 0x60000, scoped, tag = 'input window, operand 19, single buffered']
    #allocation31 [shape = 's32[1]{0}', space=sflag, size = 0x4, scoped, tag = 'scoped memory for _lambda_.1']
    #allocation32 [shape = 'u8[3072]{0}', space=vmem, size = 0xc00, scoped, tag = 'input window, operand 20, single buffered']
    #allocation33 [shape = 'u8[131072]{0}', space=vmem, size = 0x20000, scoped, tag = 'input window, operand 21, single buffered']
    #allocation34 [shape = 's32[1]{0}', space=sflag, size = 0x4, scoped, tag = 'scoped memory for _lambda_.1']
    #allocation35 [shape = 'u8[1024]{0}', space=vmem, size = 0x400, scoped, tag = 'input window, operand 22, single buffered']
    #allocation36 [shape = 'u8[1024]{0}', space=vmem, size = 0x400, scoped, tag = 'input window, operand 23, single buffered']
    #allocation37 [shape = 's32[1]{0}', space=sflag, size = 0x4, scoped, tag = 'scoped memory for _lambda_.1']
    #allocation38 [shape = 'u8[1024]{0}', space=vmem, size = 0x400, scoped, tag = 'input window, operand 24, single buffered']
    #allocation39 [shape = 'u8[131072]{0}', space=vmem, size = 0x20000, scoped, tag = 'input window, operand 25, single buffered']
    #allocation40 [shape = 's32[1]{0}', space=sflag, size = 0x4, scoped, tag = 'scoped memory for _lambda_.1']
    #allocation41 [shape = 'u8[1024]{0}', space=vmem, size = 0x400, scoped, tag = 'input window, operand 26, single buffered']
    #allocation42 [shape = 'u8[262144]{0}', space=vmem, size = 0x40000, scoped, tag = 'input window, operand 27, single buffered']
    #allocation43 [shape = 's32[1]{0}', space=sflag, size = 0x4, scoped, tag = 'scoped memory for _lambda_.1']
    #allocation44 [shape = 'u8[2048]{0}', space=vmem, size = 0x800, scoped, tag = 'input window, operand 28, single buffered']
    #allocation45 [shape = 'u8[131072]{0}', space=vmem, size = 0x20000, scoped, tag = 'input window, operand 29, single buffered']
    #allocation46 [shape = 's32[1]{0}', space=sflag, size = 0x4, scoped, tag = 'scoped memory for _lambda_.1']
    #allocation47 [shape = 'u8[1024]{0}', space=vmem, size = 0x400, scoped, tag = 'input window, operand 30, single buffered']
    #allocation48 [shape = 'u8[1024]{0}', space=vmem, size = 0x400, scoped, tag = 'input window, operand 31, single buffered']
    #allocation49 [shape = 's32[1]{0}', space=sflag, size = 0x4, scoped, tag = 'scoped memory for _lambda_.1']
    #allocation50 [shape = 'u8[1024]{0}', space=vmem, size = 0x400, scoped, tag = 'input window, operand 32, single buffered']
    #allocation51 [shape = 'u8[131072]{0}', space=vmem, size = 0x20000, scoped, tag = 'input window, operand 33, single buffered']
    #allocation52 [shape = 's32[1]{0}', space=sflag, size = 0x4, scoped, tag = 'scoped memory for _lambda_.1']
    #allocation53 [shape = 'u8[1024]{0}', space=vmem, size = 0x400, scoped, tag = 'input window, operand 34, single buffered']
    #allocation54 [shape = 'u8[131072]{0}', space=vmem, size = 0x20000, scoped, tag = 'input window, operand 35, single buffered']
    #allocation55 [shape = 's32[1]{0}', space=sflag, size = 0x4, scoped, tag = 'scoped memory for _lambda_.1']
    #allocation56 [shape = 'u8[1024]{0}', space=vmem, size = 0x400, scoped, tag = 'input window, operand 36, single buffered']
    #allocation57 [shape = 'u8[1024]{0}', space=vmem, size = 0x400, scoped, tag = 'input window, operand 37, single buffered']
    #allocation58 [shape = 's32[1]{0}', space=sflag, size = 0x4, scoped, tag = 'scoped memory for _lambda_.1']
    #allocation59 [shape = 'u8[1024]{0}', space=vmem, size = 0x400, scoped, tag = 'input window, operand 38, single buffered']
    #allocation60 [shape = 'u8[393216]{0}', space=vmem, size = 0x60000, scoped, tag = 'input window, operand 39, single buffered']
    #allocation61 [shape = 's32[1]{0}', space=sflag, size = 0x4, scoped, tag = 'scoped memory for _lambda_.1']
    #allocation62 [shape = 'u8[3072]{0}', space=vmem, size = 0xc00, scoped, tag = 'input window, operand 40, single buffered']
    #allocation63 [shape = 'u8[49152]{0}', space=vmem, size = 0xc000, scoped, tag = 'output window, operand 0, single buffered']
    %88 = vsyncpa [#allocation4], 0
    %89 = vsyncpa [#allocation7], 0
    %90 = vsyncpa [#allocation10], 0
    %91 = vsyncpa [#allocation13], 0
    %92 = vsyncpa [#allocation16], 0
    %93 = vsyncpa [#allocation19], 0
    %94 = vsyncpa [#allocation22], 0
    %95 = vsyncpa [#allocation25], 0
    %96 = vsyncpa [#allocation28], 0
    %97 = vsyncpa [#allocation31], 0
    %98 = vsyncpa [#allocation34], 0
    %99 = vsyncpa [#allocation37], 0
    %100 = vsyncpa [#allocation40], 0
    %101 = vsyncpa [#allocation43], 0
    %102 = vsyncpa [#allocation46], 0
    %103 = vsyncpa [#allocation49], 0
    %104 = vsyncpa [#allocation52], 0
    %105 = vsyncpa [#allocation55], 0
    %106 = vsyncpa [#allocation58], 0
    %107 = vsyncpa [#allocation61], 0
    %108 = vsyncpa [#allocation5], 0
    // Predicated region
    $region2: #{_lambda_.1} parent=1 // pred_check
      _
    $region3: #{_lambda_.1} parent=1 // pred_check_branch
      %110 = sbr.rel (0) target = $region5
    $region4: #{_lambda_.1} parent=1 // pred_region
      %112 = vsyncadd [#allocation4], 0
      %s113 = sshll.u32 %s1, 4
      %s114 = int_to_ptr.hbm [resolvable:$true] %s113
      %s115 = sshll.u32 [#allocation3], 4
      %s116 = int_to_ptr.vmem [resolvable:$true] %s115
      %121 = dma.hbm_to_vmem [thread:$0]  %s114, 256, %s116, [#allocation4], 128, 128, 8
    $region5: #{_lambda_.1} parent=1 // pred_fallthru
      _
    // Predicated region
    $region6: #{_lambda_.1} parent=1 // pred_check
      _
    $region7: #{_lambda_.1} parent=1 // pred_check_branch
      %123 = sbr.rel (0) target = $region9
    $region8: #{_lambda_.1} parent=1 // pred_region
      _
    $region9: #{_lambda_.1} parent=1 // pred_fallthru
      _
    // Predicated region
    $region10: #{_lambda_.1} parent=1 // pred_check
      _
    $region11: #{_lambda_.1} parent=1 // pred_check_branch
      %125 = sbr.rel (0) target = $region13
    $region12: #{_lambda_.1} parent=1 // pred_region
      _
    $region13: #{_lambda_.1} parent=1 // pred_fallthru
      _
    // Predicated region
    $region14: #{_lambda_.1} parent=1 // pred_check
      _
    $region15: #{_lambda_.1} parent=1 // pred_check_branch
      %127 = sbr.rel (0) target = $region17
    $region16: #{_lambda_.1} parent=1 // pred_region
      %129 = vsyncadd [#allocation7], 0
      %s130 = sshll.u32 %s7, 4
      %s131 = int_to_ptr.hbm [resolvable:$true] %s130
      %s132 = sshll.u32 [#allocation6], 4
      %s133 = int_to_ptr.vmem [resolvable:$true] %s132
      %138 = dma.hbm_to_vmem [thread:$0]  %s131, 1024, %s133, [#allocation7], 128, 128, 8
    $region17: #{_lambda_.1} parent=1 // pred_fallthru
      _
    // Predicated region
    $region18: #{_lambda_.1} parent=1 // pred_check
      _
    $region19: #{_lambda_.1} parent=1 // pred_check_branch
      %140 = sbr.rel (0) target = $region21
    $region20: #{_lambda_.1} parent=1 // pred_region
      %142 = vsyncadd [#allocation7], 0
      %s144 = sshll.u32 %s9, 4
      %s145 = int_to_ptr.hbm [resolvable:$true] %s144
      %s146 = sshll.u32 [#allocation8], 4
      %s147 = int_to_ptr.vmem [resolvable:$true] %s146
      %149 = dma.hbm_to_vmem [thread:$0]  %s145, 16, %s147, [#allocation7]
    $region21: #{_lambda_.1} parent=1 // pred_fallthru
      _
    // Predicated region
    $region22: #{_lambda_.1} parent=1 // pred_check
      _
    $region23: #{_lambda_.1} parent=1 // pred_check_branch
      %151 = sbr.rel (0) target = $region25
    $region24: #{_lambda_.1} parent=1 // pred_region
      %153 = vsyncadd [#allocation10], 0
      %s154 = sshll.u32 %s11, 4
      %s155 = int_to_ptr.hbm [resolvable:$true] %s154
      %s156 = sshll.u32 [#allocation9], 4
      %s157 = int_to_ptr.vmem [resolvable:$true] %s156
      %162 = dma.hbm_to_vmem [thread:$0]  %s155, 12288, %s157, [#allocation10], 384, 384, 24
    $region25: #{_lambda_.1} parent=1 // pred_fallthru
      _
    // Predicated region
    $region26: #{_lambda_.1} parent=1 // pred_check
      _
    $region27: #{_lambda_.1} parent=1 // pred_check_branch
      %164 = sbr.rel (0) target = $region29
    $region28: #{_lambda_.1} parent=1 // pred_region
      %166 = vsyncadd [#allocation10], 0
      %s167 = sshll.u32 %s13, 4
      %s168 = int_to_ptr.hbm [resolvable:$true] %s167
      %s169 = sshll.u32 [#allocation11], 4
      %s170 = int_to_ptr.vmem [resolvable:$true] %s169
      %175 = dma.hbm_to_vmem [thread:$0]  %s168, 96, %s170, [#allocation10], 48, 48, 3
    $region29: #{_lambda_.1} parent=1 // pred_fallthru
      _
    // Predicated region
    $region30: #{_lambda_.1} parent=1 // pred_check
      _
    $region31: #{_lambda_.1} parent=1 // pred_check_branch
      %177 = sbr.rel (0) target = $region33
    $region32: #{_lambda_.1} parent=1 // pred_region
      %179 = vsyncadd [#allocation13], 0
      %s180 = sshll.u32 %s15, 4
      %s181 = int_to_ptr.hbm [resolvable:$true] %s180
      %s182 = sshll.u32 [#allocation12], 4
      %s183 = int_to_ptr.vmem [resolvable:$true] %s182
      %188 = dma.hbm_to_vmem [thread:$0]  %s181, 4096, %s183, [#allocation13], 128, 128, 8
    $region33: #{_lambda_.1} parent=1 // pred_fallthru
      _
    // Predicated region
    $region34: #{_lambda_.1} parent=1 // pred_check
      _
    $region35: #{_lambda_.1} parent=1 // pred_check_branch
      %190 = sbr.rel (0) target = $region37
    $region36: #{_lambda_.1} parent=1 // pred_region
      %192 = vsyncadd [#allocation13], 0
      %s193 = sshll.u32 %s17, 4
      %s194 = int_to_ptr.hbm [resolvable:$true] %s193
      %s195 = sshll.u32 [#allocation14], 4
      %s196 = int_to_ptr.vmem [resolvable:$true] %s195
      %201 = dma.hbm_to_vmem [thread:$0]  %s194, 32, %s196, [#allocation13], 16, 16, 1
    $region37: #{_lambda_.1} parent=1 // pred_fallthru
      _
    // Predicated region
    $region38: #{_lambda_.1} parent=1 // pred_check
      _
    $region39: #{_lambda_.1} parent=1 // pred_check_branch
      %203 = sbr.rel (0) target = $region41
    $region40: #{_lambda_.1} parent=1 // pred_region
      %205 = vsyncadd [#allocation16], 0
      %s206 = sshll.u32 %s19, 4
      %s207 = int_to_ptr.hbm [resolvable:$true] %s206
      %s208 = sshll.u32 [#allocation15], 4
      %s209 = int_to_ptr.vmem [resolvable:$true] %s208
      %214 = dma.hbm_to_vmem [thread:$0]  %s207, 32, %s209, [#allocation16], 16, 16, 1
    $region41: #{_lambda_.1} parent=1 // pred_fallthru
      _
    // Predicated region
    $region42: #{_lambda_.1} parent=1 // pred_check
      _
    $region43: #{_lambda_.1} parent=1 // pred_check_branch
      %216 = sbr.rel (0) target = $region45
    $region44: #{_lambda_.1} parent=1 // pred_region
      %218 = vsyncadd [#allocation16], 0
      %s219 = sshll.u32 %s21, 4
      %s220 = int_to_ptr.hbm [resolvable:$true] %s219
      %s221 = sshll.u32 [#allocation17], 4
      %s222 = int_to_ptr.vmem [resolvable:$true] %s221
      %227 = dma.hbm_to_vmem [thread:$0]  %s220, 32, %s222, [#allocation16], 16, 16, 1
    $region45: #{_lambda_.1} parent=1 // pred_fallthru
      _
    // Predicated region
    $region46: #{_lambda_.1} parent=1 // pred_check
      _
    $region47: #{_lambda_.1} parent=1 // pred_check_branch
      %229 = sbr.rel (0) target = $region49
    $region48: #{_lambda_.1} parent=1 // pred_region
      %231 = vsyncadd [#allocation19], 0
      %s232 = sshll.u32 %s23, 4
      %s233 = int_to_ptr.hbm [resolvable:$true] %s232
      %s234 = sshll.u32 [#allocation18], 4
      %s235 = int_to_ptr.vmem [resolvable:$true] %s234
      %240 = dma.hbm_to_vmem [thread:$0]  %s233, 4096, %s235, [#allocation19], 128, 128, 8
    $region49: #{_lambda_.1} parent=1 // pred_fallthru
      _
    // Predicated region
    $region50: #{_lambda_.1} parent=1 // pred_check
      _
    $region51: #{_lambda_.1} parent=1 // pred_check_branch
      %242 = sbr.rel (0) target = $region53
    $region52: #{_lambda_.1} parent=1 // pred_region
      %244 = vsyncadd [#allocation19], 0
      %s245 = sshll.u32 %s25, 4
      %s246 = int_to_ptr.hbm [resolvable:$true] %s245
      %s247 = sshll.u32 [#allocation20], 4
      %s248 = int_to_ptr.vmem [resolvable:$true] %s247
      %253 = dma.hbm_to_vmem [thread:$0]  %s246, 32, %s248, [#allocation19], 16, 16, 1
    $region53: #{_lambda_.1} parent=1 // pred_fallthru
      _
    // Predicated region
    $region54: #{_lambda_.1} parent=1 // pred_check
      _
    $region55: #{_lambda_.1} parent=1 // pred_check_branch
      %255 = sbr.rel (0) target = $region57
    $region56: #{_lambda_.1} parent=1 // pred_region
      %257 = vsyncadd [#allocation22], 0
      %s258 = sshll.u32 %s27, 4
      %s259 = int_to_ptr.hbm [resolvable:$true] %s258
      %s260 = sshll.u32 [#allocation21], 4
      %s261 = int_to_ptr.vmem [resolvable:$true] %s260
      %266 = dma.hbm_to_vmem [thread:$0]  %s259, 4096, %s261, [#allocation22], 128, 128, 8
    $region57: #{_lambda_.1} parent=1 // pred_fallthru
      _
    // Predicated region
    $region58: #{_lambda_.1} parent=1 // pred_check
      _
    $region59: #{_lambda_.1} parent=1 // pred_check_branch
      %268 = sbr.rel (0) target = $region61
    $region60: #{_lambda_.1} parent=1 // pred_region
      %270 = vsyncadd [#allocation22], 0
      %s271 = sshll.u32 %s29, 4
      %s272 = int_to_ptr.hbm [resolvable:$true] %s271
      %s273 = sshll.u32 [#allocation23], 4
      %s274 = int_to_ptr.vmem [resolvable:$true] %s273
      %279 = dma.hbm_to_vmem [thread:$0]  %s272, 32, %s274, [#allocation22], 16, 16, 1
    $region61: #{_lambda_.1} parent=1 // pred_fallthru
      _
    // Predicated region
    $region62: #{_lambda_.1} parent=1 // pred_check
      _
    $region63: #{_lambda_.1} parent=1 // pred_check_branch
      %281 = sbr.rel (0) target = $region65
    $region64: #{_lambda_.1} parent=1 // pred_region
      %283 = vsyncadd [#allocation25], 0
      %s284 = sshll.u32 %s31, 4
      %s285 = int_to_ptr.hbm [resolvable:$true] %s284
      %s286 = sshll.u32 [#allocation24], 4
      %s287 = int_to_ptr.vmem [resolvable:$true] %s286
      %292 = dma.hbm_to_vmem [thread:$0]  %s285, 32, %s287, [#allocation25], 16, 16, 1
    $region65: #{_lambda_.1} parent=1 // pred_fallthru
      _
    // Predicated region
    $region66: #{_lambda_.1} parent=1 // pred_check
      _
    $region67: #{_lambda_.1} parent=1 // pred_check_branch
      %294 = sbr.rel (0) target = $region69
    $region68: #{_lambda_.1} parent=1 // pred_region
      %296 = vsyncadd [#allocation25], 0
      %s297 = sshll.u32 %s33, 4
      %s298 = int_to_ptr.hbm [resolvable:$true] %s297
      %s299 = sshll.u32 [#allocation26], 4
      %s300 = int_to_ptr.vmem [resolvable:$true] %s299
      %305 = dma.hbm_to_vmem [thread:$0]  %s298, 32, %s300, [#allocation25], 16, 16, 1
    $region69: #{_lambda_.1} parent=1 // pred_fallthru
      _
    // Predicated region
    $region70: #{_lambda_.1} parent=1 // pred_check
      _
    $region71: #{_lambda_.1} parent=1 // pred_check_branch
      %307 = sbr.rel (0) target = $region73
    $region72: #{_lambda_.1} parent=1 // pred_region
      %309 = vsyncadd [#allocation28], 0
      %s310 = sshll.u32 %s35, 4
      %s311 = int_to_ptr.hbm [resolvable:$true] %s310
      %s312 = sshll.u32 [#allocation27], 4
      %s313 = int_to_ptr.vmem [resolvable:$true] %s312
      %318 = dma.hbm_to_vmem [thread:$0]  %s311, 2048, %s313, [#allocation28], 128, 128, 8
    $region73: #{_lambda_.1} parent=1 // pred_fallthru
      _
    // Predicated region
    $region74: #{_lambda_.1} parent=1 // pred_check
      _
    $region75: #{_lambda_.1} parent=1 // pred_check_branch
      %320 = sbr.rel (0) target = $region77
    $region76: #{_lambda_.1} parent=1 // pred_region
      %322 = vsyncadd [#allocation28], 0
      %s324 = sshll.u32 %s37, 4
      %s325 = int_to_ptr.hbm [resolvable:$true] %s324
      %s326 = sshll.u32 [#allocation29], 4
      %s327 = int_to_ptr.vmem [resolvable:$true] %s326
      %329 = dma.hbm_to_vmem [thread:$0]  %s325, 16, %s327, [#allocation28]
    $region77: #{_lambda_.1} parent=1 // pred_fallthru
      _
    // Predicated region
    $region78: #{_lambda_.1} parent=1 // pred_check
      _
    $region79: #{_lambda_.1} parent=1 // pred_check_branch
      %331 = sbr.rel (0) target = $region81
    $region80: #{_lambda_.1} parent=1 // pred_region
      %333 = vsyncadd [#allocation31], 0
      %s334 = sshll.u32 %s39, 4
      %s335 = int_to_ptr.hbm [resolvable:$true] %s334
      %s336 = sshll.u32 [#allocation30], 4
      %s337 = int_to_ptr.vmem [resolvable:$true] %s336
      %342 = dma.hbm_to_vmem [thread:$0]  %s335, 12288, %s337, [#allocation31], 384, 384, 24
    $region81: #{_lambda_.1} parent=1 // pred_fallthru
      _
    // Predicated region
    $region82: #{_lambda_.1} parent=1 // pred_check
      _
    $region83: #{_lambda_.1} parent=1 // pred_check_branch
      %344 = sbr.rel (0) target = $region85
    $region84: #{_lambda_.1} parent=1 // pred_region
      %346 = vsyncadd [#allocation31], 0
      %s347 = sshll.u32 %s41, 4
      %s348 = int_to_ptr.hbm [resolvable:$true] %s347
      %s349 = sshll.u32 [#allocation32], 4
      %s350 = int_to_ptr.vmem [resolvable:$true] %s349
      %355 = dma.hbm_to_vmem [thread:$0]  %s348, 96, %s350, [#allocation31], 48, 48, 3
    $region85: #{_lambda_.1} parent=1 // pred_fallthru
      _
    // Predicated region
    $region86: #{_lambda_.1} parent=1 // pred_check
      _
    $region87: #{_lambda_.1} parent=1 // pred_check_branch
      %357 = sbr.rel (0) target = $region89
    $region88: #{_lambda_.1} parent=1 // pred_region
      %359 = vsyncadd [#allocation34], 0
      %s360 = sshll.u32 %s43, 4
      %s361 = int_to_ptr.hbm [resolvable:$true] %s360
      %s362 = sshll.u32 [#allocation33], 4
      %s363 = int_to_ptr.vmem [resolvable:$true] %s362
      %368 = dma.hbm_to_vmem [thread:$0]  %s361, 4096, %s363, [#allocation34], 128, 128, 8
    $region89: #{_lambda_.1} parent=1 // pred_fallthru
      _
    // Predicated region
    $region90: #{_lambda_.1} parent=1 // pred_check
      _
    $region91: #{_lambda_.1} parent=1 // pred_check_branch
      %370 = sbr.rel (0) target = $region93
    $region92: #{_lambda_.1} parent=1 // pred_region
      %372 = vsyncadd [#allocation34], 0
      %s373 = sshll.u32 %s45, 4
      %s374 = int_to_ptr.hbm [resolvable:$true] %s373
      %s375 = sshll.u32 [#allocation35], 4
      %s376 = int_to_ptr.vmem [resolvable:$true] %s375
      %381 = dma.hbm_to_vmem [thread:$0]  %s374, 32, %s376, [#allocation34], 16, 16, 1
    $region93: #{_lambda_.1} parent=1 // pred_fallthru
      _
    // Predicated region
    $region94: #{_lambda_.1} parent=1 // pred_check
      _
    $region95: #{_lambda_.1} parent=1 // pred_check_branch
      %383 = sbr.rel (0) target = $region97
    $region96: #{_lambda_.1} parent=1 // pred_region
      %385 = vsyncadd [#allocation37], 0
      %s386 = sshll.u32 %s47, 4
      %s387 = int_to_ptr.hbm [resolvable:$true] %s386
      %s388 = sshll.u32 [#allocation36], 4
      %s389 = int_to_ptr.vmem [resolvable:$true] %s388
      %394 = dma.hbm_to_vmem [thread:$0]  %s387, 32, %s389, [#allocation37], 16, 16, 1
    $region97: #{_lambda_.1} parent=1 // pred_fallthru
      _
    // Predicated region
    $region98: #{_lambda_.1} parent=1 // pred_check
      _
    $region99: #{_lambda_.1} parent=1 // pred_check_branch
      %396 = sbr.rel (0) target = $region101
    $region100: #{_lambda_.1} parent=1 // pred_region
      %398 = vsyncadd [#allocation37], 0
      %s399 = sshll.u32 %s49, 4
      %s400 = int_to_ptr.hbm [resolvable:$true] %s399
      %s401 = sshll.u32 [#allocation38], 4
      %s402 = int_to_ptr.vmem [resolvable:$true] %s401
      %407 = dma.hbm_to_vmem [thread:$0]  %s400, 32, %s402, [#allocation37], 16, 16, 1
    $region101: #{_lambda_.1} parent=1 // pred_fallthru
      _
    // Predicated region
    $region102: #{_lambda_.1} parent=1 // pred_check
      _
    $region103: #{_lambda_.1} parent=1 // pred_check_branch
      %409 = sbr.rel (0) target = $region105
    $region104: #{_lambda_.1} parent=1 // pred_region
      %411 = vsyncadd [#allocation40], 0
      %s412 = sshll.u32 %s51, 4
      %s413 = int_to_ptr.hbm [resolvable:$true] %s412
      %s414 = sshll.u32 [#allocation39], 4
      %s415 = int_to_ptr.vmem [resolvable:$true] %s414
      %420 = dma.hbm_to_vmem [thread:$0]  %s413, 4096, %s415, [#allocation40], 128, 128, 8
    $region105: #{_lambda_.1} parent=1 // pred_fallthru
      _
    // Predicated region
    $region106: #{_lambda_.1} parent=1 // pred_check
      _
    $region107: #{_lambda_.1} parent=1 // pred_check_branch
      %422 = sbr.rel (0) target = $region109
    $region108: #{_lambda_.1} parent=1 // pred_region
      %424 = vsyncadd [#allocation40], 0
      %s425 = sshll.u32 %s53, 4
      %s426 = int_to_ptr.hbm [resolvable:$true] %s425
      %s427 = sshll.u32 [#allocation41], 4
      %s428 = int_to_ptr.vmem [resolvable:$true] %s427
      %433 = dma.hbm_to_vmem [thread:$0]  %s426, 32, %s428, [#allocation40], 16, 16, 1
    $region109: #{_lambda_.1} parent=1 // pred_fallthru
      _
    // Predicated region
    $region110: #{_lambda_.1} parent=1 // pred_check
      _
    $region111: #{_lambda_.1} parent=1 // pred_check_branch
      %435 = sbr.rel (0) target = $region113
    $region112: #{_lambda_.1} parent=1 // pred_region
      %437 = vsyncadd [#allocation43], 0
      %s438 = sshll.u32 %s55, 4
      %s439 = int_to_ptr.hbm [resolvable:$true] %s438
      %s440 = sshll.u32 [#allocation42], 4
      %s441 = int_to_ptr.vmem [resolvable:$true] %s440
      %446 = dma.hbm_to_vmem [thread:$0]  %s439, 8192, %s441, [#allocation43], 256, 256, 16
    $region113: #{_lambda_.1} parent=1 // pred_fallthru
      _
    // Predicated region
    $region114: #{_lambda_.1} parent=1 // pred_check
      _
    $region115: #{_lambda_.1} parent=1 // pred_check_branch
      %448 = sbr.rel (0) target = $region117
    $region116: #{_lambda_.1} parent=1 // pred_region
      %450 = vsyncadd [#allocation43], 0
      %s451 = sshll.u32 %s57, 4
      %s452 = int_to_ptr.hbm [resolvable:$true] %s451
      %s453 = sshll.u32 [#allocation44], 4
      %s454 = int_to_ptr.vmem [resolvable:$true] %s453
      %459 = dma.hbm_to_vmem [thread:$0]  %s452, 64, %s454, [#allocation43], 32, 32, 2
    $region117: #{_lambda_.1} parent=1 // pred_fallthru
      _
    // Predicated region
    $region118: #{_lambda_.1} parent=1 // pred_check
      _
    $region119: #{_lambda_.1} parent=1 // pred_check_branch
      %461 = sbr.rel (0) target = $region121
    $region120: #{_lambda_.1} parent=1 // pred_region
      %463 = vsyncadd [#allocation46], 0
      %s464 = sshll.u32 %s59, 4
      %s465 = int_to_ptr.hbm [resolvable:$true] %s464
      %s466 = sshll.u32 [#allocation45], 4
      %s467 = int_to_ptr.vmem [resolvable:$true] %s466
      %472 = dma.hbm_to_vmem [thread:$0]  %s465, 4096, %s467, [#allocation46], 128, 128, 8
    $region121: #{_lambda_.1} parent=1 // pred_fallthru
      _
    // Predicated region
    $region122: #{_lambda_.1} parent=1 // pred_check
      _
    $region123: #{_lambda_.1} parent=1 // pred_check_branch
      %474 = sbr.rel (0) target = $region125
    $region124: #{_lambda_.1} parent=1 // pred_region
      %476 = vsyncadd [#allocation46], 0
      %s477 = sshll.u32 %s61, 4
      %s478 = int_to_ptr.hbm [resolvable:$true] %s477
      %s479 = sshll.u32 [#allocation47], 4
      %s480 = int_to_ptr.vmem [resolvable:$true] %s479
      %485 = dma.hbm_to_vmem [thread:$0]  %s478, 32, %s480, [#allocation46], 16, 16, 1
    $region125: #{_lambda_.1} parent=1 // pred_fallthru
      _
    // Predicated region
    $region126: #{_lambda_.1} parent=1 // pred_check
      _
    $region127: #{_lambda_.1} parent=1 // pred_check_branch
      %487 = sbr.rel (0) target = $region129
    $region128: #{_lambda_.1} parent=1 // pred_region
      %489 = vsyncadd [#allocation49], 0
      %s490 = sshll.u32 %s63, 4
      %s491 = int_to_ptr.hbm [resolvable:$true] %s490
      %s492 = sshll.u32 [#allocation48], 4
      %s493 = int_to_ptr.vmem [resolvable:$true] %s492
      %498 = dma.hbm_to_vmem [thread:$0]  %s491, 32, %s493, [#allocation49], 16, 16, 1
    $region129: #{_lambda_.1} parent=1 // pred_fallthru
      _
    // Predicated region
    $region130: #{_lambda_.1} parent=1 // pred_check
      _
    $region131: #{_lambda_.1} parent=1 // pred_check_branch
      %500 = sbr.rel (0) target = $region133
    $region132: #{_lambda_.1} parent=1 // pred_region
      %502 = vsyncadd [#allocation49], 0
      %s503 = sshll.u32 %s65, 4
      %s504 = int_to_ptr.hbm [resolvable:$true] %s503
      %s505 = sshll.u32 [#allocation50], 4
      %s506 = int_to_ptr.vmem [resolvable:$true] %s505
      %511 = dma.hbm_to_vmem [thread:$0]  %s504, 32, %s506, [#allocation49], 16, 16, 1
    $region133: #{_lambda_.1} parent=1 // pred_fallthru
      _
    // Predicated region
    $region134: #{_lambda_.1} parent=1 // pred_check
      _
    $region135: #{_lambda_.1} parent=1 // pred_check_branch
      %513 = sbr.rel (0) target = $region137
    $region136: #{_lambda_.1} parent=1 // pred_region
      %515 = vsyncadd [#allocation52], 0
      %s516 = sshll.u32 %s67, 4
      %s517 = int_to_ptr.hbm [resolvable:$true] %s516
      %s518 = sshll.u32 [#allocation51], 4
      %s519 = int_to_ptr.vmem [resolvable:$true] %s518
      %524 = dma.hbm_to_vmem [thread:$0]  %s517, 4096, %s519, [#allocation52], 128, 128, 8
    $region137: #{_lambda_.1} parent=1 // pred_fallthru
      _
    // Predicated region
    $region138: #{_lambda_.1} parent=1 // pred_check
      _
    $region139: #{_lambda_.1} parent=1 // pred_check_branch
      %526 = sbr.rel (0) target = $region141
    $region140: #{_lambda_.1} parent=1 // pred_region
      %528 = vsyncadd [#allocation52], 0
      %s529 = sshll.u32 %s69, 4
      %s530 = int_to_ptr.hbm [resolvable:$true] %s529
      %s531 = sshll.u32 [#allocation53], 4
      %s532 = int_to_ptr.vmem [resolvable:$true] %s531
      %537 = dma.hbm_to_vmem [thread:$0]  %s530, 32, %s532, [#allocation52], 16, 16, 1
    $region141: #{_lambda_.1} parent=1 // pred_fallthru
      _
    // Predicated region
    $region142: #{_lambda_.1} parent=1 // pred_check
      _
    $region143: #{_lambda_.1} parent=1 // pred_check_branch
      %539 = sbr.rel (0) target = $region145
    $region144: #{_lambda_.1} parent=1 // pred_region
      %541 = vsyncadd [#allocation55], 0
      %s542 = sshll.u32 %s71, 4
      %s543 = int_to_ptr.hbm [resolvable:$true] %s542
      %s544 = sshll.u32 [#allocation54], 4
      %s545 = int_to_ptr.vmem [resolvable:$true] %s544
      %550 = dma.hbm_to_vmem [thread:$0]  %s543, 4096, %s545, [#allocation55], 128, 128, 8
    $region145: #{_lambda_.1} parent=1 // pred_fallthru
      _
    // Predicated region
    $region146: #{_lambda_.1} parent=1 // pred_check
      _
    $region147: #{_lambda_.1} parent=1 // pred_check_branch
      %552 = sbr.rel (0) target = $region149
    $region148: #{_lambda_.1} parent=1 // pred_region
      %554 = vsyncadd [#allocation55], 0
      %s555 = sshll.u32 %s73, 4
      %s556 = int_to_ptr.hbm [resolvable:$true] %s555
      %s557 = sshll.u32 [#allocation56], 4
      %s558 = int_to_ptr.vmem [resolvable:$true] %s557
      %563 = dma.hbm_to_vmem [thread:$0]  %s556, 32, %s558, [#allocation55], 16, 16, 1
    $region149: #{_lambda_.1} parent=1 // pred_fallthru
      _
    // Predicated region
    $region150: #{_lambda_.1} parent=1 // pred_check
      _
    $region151: #{_lambda_.1} parent=1 // pred_check_branch
      %565 = sbr.rel (0) target = $region153
    $region152: #{_lambda_.1} parent=1 // pred_region
      %567 = vsyncadd [#allocation58], 0
      %s568 = sshll.u32 %s75, 4
      %s569 = int_to_ptr.hbm [resolvable:$true] %s568
      %s570 = sshll.u32 [#allocation57], 4
      %s571 = int_to_ptr.vmem [resolvable:$true] %s570
      %576 = dma.hbm_to_vmem [thread:$0]  %s569, 32, %s571, [#allocation58], 16, 16, 1
    $region153: #{_lambda_.1} parent=1 // pred_fallthru
      _
    // Predicated region
    $region154: #{_lambda_.1} parent=1 // pred_check
      _
    $region155: #{_lambda_.1} parent=1 // pred_check_branch
      %578 = sbr.rel (0) target = $region157
    $region156: #{_lambda_.1} parent=1 // pred_region
      %580 = vsyncadd [#allocation58], 0
      %s581 = sshll.u32 %s77, 4
      %s582 = int_to_ptr.hbm [resolvable:$true] %s581
      %s583 = sshll.u32 [#allocation59], 4
      %s584 = int_to_ptr.vmem [resolvable:$true] %s583
      %589 = dma.hbm_to_vmem [thread:$0]  %s582, 32, %s584, [#allocation58], 16, 16, 1
    $region157: #{_lambda_.1} parent=1 // pred_fallthru
      _
    // Predicated region
    $region158: #{_lambda_.1} parent=1 // pred_check
      _
    $region159: #{_lambda_.1} parent=1 // pred_check_branch
      %591 = sbr.rel (0) target = $region161
    $region160: #{_lambda_.1} parent=1 // pred_region
      %593 = vsyncadd [#allocation61], 0
      %s594 = sshll.u32 %s79, 4
      %s595 = int_to_ptr.hbm [resolvable:$true] %s594
      %s596 = sshll.u32 [#allocation60], 4
      %s597 = int_to_ptr.vmem [resolvable:$true] %s596
      %602 = dma.hbm_to_vmem [thread:$0]  %s595, 12288, %s597, [#allocation61], 768, 768, 48
    $region161: #{_lambda_.1} parent=1 // pred_fallthru
      _
    // Predicated region
    $region162: #{_lambda_.1} parent=1 // pred_check
      _
    $region163: #{_lambda_.1} parent=1 // pred_check_branch
      %604 = sbr.rel (0) target = $region165
    $region164: #{_lambda_.1} parent=1 // pred_region
      %606 = vsyncadd [#allocation61], 0
      %s608 = sshll.u32 %s81, 4
      %s609 = int_to_ptr.hbm [resolvable:$true] %s608
      %s610 = sshll.u32 [#allocation62], 4
      %s611 = int_to_ptr.vmem [resolvable:$true] %s610
      %613 = dma.hbm_to_vmem [thread:$0]  %s609, 96, %s611, [#allocation61]
    $region165: #{_lambda_.1} parent=1 // pred_fallthru
      _
    // Predicated region
    $region166: #{_lambda_.1} parent=1 // pred_check
      _
    $region167: #{_lambda_.1} parent=1 // pred_check_branch
      %615 = sbr.rel (0) target = $region169
    $region168: #{_lambda_.1} parent=1 // pred_region
      %617 = dma.done [#allocation4], 256
    $region169: #{_lambda_.1} parent=1 // pred_fallthru
      _
    // Predicated region
    $region170: #{_lambda_.1} parent=1 // pred_check
      _
    $region171: #{_lambda_.1} parent=1 // pred_check_branch
      %619 = sbr.rel (0) target = $region173
    $region172: #{_lambda_.1} parent=1 // pred_region
      %621 = dma.done [#allocation7], 1024
    $region173: #{_lambda_.1} parent=1 // pred_fallthru
      _
    // Predicated region
    $region174: #{_lambda_.1} parent=1 // pred_check
      _
    $region175: #{_lambda_.1} parent=1 // pred_check_branch
      %623 = sbr.rel (0) target = $region177
    $region176: #{_lambda_.1} parent=1 // pred_region
      %625 = dma.done [#allocation7], 16
    $region177: #{_lambda_.1} parent=1 // pred_fallthru
      _
    // Predicated region
    $region178: #{_lambda_.1} parent=1 // pred_check
      _
    $region179: #{_lambda_.1} parent=1 // pred_check_branch
      %627 = sbr.rel (0) target = $region181
    $region180: #{_lambda_.1} parent=1 // pred_region
      %629 = dma.done [#allocation10], 12288
    $region181: #{_lambda_.1} parent=1 // pred_fallthru
      _
    // Predicated region
    $region182: #{_lambda_.1} parent=1 // pred_check
      _
    $region183: #{_lambda_.1} parent=1 // pred_check_branch
      %631 = sbr.rel (0) target = $region185
    $region184: #{_lambda_.1} parent=1 // pred_region
      %633 = dma.done [#allocation10], 96
    $region185: #{_lambda_.1} parent=1 // pred_fallthru
      _
    // Predicated region
    $region186: #{_lambda_.1} parent=1 // pred_check
      _
    $region187: #{_lambda_.1} parent=1 // pred_check_branch
      %635 = sbr.rel (0) target = $region189
    $region188: #{_lambda_.1} parent=1 // pred_region
      %637 = dma.done [#allocation13], 4096
    $region189: #{_lambda_.1} parent=1 // pred_fallthru
      _
    // Predicated region
    $region190: #{_lambda_.1} parent=1 // pred_check
      _
    $region191: #{_lambda_.1} parent=1 // pred_check_branch
      %639 = sbr.rel (0) target = $region193
    $region192: #{_lambda_.1} parent=1 // pred_region
      %641 = dma.done [#allocation13], 32
    $region193: #{_lambda_.1} parent=1 // pred_fallthru
      _
    // Predicated region
    $region194: #{_lambda_.1} parent=1 // pred_check
      _
    $region195: #{_lambda_.1} parent=1 // pred_check_branch
      %643 = sbr.rel (0) target = $region197
    $region196: #{_lambda_.1} parent=1 // pred_region
      %645 = dma.done [#allocation16], 32
    $region197: #{_lambda_.1} parent=1 // pred_fallthru
      _
    // Predicated region
    $region198: #{_lambda_.1} parent=1 // pred_check
      _
    $region199: #{_lambda_.1} parent=1 // pred_check_branch
      %647 = sbr.rel (0) target = $region201
    $region200: #{_lambda_.1} parent=1 // pred_region
      %649 = dma.done [#allocation16], 32
    $region201: #{_lambda_.1} parent=1 // pred_fallthru
      _
    // Predicated region
    $region202: #{_lambda_.1} parent=1 // pred_check
      _
    $region203: #{_lambda_.1} parent=1 // pred_check_branch
      %651 = sbr.rel (0) target = $region205
    $region204: #{_lambda_.1} parent=1 // pred_region
      %653 = dma.done [#allocation19], 4096
    $region205: #{_lambda_.1} parent=1 // pred_fallthru
      _
    // Predicated region
    $region206: #{_lambda_.1} parent=1 // pred_check
      _
    $region207: #{_lambda_.1} parent=1 // pred_check_branch
      %655 = sbr.rel (0) target = $region209
    $region208: #{_lambda_.1} parent=1 // pred_region
      %657 = dma.done [#allocation19], 32
    $region209: #{_lambda_.1} parent=1 // pred_fallthru
      _
    // Predicated region
    $region210: #{_lambda_.1} parent=1 // pred_check
      _
    $region211: #{_lambda_.1} parent=1 // pred_check_branch
      %659 = sbr.rel (0) target = $region213
    $region212: #{_lambda_.1} parent=1 // pred_region
      %661 = dma.done [#allocation22], 4096
    $region213: #{_lambda_.1} parent=1 // pred_fallthru
      _
    // Predicated region
    $region214: #{_lambda_.1} parent=1 // pred_check
      _
    $region215: #{_lambda_.1} parent=1 // pred_check_branch
      %663 = sbr.rel (0) target = $region217
    $region216: #{_lambda_.1} parent=1 // pred_region
      %665 = dma.done [#allocation22], 32
    $region217: #{_lambda_.1} parent=1 // pred_fallthru
      _
    // Predicated region
    $region218: #{_lambda_.1} parent=1 // pred_check
      _
    $region219: #{_lambda_.1} parent=1 // pred_check_branch
      %667 = sbr.rel (0) target = $region221
    $region220: #{_lambda_.1} parent=1 // pred_region
      %669 = dma.done [#allocation25], 32
    $region221: #{_lambda_.1} parent=1 // pred_fallthru
      _
    // Predicated region
    $region222: #{_lambda_.1} parent=1 // pred_check
      _
    $region223: #{_lambda_.1} parent=1 // pred_check_branch
      %671 = sbr.rel (0) target = $region225
    $region224: #{_lambda_.1} parent=1 // pred_region
      %673 = dma.done [#allocation25], 32
    $region225: #{_lambda_.1} parent=1 // pred_fallthru
      _
    // Predicated region
    $region226: #{_lambda_.1} parent=1 // pred_check
      _
    $region227: #{_lambda_.1} parent=1 // pred_check_branch
      %675 = sbr.rel (0) target = $region229
    $region228: #{_lambda_.1} parent=1 // pred_region
      %677 = dma.done [#allocation28], 2048
    $region229: #{_lambda_.1} parent=1 // pred_fallthru
      _
    // Predicated region
    $region230: #{_lambda_.1} parent=1 // pred_check
      _
    $region231: #{_lambda_.1} parent=1 // pred_check_branch
      %679 = sbr.rel (0) target = $region233
    $region232: #{_lambda_.1} parent=1 // pred_region
      %681 = dma.done [#allocation28], 16
    $region233: #{_lambda_.1} parent=1 // pred_fallthru
      _
    // Predicated region
    $region234: #{_lambda_.1} parent=1 // pred_check
      _
    $region235: #{_lambda_.1} parent=1 // pred_check_branch
      %683 = sbr.rel (0) target = $region237
    $region236: #{_lambda_.1} parent=1 // pred_region
      %685 = dma.done [#allocation31], 12288
    $region237: #{_lambda_.1} parent=1 // pred_fallthru
      _
    // Predicated region
    $region238: #{_lambda_.1} parent=1 // pred_check
      _
    $region239: #{_lambda_.1} parent=1 // pred_check_branch
      %687 = sbr.rel (0) target = $region241
    $region240: #{_lambda_.1} parent=1 // pred_region
      %689 = dma.done [#allocation31], 96
    $region241: #{_lambda_.1} parent=1 // pred_fallthru
      _
    // Predicated region
    $region242: #{_lambda_.1} parent=1 // pred_check
      _
    $region243: #{_lambda_.1} parent=1 // pred_check_branch
      %691 = sbr.rel (0) target = $region245
    $region244: #{_lambda_.1} parent=1 // pred_region
      %693 = dma.done [#allocation34], 4096
    $region245: #{_lambda_.1} parent=1 // pred_fallthru
      _
    // Predicated region
    $region246: #{_lambda_.1} parent=1 // pred_check
      _
    $region247: #{_lambda_.1} parent=1 // pred_check_branch
      %695 = sbr.rel (0) target = $region249
    $region248: #{_lambda_.1} parent=1 // pred_region
      %697 = dma.done [#allocation34], 32
    $region249: #{_lambda_.1} parent=1 // pred_fallthru
      _
    // Predicated region
    $region250: #{_lambda_.1} parent=1 // pred_check
      _
    $region251: #{_lambda_.1} parent=1 // pred_check_branch
      %699 = sbr.rel (0) target = $region253
    $region252: #{_lambda_.1} parent=1 // pred_region
      %701 = dma.done [#allocation37], 32
    $region253: #{_lambda_.1} parent=1 // pred_fallthru
      _
    // Predicated region
    $region254: #{_lambda_.1} parent=1 // pred_check
      _
    $region255: #{_lambda_.1} parent=1 // pred_check_branch
      %703 = sbr.rel (0) target = $region257
    $region256: #{_lambda_.1} parent=1 // pred_region
      %705 = dma.done [#allocation37], 32
    $region257: #{_lambda_.1} parent=1 // pred_fallthru
      _
    // Predicated region
    $region258: #{_lambda_.1} parent=1 // pred_check
      _
    $region259: #{_lambda_.1} parent=1 // pred_check_branch
      %707 = sbr.rel (0) target = $region261
    $region260: #{_lambda_.1} parent=1 // pred_region
      %709 = dma.done [#allocation40], 4096
    $region261: #{_lambda_.1} parent=1 // pred_fallthru
      _
    // Predicated region
    $region262: #{_lambda_.1} parent=1 // pred_check
      _
    $region263: #{_lambda_.1} parent=1 // pred_check_branch
      %711 = sbr.rel (0) target = $region265
    $region264: #{_lambda_.1} parent=1 // pred_region
      %713 = dma.done [#allocation40], 32
    $region265: #{_lambda_.1} parent=1 // pred_fallthru
      _
    // Predicated region
    $region266: #{_lambda_.1} parent=1 // pred_check
      _
    $region267: #{_lambda_.1} parent=1 // pred_check_branch
      %715 = sbr.rel (0) target = $region269
    $region268: #{_lambda_.1} parent=1 // pred_region
      %717 = dma.done [#allocation43], 8192
    $region269: #{_lambda_.1} parent=1 // pred_fallthru
      _
    // Predicated region
    $region270: #{_lambda_.1} parent=1 // pred_check
      _
    $region271: #{_lambda_.1} parent=1 // pred_check_branch
      %719 = sbr.rel (0) target = $region273
    $region272: #{_lambda_.1} parent=1 // pred_region
      %721 = dma.done [#allocation43], 64
    $region273: #{_lambda_.1} parent=1 // pred_fallthru
      _
    // Predicated region
    $region274: #{_lambda_.1} parent=1 // pred_check
      _
    $region275: #{_lambda_.1} parent=1 // pred_check_branch
      %723 = sbr.rel (0) target = $region277
    $region276: #{_lambda_.1} parent=1 // pred_region
      %725 = dma.done [#allocation46], 4096
    $region277: #{_lambda_.1} parent=1 // pred_fallthru
      _
    // Predicated region
    $region278: #{_lambda_.1} parent=1 // pred_check
      _
    $region279: #{_lambda_.1} parent=1 // pred_check_branch
      %727 = sbr.rel (0) target = $region281
    $region280: #{_lambda_.1} parent=1 // pred_region
      %729 = dma.done [#allocation46], 32
    $region281: #{_lambda_.1} parent=1 // pred_fallthru
      _
    // Predicated region
    $region282: #{_lambda_.1} parent=1 // pred_check
      _
    $region283: #{_lambda_.1} parent=1 // pred_check_branch
      %731 = sbr.rel (0) target = $region285
    $region284: #{_lambda_.1} parent=1 // pred_region
      %733 = dma.done [#allocation49], 32
    $region285: #{_lambda_.1} parent=1 // pred_fallthru
      _
    // Predicated region
    $region286: #{_lambda_.1} parent=1 // pred_check
      _
    $region287: #{_lambda_.1} parent=1 // pred_check_branch
      %735 = sbr.rel (0) target = $region289
    $region288: #{_lambda_.1} parent=1 // pred_region
      %737 = dma.done [#allocation49], 32
    $region289: #{_lambda_.1} parent=1 // pred_fallthru
      _
    // Predicated region
    $region290: #{_lambda_.1} parent=1 // pred_check
      _
    $region291: #{_lambda_.1} parent=1 // pred_check_branch
      %739 = sbr.rel (0) target = $region293
    $region292: #{_lambda_.1} parent=1 // pred_region
      %741 = dma.done [#allocation52], 4096
    $region293: #{_lambda_.1} parent=1 // pred_fallthru
      _
    // Predicated region
    $region294: #{_lambda_.1} parent=1 // pred_check
      _
    $region295: #{_lambda_.1} parent=1 // pred_check_branch
      %743 = sbr.rel (0) target = $region297
    $region296: #{_lambda_.1} parent=1 // pred_region
      %745 = dma.done [#allocation52], 32
    $region297: #{_lambda_.1} parent=1 // pred_fallthru
      _
    // Predicated region
    $region298: #{_lambda_.1} parent=1 // pred_check
      _
    $region299: #{_lambda_.1} parent=1 // pred_check_branch
      %747 = sbr.rel (0) target = $region301
    $region300: #{_lambda_.1} parent=1 // pred_region
      %749 = dma.done [#allocation55], 4096
    $region301: #{_lambda_.1} parent=1 // pred_fallthru
      _
    // Predicated region
    $region302: #{_lambda_.1} parent=1 // pred_check
      _
    $region303: #{_lambda_.1} parent=1 // pred_check_branch
      %751 = sbr.rel (0) target = $region305
    $region304: #{_lambda_.1} parent=1 // pred_region
      %753 = dma.done [#allocation55], 32
    $region305: #{_lambda_.1} parent=1 // pred_fallthru
      _
    // Predicated region
    $region306: #{_lambda_.1} parent=1 // pred_check
      _
    $region307: #{_lambda_.1} parent=1 // pred_check_branch
      %755 = sbr.rel (0) target = $region309
    $region308: #{_lambda_.1} parent=1 // pred_region
      %757 = dma.done [#allocation58], 32
    $region309: #{_lambda_.1} parent=1 // pred_fallthru
      _
    // Predicated region
    $region310: #{_lambda_.1} parent=1 // pred_check
      _
    $region311: #{_lambda_.1} parent=1 // pred_check_branch
      %759 = sbr.rel (0) target = $region313
    $region312: #{_lambda_.1} parent=1 // pred_region
      %761 = dma.done [#allocation58], 32
    $region313: #{_lambda_.1} parent=1 // pred_fallthru
      _
    // Predicated region
    $region314: #{_lambda_.1} parent=1 // pred_check
      _
    $region315: #{_lambda_.1} parent=1 // pred_check_branch
      %763 = sbr.rel (0) target = $region317
    $region316: #{_lambda_.1} parent=1 // pred_region
      %765 = dma.done [#allocation61], 12288
    $region317: #{_lambda_.1} parent=1 // pred_fallthru
      _
    // Predicated region
    $region318: #{_lambda_.1} parent=1 // pred_check
      _
    $region319: #{_lambda_.1} parent=1 // pred_check_branch
      %767 = sbr.rel (0) target = $region321
    $region320: #{_lambda_.1} parent=1 // pred_region
      %769 = dma.done [#allocation61], 96
    $region321: #{_lambda_.1} parent=1 // pred_fallthru
      _
    %v770 = vld [vmem:[#allocation3] sm:$0xff]
    %v771 = vld [vmem:[#allocation3 + $0x8] sm:$0xff]
    %v772 = vld [vmem:[#allocation6] sm:$0xff]
    %v773 = vld [vmem:[#allocation6 + $0x8] sm:$0xff]
    %v774 = vld [vmem:[#allocation6 + $0x10] sm:$0xff]
    %v775 = vld [vmem:[#allocation6 + $0x18] sm:$0xff]
    %v776 = vld [vmem:[#allocation6 + $0x20] sm:$0xff]
    %v777 = vld [vmem:[#allocation6 + $0x28] sm:$0xff]
    %v778 = vld [vmem:[#allocation6 + $0x30] sm:$0xff]
    %v779 = vld [vmem:[#allocation6 + $0x38] sm:$0xff]
    %v780 = vld [vmem:[#allocation8] sm:$0x1]
    %v782 = vperm.slane %v780, 0
    %vm784 = vcmask 523264
    %v786 = vsel %vm784, %v770, 0
    %v789 = vsel %vm784, %v771, 0
    %791 = vmatpush.msra.mxu0 0.0
    %792 = vmatpush.msra.mxu0 0.0
    %793 = vmatpush.msra.mxu0 0.0
    %794 = vmatpush.msra.mxu0 0.0
    %795 = vmatpush.msra.mxu0 0.0
    %796 = vmatpush.msra.mxu0 0.0
    %797 = vmatpush.msra.mxu0 0.0
    %798 = vmatpush.msra.mxu0 0.0
    %799 = vmatpush.msra.mxu0 %v779
    %800 = vmatpush.msra.mxu0 %v778
    %801 = vmatpush.msra.mxu0 %v777
    %802 = vmatpush.msra.mxu0 %v776
    %803 = vmatpush.msra.mxu0 %v775
    %804 = vmatpush.msra.mxu0 %v774
    %805 = vmatpush.msra.mxu0 %v773
    %806 = vmatpush.msra.mxu0 %v772
    %807 = vmatmul.f32.gmra.mxu0 %v786
    %v808 = vpop.f32.mrf.mxu0
    %v809 = vadd.f32 %v782, %v808
    %810 = vmatmul.f32.gmra.mxu0 %v789
    %v811 = vpop.f32.mrf.mxu0
    %v812 = vadd.f32 %v782, %v811
    %813 = vdwg.mxu0
    %v814 = vmul.f32 %v809, 11.313708
    %v815 = vmul.f32 %v812, 11.313708
    %v816 = vld [vmem:[%s5] sm:$0xff]
    %v817 = vld [vmem:[%s5 + $0x8] sm:$0xff]
    %v818 = vadd.f32 %v814, %v816
    %v819 = vadd.f32 %v815, %v817
    %v820 = vld [vmem:[%s3] sm:$0x3]
    %v821 = vmul.f32 %v820, -1e+09
    %v822 = vld [vmem:[#allocation9] sm:$0xff]
    %v823 = vld [vmem:[#allocation9 + $0x8] sm:$0xff]
    %v824 = vld [vmem:[#allocation9 + $0x10] sm:$0xff]
    %v825 = vld [vmem:[#allocation9 + $0x18] sm:$0xff]
    %v826 = vld [vmem:[#allocation9 + $0x20] sm:$0xff]
    %v827 = vld [vmem:[#allocation9 + $0x28] sm:$0xff]
    %v828 = vld [vmem:[#allocation9 + $0x30] sm:$0xff]
    %v829 = vld [vmem:[#allocation9 + $0x38] sm:$0xff]
    %v830 = vld [vmem:[#allocation9 + $0x40] sm:$0xff]
    %v831 = vld [vmem:[#allocation9 + $0x48] sm:$0xff]
    %v832 = vld [vmem:[#allocation9 + $0x50] sm:$0xff]
    %v833 = vld [vmem:[#allocation9 + $0x58] sm:$0xff]
    %v834 = vld [vmem:[#allocation9 + $0x60] sm:$0xff]
    %v835 = vld [vmem:[#allocation9 + $0x68] sm:$0xff]
    %v836 = vld [vmem:[#allocation9 + $0x70] sm:$0xff]
    %v837 = vld [vmem:[#allocation9 + $0x78] sm:$0xff]
    %v838 = vld [vmem:[#allocation9 + $0x80] sm:$0xff]
    %v839 = vld [vmem:[#allocation9 + $0x88] sm:$0xff]
    %v840 = vld [vmem:[#allocation9 + $0x90] sm:$0xff]
    %v841 = vld [vmem:[#allocation9 + $0x98] sm:$0xff]
    %v842 = vld [vmem:[#allocation9 + $0xa0] sm:$0xff]
    %v843 = vld [vmem:[#allocation9 + $0xa8] sm:$0xff]
    %v844 = vld [vmem:[#allocation9 + $0xb0] sm:$0xff]
    %v845 = vld [vmem:[#allocation9 + $0xb8] sm:$0xff]
    %v846 = vld [vmem:[#allocation9 + $0xc0] sm:$0xff]
    %v847 = vld [vmem:[#allocation9 + $0xc8] sm:$0xff]
    %v848 = vld [vmem:[#allocation9 + $0xd0] sm:$0xff]
    %v849 = vld [vmem:[#allocation9 + $0xd8] sm:$0xff]
    %v850 = vld [vmem:[#allocation9 + $0xe0] sm:$0xff]
    %v851 = vld [vmem:[#allocation9 + $0xe8] sm:$0xff]
    %v852 = vld [vmem:[#allocation9 + $0xf0] sm:$0xff]
    %v853 = vld [vmem:[#allocation9 + $0xf8] sm:$0xff]
    %v854 = vld [vmem:[#allocation9 + $0x100] sm:$0xff]
    %v855 = vld [vmem:[#allocation9 + $0x108] sm:$0xff]
    %v856 = vld [vmem:[#allocation9 + $0x110] sm:$0xff]
    %v857 = vld [vmem:[#allocation9 + $0x118] sm:$0xff]
    %v858 = vld [vmem:[#allocation9 + $0x120] sm:$0xff]
    %v859 = vld [vmem:[#allocation9 + $0x128] sm:$0xff]
    %v860 = vld [vmem:[#allocation9 + $0x130] sm:$0xff]
    %v861 = vld [vmem:[#allocation9 + $0x138] sm:$0xff]
    %v862 = vld [vmem:[#allocation9 + $0x140] sm:$0xff]
    %v863 = vld [vmem:[#allocation9 + $0x148] sm:$0xff]
    %v864 = vld [vmem:[#allocation9 + $0x150] sm:$0xff]
    %v865 = vld [vmem:[#allocation9 + $0x158] sm:$0xff]
    %v866 = vld [vmem:[#allocation9 + $0x160] sm:$0xff]
    %v867 = vld [vmem:[#allocation9 + $0x168] sm:$0xff]
    %v868 = vld [vmem:[#allocation9 + $0x170] sm:$0xff]
    %v869 = vld [vmem:[#allocation9 + $0x178] sm:$0xff]
    %v870 = vld [vmem:[#allocation11] sm:$0x7]
    %v872 = vperm.slane %v870, 0
    %v873 = vperm.slane %v870, 1
    %v874 = vperm.slane %v870, 2
    %878 = vmatpush.msra.mxu0 %v867
    %879 = vmatpush.msra.mxu0 %v864
    %880 = vmatpush.msra.mxu0 %v861
    %881 = vmatpush.msra.mxu0 %v858
    %882 = vmatpush.msra.mxu0 %v855
    %883 = vmatpush.msra.mxu0 %v852
    %884 = vmatpush.msra.mxu0 %v849
    %885 = vmatpush.msra.mxu0 %v846
    %886 = vmatpush.msra.mxu0 %v843
    %887 = vmatpush.msra.mxu0 %v840
    %888 = vmatpush.msra.mxu0 %v837
    %889 = vmatpush.msra.mxu0 %v834
    %890 = vmatpush.msra.mxu0 %v831
    %891 = vmatpush.msra.mxu0 %v828
    %892 = vmatpush.msra.mxu0 %v825
    %893 = vmatpush.msra.mxu0 %v822
    %894 = vmatmul.f32.gmra.mxu0 %v818
    %v895 = vpop.f32.mrf.mxu0
    %v896 = vadd.f32 %v872, %v895
    %897 = vmatmul.f32.gmra.mxu0 %v819
    %v898 = vpop.f32.mrf.mxu0
    %v899 = vadd.f32 %v872, %v898
    %900 = vdwg.mxu0
    %901 = vmatpush.msra.mxu0 %v868
    %902 = vmatpush.msra.mxu0 %v865
    %903 = vmatpush.msra.mxu0 %v862
    %904 = vmatpush.msra.mxu0 %v859
    %905 = vmatpush.msra.mxu0 %v856
    %906 = vmatpush.msra.mxu0 %v853
    %907 = vmatpush.msra.mxu0 %v850
    %908 = vmatpush.msra.mxu0 %v847
    %909 = vmatpush.msra.mxu0 %v844
    %910 = vmatpush.msra.mxu0 %v841
    %911 = vmatpush.msra.mxu0 %v838
    %912 = vmatpush.msra.mxu0 %v835
    %913 = vmatpush.msra.mxu0 %v832
    %914 = vmatpush.msra.mxu0 %v829
    %915 = vmatpush.msra.mxu0 %v826
    %916 = vmatpush.msra.mxu0 %v823
    %917 = vmatmul.f32.gmra.mxu0 %v818
    %v918 = vpop.f32.mrf.mxu0
    %v919 = vadd.f32 %v873, %v918
    %920 = vmatmul.f32.gmra.mxu0 %v819
    %v921 = vpop.f32.mrf.mxu0
    %v922 = vadd.f32 %v873, %v921
    %923 = vdwg.mxu0
    %924 = vmatpush.msra.mxu0 %v869
    %925 = vmatpush.msra.mxu0 %v866
    %926 = vmatpush.msra.mxu0 %v863
    %927 = vmatpush.msra.mxu0 %v860
    %928 = vmatpush.msra.mxu0 %v857
    %929 = vmatpush.msra.mxu0 %v854
    %930 = vmatpush.msra.mxu0 %v851
    %931 = vmatpush.msra.mxu0 %v848
    %932 = vmatpush.msra.mxu0 %v845
    %933 = vmatpush.msra.mxu0 %v842
    %934 = vmatpush.msra.mxu0 %v839
    %935 = vmatpush.msra.mxu0 %v836
    %936 = vmatpush.msra.mxu0 %v833
    %937 = vmatpush.msra.mxu0 %v830
    %938 = vmatpush.msra.mxu0 %v827
    %939 = vmatpush.msra.mxu0 %v824
    %940 = vmatmul.f32.gmra.mxu0 %v818
    %v941 = vpop.f32.mrf.mxu0
    %v942 = vadd.f32 %v874, %v941
    %943 = vmatmul.f32.gmra.mxu0 %v819
    %v944 = vpop.f32.mrf.mxu0
    %v945 = vadd.f32 %v874, %v944
    %946 = vdwg.mxu0
    %v947 = vld [vmem:[#allocation12] sm:$0xff]
    %v948 = vld [vmem:[#allocation12 + $0x8] sm:$0xff]
    %v949 = vld [vmem:[#allocation12 + $0x10] sm:$0xff]
    %v950 = vld [vmem:[#allocation12 + $0x18] sm:$0xff]
    %v951 = vld [vmem:[#allocation12 + $0x20] sm:$0xff]
    %v952 = vld [vmem:[#allocation12 + $0x28] sm:$0xff]
    %v953 = vld [vmem:[#allocation12 + $0x30] sm:$0xff]
    %v954 = vld [vmem:[#allocation12 + $0x38] sm:$0xff]
    %v955 = vld [vmem:[#allocation12 + $0x40] sm:$0xff]
    %v956 = vld [vmem:[#allocation12 + $0x48] sm:$0xff]
    %v957 = vld [vmem:[#allocation12 + $0x50] sm:$0xff]
    %v958 = vld [vmem:[#allocation12 + $0x58] sm:$0xff]
    %v959 = vld [vmem:[#allocation12 + $0x60] sm:$0xff]
    %v960 = vld [vmem:[#allocation12 + $0x68] sm:$0xff]
    %v961 = vld [vmem:[#allocation12 + $0x70] sm:$0xff]
    %v962 = vld [vmem:[#allocation12 + $0x78] sm:$0xff]
    %v963 = vld [vmem:[#allocation14] sm:$0x1]
    %vm964 = vcmask 261120
    %v966 = vsel %vm964, %v896, 0
    %v969 = vsel %vm964, %v919, 0
    %971 = vmatpush.xpose.msra.mxu0 0.0
    %972 = vmatpush.xpose.msra.mxu0 0.0
    %973 = vmatpush.xpose.msra.mxu0 0.0
    %974 = vmatpush.xpose.msra.mxu0 0.0
    %975 = vmatpush.xpose.msra.mxu0 0.0
    %976 = vmatpush.xpose.msra.mxu0 0.0
    %977 = vmatpush.xpose.msra.mxu0 0.0
    %978 = vmatpush.xpose.msra.mxu0 0.0
    %979 = vmatpush.xpose.msra.mxu0 0.0
    %980 = vmatpush.xpose.msra.mxu0 0.0
    %981 = vmatpush.xpose.msra.mxu0 0.0
    %982 = vmatpush.xpose.msra.mxu0 0.0
    %983 = vmatpush.xpose.msra.mxu0 0.0
    %984 = vmatpush.xpose.msra.mxu0 0.0
    %985 = vmatpush.xpose.msra.mxu0 0.0
    %986 = vmatpush.xpose.msra.mxu0 %v969
    %987 = vmatmul.f32.gmra.mxu0 %v966
    %v988 = vpop.f32.mrf.mxu0
    %v989 = vadd.f32 0.0, %v988
    %990 = vdwg.mxu0
    %v991 = vmul.f32 %v989, 0.17677669
    %v992 = vperm.slane %v821, 0
    %v993 = vadd.f32 %v991, %v992
    %vm994 = vcmask 64512
    %v995 = vsel %vm994, %v993, -inf
    %996 = vmax.xlane.f32.xlu0 %v995
    %v997 = vpop.xlane.xlu0 %996
    %v998 = vsub.f32 %v993, %v997
    %v999 = vmul.f32 %v998, 1.442695
    %v1000 = vpow.pop %v999
    %v1001 = vsel %vm994, %v1000, 0.0
    %1002 = vadd.xlane.f32.xlu0 %v1001
    %v1003 = vpop.xlane.xlu0 %1002
    %v1004 = vrcp.pop %v1003
    %v1005 = vmul.f32 %v1000, %v1004
    %v1007 = vsel %vm994, %v1005, 0
    %1009 = vmatpush.msra.mxu0 0.0
    %1010 = vmatpush.msra.mxu0 0.0
    %1011 = vmatpush.msra.mxu0 0.0
    %1012 = vmatpush.msra.mxu0 0.0
    %1013 = vmatpush.msra.mxu0 0.0
    %1014 = vmatpush.msra.mxu0 0.0
    %1015 = vmatpush.msra.mxu0 0.0
    %1016 = vmatpush.msra.mxu0 0.0
    %1017 = vmatpush.msra.mxu0 0.0
    %1018 = vmatpush.msra.mxu0 0.0
    %1019 = vmatpush.msra.mxu0 0.0
    %1020 = vmatpush.msra.mxu0 0.0
    %1021 = vmatpush.msra.mxu0 0.0
    %1022 = vmatpush.msra.mxu0 0.0
    %1023 = vmatpush.msra.mxu0 0.0
    %1024 = vmatpush.msra.mxu0 %v942
    %1025 = vmatmul.f32.gmra.mxu0 %v1007
    %v1026 = vpop.f32.mrf.mxu0
    %v1027 = vadd.f32 0.0, %v1026
    %1028 = vdwg.mxu0
    %1029 = vst.msk [vmem:[#allocation2] sm:$0xff] %vm964, %v1027
    %1030 = vrot.lane.b32.xlu0 %v896, 96
    %v1031 = vpop.permute.xlu0 %1030
    %1032 = vrot.lane.b32.xlu0 %v919, 96
    %v1033 = vpop.permute.xlu0 %1032
    %v1034 = vsel %vm964, %v1031, 0
    %v1036 = vsel %vm964, %v1033, 0
    %1038 = vmatpush.xpose.msra.mxu0 0.0
    %1039 = vmatpush.xpose.msra.mxu0 0.0
    %1040 = vmatpush.xpose.msra.mxu0 0.0
    %1041 = vmatpush.xpose.msra.mxu0 0.0
    %1042 = vmatpush.xpose.msra.mxu0 0.0
    %1043 = vmatpush.xpose.msra.mxu0 0.0
    %1044 = vmatpush.xpose.msra.mxu0 0.0
    %1045 = vmatpush.xpose.msra.mxu0 0.0
    %1046 = vmatpush.xpose.msra.mxu0 0.0
    %1047 = vmatpush.xpose.msra.mxu0 0.0
    %1048 = vmatpush.xpose.msra.mxu0 0.0
    %1049 = vmatpush.xpose.msra.mxu0 0.0
    %1050 = vmatpush.xpose.msra.mxu0 0.0
    %1051 = vmatpush.xpose.msra.mxu0 0.0
    %1052 = vmatpush.xpose.msra.mxu0 0.0
    %1053 = vmatpush.xpose.msra.mxu0 %v1036
    %1054 = vmatmul.f32.gmra.mxu0 %v1034
    %v1055 = vpop.f32.mrf.mxu0
    %v1056 = vadd.f32 0.0, %v1055
    %1057 = vdwg.mxu0
    %v1058 = vmul.f32 %v1056, 0.17677669
    %v1059 = vadd.f32 %v1058, %v992
    %v1060 = vsel %vm994, %v1059, -inf
    %1061 = vmax.xlane.f32.xlu0 %v1060
    %v1062 = vpop.xlane.xlu0 %1061
    %v1063 = vsub.f32 %v1059, %v1062
    %v1064 = vmul.f32 %v1063, 1.442695
    %v1065 = vpow.pop %v1064
    %v1066 = vsel %vm994, %v1065, 0.0
    %1067 = vadd.xlane.f32.xlu0 %v1066
    %v1068 = vpop.xlane.xlu0 %1067
    %v1069 = vrcp.pop %v1068
    %v1070 = vmul.f32 %v1065, %v1069
    %1072 = vrot.lane.b32.xlu0 %v942, 96
    %v1073 = vpop.permute.xlu0 %1072
    %v1076 = vsel %vm994, %v1070, 0
    %1078 = vmatpush.msra.mxu0 0.0
    %1079 = vmatpush.msra.mxu0 0.0
    %1080 = vmatpush.msra.mxu0 0.0
    %1081 = vmatpush.msra.mxu0 0.0
    %1082 = vmatpush.msra.mxu0 0.0
    %1083 = vmatpush.msra.mxu0 0.0
    %1084 = vmatpush.msra.mxu0 0.0
    %1085 = vmatpush.msra.mxu0 0.0
    %1086 = vmatpush.msra.mxu0 0.0
    %1087 = vmatpush.msra.mxu0 0.0
    %1088 = vmatpush.msra.mxu0 0.0
    %1089 = vmatpush.msra.mxu0 0.0
    %1090 = vmatpush.msra.mxu0 0.0
    %1091 = vmatpush.msra.mxu0 0.0
    %1092 = vmatpush.msra.mxu0 0.0
    %1093 = vmatpush.msra.mxu0 %v1073
    %1094 = vmatmul.f32.gmra.mxu0 %v1076
    %v1095 = vpop.f32.mrf.mxu0
    %v1096 = vadd.f32 0.0, %v1095
    %1097 = vdwg.mxu0
    %1099 = vrot.lane.b32.xlu0 %v1096, 32
    %v1100 = vpop.permute.xlu0 %1099
    %vm1102 = vcmask 523520
    %1103 = vst.msk [vmem:[#allocation2] sm:$0xff] %vm1102, %v1100
    %1104 = vrot.lane.b32.xlu0 %v896, 64
    %v1105 = vpop.permute.xlu0 %1104
    %1106 = vrot.lane.b32.xlu0 %v919, 64
    %v1107 = vpop.permute.xlu0 %1106
    %v1108 = vsel %vm964, %v1105, 0
    %v1110 = vsel %vm964, %v1107, 0
    %1112 = vmatpush.xpose.msra.mxu0 0.0
    %1113 = vmatpush.xpose.msra.mxu0 0.0
    %1114 = vmatpush.xpose.msra.mxu0 0.0
    %1115 = vmatpush.xpose.msra.mxu0 0.0
    %1116 = vmatpush.xpose.msra.mxu0 0.0
    %1117 = vmatpush.xpose.msra.mxu0 0.0
    %1118 = vmatpush.xpose.msra.mxu0 0.0
    %1119 = vmatpush.xpose.msra.mxu0 0.0
    %1120 = vmatpush.xpose.msra.mxu0 0.0
    %1121 = vmatpush.xpose.msra.mxu0 0.0
    %1122 = vmatpush.xpose.msra.mxu0 0.0
    %1123 = vmatpush.xpose.msra.mxu0 0.0
    %1124 = vmatpush.xpose.msra.mxu0 0.0
    %1125 = vmatpush.xpose.msra.mxu0 0.0
    %1126 = vmatpush.xpose.msra.mxu0 0.0
    %1127 = vmatpush.xpose.msra.mxu0 %v1110
    %1128 = vmatmul.f32.gmra.mxu0 %v1108
    %v1129 = vpop.f32.mrf.mxu0
    %v1130 = vadd.f32 0.0, %v1129
    %1131 = vdwg.mxu0
    %v1132 = vmul.f32 %v1130, 0.17677669
    %v1133 = vadd.f32 %v1132, %v992
    %v1134 = vsel %vm994, %v1133, -inf
    %1135 = vmax.xlane.f32.xlu0 %v1134
    %v1136 = vpop.xlane.xlu0 %1135
    %v1137 = vsub.f32 %v1133, %v1136
    %v1138 = vmul.f32 %v1137, 1.442695
    %v1139 = vpow.pop %v1138
    %v1140 = vsel %vm994, %v1139, 0.0
    %1141 = vadd.xlane.f32.xlu0 %v1140
    %v1142 = vpop.xlane.xlu0 %1141
    %v1143 = vrcp.pop %v1142
    %v1144 = vmul.f32 %v1139, %v1143
    %1145 = vrot.lane.b32.xlu0 %v942, 64
    %v1146 = vpop.permute.xlu0 %1145
    %v1149 = vsel %vm994, %v1144, 0
    %1151 = vmatpush.msra.mxu0 0.0
    %1152 = vmatpush.msra.mxu0 0.0
    %1153 = vmatpush.msra.mxu0 0.0
    %1154 = vmatpush.msra.mxu0 0.0
    %1155 = vmatpush.msra.mxu0 0.0
    %1156 = vmatpush.msra.mxu0 0.0
    %1157 = vmatpush.msra.mxu0 0.0
    %1158 = vmatpush.msra.mxu0 0.0
    %1159 = vmatpush.msra.mxu0 0.0
    %1160 = vmatpush.msra.mxu0 0.0
    %1161 = vmatpush.msra.mxu0 0.0
    %1162 = vmatpush.msra.mxu0 0.0
    %1163 = vmatpush.msra.mxu0 0.0
    %1164 = vmatpush.msra.mxu0 0.0
    %1165 = vmatpush.msra.mxu0 0.0
    %1166 = vmatpush.msra.mxu0 %v1146
    %1167 = vmatmul.f32.gmra.mxu0 %v1149
    %v1168 = vpop.f32.mrf.mxu0
    %v1169 = vadd.f32 0.0, %v1168
    %1170 = vdwg.mxu0
    %1172 = vrot.lane.b32.xlu0 %v1169, 64
    %v1173 = vpop.permute.xlu0 %1172
    %vm1175 = vcmask 785920
    %1176 = vst.msk [vmem:[#allocation2] sm:$0xff] %vm1175, %v1173
    %1177 = vrot.lane.b32.xlu0 %v896, 32
    %v1178 = vpop.permute.xlu0 %1177
    %1179 = vrot.lane.b32.xlu0 %v919, 32
    %v1180 = vpop.permute.xlu0 %1179
    %v1181 = vsel %vm964, %v1178, 0
    %v1183 = vsel %vm964, %v1180, 0
    %1185 = vmatpush.xpose.msra.mxu0 0.0
    %1186 = vmatpush.xpose.msra.mxu0 0.0
    %1187 = vmatpush.xpose.msra.mxu0 0.0
    %1188 = vmatpush.xpose.msra.mxu0 0.0
    %1189 = vmatpush.xpose.msra.mxu0 0.0
    %1190 = vmatpush.xpose.msra.mxu0 0.0
    %1191 = vmatpush.xpose.msra.mxu0 0.0
    %1192 = vmatpush.xpose.msra.mxu0 0.0
    %1193 = vmatpush.xpose.msra.mxu0 0.0
    %1194 = vmatpush.xpose.msra.mxu0 0.0
    %1195 = vmatpush.xpose.msra.mxu0 0.0
    %1196 = vmatpush.xpose.msra.mxu0 0.0
    %1197 = vmatpush.xpose.msra.mxu0 0.0
    %1198 = vmatpush.xpose.msra.mxu0 0.0
    %1199 = vmatpush.xpose.msra.mxu0 0.0
    %1200 = vmatpush.xpose.msra.mxu0 %v1183
    %1201 = vmatmul.f32.gmra.mxu0 %v1181
    %v1202 = vpop.f32.mrf.mxu0
    %v1203 = vadd.f32 0.0, %v1202
    %1204 = vdwg.mxu0
    %v1205 = vmul.f32 %v1203, 0.17677669
    %v1206 = vadd.f32 %v1205, %v992
    %v1207 = vsel %vm994, %v1206, -inf
    %1208 = vmax.xlane.f32.xlu0 %v1207
    %v1209 = vpop.xlane.xlu0 %1208
    %v1210 = vsub.f32 %v1206, %v1209
    %v1211 = vmul.f32 %v1210, 1.442695
    %v1212 = vpow.pop %v1211
    %v1213 = vsel %vm994, %v1212, 0.0
    %1214 = vadd.xlane.f32.xlu0 %v1213
    %v1215 = vpop.xlane.xlu0 %1214
    %v1216 = vrcp.pop %v1215
    %v1217 = vmul.f32 %v1212, %v1216
    %1218 = vrot.lane.b32.xlu0 %v942, 32
    %v1219 = vpop.permute.xlu0 %1218
    %v1222 = vsel %vm994, %v1217, 0
    %1224 = vmatpush.msra.mxu0 0.0
    %1225 = vmatpush.msra.mxu0 0.0
    %1226 = vmatpush.msra.mxu0 0.0
    %1227 = vmatpush.msra.mxu0 0.0
    %1228 = vmatpush.msra.mxu0 0.0
    %1229 = vmatpush.msra.mxu0 0.0
    %1230 = vmatpush.msra.mxu0 0.0
    %1231 = vmatpush.msra.mxu0 0.0
    %1232 = vmatpush.msra.mxu0 0.0
    %1233 = vmatpush.msra.mxu0 0.0
    %1234 = vmatpush.msra.mxu0 0.0
    %1235 = vmatpush.msra.mxu0 0.0
    %1236 = vmatpush.msra.mxu0 0.0
    %1237 = vmatpush.msra.mxu0 0.0
    %1238 = vmatpush.msra.mxu0 0.0
    %1239 = vmatpush.msra.mxu0 %v1219
    %1240 = vmatmul.f32.gmra.mxu0 %v1222
    %v1241 = vpop.f32.mrf.mxu0
    %v1242 = vadd.f32 0.0, %v1241
    %1243 = vdwg.mxu0
    %1245 = vrot.lane.b32.xlu0 %v1242, 96
    %v1246 = vpop.permute.xlu0 %1245
    %vm1248 = vcmask 1048320
    %1249 = vst.msk [vmem:[#allocation2] sm:$0xff] %vm1248, %v1246
    %v1251 = vsel %vm964, %v899, 0
    %v1254 = vsel %vm964, %v922, 0
    %1256 = vmatpush.xpose.msra.mxu0 0.0
    %1257 = vmatpush.xpose.msra.mxu0 0.0
    %1258 = vmatpush.xpose.msra.mxu0 0.0
    %1259 = vmatpush.xpose.msra.mxu0 0.0
    %1260 = vmatpush.xpose.msra.mxu0 0.0
    %1261 = vmatpush.xpose.msra.mxu0 0.0
    %1262 = vmatpush.xpose.msra.mxu0 0.0
    %1263 = vmatpush.xpose.msra.mxu0 0.0
    %1264 = vmatpush.xpose.msra.mxu0 0.0
    %1265 = vmatpush.xpose.msra.mxu0 0.0
    %1266 = vmatpush.xpose.msra.mxu0 0.0
    %1267 = vmatpush.xpose.msra.mxu0 0.0
    %1268 = vmatpush.xpose.msra.mxu0 0.0
    %1269 = vmatpush.xpose.msra.mxu0 0.0
    %1270 = vmatpush.xpose.msra.mxu0 0.0
    %1271 = vmatpush.xpose.msra.mxu0 %v1254
    %1272 = vmatmul.f32.gmra.mxu0 %v1251
    %v1273 = vpop.f32.mrf.mxu0
    %v1274 = vadd.f32 0.0, %v1273
    %1275 = vdwg.mxu0
    %v1276 = vmul.f32 %v1274, 0.17677669
    %v1277 = vperm.slane %v821, 1
    %v1278 = vadd.f32 %v1276, %v1277
    %v1279 = vsel %vm994, %v1278, -inf
    %1280 = vmax.xlane.f32.xlu0 %v1279
    %v1281 = vpop.xlane.xlu0 %1280
    %v1282 = vsub.f32 %v1278, %v1281
    %v1283 = vmul.f32 %v1282, 1.442695
    %v1284 = vpow.pop %v1283
    %v1285 = vsel %vm994, %v1284, 0.0
    %1286 = vadd.xlane.f32.xlu0 %v1285
    %v1287 = vpop.xlane.xlu0 %1286
    %v1288 = vrcp.pop %v1287
    %v1289 = vmul.f32 %v1284, %v1288
    %v1291 = vsel %vm994, %v1289, 0
    %1293 = vmatpush.msra.mxu0 0.0
    %1294 = vmatpush.msra.mxu0 0.0
    %1295 = vmatpush.msra.mxu0 0.0
    %1296 = vmatpush.msra.mxu0 0.0
    %1297 = vmatpush.msra.mxu0 0.0
    %1298 = vmatpush.msra.mxu0 0.0
    %1299 = vmatpush.msra.mxu0 0.0
    %1300 = vmatpush.msra.mxu0 0.0
    %1301 = vmatpush.msra.mxu0 0.0
    %1302 = vmatpush.msra.mxu0 0.0
    %1303 = vmatpush.msra.mxu0 0.0
    %1304 = vmatpush.msra.mxu0 0.0
    %1305 = vmatpush.msra.mxu0 0.0
    %1306 = vmatpush.msra.mxu0 0.0
    %1307 = vmatpush.msra.mxu0 0.0
    %1308 = vmatpush.msra.mxu0 %v945
    %1309 = vmatmul.f32.gmra.mxu0 %v1291
    %v1310 = vpop.f32.mrf.mxu0
    %v1311 = vadd.f32 0.0, %v1310
    %1312 = vdwg.mxu0
    %1313 = vst.msk [vmem:[#allocation2 + $0x8] sm:$0xff] %vm964, %v1311
    %1314 = vrot.lane.b32.xlu0 %v899, 96
    %v1315 = vpop.permute.xlu0 %1314
    %1316 = vrot.lane.b32.xlu0 %v922, 96
    %v1317 = vpop.permute.xlu0 %1316
    %v1318 = vsel %vm964, %v1315, 0
    %v1320 = vsel %vm964, %v1317, 0
    %1322 = vmatpush.xpose.msra.mxu0 0.0
    %1323 = vmatpush.xpose.msra.mxu0 0.0
    %1324 = vmatpush.xpose.msra.mxu0 0.0
    %1325 = vmatpush.xpose.msra.mxu0 0.0
    %1326 = vmatpush.xpose.msra.mxu0 0.0
    %1327 = vmatpush.xpose.msra.mxu0 0.0
    %1328 = vmatpush.xpose.msra.mxu0 0.0
    %1329 = vmatpush.xpose.msra.mxu0 0.0
    %1330 = vmatpush.xpose.msra.mxu0 0.0
    %1331 = vmatpush.xpose.msra.mxu0 0.0
    %1332 = vmatpush.xpose.msra.mxu0 0.0
    %1333 = vmatpush.xpose.msra.mxu0 0.0
    %1334 = vmatpush.xpose.msra.mxu0 0.0
    %1335 = vmatpush.xpose.msra.mxu0 0.0
    %1336 = vmatpush.xpose.msra.mxu0 0.0
    %1337 = vmatpush.xpose.msra.mxu0 %v1320
    %1338 = vmatmul.f32.gmra.mxu0 %v1318
    %v1339 = vpop.f32.mrf.mxu0
    %v1340 = vadd.f32 0.0, %v1339
    %1341 = vdwg.mxu0
    %v1342 = vmul.f32 %v1340, 0.17677669
    %v1343 = vadd.f32 %v1342, %v1277
    %v1344 = vsel %vm994, %v1343, -inf
    %1345 = vmax.xlane.f32.xlu0 %v1344
    %v1346 = vpop.xlane.xlu0 %1345
    %v1347 = vsub.f32 %v1343, %v1346
    %v1348 = vmul.f32 %v1347, 1.442695
    %v1349 = vpow.pop %v1348
    %v1350 = vsel %vm994, %v1349, 0.0
    %1351 = vadd.xlane.f32.xlu0 %v1350
    %v1352 = vpop.xlane.xlu0 %1351
    %v1353 = vrcp.pop %v1352
    %v1354 = vmul.f32 %v1349, %v1353
    %1356 = vrot.lane.b32.xlu0 %v945, 96
    %v1357 = vpop.permute.xlu0 %1356
    %v1360 = vsel %vm994, %v1354, 0
    %1362 = vmatpush.msra.mxu0 0.0
    %1363 = vmatpush.msra.mxu0 0.0
    %1364 = vmatpush.msra.mxu0 0.0
    %1365 = vmatpush.msra.mxu0 0.0
    %1366 = vmatpush.msra.mxu0 0.0
    %1367 = vmatpush.msra.mxu0 0.0
    %1368 = vmatpush.msra.mxu0 0.0
    %1369 = vmatpush.msra.mxu0 0.0
    %1370 = vmatpush.msra.mxu0 0.0
    %1371 = vmatpush.msra.mxu0 0.0
    %1372 = vmatpush.msra.mxu0 0.0
    %1373 = vmatpush.msra.mxu0 0.0
    %1374 = vmatpush.msra.mxu0 0.0
    %1375 = vmatpush.msra.mxu0 0.0
    %1376 = vmatpush.msra.mxu0 0.0
    %1377 = vmatpush.msra.mxu0 %v1357
    %1378 = vmatmul.f32.gmra.mxu0 %v1360
    %v1379 = vpop.f32.mrf.mxu0
    %v1380 = vadd.f32 0.0, %v1379
    %1381 = vdwg.mxu0
    %1383 = vrot.lane.b32.xlu0 %v1380, 32
    %v1384 = vpop.permute.xlu0 %1383
    %1386 = vst.msk [vmem:[#allocation2 + $0x8] sm:$0xff] %vm1102, %v1384
    %1387 = vrot.lane.b32.xlu0 %v899, 64
    %v1388 = vpop.permute.xlu0 %1387
    %1389 = vrot.lane.b32.xlu0 %v922, 64
    %v1390 = vpop.permute.xlu0 %1389
    %v1391 = vsel %vm964, %v1388, 0
    %v1393 = vsel %vm964, %v1390, 0
    %1395 = vmatpush.xpose.msra.mxu0 0.0
    %1396 = vmatpush.xpose.msra.mxu0 0.0
    %1397 = vmatpush.xpose.msra.mxu0 0.0
    %1398 = vmatpush.xpose.msra.mxu0 0.0
    %1399 = vmatpush.xpose.msra.mxu0 0.0
    %1400 = vmatpush.xpose.msra.mxu0 0.0
    %1401 = vmatpush.xpose.msra.mxu0 0.0
    %1402 = vmatpush.xpose.msra.mxu0 0.0
    %1403 = vmatpush.xpose.msra.mxu0 0.0
    %1404 = vmatpush.xpose.msra.mxu0 0.0
    %1405 = vmatpush.xpose.msra.mxu0 0.0
    %1406 = vmatpush.xpose.msra.mxu0 0.0
    %1407 = vmatpush.xpose.msra.mxu0 0.0
    %1408 = vmatpush.xpose.msra.mxu0 0.0
    %1409 = vmatpush.xpose.msra.mxu0 0.0
    %1410 = vmatpush.xpose.msra.mxu0 %v1393
    %1411 = vmatmul.f32.gmra.mxu0 %v1391
    %v1412 = vpop.f32.mrf.mxu0
    %v1413 = vadd.f32 0.0, %v1412
    %1414 = vdwg.mxu0
    %v1415 = vmul.f32 %v1413, 0.17677669
    %v1416 = vadd.f32 %v1415, %v1277
    %v1417 = vsel %vm994, %v1416, -inf
    %1418 = vmax.xlane.f32.xlu0 %v1417
    %v1419 = vpop.xlane.xlu0 %1418
    %v1420 = vsub.f32 %v1416, %v1419
    %v1421 = vmul.f32 %v1420, 1.442695
    %v1422 = vpow.pop %v1421
    %v1423 = vsel %vm994, %v1422, 0.0
    %1424 = vadd.xlane.f32.xlu0 %v1423
    %v1425 = vpop.xlane.xlu0 %1424
    %v1426 = vrcp.pop %v1425
    %v1427 = vmul.f32 %v1422, %v1426
    %1428 = vrot.lane.b32.xlu0 %v945, 64
    %v1429 = vpop.permute.xlu0 %1428
    %v1432 = vsel %vm994, %v1427, 0
    %1434 = vmatpush.msra.mxu0 0.0
    %1435 = vmatpush.msra.mxu0 0.0
    %1436 = vmatpush.msra.mxu0 0.0
    %1437 = vmatpush.msra.mxu0 0.0
    %1438 = vmatpush.msra.mxu0 0.0
    %1439 = vmatpush.msra.mxu0 0.0
    %1440 = vmatpush.msra.mxu0 0.0
    %1441 = vmatpush.msra.mxu0 0.0
    %1442 = vmatpush.msra.mxu0 0.0
    %1443 = vmatpush.msra.mxu0 0.0
    %1444 = vmatpush.msra.mxu0 0.0
    %1445 = vmatpush.msra.mxu0 0.0
    %1446 = vmatpush.msra.mxu0 0.0
    %1447 = vmatpush.msra.mxu0 0.0
    %1448 = vmatpush.msra.mxu0 0.0
    %1449 = vmatpush.msra.mxu0 %v1429
    %1450 = vmatmul.f32.gmra.mxu0 %v1432
    %v1451 = vpop.f32.mrf.mxu0
    %v1452 = vadd.f32 0.0, %v1451
    %1453 = vdwg.mxu0
    %1455 = vrot.lane.b32.xlu0 %v1452, 64
    %v1456 = vpop.permute.xlu0 %1455
    %1458 = vst.msk [vmem:[#allocation2 + $0x8] sm:$0xff] %vm1175, %v1456
    %1459 = vrot.lane.b32.xlu0 %v899, 32
    %v1460 = vpop.permute.xlu0 %1459
    %1461 = vrot.lane.b32.xlu0 %v922, 32
    %v1462 = vpop.permute.xlu0 %1461
    %v1463 = vsel %vm964, %v1460, 0
    %v1465 = vsel %vm964, %v1462, 0
    %1467 = vmatpush.xpose.msra.mxu0 0.0
    %1468 = vmatpush.xpose.msra.mxu0 0.0
    %1469 = vmatpush.xpose.msra.mxu0 0.0
    %1470 = vmatpush.xpose.msra.mxu0 0.0
    %1471 = vmatpush.xpose.msra.mxu0 0.0
    %1472 = vmatpush.xpose.msra.mxu0 0.0
    %1473 = vmatpush.xpose.msra.mxu0 0.0
    %1474 = vmatpush.xpose.msra.mxu0 0.0
    %1475 = vmatpush.xpose.msra.mxu0 0.0
    %1476 = vmatpush.xpose.msra.mxu0 0.0
    %1477 = vmatpush.xpose.msra.mxu0 0.0
    %1478 = vmatpush.xpose.msra.mxu0 0.0
    %1479 = vmatpush.xpose.msra.mxu0 0.0
    %1480 = vmatpush.xpose.msra.mxu0 0.0
    %1481 = vmatpush.xpose.msra.mxu0 0.0
    %1482 = vmatpush.xpose.msra.mxu0 %v1465
    %1483 = vmatmul.f32.gmra.mxu0 %v1463
    %v1484 = vpop.f32.mrf.mxu0
    %v1485 = vadd.f32 0.0, %v1484
    %1486 = vdwg.mxu0
    %v1487 = vmul.f32 %v1485, 0.17677669
    %v1488 = vadd.f32 %v1487, %v1277
    %v1489 = vsel %vm994, %v1488, -inf
    %1490 = vmax.xlane.f32.xlu0 %v1489
    %v1491 = vpop.xlane.xlu0 %1490
    %v1492 = vsub.f32 %v1488, %v1491
    %v1493 = vmul.f32 %v1492, 1.442695
    %v1494 = vpow.pop %v1493
    %v1495 = vsel %vm994, %v1494, 0.0
    %1496 = vadd.xlane.f32.xlu0 %v1495
    %v1497 = vpop.xlane.xlu0 %1496
    %v1498 = vrcp.pop %v1497
    %v1499 = vmul.f32 %v1494, %v1498
    %1500 = vrot.lane.b32.xlu0 %v945, 32
    %v1501 = vpop.permute.xlu0 %1500
    %v1504 = vsel %vm994, %v1499, 0
    %1506 = vmatpush.msra.mxu0 0.0
    %1507 = vmatpush.msra.mxu0 0.0
    %1508 = vmatpush.msra.mxu0 0.0
    %1509 = vmatpush.msra.mxu0 0.0
    %1510 = vmatpush.msra.mxu0 0.0
    %1511 = vmatpush.msra.mxu0 0.0
    %1512 = vmatpush.msra.mxu0 0.0
    %1513 = vmatpush.msra.mxu0 0.0
    %1514 = vmatpush.msra.mxu0 0.0
    %1515 = vmatpush.msra.mxu0 0.0
    %1516 = vmatpush.msra.mxu0 0.0
    %1517 = vmatpush.msra.mxu0 0.0
    %1518 = vmatpush.msra.mxu0 0.0
    %1519 = vmatpush.msra.mxu0 0.0
    %1520 = vmatpush.msra.mxu0 0.0
    %1521 = vmatpush.msra.mxu0 %v1501
    %1522 = vmatmul.f32.gmra.mxu0 %v1504
    %v1523 = vpop.f32.mrf.mxu0
    %v1524 = vadd.f32 0.0, %v1523
    %1525 = vdwg.mxu0
    %1527 = vrot.lane.b32.xlu0 %v1524, 96
    %v1528 = vpop.permute.xlu0 %1527
    %1530 = vst.msk [vmem:[#allocation2 + $0x8] sm:$0xff] %vm1248, %v1528
    %v1531 = vld [vmem:[#allocation2] sm:$0xff]
    %v1532 = vld [vmem:[#allocation2 + $0x8] sm:$0xff]
    %v1534 = vperm.slane %v963, 0
    %1536 = vmatpush.msra.mxu0 %v962
    %1537 = vmatpush.msra.mxu0 %v961
    %1538 = vmatpush.msra.mxu0 %v960
    %1539 = vmatpush.msra.mxu0 %v959
    %1540 = vmatpush.msra.mxu0 %v958
    %1541 = vmatpush.msra.mxu0 %v957
    %1542 = vmatpush.msra.mxu0 %v956
    %1543 = vmatpush.msra.mxu0 %v955
    %1544 = vmatpush.msra.mxu0 %v954
    %1545 = vmatpush.msra.mxu0 %v953
    %1546 = vmatpush.msra.mxu0 %v952
    %1547 = vmatpush.msra.mxu0 %v951
    %1548 = vmatpush.msra.mxu0 %v950
    %1549 = vmatpush.msra.mxu0 %v949
    %1550 = vmatpush.msra.mxu0 %v948
    %1551 = vmatpush.msra.mxu0 %v947
    %1552 = vmatmul.f32.gmra.mxu0 %v1531
    %v1553 = vpop.f32.mrf.mxu0
    %v1554 = vadd.f32 %v1534, %v1553
    %1555 = vmatmul.f32.gmra.mxu0 %v1532
    %v1556 = vpop.f32.mrf.mxu0
    %v1557 = vadd.f32 %v1534, %v1556
    %1558 = vdwg.mxu0
    %v1559 = vadd.f32 %v818, %v1554
    %v1560 = vadd.f32 %v819, %v1557
    %v1561 = vld [vmem:[#allocation15] sm:$0x1]
    %v1562 = vld [vmem:[#allocation17] sm:$0x1]
    %1563 = vadd.xlane.f32.xlu0 %v1559
    %v1564 = vpop.xlane.xlu0 %1563
    %1565 = vadd.xlane.f32.xlu0 %v1560
    %v1566 = vpop.xlane.xlu0 %1565
    %v1567 = vrcp.pop 128.0
    %v1568 = vmul.f32 128.0, %v1567
    %v1569 = vsub.f32 1.0, %v1568
    %v1570 = vmul.f32 %v1567, %v1569
    %v1571 = vadd.f32 %v1567, %v1570
    %vm1572 = vweird.f32 %v1567
    %v1573 = vsel %vm1572, %v1567, %v1571
    %v1574 = vmul.f32 %v1564, %v1573
    %v1575 = vmul.f32 %v1566, %v1573
    %v1576 = vsub.f32 %v1559, %v1574
    %v1577 = vsub.f32 %v1560, %v1575
    %v1578 = vmul.f32 %v1576, %v1576
    %v1579 = vmul.f32 %v1577, %v1577
    %1580 = vadd.xlane.f32.xlu0 %v1578
    %v1581 = vpop.xlane.xlu0 %1580
    %1582 = vadd.xlane.f32.xlu0 %v1579
    %v1583 = vpop.xlane.xlu0 %1582
    %v1584 = vmul.f32 %v1581, %v1573
    %v1585 = vmul.f32 %v1583, %v1573
    %v1586 = vadd.f32 %v1584, 1e-05
    %v1587 = vadd.f32 %v1585, 1e-05
    %v1588 = vrsqrt.pop %v1586
    %v1589 = vmul.f32 %v1588, %v1586
    %v1590 = vmul.f32 %v1589, %v1588
    %v1591 = vmul.f32 0.5, %v1590
    %v1592 = vsub.f32 1.5, %v1591
    %v1593 = vmul.f32 %v1588, %v1592
    %vm1594 = vweird.f32 %v1586
    %vm1595 = vweird.f32 %v1588
    %vm1596 = vmor %vm1594, %vm1595
    %v1597 = vsel %vm1596, %v1588, %v1593
    %v1598 = vrsqrt.pop %v1587
    %v1599 = vmul.f32 %v1598, %v1587
    %v1600 = vmul.f32 %v1599, %v1598
    %v1601 = vmul.f32 0.5, %v1600
    %v1602 = vsub.f32 1.5, %v1601
    %v1603 = vmul.f32 %v1598, %v1602
    %vm1604 = vweird.f32 %v1587
    %vm1605 = vweird.f32 %v1598
    %vm1606 = vmor %vm1604, %vm1605
    %v1607 = vsel %vm1606, %v1598, %v1603
    %v1608 = vmul.f32 %v1576, %v1597
    %v1609 = vmul.f32 %v1577, %v1607
    %v1611 = vperm.slane %v1561, 0
    %v1613 = vmul.f32 %v1608, %v1611
    %v1614 = vmul.f32 %v1609, %v1611
    %v1616 = vperm.slane %v1562, 0
    %v1618 = vadd.f32 %v1613, %v1616
    %v1619 = vadd.f32 %v1614, %v1616
    %v1620 = vld [vmem:[#allocation18] sm:$0xff]
    %v1621 = vld [vmem:[#allocation18 + $0x8] sm:$0xff]
    %v1622 = vld [vmem:[#allocation18 + $0x10] sm:$0xff]
    %v1623 = vld [vmem:[#allocation18 + $0x18] sm:$0xff]
    %v1624 = vld [vmem:[#allocation18 + $0x20] sm:$0xff]
    %v1625 = vld [vmem:[#allocation18 + $0x28] sm:$0xff]
    %v1626 = vld [vmem:[#allocation18 + $0x30] sm:$0xff]
    %v1627 = vld [vmem:[#allocation18 + $0x38] sm:$0xff]
    %v1628 = vld [vmem:[#allocation18 + $0x40] sm:$0xff]
    %v1629 = vld [vmem:[#allocation18 + $0x48] sm:$0xff]
    %v1630 = vld [vmem:[#allocation18 + $0x50] sm:$0xff]
    %v1631 = vld [vmem:[#allocation18 + $0x58] sm:$0xff]
    %v1632 = vld [vmem:[#allocation18 + $0x60] sm:$0xff]
    %v1633 = vld [vmem:[#allocation18 + $0x68] sm:$0xff]
    %v1634 = vld [vmem:[#allocation18 + $0x70] sm:$0xff]
    %v1635 = vld [vmem:[#allocation18 + $0x78] sm:$0xff]
    %v1636 = vld [vmem:[#allocation20] sm:$0x1]
    %v1638 = vperm.slane %v1636, 0
    %1640 = vmatpush.msra.mxu0 %v1635
    %1641 = vmatpush.msra.mxu0 %v1634
    %1642 = vmatpush.msra.mxu0 %v1633
    %1643 = vmatpush.msra.mxu0 %v1632
    %1644 = vmatpush.msra.mxu0 %v1631
    %1645 = vmatpush.msra.mxu0 %v1630
    %1646 = vmatpush.msra.mxu0 %v1629
    %1647 = vmatpush.msra.mxu0 %v1628
    %1648 = vmatpush.msra.mxu0 %v1627
    %1649 = vmatpush.msra.mxu0 %v1626
    %1650 = vmatpush.msra.mxu0 %v1625
    %1651 = vmatpush.msra.mxu0 %v1624
    %1652 = vmatpush.msra.mxu0 %v1623
    %1653 = vmatpush.msra.mxu0 %v1622
    %1654 = vmatpush.msra.mxu0 %v1621
    %1655 = vmatpush.msra.mxu0 %v1620
    %1656 = vmatmul.f32.gmra.mxu0 %v1618
    %v1657 = vpop.f32.mrf.mxu0
    %v1658 = vadd.f32 %v1638, %v1657
    %1659 = vmatmul.f32.gmra.mxu0 %v1619
    %v1660 = vpop.f32.mrf.mxu0
    %v1661 = vadd.f32 %v1638, %v1660
    %1662 = vdwg.mxu0
    %v1663 = vmax.f32 %v1658, 0.0
    %v1664 = vmax.f32 %v1661, 0.0
    %v1665 = vld [vmem:[#allocation21] sm:$0xff]
    %v1666 = vld [vmem:[#allocation21 + $0x8] sm:$0xff]
    %v1667 = vld [vmem:[#allocation21 + $0x10] sm:$0xff]
    %v1668 = vld [vmem:[#allocation21 + $0x18] sm:$0xff]
    %v1669 = vld [vmem:[#allocation21 + $0x20] sm:$0xff]
    %v1670 = vld [vmem:[#allocation21 + $0x28] sm:$0xff]
    %v1671 = vld [vmem:[#allocation21 + $0x30] sm:$0xff]
    %v1672 = vld [vmem:[#allocation21 + $0x38] sm:$0xff]
    %v1673 = vld [vmem:[#allocation21 + $0x40] sm:$0xff]
    %v1674 = vld [vmem:[#allocation21 + $0x48] sm:$0xff]
    %v1675 = vld [vmem:[#allocation21 + $0x50] sm:$0xff]
    %v1676 = vld [vmem:[#allocation21 + $0x58] sm:$0xff]
    %v1677 = vld [vmem:[#allocation21 + $0x60] sm:$0xff]
    %v1678 = vld [vmem:[#allocation21 + $0x68] sm:$0xff]
    %v1679 = vld [vmem:[#allocation21 + $0x70] sm:$0xff]
    %v1680 = vld [vmem:[#allocation21 + $0x78] sm:$0xff]
    %v1681 = vld [vmem:[#allocation23] sm:$0x1]
    %v1683 = vperm.slane %v1681, 0
    %1685 = vmatpush.msra.mxu0 %v1680
    %1686 = vmatpush.msra.mxu0 %v1679
    %1687 = vmatpush.msra.mxu0 %v1678
    %1688 = vmatpush.msra.mxu0 %v1677
    %1689 = vmatpush.msra.mxu0 %v1676
    %1690 = vmatpush.msra.mxu0 %v1675
    %1691 = vmatpush.msra.mxu0 %v1674
    %1692 = vmatpush.msra.mxu0 %v1673
    %1693 = vmatpush.msra.mxu0 %v1672
    %1694 = vmatpush.msra.mxu0 %v1671
    %1695 = vmatpush.msra.mxu0 %v1670
    %1696 = vmatpush.msra.mxu0 %v1669
    %1697 = vmatpush.msra.mxu0 %v1668
    %1698 = vmatpush.msra.mxu0 %v1667
    %1699 = vmatpush.msra.mxu0 %v1666
    %1700 = vmatpush.msra.mxu0 %v1665
    %1701 = vmatmul.f32.gmra.mxu0 %v1663
    %v1702 = vpop.f32.mrf.mxu0
    %v1703 = vadd.f32 %v1683, %v1702
    %1704 = vmatmul.f32.gmra.mxu0 %v1664
    %v1705 = vpop.f32.mrf.mxu0
    %v1706 = vadd.f32 %v1683, %v1705
    %1707 = vdwg.mxu0
    %v1708 = vadd.f32 %v1618, %v1703
    %v1709 = vadd.f32 %v1619, %v1706
    %v1710 = vld [vmem:[#allocation24] sm:$0x1]
    %v1711 = vld [vmem:[#allocation26] sm:$0x1]
    %1712 = vadd.xlane.f32.xlu0 %v1708
    %v1713 = vpop.xlane.xlu0 %1712
    %1714 = vadd.xlane.f32.xlu0 %v1709
    %v1715 = vpop.xlane.xlu0 %1714
    %v1716 = vmul.f32 %v1713, %v1573
    %v1717 = vmul.f32 %v1715, %v1573
    %v1718 = vsub.f32 %v1708, %v1716
    %v1719 = vsub.f32 %v1709, %v1717
    %v1720 = vmul.f32 %v1718, %v1718
    %v1721 = vmul.f32 %v1719, %v1719
    %1722 = vadd.xlane.f32.xlu0 %v1720
    %v1723 = vpop.xlane.xlu0 %1722
    %1724 = vadd.xlane.f32.xlu0 %v1721
    %v1725 = vpop.xlane.xlu0 %1724
    %v1726 = vmul.f32 %v1723, %v1573
    %v1727 = vmul.f32 %v1725, %v1573
    %v1728 = vadd.f32 %v1726, 1e-05
    %v1729 = vadd.f32 %v1727, 1e-05
    %v1730 = vrsqrt.pop %v1728
    %v1731 = vmul.f32 %v1730, %v1728
    %v1732 = vmul.f32 %v1731, %v1730
    %v1733 = vmul.f32 0.5, %v1732
    %v1734 = vsub.f32 1.5, %v1733
    %v1735 = vmul.f32 %v1730, %v1734
    %vm1736 = vweird.f32 %v1728
    %vm1737 = vweird.f32 %v1730
    %vm1738 = vmor %vm1736, %vm1737
    %v1739 = vsel %vm1738, %v1730, %v1735
    %v1740 = vrsqrt.pop %v1729
    %v1741 = vmul.f32 %v1740, %v1729
    %v1742 = vmul.f32 %v1741, %v1740
    %v1743 = vmul.f32 0.5, %v1742
    %v1744 = vsub.f32 1.5, %v1743
    %v1745 = vmul.f32 %v1740, %v1744
    %vm1746 = vweird.f32 %v1729
    %vm1747 = vweird.f32 %v1740
    %vm1748 = vmor %vm1746, %vm1747
    %v1749 = vsel %vm1748, %v1740, %v1745
    %v1750 = vmul.f32 %v1718, %v1739
    %v1751 = vmul.f32 %v1719, %v1749
    %v1753 = vperm.slane %v1710, 0
    %v1755 = vmul.f32 %v1750, %v1753
    %v1756 = vmul.f32 %v1751, %v1753
    %v1758 = vperm.slane %v1711, 0
    %v1760 = vadd.f32 %v1755, %v1758
    %v1761 = vadd.f32 %v1756, %v1758
    %s1762 = scalar_lea.vmem [#allocation9], 384
    %v1763 = vld [vmem:[%s1762] sm:$0xff]
    %v1764 = vld [vmem:[%s1762 + $0x8] sm:$0xff]
    %v1765 = vld [vmem:[%s1762 + $0x10] sm:$0xff]
    %v1766 = vld [vmem:[%s1762 + $0x18] sm:$0xff]
    %v1767 = vld [vmem:[%s1762 + $0x20] sm:$0xff]
    %v1768 = vld [vmem:[%s1762 + $0x28] sm:$0xff]
    %v1769 = vld [vmem:[%s1762 + $0x30] sm:$0xff]
    %v1770 = vld [vmem:[%s1762 + $0x38] sm:$0xff]
    %v1771 = vld [vmem:[%s1762 + $0x40] sm:$0xff]
    %v1772 = vld [vmem:[%s1762 + $0x48] sm:$0xff]
    %v1773 = vld [vmem:[%s1762 + $0x50] sm:$0xff]
    %v1774 = vld [vmem:[%s1762 + $0x58] sm:$0xff]
    %v1775 = vld [vmem:[%s1762 + $0x60] sm:$0xff]
    %v1776 = vld [vmem:[%s1762 + $0x68] sm:$0xff]
    %v1777 = vld [vmem:[%s1762 + $0x70] sm:$0xff]
    %v1778 = vld [vmem:[%s1762 + $0x78] sm:$0xff]
    %v1779 = vld [vmem:[%s1762 + $0x80] sm:$0xff]
    %v1780 = vld [vmem:[%s1762 + $0x88] sm:$0xff]
    %v1781 = vld [vmem:[%s1762 + $0x90] sm:$0xff]
    %v1782 = vld [vmem:[%s1762 + $0x98] sm:$0xff]
    %v1783 = vld [vmem:[%s1762 + $0xa0] sm:$0xff]
    %v1784 = vld [vmem:[%s1762 + $0xa8] sm:$0xff]
    %v1785 = vld [vmem:[%s1762 + $0xb0] sm:$0xff]
    %v1786 = vld [vmem:[%s1762 + $0xb8] sm:$0xff]
    %v1787 = vld [vmem:[%s1762 + $0xc0] sm:$0xff]
    %v1788 = vld [vmem:[%s1762 + $0xc8] sm:$0xff]
    %v1789 = vld [vmem:[%s1762 + $0xd0] sm:$0xff]
    %v1790 = vld [vmem:[%s1762 + $0xd8] sm:$0xff]
    %v1791 = vld [vmem:[%s1762 + $0xe0] sm:$0xff]
    %v1792 = vld [vmem:[%s1762 + $0xe8] sm:$0xff]
    %v1793 = vld [vmem:[%s1762 + $0xf0] sm:$0xff]
    %v1794 = vld [vmem:[%s1762 + $0xf8] sm:$0xff]
    %v1795 = vld [vmem:[%s1762 + $0x100] sm:$0xff]
    %v1796 = vld [vmem:[%s1762 + $0x108] sm:$0xff]
    %v1797 = vld [vmem:[%s1762 + $0x110] sm:$0xff]
    %v1798 = vld [vmem:[%s1762 + $0x118] sm:$0xff]
    %v1799 = vld [vmem:[%s1762 + $0x120] sm:$0xff]
    %v1800 = vld [vmem:[%s1762 + $0x128] sm:$0xff]
    %v1801 = vld [vmem:[%s1762 + $0x130] sm:$0xff]
    %v1802 = vld [vmem:[%s1762 + $0x138] sm:$0xff]
    %v1803 = vld [vmem:[%s1762 + $0x140] sm:$0xff]
    %v1804 = vld [vmem:[%s1762 + $0x148] sm:$0xff]
    %v1805 = vld [vmem:[%s1762 + $0x150] sm:$0xff]
    %v1806 = vld [vmem:[%s1762 + $0x158] sm:$0xff]
    %v1807 = vld [vmem:[%s1762 + $0x160] sm:$0xff]
    %v1808 = vld [vmem:[%s1762 + $0x168] sm:$0xff]
    %v1809 = vld [vmem:[%s1762 + $0x170] sm:$0xff]
    %v1810 = vld [vmem:[%s1762 + $0x178] sm:$0xff]
    %s1811 = scalar_lea.vmem [#allocation11], 3
    %v1812 = vld [vmem:[%s1811] sm:$0x7]
    %v1814 = vperm.slane %v1812, 0
    %v1815 = vperm.slane %v1812, 1
    %v1816 = vperm.slane %v1812, 2
    %1820 = vmatpush.msra.mxu0 %v1808
    %1821 = vmatpush.msra.mxu0 %v1805
    %1822 = vmatpush.msra.mxu0 %v1802
    %1823 = vmatpush.msra.mxu0 %v1799
    %1824 = vmatpush.msra.mxu0 %v1796
    %1825 = vmatpush.msra.mxu0 %v1793
    %1826 = vmatpush.msra.mxu0 %v1790
    %1827 = vmatpush.msra.mxu0 %v1787
    %1828 = vmatpush.msra.mxu0 %v1784
    %1829 = vmatpush.msra.mxu0 %v1781
    %1830 = vmatpush.msra.mxu0 %v1778
    %1831 = vmatpush.msra.mxu0 %v1775
    %1832 = vmatpush.msra.mxu0 %v1772
    %1833 = vmatpush.msra.mxu0 %v1769
    %1834 = vmatpush.msra.mxu0 %v1766
    %1835 = vmatpush.msra.mxu0 %v1763
    %1836 = vmatmul.f32.gmra.mxu0 %v1760
    %v1837 = vpop.f32.mrf.mxu0
    %v1838 = vadd.f32 %v1814, %v1837
    %1839 = vmatmul.f32.gmra.mxu0 %v1761
    %v1840 = vpop.f32.mrf.mxu0
    %v1841 = vadd.f32 %v1814, %v1840
    %1842 = vdwg.mxu0
    %1843 = vmatpush.msra.mxu0 %v1809
    %1844 = vmatpush.msra.mxu0 %v1806
    %1845 = vmatpush.msra.mxu0 %v1803
    %1846 = vmatpush.msra.mxu0 %v1800
    %1847 = vmatpush.msra.mxu0 %v1797
    %1848 = vmatpush.msra.mxu0 %v1794
    %1849 = vmatpush.msra.mxu0 %v1791
    %1850 = vmatpush.msra.mxu0 %v1788
    %1851 = vmatpush.msra.mxu0 %v1785
    %1852 = vmatpush.msra.mxu0 %v1782
    %1853 = vmatpush.msra.mxu0 %v1779
    %1854 = vmatpush.msra.mxu0 %v1776
    %1855 = vmatpush.msra.mxu0 %v1773
    %1856 = vmatpush.msra.mxu0 %v1770
    %1857 = vmatpush.msra.mxu0 %v1767
    %1858 = vmatpush.msra.mxu0 %v1764
    %1859 = vmatmul.f32.gmra.mxu0 %v1760
    %v1860 = vpop.f32.mrf.mxu0
    %v1861 = vadd.f32 %v1815, %v1860
    %1862 = vmatmul.f32.gmra.mxu0 %v1761
    %v1863 = vpop.f32.mrf.mxu0
    %v1864 = vadd.f32 %v1815, %v1863
    %1865 = vdwg.mxu0
    %1866 = vmatpush.msra.mxu0 %v1810
    %1867 = vmatpush.msra.mxu0 %v1807
    %1868 = vmatpush.msra.mxu0 %v1804
    %1869 = vmatpush.msra.mxu0 %v1801
    %1870 = vmatpush.msra.mxu0 %v1798
    %1871 = vmatpush.msra.mxu0 %v1795
    %1872 = vmatpush.msra.mxu0 %v1792
    %1873 = vmatpush.msra.mxu0 %v1789
    %1874 = vmatpush.msra.mxu0 %v1786
    %1875 = vmatpush.msra.mxu0 %v1783
    %1876 = vmatpush.msra.mxu0 %v1780
    %1877 = vmatpush.msra.mxu0 %v1777
    %1878 = vmatpush.msra.mxu0 %v1774
    %1879 = vmatpush.msra.mxu0 %v1771
    %1880 = vmatpush.msra.mxu0 %v1768
    %1881 = vmatpush.msra.mxu0 %v1765
    %1882 = vmatmul.f32.gmra.mxu0 %v1760
    %v1883 = vpop.f32.mrf.mxu0
    %v1884 = vadd.f32 %v1816, %v1883
    %1885 = vmatmul.f32.gmra.mxu0 %v1761
    %v1886 = vpop.f32.mrf.mxu0
    %v1887 = vadd.f32 %v1816, %v1886
    %1888 = vdwg.mxu0
    %s1889 = scalar_lea.vmem [#allocation12], 128
    %v1890 = vld [vmem:[%s1889] sm:$0xff]
    %v1891 = vld [vmem:[%s1889 + $0x8] sm:$0xff]
    %v1892 = vld [vmem:[%s1889 + $0x10] sm:$0xff]
    %v1893 = vld [vmem:[%s1889 + $0x18] sm:$0xff]
    %v1894 = vld [vmem:[%s1889 + $0x20] sm:$0xff]
    %v1895 = vld [vmem:[%s1889 + $0x28] sm:$0xff]
    %v1896 = vld [vmem:[%s1889 + $0x30] sm:$0xff]
    %v1897 = vld [vmem:[%s1889 + $0x38] sm:$0xff]
    %v1898 = vld [vmem:[%s1889 + $0x40] sm:$0xff]
    %v1899 = vld [vmem:[%s1889 + $0x48] sm:$0xff]
    %v1900 = vld [vmem:[%s1889 + $0x50] sm:$0xff]
    %v1901 = vld [vmem:[%s1889 + $0x58] sm:$0xff]
    %v1902 = vld [vmem:[%s1889 + $0x60] sm:$0xff]
    %v1903 = vld [vmem:[%s1889 + $0x68] sm:$0xff]
    %v1904 = vld [vmem:[%s1889 + $0x70] sm:$0xff]
    %v1905 = vld [vmem:[%s1889 + $0x78] sm:$0xff]
    %s1906 = scalar_lea.vmem [#allocation14], 1
    %v1907 = vld [vmem:[%s1906] sm:$0x1]
    %v1909 = vsel %vm964, %v1838, 0
    %v1912 = vsel %vm964, %v1861, 0
    %1914 = vmatpush.xpose.msra.mxu0 0.0
    %1915 = vmatpush.xpose.msra.mxu0 0.0
    %1916 = vmatpush.xpose.msra.mxu0 0.0
    %1917 = vmatpush.xpose.msra.mxu0 0.0
    %1918 = vmatpush.xpose.msra.mxu0 0.0
    %1919 = vmatpush.xpose.msra.mxu0 0.0
    %1920 = vmatpush.xpose.msra.mxu0 0.0
    %1921 = vmatpush.xpose.msra.mxu0 0.0
    %1922 = vmatpush.xpose.msra.mxu0 0.0
    %1923 = vmatpush.xpose.msra.mxu0 0.0
    %1924 = vmatpush.xpose.msra.mxu0 0.0
    %1925 = vmatpush.xpose.msra.mxu0 0.0
    %1926 = vmatpush.xpose.msra.mxu0 0.0
    %1927 = vmatpush.xpose.msra.mxu0 0.0
    %1928 = vmatpush.xpose.msra.mxu0 0.0
    %1929 = vmatpush.xpose.msra.mxu0 %v1912
    %1930 = vmatmul.f32.gmra.mxu0 %v1909
    %v1931 = vpop.f32.mrf.mxu0
    %v1932 = vadd.f32 0.0, %v1931
    %1933 = vdwg.mxu0
    %v1934 = vmul.f32 %v1932, 0.17677669
    %v1935 = vadd.f32 %v1934, %v992
    %v1936 = vsel %vm994, %v1935, -inf
    %1937 = vmax.xlane.f32.xlu0 %v1936
    %v1938 = vpop.xlane.xlu0 %1937
    %v1939 = vsub.f32 %v1935, %v1938
    %v1940 = vmul.f32 %v1939, 1.442695
    %v1941 = vpow.pop %v1940
    %v1942 = vsel %vm994, %v1941, 0.0
    %1943 = vadd.xlane.f32.xlu0 %v1942
    %v1944 = vpop.xlane.xlu0 %1943
    %v1945 = vrcp.pop %v1944
    %v1946 = vmul.f32 %v1941, %v1945
    %v1948 = vsel %vm994, %v1946, 0
    %1950 = vmatpush.msra.mxu0 0.0
    %1951 = vmatpush.msra.mxu0 0.0
    %1952 = vmatpush.msra.mxu0 0.0
    %1953 = vmatpush.msra.mxu0 0.0
    %1954 = vmatpush.msra.mxu0 0.0
    %1955 = vmatpush.msra.mxu0 0.0
    %1956 = vmatpush.msra.mxu0 0.0
    %1957 = vmatpush.msra.mxu0 0.0
    %1958 = vmatpush.msra.mxu0 0.0
    %1959 = vmatpush.msra.mxu0 0.0
    %1960 = vmatpush.msra.mxu0 0.0
    %1961 = vmatpush.msra.mxu0 0.0
    %1962 = vmatpush.msra.mxu0 0.0
    %1963 = vmatpush.msra.mxu0 0.0
    %1964 = vmatpush.msra.mxu0 0.0
    %1965 = vmatpush.msra.mxu0 %v1884
    %1966 = vmatmul.f32.gmra.mxu0 %v1948
    %v1967 = vpop.f32.mrf.mxu0
    %v1968 = vadd.f32 0.0, %v1967
    %1969 = vdwg.mxu0
    %1970 = vst.msk [vmem:[#allocation2] sm:$0xff] %vm964, %v1968
    %1971 = vrot.lane.b32.xlu0 %v1838, 96
    %v1972 = vpop.permute.xlu0 %1971
    %1973 = vrot.lane.b32.xlu0 %v1861, 96
    %v1974 = vpop.permute.xlu0 %1973
    %v1975 = vsel %vm964, %v1972, 0
    %v1977 = vsel %vm964, %v1974, 0
    %1979 = vmatpush.xpose.msra.mxu0 0.0
    %1980 = vmatpush.xpose.msra.mxu0 0.0
    %1981 = vmatpush.xpose.msra.mxu0 0.0
    %1982 = vmatpush.xpose.msra.mxu0 0.0
    %1983 = vmatpush.xpose.msra.mxu0 0.0
    %1984 = vmatpush.xpose.msra.mxu0 0.0
    %1985 = vmatpush.xpose.msra.mxu0 0.0
    %1986 = vmatpush.xpose.msra.mxu0 0.0
    %1987 = vmatpush.xpose.msra.mxu0 0.0
    %1988 = vmatpush.xpose.msra.mxu0 0.0
    %1989 = vmatpush.xpose.msra.mxu0 0.0
    %1990 = vmatpush.xpose.msra.mxu0 0.0
    %1991 = vmatpush.xpose.msra.mxu0 0.0
    %1992 = vmatpush.xpose.msra.mxu0 0.0
    %1993 = vmatpush.xpose.msra.mxu0 0.0
    %1994 = vmatpush.xpose.msra.mxu0 %v1977
    %1995 = vmatmul.f32.gmra.mxu0 %v1975
    %v1996 = vpop.f32.mrf.mxu0
    %v1997 = vadd.f32 0.0, %v1996
    %1998 = vdwg.mxu0
    %v1999 = vmul.f32 %v1997, 0.17677669
    %v2000 = vadd.f32 %v1999, %v992
    %v2001 = vsel %vm994, %v2000, -inf
    %2002 = vmax.xlane.f32.xlu0 %v2001
    %v2003 = vpop.xlane.xlu0 %2002
    %v2004 = vsub.f32 %v2000, %v2003
    %v2005 = vmul.f32 %v2004, 1.442695
    %v2006 = vpow.pop %v2005
    %v2007 = vsel %vm994, %v2006, 0.0
    %2008 = vadd.xlane.f32.xlu0 %v2007
    %v2009 = vpop.xlane.xlu0 %2008
    %v2010 = vrcp.pop %v2009
    %v2011 = vmul.f32 %v2006, %v2010
    %2013 = vrot.lane.b32.xlu0 %v1884, 96
    %v2014 = vpop.permute.xlu0 %2013
    %v2017 = vsel %vm994, %v2011, 0
    %2019 = vmatpush.msra.mxu0 0.0
    %2020 = vmatpush.msra.mxu0 0.0
    %2021 = vmatpush.msra.mxu0 0.0
    %2022 = vmatpush.msra.mxu0 0.0
    %2023 = vmatpush.msra.mxu0 0.0
    %2024 = vmatpush.msra.mxu0 0.0
    %2025 = vmatpush.msra.mxu0 0.0
    %2026 = vmatpush.msra.mxu0 0.0
    %2027 = vmatpush.msra.mxu0 0.0
    %2028 = vmatpush.msra.mxu0 0.0
    %2029 = vmatpush.msra.mxu0 0.0
    %2030 = vmatpush.msra.mxu0 0.0
    %2031 = vmatpush.msra.mxu0 0.0
    %2032 = vmatpush.msra.mxu0 0.0
    %2033 = vmatpush.msra.mxu0 0.0
    %2034 = vmatpush.msra.mxu0 %v2014
    %2035 = vmatmul.f32.gmra.mxu0 %v2017
    %v2036 = vpop.f32.mrf.mxu0
    %v2037 = vadd.f32 0.0, %v2036
    %2038 = vdwg.mxu0
    %2040 = vrot.lane.b32.xlu0 %v2037, 32
    %v2041 = vpop.permute.xlu0 %2040
    %2043 = vst.msk [vmem:[#allocation2] sm:$0xff] %vm1102, %v2041
    %2044 = vrot.lane.b32.xlu0 %v1838, 64
    %v2045 = vpop.permute.xlu0 %2044
    %2046 = vrot.lane.b32.xlu0 %v1861, 64
    %v2047 = vpop.permute.xlu0 %2046
    %v2048 = vsel %vm964, %v2045, 0
    %v2050 = vsel %vm964, %v2047, 0
    %2052 = vmatpush.xpose.msra.mxu0 0.0
    %2053 = vmatpush.xpose.msra.mxu0 0.0
    %2054 = vmatpush.xpose.msra.mxu0 0.0
    %2055 = vmatpush.xpose.msra.mxu0 0.0
    %2056 = vmatpush.xpose.msra.mxu0 0.0
    %2057 = vmatpush.xpose.msra.mxu0 0.0
    %2058 = vmatpush.xpose.msra.mxu0 0.0
    %2059 = vmatpush.xpose.msra.mxu0 0.0
    %2060 = vmatpush.xpose.msra.mxu0 0.0
    %2061 = vmatpush.xpose.msra.mxu0 0.0
    %2062 = vmatpush.xpose.msra.mxu0 0.0
    %2063 = vmatpush.xpose.msra.mxu0 0.0
    %2064 = vmatpush.xpose.msra.mxu0 0.0
    %2065 = vmatpush.xpose.msra.mxu0 0.0
    %2066 = vmatpush.xpose.msra.mxu0 0.0
    %2067 = vmatpush.xpose.msra.mxu0 %v2050
    %2068 = vmatmul.f32.gmra.mxu0 %v2048
    %v2069 = vpop.f32.mrf.mxu0
    %v2070 = vadd.f32 0.0, %v2069
    %2071 = vdwg.mxu0
    %v2072 = vmul.f32 %v2070, 0.17677669
    %v2073 = vadd.f32 %v2072, %v992
    %v2074 = vsel %vm994, %v2073, -inf
    %2075 = vmax.xlane.f32.xlu0 %v2074
    %v2076 = vpop.xlane.xlu0 %2075
    %v2077 = vsub.f32 %v2073, %v2076
    %v2078 = vmul.f32 %v2077, 1.442695
    %v2079 = vpow.pop %v2078
    %v2080 = vsel %vm994, %v2079, 0.0
    %2081 = vadd.xlane.f32.xlu0 %v2080
    %v2082 = vpop.xlane.xlu0 %2081
    %v2083 = vrcp.pop %v2082
    %v2084 = vmul.f32 %v2079, %v2083
    %2085 = vrot.lane.b32.xlu0 %v1884, 64
    %v2086 = vpop.permute.xlu0 %2085
    %v2089 = vsel %vm994, %v2084, 0
    %2091 = vmatpush.msra.mxu0 0.0
    %2092 = vmatpush.msra.mxu0 0.0
    %2093 = vmatpush.msra.mxu0 0.0
    %2094 = vmatpush.msra.mxu0 0.0
    %2095 = vmatpush.msra.mxu0 0.0
    %2096 = vmatpush.msra.mxu0 0.0
    %2097 = vmatpush.msra.mxu0 0.0
    %2098 = vmatpush.msra.mxu0 0.0
    %2099 = vmatpush.msra.mxu0 0.0
    %2100 = vmatpush.msra.mxu0 0.0
    %2101 = vmatpush.msra.mxu0 0.0
    %2102 = vmatpush.msra.mxu0 0.0
    %2103 = vmatpush.msra.mxu0 0.0
    %2104 = vmatpush.msra.mxu0 0.0
    %2105 = vmatpush.msra.mxu0 0.0
    %2106 = vmatpush.msra.mxu0 %v2086
    %2107 = vmatmul.f32.gmra.mxu0 %v2089
    %v2108 = vpop.f32.mrf.mxu0
    %v2109 = vadd.f32 0.0, %v2108
    %2110 = vdwg.mxu0
    %2112 = vrot.lane.b32.xlu0 %v2109, 64
    %v2113 = vpop.permute.xlu0 %2112
    %2115 = vst.msk [vmem:[#allocation2] sm:$0xff] %vm1175, %v2113
    %2116 = vrot.lane.b32.xlu0 %v1838, 32
    %v2117 = vpop.permute.xlu0 %2116
    %2118 = vrot.lane.b32.xlu0 %v1861, 32
    %v2119 = vpop.permute.xlu0 %2118
    %v2120 = vsel %vm964, %v2117, 0
    %v2122 = vsel %vm964, %v2119, 0
    %2124 = vmatpush.xpose.msra.mxu0 0.0
    %2125 = vmatpush.xpose.msra.mxu0 0.0
    %2126 = vmatpush.xpose.msra.mxu0 0.0
    %2127 = vmatpush.xpose.msra.mxu0 0.0
    %2128 = vmatpush.xpose.msra.mxu0 0.0
    %2129 = vmatpush.xpose.msra.mxu0 0.0
    %2130 = vmatpush.xpose.msra.mxu0 0.0
    %2131 = vmatpush.xpose.msra.mxu0 0.0
    %2132 = vmatpush.xpose.msra.mxu0 0.0
    %2133 = vmatpush.xpose.msra.mxu0 0.0
    %2134 = vmatpush.xpose.msra.mxu0 0.0
    %2135 = vmatpush.xpose.msra.mxu0 0.0
    %2136 = vmatpush.xpose.msra.mxu0 0.0
    %2137 = vmatpush.xpose.msra.mxu0 0.0
    %2138 = vmatpush.xpose.msra.mxu0 0.0
    %2139 = vmatpush.xpose.msra.mxu0 %v2122
    %2140 = vmatmul.f32.gmra.mxu0 %v2120
    %v2141 = vpop.f32.mrf.mxu0
    %v2142 = vadd.f32 0.0, %v2141
    %2143 = vdwg.mxu0
    %v2144 = vmul.f32 %v2142, 0.17677669
    %v2145 = vadd.f32 %v2144, %v992
    %v2146 = vsel %vm994, %v2145, -inf
    %2147 = vmax.xlane.f32.xlu0 %v2146
    %v2148 = vpop.xlane.xlu0 %2147
    %v2149 = vsub.f32 %v2145, %v2148
    %v2150 = vmul.f32 %v2149, 1.442695
    %v2151 = vpow.pop %v2150
    %v2152 = vsel %vm994, %v2151, 0.0
    %2153 = vadd.xlane.f32.xlu0 %v2152
    %v2154 = vpop.xlane.xlu0 %2153
    %v2155 = vrcp.pop %v2154
    %v2156 = vmul.f32 %v2151, %v2155
    %2157 = vrot.lane.b32.xlu0 %v1884, 32
    %v2158 = vpop.permute.xlu0 %2157
    %v2161 = vsel %vm994, %v2156, 0
    %2163 = vmatpush.msra.mxu0 0.0
    %2164 = vmatpush.msra.mxu0 0.0
    %2165 = vmatpush.msra.mxu0 0.0
    %2166 = vmatpush.msra.mxu0 0.0
    %2167 = vmatpush.msra.mxu0 0.0
    %2168 = vmatpush.msra.mxu0 0.0
    %2169 = vmatpush.msra.mxu0 0.0
    %2170 = vmatpush.msra.mxu0 0.0
    %2171 = vmatpush.msra.mxu0 0.0
    %2172 = vmatpush.msra.mxu0 0.0
    %2173 = vmatpush.msra.mxu0 0.0
    %2174 = vmatpush.msra.mxu0 0.0
    %2175 = vmatpush.msra.mxu0 0.0
    %2176 = vmatpush.msra.mxu0 0.0
    %2177 = vmatpush.msra.mxu0 0.0
    %2178 = vmatpush.msra.mxu0 %v2158
    %2179 = vmatmul.f32.gmra.mxu0 %v2161
    %v2180 = vpop.f32.mrf.mxu0
    %v2181 = vadd.f32 0.0, %v2180
    %2182 = vdwg.mxu0
    %2184 = vrot.lane.b32.xlu0 %v2181, 96
    %v2185 = vpop.permute.xlu0 %2184
    %2187 = vst.msk [vmem:[#allocation2] sm:$0xff] %vm1248, %v2185
    %v2189 = vsel %vm964, %v1841, 0
    %v2192 = vsel %vm964, %v1864, 0
    %2194 = vmatpush.xpose.msra.mxu0 0.0
    %2195 = vmatpush.xpose.msra.mxu0 0.0
    %2196 = vmatpush.xpose.msra.mxu0 0.0
    %2197 = vmatpush.xpose.msra.mxu0 0.0
    %2198 = vmatpush.xpose.msra.mxu0 0.0
    %2199 = vmatpush.xpose.msra.mxu0 0.0
    %2200 = vmatpush.xpose.msra.mxu0 0.0
    %2201 = vmatpush.xpose.msra.mxu0 0.0
    %2202 = vmatpush.xpose.msra.mxu0 0.0
    %2203 = vmatpush.xpose.msra.mxu0 0.0
    %2204 = vmatpush.xpose.msra.mxu0 0.0
    %2205 = vmatpush.xpose.msra.mxu0 0.0
    %2206 = vmatpush.xpose.msra.mxu0 0.0
    %2207 = vmatpush.xpose.msra.mxu0 0.0
    %2208 = vmatpush.xpose.msra.mxu0 0.0
    %2209 = vmatpush.xpose.msra.mxu0 %v2192
    %2210 = vmatmul.f32.gmra.mxu0 %v2189
    %v2211 = vpop.f32.mrf.mxu0
    %v2212 = vadd.f32 0.0, %v2211
    %2213 = vdwg.mxu0
    %v2214 = vmul.f32 %v2212, 0.17677669
    %v2215 = vadd.f32 %v2214, %v1277
    %v2216 = vsel %vm994, %v2215, -inf
    %2217 = vmax.xlane.f32.xlu0 %v2216
    %v2218 = vpop.xlane.xlu0 %2217
    %v2219 = vsub.f32 %v2215, %v2218
    %v2220 = vmul.f32 %v2219, 1.442695
    %v2221 = vpow.pop %v2220
    %v2222 = vsel %vm994, %v2221, 0.0
    %2223 = vadd.xlane.f32.xlu0 %v2222
    %v2224 = vpop.xlane.xlu0 %2223
    %v2225 = vrcp.pop %v2224
    %v2226 = vmul.f32 %v2221, %v2225
    %v2228 = vsel %vm994, %v2226, 0
    %2230 = vmatpush.msra.mxu0 0.0
    %2231 = vmatpush.msra.mxu0 0.0
    %2232 = vmatpush.msra.mxu0 0.0
    %2233 = vmatpush.msra.mxu0 0.0
    %2234 = vmatpush.msra.mxu0 0.0
    %2235 = vmatpush.msra.mxu0 0.0
    %2236 = vmatpush.msra.mxu0 0.0
    %2237 = vmatpush.msra.mxu0 0.0
    %2238 = vmatpush.msra.mxu0 0.0
    %2239 = vmatpush.msra.mxu0 0.0
    %2240 = vmatpush.msra.mxu0 0.0
    %2241 = vmatpush.msra.mxu0 0.0
    %2242 = vmatpush.msra.mxu0 0.0
    %2243 = vmatpush.msra.mxu0 0.0
    %2244 = vmatpush.msra.mxu0 0.0
    %2245 = vmatpush.msra.mxu0 %v1887
    %2246 = vmatmul.f32.gmra.mxu0 %v2228
    %v2247 = vpop.f32.mrf.mxu0
    %v2248 = vadd.f32 0.0, %v2247
    %2249 = vdwg.mxu0
    %2250 = vst.msk [vmem:[#allocation2 + $0x8] sm:$0xff] %vm964, %v2248
    %2251 = vrot.lane.b32.xlu0 %v1841, 96
    %v2252 = vpop.permute.xlu0 %2251
    %2253 = vrot.lane.b32.xlu0 %v1864, 96
    %v2254 = vpop.permute.xlu0 %2253
    %v2255 = vsel %vm964, %v2252, 0
    %v2257 = vsel %vm964, %v2254, 0
    %2259 = vmatpush.xpose.msra.mxu0 0.0
    %2260 = vmatpush.xpose.msra.mxu0 0.0
    %2261 = vmatpush.xpose.msra.mxu0 0.0
    %2262 = vmatpush.xpose.msra.mxu0 0.0
    %2263 = vmatpush.xpose.msra.mxu0 0.0
    %2264 = vmatpush.xpose.msra.mxu0 0.0
    %2265 = vmatpush.xpose.msra.mxu0 0.0
    %2266 = vmatpush.xpose.msra.mxu0 0.0
    %2267 = vmatpush.xpose.msra.mxu0 0.0
    %2268 = vmatpush.xpose.msra.mxu0 0.0
    %2269 = vmatpush.xpose.msra.mxu0 0.0
    %2270 = vmatpush.xpose.msra.mxu0 0.0
    %2271 = vmatpush.xpose.msra.mxu0 0.0
    %2272 = vmatpush.xpose.msra.mxu0 0.0
    %2273 = vmatpush.xpose.msra.mxu0 0.0
    %2274 = vmatpush.xpose.msra.mxu0 %v2257
    %2275 = vmatmul.f32.gmra.mxu0 %v2255
    %v2276 = vpop.f32.mrf.mxu0
    %v2277 = vadd.f32 0.0, %v2276
    %2278 = vdwg.mxu0
    %v2279 = vmul.f32 %v2277, 0.17677669
    %v2280 = vadd.f32 %v2279, %v1277
    %v2281 = vsel %vm994, %v2280, -inf
    %2282 = vmax.xlane.f32.xlu0 %v2281
    %v2283 = vpop.xlane.xlu0 %2282
    %v2284 = vsub.f32 %v2280, %v2283
    %v2285 = vmul.f32 %v2284, 1.442695
    %v2286 = vpow.pop %v2285
    %v2287 = vsel %vm994, %v2286, 0.0
    %2288 = vadd.xlane.f32.xlu0 %v2287
    %v2289 = vpop.xlane.xlu0 %2288
    %v2290 = vrcp.pop %v2289
    %v2291 = vmul.f32 %v2286, %v2290
    %2293 = vrot.lane.b32.xlu0 %v1887, 96
    %v2294 = vpop.permute.xlu0 %2293
    %v2297 = vsel %vm994, %v2291, 0
    %2299 = vmatpush.msra.mxu0 0.0
    %2300 = vmatpush.msra.mxu0 0.0
    %2301 = vmatpush.msra.mxu0 0.0
    %2302 = vmatpush.msra.mxu0 0.0
    %2303 = vmatpush.msra.mxu0 0.0
    %2304 = vmatpush.msra.mxu0 0.0
    %2305 = vmatpush.msra.mxu0 0.0
    %2306 = vmatpush.msra.mxu0 0.0
    %2307 = vmatpush.msra.mxu0 0.0
    %2308 = vmatpush.msra.mxu0 0.0
    %2309 = vmatpush.msra.mxu0 0.0
    %2310 = vmatpush.msra.mxu0 0.0
    %2311 = vmatpush.msra.mxu0 0.0
    %2312 = vmatpush.msra.mxu0 0.0
    %2313 = vmatpush.msra.mxu0 0.0
    %2314 = vmatpush.msra.mxu0 %v2294
    %2315 = vmatmul.f32.gmra.mxu0 %v2297
    %v2316 = vpop.f32.mrf.mxu0
    %v2317 = vadd.f32 0.0, %v2316
    %2318 = vdwg.mxu0
    %2320 = vrot.lane.b32.xlu0 %v2317, 32
    %v2321 = vpop.permute.xlu0 %2320
    %2323 = vst.msk [vmem:[#allocation2 + $0x8] sm:$0xff] %vm1102, %v2321
    %2324 = vrot.lane.b32.xlu0 %v1841, 64
    %v2325 = vpop.permute.xlu0 %2324
    %2326 = vrot.lane.b32.xlu0 %v1864, 64
    %v2327 = vpop.permute.xlu0 %2326
    %v2328 = vsel %vm964, %v2325, 0
    %v2330 = vsel %vm964, %v2327, 0
    %2332 = vmatpush.xpose.msra.mxu0 0.0
    %2333 = vmatpush.xpose.msra.mxu0 0.0
    %2334 = vmatpush.xpose.msra.mxu0 0.0
    %2335 = vmatpush.xpose.msra.mxu0 0.0
    %2336 = vmatpush.xpose.msra.mxu0 0.0
    %2337 = vmatpush.xpose.msra.mxu0 0.0
    %2338 = vmatpush.xpose.msra.mxu0 0.0
    %2339 = vmatpush.xpose.msra.mxu0 0.0
    %2340 = vmatpush.xpose.msra.mxu0 0.0
    %2341 = vmatpush.xpose.msra.mxu0 0.0
    %2342 = vmatpush.xpose.msra.mxu0 0.0
    %2343 = vmatpush.xpose.msra.mxu0 0.0
    %2344 = vmatpush.xpose.msra.mxu0 0.0
    %2345 = vmatpush.xpose.msra.mxu0 0.0
    %2346 = vmatpush.xpose.msra.mxu0 0.0
    %2347 = vmatpush.xpose.msra.mxu0 %v2330
    %2348 = vmatmul.f32.gmra.mxu0 %v2328
    %v2349 = vpop.f32.mrf.mxu0
    %v2350 = vadd.f32 0.0, %v2349
    %2351 = vdwg.mxu0
    %v2352 = vmul.f32 %v2350, 0.17677669
    %v2353 = vadd.f32 %v2352, %v1277
    %v2354 = vsel %vm994, %v2353, -inf
    %2355 = vmax.xlane.f32.xlu0 %v2354
    %v2356 = vpop.xlane.xlu0 %2355
    %v2357 = vsub.f32 %v2353, %v2356
    %v2358 = vmul.f32 %v2357, 1.442695
    %v2359 = vpow.pop %v2358
    %v2360 = vsel %vm994, %v2359, 0.0
    %2361 = vadd.xlane.f32.xlu0 %v2360
    %v2362 = vpop.xlane.xlu0 %2361
    %v2363 = vrcp.pop %v2362
    %v2364 = vmul.f32 %v2359, %v2363
    %2365 = vrot.lane.b32.xlu0 %v1887, 64
    %v2366 = vpop.permute.xlu0 %2365
    %v2369 = vsel %vm994, %v2364, 0
    %2371 = vmatpush.msra.mxu0 0.0
    %2372 = vmatpush.msra.mxu0 0.0
    %2373 = vmatpush.msra.mxu0 0.0
    %2374 = vmatpush.msra.mxu0 0.0
    %2375 = vmatpush.msra.mxu0 0.0
    %2376 = vmatpush.msra.mxu0 0.0
    %2377 = vmatpush.msra.mxu0 0.0
    %2378 = vmatpush.msra.mxu0 0.0
    %2379 = vmatpush.msra.mxu0 0.0
    %2380 = vmatpush.msra.mxu0 0.0
    %2381 = vmatpush.msra.mxu0 0.0
    %2382 = vmatpush.msra.mxu0 0.0
    %2383 = vmatpush.msra.mxu0 0.0
    %2384 = vmatpush.msra.mxu0 0.0
    %2385 = vmatpush.msra.mxu0 0.0
    %2386 = vmatpush.msra.mxu0 %v2366
    %2387 = vmatmul.f32.gmra.mxu0 %v2369
    %v2388 = vpop.f32.mrf.mxu0
    %v2389 = vadd.f32 0.0, %v2388
    %2390 = vdwg.mxu0
    %2392 = vrot.lane.b32.xlu0 %v2389, 64
    %v2393 = vpop.permute.xlu0 %2392
    %2395 = vst.msk [vmem:[#allocation2 + $0x8] sm:$0xff] %vm1175, %v2393
    %2396 = vrot.lane.b32.xlu0 %v1841, 32
    %v2397 = vpop.permute.xlu0 %2396
    %2398 = vrot.lane.b32.xlu0 %v1864, 32
    %v2399 = vpop.permute.xlu0 %2398
    %v2400 = vsel %vm964, %v2397, 0
    %v2402 = vsel %vm964, %v2399, 0
    %2404 = vmatpush.xpose.msra.mxu0 0.0
    %2405 = vmatpush.xpose.msra.mxu0 0.0
    %2406 = vmatpush.xpose.msra.mxu0 0.0
    %2407 = vmatpush.xpose.msra.mxu0 0.0
    %2408 = vmatpush.xpose.msra.mxu0 0.0
    %2409 = vmatpush.xpose.msra.mxu0 0.0
    %2410 = vmatpush.xpose.msra.mxu0 0.0
    %2411 = vmatpush.xpose.msra.mxu0 0.0
    %2412 = vmatpush.xpose.msra.mxu0 0.0
    %2413 = vmatpush.xpose.msra.mxu0 0.0
    %2414 = vmatpush.xpose.msra.mxu0 0.0
    %2415 = vmatpush.xpose.msra.mxu0 0.0
    %2416 = vmatpush.xpose.msra.mxu0 0.0
    %2417 = vmatpush.xpose.msra.mxu0 0.0
    %2418 = vmatpush.xpose.msra.mxu0 0.0
    %2419 = vmatpush.xpose.msra.mxu0 %v2402
    %2420 = vmatmul.f32.gmra.mxu0 %v2400
    %v2421 = vpop.f32.mrf.mxu0
    %v2422 = vadd.f32 0.0, %v2421
    %2423 = vdwg.mxu0
    %v2424 = vmul.f32 %v2422, 0.17677669
    %v2425 = vadd.f32 %v2424, %v1277
    %v2426 = vsel %vm994, %v2425, -inf
    %2427 = vmax.xlane.f32.xlu0 %v2426
    %v2428 = vpop.xlane.xlu0 %2427
    %v2429 = vsub.f32 %v2425, %v2428
    %v2430 = vmul.f32 %v2429, 1.442695
    %v2431 = vpow.pop %v2430
    %v2432 = vsel %vm994, %v2431, 0.0
    %2433 = vadd.xlane.f32.xlu0 %v2432
    %v2434 = vpop.xlane.xlu0 %2433
    %v2435 = vrcp.pop %v2434
    %v2436 = vmul.f32 %v2431, %v2435
    %2437 = vrot.lane.b32.xlu0 %v1887, 32
    %v2438 = vpop.permute.xlu0 %2437
    %v2441 = vsel %vm994, %v2436, 0
    %2443 = vmatpush.msra.mxu0 0.0
    %2444 = vmatpush.msra.mxu0 0.0
    %2445 = vmatpush.msra.mxu0 0.0
    %2446 = vmatpush.msra.mxu0 0.0
    %2447 = vmatpush.msra.mxu0 0.0
    %2448 = vmatpush.msra.mxu0 0.0
    %2449 = vmatpush.msra.mxu0 0.0
    %2450 = vmatpush.msra.mxu0 0.0
    %2451 = vmatpush.msra.mxu0 0.0
    %2452 = vmatpush.msra.mxu0 0.0
    %2453 = vmatpush.msra.mxu0 0.0
    %2454 = vmatpush.msra.mxu0 0.0
    %2455 = vmatpush.msra.mxu0 0.0
    %2456 = vmatpush.msra.mxu0 0.0
    %2457 = vmatpush.msra.mxu0 0.0
    %2458 = vmatpush.msra.mxu0 %v2438
    %2459 = vmatmul.f32.gmra.mxu0 %v2441
    %v2460 = vpop.f32.mrf.mxu0
    %v2461 = vadd.f32 0.0, %v2460
    %2462 = vdwg.mxu0
    %2464 = vrot.lane.b32.xlu0 %v2461, 96
    %v2465 = vpop.permute.xlu0 %2464
    %2467 = vst.msk [vmem:[#allocation2 + $0x8] sm:$0xff] %vm1248, %v2465
    %v2468 = vld [vmem:[#allocation2] sm:$0xff]
    %v2469 = vld [vmem:[#allocation2 + $0x8] sm:$0xff]
    %v2471 = vperm.slane %v1907, 0
    %2473 = vmatpush.msra.mxu0 %v1905
    %2474 = vmatpush.msra.mxu0 %v1904
    %2475 = vmatpush.msra.mxu0 %v1903
    %2476 = vmatpush.msra.mxu0 %v1902
    %2477 = vmatpush.msra.mxu0 %v1901
    %2478 = vmatpush.msra.mxu0 %v1900
    %2479 = vmatpush.msra.mxu0 %v1899
    %2480 = vmatpush.msra.mxu0 %v1898
    %2481 = vmatpush.msra.mxu0 %v1897
    %2482 = vmatpush.msra.mxu0 %v1896
    %2483 = vmatpush.msra.mxu0 %v1895
    %2484 = vmatpush.msra.mxu0 %v1894
    %2485 = vmatpush.msra.mxu0 %v1893
    %2486 = vmatpush.msra.mxu0 %v1892
    %2487 = vmatpush.msra.mxu0 %v1891
    %2488 = vmatpush.msra.mxu0 %v1890
    %2489 = vmatmul.f32.gmra.mxu0 %v2468
    %v2490 = vpop.f32.mrf.mxu0
    %v2491 = vadd.f32 %v2471, %v2490
    %2492 = vmatmul.f32.gmra.mxu0 %v2469
    %v2493 = vpop.f32.mrf.mxu0
    %v2494 = vadd.f32 %v2471, %v2493
    %2495 = vdwg.mxu0
    %v2496 = vadd.f32 %v1760, %v2491
    %v2497 = vadd.f32 %v1761, %v2494
    %s2498 = scalar_lea.vmem [#allocation15], 1
    %v2499 = vld [vmem:[%s2498] sm:$0x1]
    %s2500 = scalar_lea.vmem [#allocation17], 1
    %v2501 = vld [vmem:[%s2500] sm:$0x1]
    %2502 = vadd.xlane.f32.xlu0 %v2496
    %v2503 = vpop.xlane.xlu0 %2502
    %2504 = vadd.xlane.f32.xlu0 %v2497
    %v2505 = vpop.xlane.xlu0 %2504
    %v2506 = vmul.f32 %v2503, %v1573
    %v2507 = vmul.f32 %v2505, %v1573
    %v2508 = vsub.f32 %v2496, %v2506
    %v2509 = vsub.f32 %v2497, %v2507
    %v2510 = vmul.f32 %v2508, %v2508
    %v2511 = vmul.f32 %v2509, %v2509
    %2512 = vadd.xlane.f32.xlu0 %v2510
    %v2513 = vpop.xlane.xlu0 %2512
    %2514 = vadd.xlane.f32.xlu0 %v2511
    %v2515 = vpop.xlane.xlu0 %2514
    %v2516 = vmul.f32 %v2513, %v1573
    %v2517 = vmul.f32 %v2515, %v1573
    %v2518 = vadd.f32 %v2516, 1e-05
    %v2519 = vadd.f32 %v2517, 1e-05
    %v2520 = vrsqrt.pop %v2518
    %v2521 = vmul.f32 %v2520, %v2518
    %v2522 = vmul.f32 %v2521, %v2520
    %v2523 = vmul.f32 0.5, %v2522
    %v2524 = vsub.f32 1.5, %v2523
    %v2525 = vmul.f32 %v2520, %v2524
    %vm2526 = vweird.f32 %v2518
    %vm2527 = vweird.f32 %v2520
    %vm2528 = vmor %vm2526, %vm2527
    %v2529 = vsel %vm2528, %v2520, %v2525
    %v2530 = vrsqrt.pop %v2519
    %v2531 = vmul.f32 %v2530, %v2519
    %v2532 = vmul.f32 %v2531, %v2530
    %v2533 = vmul.f32 0.5, %v2532
    %v2534 = vsub.f32 1.5, %v2533
    %v2535 = vmul.f32 %v2530, %v2534
    %vm2536 = vweird.f32 %v2519
    %vm2537 = vweird.f32 %v2530
    %vm2538 = vmor %vm2536, %vm2537
    %v2539 = vsel %vm2538, %v2530, %v2535
    %v2540 = vmul.f32 %v2508, %v2529
    %v2541 = vmul.f32 %v2509, %v2539
    %v2543 = vperm.slane %v2499, 0
    %v2545 = vmul.f32 %v2540, %v2543
    %v2546 = vmul.f32 %v2541, %v2543
    %v2548 = vperm.slane %v2501, 0
    %v2550 = vadd.f32 %v2545, %v2548
    %v2551 = vadd.f32 %v2546, %v2548
    %s2552 = scalar_lea.vmem [#allocation18], 128
    %v2553 = vld [vmem:[%s2552] sm:$0xff]
    %v2554 = vld [vmem:[%s2552 + $0x8] sm:$0xff]
    %v2555 = vld [vmem:[%s2552 + $0x10] sm:$0xff]
    %v2556 = vld [vmem:[%s2552 + $0x18] sm:$0xff]
    %v2557 = vld [vmem:[%s2552 + $0x20] sm:$0xff]
    %v2558 = vld [vmem:[%s2552 + $0x28] sm:$0xff]
    %v2559 = vld [vmem:[%s2552 + $0x30] sm:$0xff]
    %v2560 = vld [vmem:[%s2552 + $0x38] sm:$0xff]
    %v2561 = vld [vmem:[%s2552 + $0x40] sm:$0xff]
    %v2562 = vld [vmem:[%s2552 + $0x48] sm:$0xff]
    %v2563 = vld [vmem:[%s2552 + $0x50] sm:$0xff]
    %v2564 = vld [vmem:[%s2552 + $0x58] sm:$0xff]
    %v2565 = vld [vmem:[%s2552 + $0x60] sm:$0xff]
    %v2566 = vld [vmem:[%s2552 + $0x68] sm:$0xff]
    %v2567 = vld [vmem:[%s2552 + $0x70] sm:$0xff]
    %v2568 = vld [vmem:[%s2552 + $0x78] sm:$0xff]
    %s2569 = scalar_lea.vmem [#allocation20], 1
    %v2570 = vld [vmem:[%s2569] sm:$0x1]
    %v2572 = vperm.slane %v2570, 0
    %2574 = vmatpush.msra.mxu0 %v2568
    %2575 = vmatpush.msra.mxu0 %v2567
    %2576 = vmatpush.msra.mxu0 %v2566
    %2577 = vmatpush.msra.mxu0 %v2565
    %2578 = vmatpush.msra.mxu0 %v2564
    %2579 = vmatpush.msra.mxu0 %v2563
    %2580 = vmatpush.msra.mxu0 %v2562
    %2581 = vmatpush.msra.mxu0 %v2561
    %2582 = vmatpush.msra.mxu0 %v2560
    %2583 = vmatpush.msra.mxu0 %v2559
    %2584 = vmatpush.msra.mxu0 %v2558
    %2585 = vmatpush.msra.mxu0 %v2557
    %2586 = vmatpush.msra.mxu0 %v2556
    %2587 = vmatpush.msra.mxu0 %v2555
    %2588 = vmatpush.msra.mxu0 %v2554
    %2589 = vmatpush.msra.mxu0 %v2553
    %2590 = vmatmul.f32.gmra.mxu0 %v2550
    %v2591 = vpop.f32.mrf.mxu0
    %v2592 = vadd.f32 %v2572, %v2591
    %2593 = vmatmul.f32.gmra.mxu0 %v2551
    %v2594 = vpop.f32.mrf.mxu0
    %v2595 = vadd.f32 %v2572, %v2594
    %2596 = vdwg.mxu0
    %v2597 = vmax.f32 %v2592, 0.0
    %v2598 = vmax.f32 %v2595, 0.0
    %s2599 = scalar_lea.vmem [#allocation21], 128
    %v2600 = vld [vmem:[%s2599] sm:$0xff]
    %v2601 = vld [vmem:[%s2599 + $0x8] sm:$0xff]
    %v2602 = vld [vmem:[%s2599 + $0x10] sm:$0xff]
    %v2603 = vld [vmem:[%s2599 + $0x18] sm:$0xff]
    %v2604 = vld [vmem:[%s2599 + $0x20] sm:$0xff]
    %v2605 = vld [vmem:[%s2599 + $0x28] sm:$0xff]
    %v2606 = vld [vmem:[%s2599 + $0x30] sm:$0xff]
    %v2607 = vld [vmem:[%s2599 + $0x38] sm:$0xff]
    %v2608 = vld [vmem:[%s2599 + $0x40] sm:$0xff]
    %v2609 = vld [vmem:[%s2599 + $0x48] sm:$0xff]
    %v2610 = vld [vmem:[%s2599 + $0x50] sm:$0xff]
    %v2611 = vld [vmem:[%s2599 + $0x58] sm:$0xff]
    %v2612 = vld [vmem:[%s2599 + $0x60] sm:$0xff]
    %v2613 = vld [vmem:[%s2599 + $0x68] sm:$0xff]
    %v2614 = vld [vmem:[%s2599 + $0x70] sm:$0xff]
    %v2615 = vld [vmem:[%s2599 + $0x78] sm:$0xff]
    %s2616 = scalar_lea.vmem [#allocation23], 1
    %v2617 = vld [vmem:[%s2616] sm:$0x1]
    %v2619 = vperm.slane %v2617, 0
    %2621 = vmatpush.msra.mxu0 %v2615
    %2622 = vmatpush.msra.mxu0 %v2614
    %2623 = vmatpush.msra.mxu0 %v2613
    %2624 = vmatpush.msra.mxu0 %v2612
    %2625 = vmatpush.msra.mxu0 %v2611
    %2626 = vmatpush.msra.mxu0 %v2610
    %2627 = vmatpush.msra.mxu0 %v2609
    %2628 = vmatpush.msra.mxu0 %v2608
    %2629 = vmatpush.msra.mxu0 %v2607
    %2630 = vmatpush.msra.mxu0 %v2606
    %2631 = vmatpush.msra.mxu0 %v2605
    %2632 = vmatpush.msra.mxu0 %v2604
    %2633 = vmatpush.msra.mxu0 %v2603
    %2634 = vmatpush.msra.mxu0 %v2602
    %2635 = vmatpush.msra.mxu0 %v2601
    %2636 = vmatpush.msra.mxu0 %v2600
    %2637 = vmatmul.f32.gmra.mxu0 %v2597
    %v2638 = vpop.f32.mrf.mxu0
    %v2639 = vadd.f32 %v2619, %v2638
    %2640 = vmatmul.f32.gmra.mxu0 %v2598
    %v2641 = vpop.f32.mrf.mxu0
    %v2642 = vadd.f32 %v2619, %v2641
    %2643 = vdwg.mxu0
    %v2644 = vadd.f32 %v2550, %v2639
    %v2645 = vadd.f32 %v2551, %v2642
    %s2646 = scalar_lea.vmem [#allocation24], 1
    %v2647 = vld [vmem:[%s2646] sm:$0x1]
    %s2648 = scalar_lea.vmem [#allocation26], 1
    %v2649 = vld [vmem:[%s2648] sm:$0x1]
    %2650 = vadd.xlane.f32.xlu0 %v2644
    %v2651 = vpop.xlane.xlu0 %2650
    %2652 = vadd.xlane.f32.xlu0 %v2645
    %v2653 = vpop.xlane.xlu0 %2652
    %v2654 = vmul.f32 %v2651, %v1573
    %v2655 = vmul.f32 %v2653, %v1573
    %v2656 = vsub.f32 %v2644, %v2654
    %v2657 = vsub.f32 %v2645, %v2655
    %v2658 = vmul.f32 %v2656, %v2656
    %v2659 = vmul.f32 %v2657, %v2657
    %2660 = vadd.xlane.f32.xlu0 %v2658
    %v2661 = vpop.xlane.xlu0 %2660
    %2662 = vadd.xlane.f32.xlu0 %v2659
    %v2663 = vpop.xlane.xlu0 %2662
    %v2664 = vmul.f32 %v2661, %v1573
    %v2665 = vmul.f32 %v2663, %v1573
    %v2666 = vadd.f32 %v2664, 1e-05
    %v2667 = vadd.f32 %v2665, 1e-05
    %v2668 = vrsqrt.pop %v2666
    %v2669 = vmul.f32 %v2668, %v2666
    %v2670 = vmul.f32 %v2669, %v2668
    %v2671 = vmul.f32 0.5, %v2670
    %v2672 = vsub.f32 1.5, %v2671
    %v2673 = vmul.f32 %v2668, %v2672
    %vm2674 = vweird.f32 %v2666
    %vm2675 = vweird.f32 %v2668
    %vm2676 = vmor %vm2674, %vm2675
    %v2677 = vsel %vm2676, %v2668, %v2673
    %v2678 = vrsqrt.pop %v2667
    %v2679 = vmul.f32 %v2678, %v2667
    %v2680 = vmul.f32 %v2679, %v2678
    %v2681 = vmul.f32 0.5, %v2680
    %v2682 = vsub.f32 1.5, %v2681
    %v2683 = vmul.f32 %v2678, %v2682
    %vm2684 = vweird.f32 %v2667
    %vm2685 = vweird.f32 %v2678
    %vm2686 = vmor %vm2684, %vm2685
    %v2687 = vsel %vm2686, %v2678, %v2683
    %v2688 = vmul.f32 %v2656, %v2677
    %v2689 = vmul.f32 %v2657, %v2687
    %v2691 = vperm.slane %v2647, 0
    %v2693 = vmul.f32 %v2688, %v2691
    %v2694 = vmul.f32 %v2689, %v2691
    %v2696 = vperm.slane %v2649, 0
    %v2698 = vadd.f32 %v2693, %v2696
    %v2699 = vadd.f32 %v2694, %v2696
    %v2700 = vld [vmem:[#allocation27] sm:$0xff]
    %v2701 = vld [vmem:[#allocation27 + $0x8] sm:$0xff]
    %v2702 = vld [vmem:[#allocation27 + $0x10] sm:$0xff]
    %v2703 = vld [vmem:[#allocation27 + $0x18] sm:$0xff]
    %v2704 = vld [vmem:[#allocation27 + $0x20] sm:$0xff]
    %v2705 = vld [vmem:[#allocation27 + $0x28] sm:$0xff]
    %v2706 = vld [vmem:[#allocation27 + $0x30] sm:$0xff]
    %v2707 = vld [vmem:[#allocation27 + $0x38] sm:$0xff]
    %v2708 = vld [vmem:[#allocation27 + $0x40] sm:$0xff]
    %v2709 = vld [vmem:[#allocation27 + $0x48] sm:$0xff]
    %v2710 = vld [vmem:[#allocation27 + $0x50] sm:$0xff]
    %v2711 = vld [vmem:[#allocation27 + $0x58] sm:$0xff]
    %v2712 = vld [vmem:[#allocation27 + $0x60] sm:$0xff]
    %v2713 = vld [vmem:[#allocation27 + $0x68] sm:$0xff]
    %v2714 = vld [vmem:[#allocation27 + $0x70] sm:$0xff]
    %v2715 = vld [vmem:[#allocation27 + $0x78] sm:$0xff]
    %v2716 = vld [vmem:[#allocation29] sm:$0x1]
    %v2718 = vperm.slane %v2716, 0
    %2720 = vmatpush.msra.mxu0 %v2715
    %2721 = vmatpush.msra.mxu0 %v2714
    %2722 = vmatpush.msra.mxu0 %v2713
    %2723 = vmatpush.msra.mxu0 %v2712
    %2724 = vmatpush.msra.mxu0 %v2711
    %2725 = vmatpush.msra.mxu0 %v2710
    %2726 = vmatpush.msra.mxu0 %v2709
    %2727 = vmatpush.msra.mxu0 %v2708
    %2728 = vmatpush.msra.mxu0 %v2707
    %2729 = vmatpush.msra.mxu0 %v2706
    %2730 = vmatpush.msra.mxu0 %v2705
    %2731 = vmatpush.msra.mxu0 %v2704
    %2732 = vmatpush.msra.mxu0 %v2703
    %2733 = vmatpush.msra.mxu0 %v2702
    %2734 = vmatpush.msra.mxu0 %v2701
    %2735 = vmatpush.msra.mxu0 %v2700
    %2736 = vmatmul.f32.gmra.mxu0 %v2698
    %v2737 = vpop.f32.mrf.mxu0
    %v2738 = vadd.f32 %v2718, %v2737
    %2739 = vmatmul.f32.gmra.mxu0 %v2699
    %v2740 = vpop.f32.mrf.mxu0
    %v2741 = vadd.f32 %v2718, %v2740
    %2742 = vdwg.mxu0
    %v2743 = vld [vmem:[#allocation30] sm:$0xff]
    %v2744 = vld [vmem:[#allocation30 + $0x8] sm:$0xff]
    %v2745 = vld [vmem:[#allocation30 + $0x10] sm:$0xff]
    %v2746 = vld [vmem:[#allocation30 + $0x18] sm:$0xff]
    %v2747 = vld [vmem:[#allocation30 + $0x20] sm:$0xff]
    %v2748 = vld [vmem:[#allocation30 + $0x28] sm:$0xff]
    %v2749 = vld [vmem:[#allocation30 + $0x30] sm:$0xff]
    %v2750 = vld [vmem:[#allocation30 + $0x38] sm:$0xff]
    %v2751 = vld [vmem:[#allocation30 + $0x40] sm:$0xff]
    %v2752 = vld [vmem:[#allocation30 + $0x48] sm:$0xff]
    %v2753 = vld [vmem:[#allocation30 + $0x50] sm:$0xff]
    %v2754 = vld [vmem:[#allocation30 + $0x58] sm:$0xff]
    %v2755 = vld [vmem:[#allocation30 + $0x60] sm:$0xff]
    %v2756 = vld [vmem:[#allocation30 + $0x68] sm:$0xff]
    %v2757 = vld [vmem:[#allocation30 + $0x70] sm:$0xff]
    %v2758 = vld [vmem:[#allocation30 + $0x78] sm:$0xff]
    %v2759 = vld [vmem:[#allocation30 + $0x80] sm:$0xff]
    %v2760 = vld [vmem:[#allocation30 + $0x88] sm:$0xff]
    %v2761 = vld [vmem:[#allocation30 + $0x90] sm:$0xff]
    %v2762 = vld [vmem:[#allocation30 + $0x98] sm:$0xff]
    %v2763 = vld [vmem:[#allocation30 + $0xa0] sm:$0xff]
    %v2764 = vld [vmem:[#allocation30 + $0xa8] sm:$0xff]
    %v2765 = vld [vmem:[#allocation30 + $0xb0] sm:$0xff]
    %v2766 = vld [vmem:[#allocation30 + $0xb8] sm:$0xff]
    %v2767 = vld [vmem:[#allocation30 + $0xc0] sm:$0xff]
    %v2768 = vld [vmem:[#allocation30 + $0xc8] sm:$0xff]
    %v2769 = vld [vmem:[#allocation30 + $0xd0] sm:$0xff]
    %v2770 = vld [vmem:[#allocation30 + $0xd8] sm:$0xff]
    %v2771 = vld [vmem:[#allocation30 + $0xe0] sm:$0xff]
    %v2772 = vld [vmem:[#allocation30 + $0xe8] sm:$0xff]
    %v2773 = vld [vmem:[#allocation30 + $0xf0] sm:$0xff]
    %v2774 = vld [vmem:[#allocation30 + $0xf8] sm:$0xff]
    %v2775 = vld [vmem:[#allocation30 + $0x100] sm:$0xff]
    %v2776 = vld [vmem:[#allocation30 + $0x108] sm:$0xff]
    %v2777 = vld [vmem:[#allocation30 + $0x110] sm:$0xff]
    %v2778 = vld [vmem:[#allocation30 + $0x118] sm:$0xff]
    %v2779 = vld [vmem:[#allocation30 + $0x120] sm:$0xff]
    %v2780 = vld [vmem:[#allocation30 + $0x128] sm:$0xff]
    %v2781 = vld [vmem:[#allocation30 + $0x130] sm:$0xff]
    %v2782 = vld [vmem:[#allocation30 + $0x138] sm:$0xff]
    %v2783 = vld [vmem:[#allocation30 + $0x140] sm:$0xff]
    %v2784 = vld [vmem:[#allocation30 + $0x148] sm:$0xff]
    %v2785 = vld [vmem:[#allocation30 + $0x150] sm:$0xff]
    %v2786 = vld [vmem:[#allocation30 + $0x158] sm:$0xff]
    %v2787 = vld [vmem:[#allocation30 + $0x160] sm:$0xff]
    %v2788 = vld [vmem:[#allocation30 + $0x168] sm:$0xff]
    %v2789 = vld [vmem:[#allocation30 + $0x170] sm:$0xff]
    %v2790 = vld [vmem:[#allocation30 + $0x178] sm:$0xff]
    %v2791 = vld [vmem:[#allocation32] sm:$0x7]
    %v2793 = vperm.slane %v2791, 0
    %v2794 = vperm.slane %v2791, 1
    %v2795 = vperm.slane %v2791, 2
    %2799 = vmatpush.msra.mxu0 %v2788
    %2800 = vmatpush.msra.mxu0 %v2785
    %2801 = vmatpush.msra.mxu0 %v2782
    %2802 = vmatpush.msra.mxu0 %v2779
    %2803 = vmatpush.msra.mxu0 %v2776
    %2804 = vmatpush.msra.mxu0 %v2773
    %2805 = vmatpush.msra.mxu0 %v2770
    %2806 = vmatpush.msra.mxu0 %v2767
    %2807 = vmatpush.msra.mxu0 %v2764
    %2808 = vmatpush.msra.mxu0 %v2761
    %2809 = vmatpush.msra.mxu0 %v2758
    %2810 = vmatpush.msra.mxu0 %v2755
    %2811 = vmatpush.msra.mxu0 %v2752
    %2812 = vmatpush.msra.mxu0 %v2749
    %2813 = vmatpush.msra.mxu0 %v2746
    %2814 = vmatpush.msra.mxu0 %v2743
    %2815 = vmatmul.f32.gmra.mxu0 %v2738
    %v2816 = vpop.f32.mrf.mxu0
    %v2817 = vadd.f32 %v2793, %v2816
    %2818 = vmatmul.f32.gmra.mxu0 %v2741
    %v2819 = vpop.f32.mrf.mxu0
    %v2820 = vadd.f32 %v2793, %v2819
    %2821 = vdwg.mxu0
    %2822 = vmatpush.msra.mxu0 %v2789
    %2823 = vmatpush.msra.mxu0 %v2786
    %2824 = vmatpush.msra.mxu0 %v2783
    %2825 = vmatpush.msra.mxu0 %v2780
    %2826 = vmatpush.msra.mxu0 %v2777
    %2827 = vmatpush.msra.mxu0 %v2774
    %2828 = vmatpush.msra.mxu0 %v2771
    %2829 = vmatpush.msra.mxu0 %v2768
    %2830 = vmatpush.msra.mxu0 %v2765
    %2831 = vmatpush.msra.mxu0 %v2762
    %2832 = vmatpush.msra.mxu0 %v2759
    %2833 = vmatpush.msra.mxu0 %v2756
    %2834 = vmatpush.msra.mxu0 %v2753
    %2835 = vmatpush.msra.mxu0 %v2750
    %2836 = vmatpush.msra.mxu0 %v2747
    %2837 = vmatpush.msra.mxu0 %v2744
    %2838 = vmatmul.f32.gmra.mxu0 %v2738
    %v2839 = vpop.f32.mrf.mxu0
    %v2840 = vadd.f32 %v2794, %v2839
    %2841 = vmatmul.f32.gmra.mxu0 %v2741
    %v2842 = vpop.f32.mrf.mxu0
    %v2843 = vadd.f32 %v2794, %v2842
    %2844 = vdwg.mxu0
    %2845 = vmatpush.msra.mxu0 %v2790
    %2846 = vmatpush.msra.mxu0 %v2787
    %2847 = vmatpush.msra.mxu0 %v2784
    %2848 = vmatpush.msra.mxu0 %v2781
    %2849 = vmatpush.msra.mxu0 %v2778
    %2850 = vmatpush.msra.mxu0 %v2775
    %2851 = vmatpush.msra.mxu0 %v2772
    %2852 = vmatpush.msra.mxu0 %v2769
    %2853 = vmatpush.msra.mxu0 %v2766
    %2854 = vmatpush.msra.mxu0 %v2763
    %2855 = vmatpush.msra.mxu0 %v2760
    %2856 = vmatpush.msra.mxu0 %v2757
    %2857 = vmatpush.msra.mxu0 %v2754
    %2858 = vmatpush.msra.mxu0 %v2751
    %2859 = vmatpush.msra.mxu0 %v2748
    %2860 = vmatpush.msra.mxu0 %v2745
    %2861 = vmatmul.f32.gmra.mxu0 %v2738
    %v2862 = vpop.f32.mrf.mxu0
    %v2863 = vadd.f32 %v2795, %v2862
    %2864 = vmatmul.f32.gmra.mxu0 %v2741
    %v2865 = vpop.f32.mrf.mxu0
    %v2866 = vadd.f32 %v2795, %v2865
    %2867 = vdwg.mxu0
    %v2868 = vld [vmem:[#allocation33] sm:$0xff]
    %v2869 = vld [vmem:[#allocation33 + $0x8] sm:$0xff]
    %v2870 = vld [vmem:[#allocation33 + $0x10] sm:$0xff]
    %v2871 = vld [vmem:[#allocation33 + $0x18] sm:$0xff]
    %v2872 = vld [vmem:[#allocation33 + $0x20] sm:$0xff]
    %v2873 = vld [vmem:[#allocation33 + $0x28] sm:$0xff]
    %v2874 = vld [vmem:[#allocation33 + $0x30] sm:$0xff]
    %v2875 = vld [vmem:[#allocation33 + $0x38] sm:$0xff]
    %v2876 = vld [vmem:[#allocation33 + $0x40] sm:$0xff]
    %v2877 = vld [vmem:[#allocation33 + $0x48] sm:$0xff]
    %v2878 = vld [vmem:[#allocation33 + $0x50] sm:$0xff]
    %v2879 = vld [vmem:[#allocation33 + $0x58] sm:$0xff]
    %v2880 = vld [vmem:[#allocation33 + $0x60] sm:$0xff]
    %v2881 = vld [vmem:[#allocation33 + $0x68] sm:$0xff]
    %v2882 = vld [vmem:[#allocation33 + $0x70] sm:$0xff]
    %v2883 = vld [vmem:[#allocation33 + $0x78] sm:$0xff]
    %v2884 = vld [vmem:[#allocation35] sm:$0x1]
    %v2886 = vsel %vm964, %v2817, 0
    %v2889 = vsel %vm964, %v2840, 0
    %2891 = vmatpush.xpose.msra.mxu0 0.0
    %2892 = vmatpush.xpose.msra.mxu0 0.0
    %2893 = vmatpush.xpose.msra.mxu0 0.0
    %2894 = vmatpush.xpose.msra.mxu0 0.0
    %2895 = vmatpush.xpose.msra.mxu0 0.0
    %2896 = vmatpush.xpose.msra.mxu0 0.0
    %2897 = vmatpush.xpose.msra.mxu0 0.0
    %2898 = vmatpush.xpose.msra.mxu0 0.0
    %2899 = vmatpush.xpose.msra.mxu0 0.0
    %2900 = vmatpush.xpose.msra.mxu0 0.0
    %2901 = vmatpush.xpose.msra.mxu0 0.0
    %2902 = vmatpush.xpose.msra.mxu0 0.0
    %2903 = vmatpush.xpose.msra.mxu0 0.0
    %2904 = vmatpush.xpose.msra.mxu0 0.0
    %2905 = vmatpush.xpose.msra.mxu0 0.0
    %2906 = vmatpush.xpose.msra.mxu0 %v2889
    %2907 = vmatmul.f32.gmra.mxu0 %v2886
    %v2908 = vpop.f32.mrf.mxu0
    %v2909 = vadd.f32 0.0, %v2908
    %2910 = vdwg.mxu0
    %v2911 = vmul.f32 %v2909, 0.17677669
    %v2912 = vsel %vm994, %v2911, -inf
    %2913 = vmax.xlane.f32.xlu0 %v2912
    %v2914 = vpop.xlane.xlu0 %2913
    %v2915 = vsub.f32 %v2911, %v2914
    %v2916 = vmul.f32 %v2915, 1.442695
    %v2917 = vpow.pop %v2916
    %v2918 = vsel %vm994, %v2917, 0.0
    %2919 = vadd.xlane.f32.xlu0 %v2918
    %v2920 = vpop.xlane.xlu0 %2919
    %v2921 = vrcp.pop %v2920
    %v2922 = vmul.f32 %v2917, %v2921
    %v2924 = vsel %vm994, %v2922, 0
    %2926 = vmatpush.msra.mxu0 0.0
    %2927 = vmatpush.msra.mxu0 0.0
    %2928 = vmatpush.msra.mxu0 0.0
    %2929 = vmatpush.msra.mxu0 0.0
    %2930 = vmatpush.msra.mxu0 0.0
    %2931 = vmatpush.msra.mxu0 0.0
    %2932 = vmatpush.msra.mxu0 0.0
    %2933 = vmatpush.msra.mxu0 0.0
    %2934 = vmatpush.msra.mxu0 0.0
    %2935 = vmatpush.msra.mxu0 0.0
    %2936 = vmatpush.msra.mxu0 0.0
    %2937 = vmatpush.msra.mxu0 0.0
    %2938 = vmatpush.msra.mxu0 0.0
    %2939 = vmatpush.msra.mxu0 0.0
    %2940 = vmatpush.msra.mxu0 0.0
    %2941 = vmatpush.msra.mxu0 %v2863
    %2942 = vmatmul.f32.gmra.mxu0 %v2924
    %v2943 = vpop.f32.mrf.mxu0
    %v2944 = vadd.f32 0.0, %v2943
    %2945 = vdwg.mxu0
    %2946 = vst.msk [vmem:[#allocation2] sm:$0xff] %vm964, %v2944
    %2947 = vrot.lane.b32.xlu0 %v2817, 96
    %v2948 = vpop.permute.xlu0 %2947
    %2949 = vrot.lane.b32.xlu0 %v2840, 96
    %v2950 = vpop.permute.xlu0 %2949
    %v2951 = vsel %vm964, %v2948, 0
    %v2953 = vsel %vm964, %v2950, 0
    %2955 = vmatpush.xpose.msra.mxu0 0.0
    %2956 = vmatpush.xpose.msra.mxu0 0.0
    %2957 = vmatpush.xpose.msra.mxu0 0.0
    %2958 = vmatpush.xpose.msra.mxu0 0.0
    %2959 = vmatpush.xpose.msra.mxu0 0.0
    %2960 = vmatpush.xpose.msra.mxu0 0.0
    %2961 = vmatpush.xpose.msra.mxu0 0.0
    %2962 = vmatpush.xpose.msra.mxu0 0.0
    %2963 = vmatpush.xpose.msra.mxu0 0.0
    %2964 = vmatpush.xpose.msra.mxu0 0.0
    %2965 = vmatpush.xpose.msra.mxu0 0.0
    %2966 = vmatpush.xpose.msra.mxu0 0.0
    %2967 = vmatpush.xpose.msra.mxu0 0.0
    %2968 = vmatpush.xpose.msra.mxu0 0.0
    %2969 = vmatpush.xpose.msra.mxu0 0.0
    %2970 = vmatpush.xpose.msra.mxu0 %v2953
    %2971 = vmatmul.f32.gmra.mxu0 %v2951
    %v2972 = vpop.f32.mrf.mxu0
    %v2973 = vadd.f32 0.0, %v2972
    %2974 = vdwg.mxu0
    %v2975 = vmul.f32 %v2973, 0.17677669
    %v2976 = vsel %vm994, %v2975, -inf
    %2977 = vmax.xlane.f32.xlu0 %v2976
    %v2978 = vpop.xlane.xlu0 %2977
    %v2979 = vsub.f32 %v2975, %v2978
    %v2980 = vmul.f32 %v2979, 1.442695
    %v2981 = vpow.pop %v2980
    %v2982 = vsel %vm994, %v2981, 0.0
    %2983 = vadd.xlane.f32.xlu0 %v2982
    %v2984 = vpop.xlane.xlu0 %2983
    %v2985 = vrcp.pop %v2984
    %v2986 = vmul.f32 %v2981, %v2985
    %2988 = vrot.lane.b32.xlu0 %v2863, 96
    %v2989 = vpop.permute.xlu0 %2988
    %v2992 = vsel %vm994, %v2986, 0
    %2994 = vmatpush.msra.mxu0 0.0
    %2995 = vmatpush.msra.mxu0 0.0
    %2996 = vmatpush.msra.mxu0 0.0
    %2997 = vmatpush.msra.mxu0 0.0
    %2998 = vmatpush.msra.mxu0 0.0
    %2999 = vmatpush.msra.mxu0 0.0
    %3000 = vmatpush.msra.mxu0 0.0
    %3001 = vmatpush.msra.mxu0 0.0
    %3002 = vmatpush.msra.mxu0 0.0
    %3003 = vmatpush.msra.mxu0 0.0
    %3004 = vmatpush.msra.mxu0 0.0
    %3005 = vmatpush.msra.mxu0 0.0
    %3006 = vmatpush.msra.mxu0 0.0
    %3007 = vmatpush.msra.mxu0 0.0
    %3008 = vmatpush.msra.mxu0 0.0
    %3009 = vmatpush.msra.mxu0 %v2989
    %3010 = vmatmul.f32.gmra.mxu0 %v2992
    %v3011 = vpop.f32.mrf.mxu0
    %v3012 = vadd.f32 0.0, %v3011
    %3013 = vdwg.mxu0
    %3015 = vrot.lane.b32.xlu0 %v3012, 32
    %v3016 = vpop.permute.xlu0 %3015
    %3018 = vst.msk [vmem:[#allocation2] sm:$0xff] %vm1102, %v3016
    %3019 = vrot.lane.b32.xlu0 %v2817, 64
    %v3020 = vpop.permute.xlu0 %3019
    %3021 = vrot.lane.b32.xlu0 %v2840, 64
    %v3022 = vpop.permute.xlu0 %3021
    %v3023 = vsel %vm964, %v3020, 0
    %v3025 = vsel %vm964, %v3022, 0
    %3027 = vmatpush.xpose.msra.mxu0 0.0
    %3028 = vmatpush.xpose.msra.mxu0 0.0
    %3029 = vmatpush.xpose.msra.mxu0 0.0
    %3030 = vmatpush.xpose.msra.mxu0 0.0
    %3031 = vmatpush.xpose.msra.mxu0 0.0
    %3032 = vmatpush.xpose.msra.mxu0 0.0
    %3033 = vmatpush.xpose.msra.mxu0 0.0
    %3034 = vmatpush.xpose.msra.mxu0 0.0
    %3035 = vmatpush.xpose.msra.mxu0 0.0
    %3036 = vmatpush.xpose.msra.mxu0 0.0
    %3037 = vmatpush.xpose.msra.mxu0 0.0
    %3038 = vmatpush.xpose.msra.mxu0 0.0
    %3039 = vmatpush.xpose.msra.mxu0 0.0
    %3040 = vmatpush.xpose.msra.mxu0 0.0
    %3041 = vmatpush.xpose.msra.mxu0 0.0
    %3042 = vmatpush.xpose.msra.mxu0 %v3025
    %3043 = vmatmul.f32.gmra.mxu0 %v3023
    %v3044 = vpop.f32.mrf.mxu0
    %v3045 = vadd.f32 0.0, %v3044
    %3046 = vdwg.mxu0
    %v3047 = vmul.f32 %v3045, 0.17677669
    %v3048 = vsel %vm994, %v3047, -inf
    %3049 = vmax.xlane.f32.xlu0 %v3048
    %v3050 = vpop.xlane.xlu0 %3049
    %v3051 = vsub.f32 %v3047, %v3050
    %v3052 = vmul.f32 %v3051, 1.442695
    %v3053 = vpow.pop %v3052
    %v3054 = vsel %vm994, %v3053, 0.0
    %3055 = vadd.xlane.f32.xlu0 %v3054
    %v3056 = vpop.xlane.xlu0 %3055
    %v3057 = vrcp.pop %v3056
    %v3058 = vmul.f32 %v3053, %v3057
    %3059 = vrot.lane.b32.xlu0 %v2863, 64
    %v3060 = vpop.permute.xlu0 %3059
    %v3063 = vsel %vm994, %v3058, 0
    %3065 = vmatpush.msra.mxu0 0.0
    %3066 = vmatpush.msra.mxu0 0.0
    %3067 = vmatpush.msra.mxu0 0.0
    %3068 = vmatpush.msra.mxu0 0.0
    %3069 = vmatpush.msra.mxu0 0.0
    %3070 = vmatpush.msra.mxu0 0.0
    %3071 = vmatpush.msra.mxu0 0.0
    %3072 = vmatpush.msra.mxu0 0.0
    %3073 = vmatpush.msra.mxu0 0.0
    %3074 = vmatpush.msra.mxu0 0.0
    %3075 = vmatpush.msra.mxu0 0.0
    %3076 = vmatpush.msra.mxu0 0.0
    %3077 = vmatpush.msra.mxu0 0.0
    %3078 = vmatpush.msra.mxu0 0.0
    %3079 = vmatpush.msra.mxu0 0.0
    %3080 = vmatpush.msra.mxu0 %v3060
    %3081 = vmatmul.f32.gmra.mxu0 %v3063
    %v3082 = vpop.f32.mrf.mxu0
    %v3083 = vadd.f32 0.0, %v3082
    %3084 = vdwg.mxu0
    %3086 = vrot.lane.b32.xlu0 %v3083, 64
    %v3087 = vpop.permute.xlu0 %3086
    %3089 = vst.msk [vmem:[#allocation2] sm:$0xff] %vm1175, %v3087
    %3090 = vrot.lane.b32.xlu0 %v2817, 32
    %v3091 = vpop.permute.xlu0 %3090
    %3092 = vrot.lane.b32.xlu0 %v2840, 32
    %v3093 = vpop.permute.xlu0 %3092
    %v3094 = vsel %vm964, %v3091, 0
    %v3096 = vsel %vm964, %v3093, 0
    %3098 = vmatpush.xpose.msra.mxu0 0.0
    %3099 = vmatpush.xpose.msra.mxu0 0.0
    %3100 = vmatpush.xpose.msra.mxu0 0.0
    %3101 = vmatpush.xpose.msra.mxu0 0.0
    %3102 = vmatpush.xpose.msra.mxu0 0.0
    %3103 = vmatpush.xpose.msra.mxu0 0.0
    %3104 = vmatpush.xpose.msra.mxu0 0.0
    %3105 = vmatpush.xpose.msra.mxu0 0.0
    %3106 = vmatpush.xpose.msra.mxu0 0.0
    %3107 = vmatpush.xpose.msra.mxu0 0.0
    %3108 = vmatpush.xpose.msra.mxu0 0.0
    %3109 = vmatpush.xpose.msra.mxu0 0.0
    %3110 = vmatpush.xpose.msra.mxu0 0.0
    %3111 = vmatpush.xpose.msra.mxu0 0.0
    %3112 = vmatpush.xpose.msra.mxu0 0.0
    %3113 = vmatpush.xpose.msra.mxu0 %v3096
    %3114 = vmatmul.f32.gmra.mxu0 %v3094
    %v3115 = vpop.f32.mrf.mxu0
    %v3116 = vadd.f32 0.0, %v3115
    %3117 = vdwg.mxu0
    %v3118 = vmul.f32 %v3116, 0.17677669
    %v3119 = vsel %vm994, %v3118, -inf
    %3120 = vmax.xlane.f32.xlu0 %v3119
    %v3121 = vpop.xlane.xlu0 %3120
    %v3122 = vsub.f32 %v3118, %v3121
    %v3123 = vmul.f32 %v3122, 1.442695
    %v3124 = vpow.pop %v3123
    %v3125 = vsel %vm994, %v3124, 0.0
    %3126 = vadd.xlane.f32.xlu0 %v3125
    %v3127 = vpop.xlane.xlu0 %3126
    %v3128 = vrcp.pop %v3127
    %v3129 = vmul.f32 %v3124, %v3128
    %3130 = vrot.lane.b32.xlu0 %v2863, 32
    %v3131 = vpop.permute.xlu0 %3130
    %v3134 = vsel %vm994, %v3129, 0
    %3136 = vmatpush.msra.mxu0 0.0
    %3137 = vmatpush.msra.mxu0 0.0
    %3138 = vmatpush.msra.mxu0 0.0
    %3139 = vmatpush.msra.mxu0 0.0
    %3140 = vmatpush.msra.mxu0 0.0
    %3141 = vmatpush.msra.mxu0 0.0
    %3142 = vmatpush.msra.mxu0 0.0
    %3143 = vmatpush.msra.mxu0 0.0
    %3144 = vmatpush.msra.mxu0 0.0
    %3145 = vmatpush.msra.mxu0 0.0
    %3146 = vmatpush.msra.mxu0 0.0
    %3147 = vmatpush.msra.mxu0 0.0
    %3148 = vmatpush.msra.mxu0 0.0
    %3149 = vmatpush.msra.mxu0 0.0
    %3150 = vmatpush.msra.mxu0 0.0
    %3151 = vmatpush.msra.mxu0 %v3131
    %3152 = vmatmul.f32.gmra.mxu0 %v3134
    %v3153 = vpop.f32.mrf.mxu0
    %v3154 = vadd.f32 0.0, %v3153
    %3155 = vdwg.mxu0
    %3157 = vrot.lane.b32.xlu0 %v3154, 96
    %v3158 = vpop.permute.xlu0 %3157
    %3160 = vst.msk [vmem:[#allocation2] sm:$0xff] %vm1248, %v3158
    %v3162 = vsel %vm964, %v2820, 0
    %v3165 = vsel %vm964, %v2843, 0
    %3167 = vmatpush.xpose.msra.mxu0 0.0
    %3168 = vmatpush.xpose.msra.mxu0 0.0
    %3169 = vmatpush.xpose.msra.mxu0 0.0
    %3170 = vmatpush.xpose.msra.mxu0 0.0
    %3171 = vmatpush.xpose.msra.mxu0 0.0
    %3172 = vmatpush.xpose.msra.mxu0 0.0
    %3173 = vmatpush.xpose.msra.mxu0 0.0
    %3174 = vmatpush.xpose.msra.mxu0 0.0
    %3175 = vmatpush.xpose.msra.mxu0 0.0
    %3176 = vmatpush.xpose.msra.mxu0 0.0
    %3177 = vmatpush.xpose.msra.mxu0 0.0
    %3178 = vmatpush.xpose.msra.mxu0 0.0
    %3179 = vmatpush.xpose.msra.mxu0 0.0
    %3180 = vmatpush.xpose.msra.mxu0 0.0
    %3181 = vmatpush.xpose.msra.mxu0 0.0
    %3182 = vmatpush.xpose.msra.mxu0 %v3165
    %3183 = vmatmul.f32.gmra.mxu0 %v3162
    %v3184 = vpop.f32.mrf.mxu0
    %v3185 = vadd.f32 0.0, %v3184
    %3186 = vdwg.mxu0
    %v3187 = vmul.f32 %v3185, 0.17677669
    %v3188 = vsel %vm994, %v3187, -inf
    %3189 = vmax.xlane.f32.xlu0 %v3188
    %v3190 = vpop.xlane.xlu0 %3189
    %v3191 = vsub.f32 %v3187, %v3190
    %v3192 = vmul.f32 %v3191, 1.442695
    %v3193 = vpow.pop %v3192
    %v3194 = vsel %vm994, %v3193, 0.0
    %3195 = vadd.xlane.f32.xlu0 %v3194
    %v3196 = vpop.xlane.xlu0 %3195
    %v3197 = vrcp.pop %v3196
    %v3198 = vmul.f32 %v3193, %v3197
    %v3200 = vsel %vm994, %v3198, 0
    %3202 = vmatpush.msra.mxu0 0.0
    %3203 = vmatpush.msra.mxu0 0.0
    %3204 = vmatpush.msra.mxu0 0.0
    %3205 = vmatpush.msra.mxu0 0.0
    %3206 = vmatpush.msra.mxu0 0.0
    %3207 = vmatpush.msra.mxu0 0.0
    %3208 = vmatpush.msra.mxu0 0.0
    %3209 = vmatpush.msra.mxu0 0.0
    %3210 = vmatpush.msra.mxu0 0.0
    %3211 = vmatpush.msra.mxu0 0.0
    %3212 = vmatpush.msra.mxu0 0.0
    %3213 = vmatpush.msra.mxu0 0.0
    %3214 = vmatpush.msra.mxu0 0.0
    %3215 = vmatpush.msra.mxu0 0.0
    %3216 = vmatpush.msra.mxu0 0.0
    %3217 = vmatpush.msra.mxu0 %v2866
    %3218 = vmatmul.f32.gmra.mxu0 %v3200
    %v3219 = vpop.f32.mrf.mxu0
    %v3220 = vadd.f32 0.0, %v3219
    %3221 = vdwg.mxu0
    %3222 = vst.msk [vmem:[#allocation2 + $0x8] sm:$0xff] %vm964, %v3220
    %3223 = vrot.lane.b32.xlu0 %v2820, 96
    %v3224 = vpop.permute.xlu0 %3223
    %3225 = vrot.lane.b32.xlu0 %v2843, 96
    %v3226 = vpop.permute.xlu0 %3225
    %v3227 = vsel %vm964, %v3224, 0
    %v3229 = vsel %vm964, %v3226, 0
    %3231 = vmatpush.xpose.msra.mxu0 0.0
    %3232 = vmatpush.xpose.msra.mxu0 0.0
    %3233 = vmatpush.xpose.msra.mxu0 0.0
    %3234 = vmatpush.xpose.msra.mxu0 0.0
    %3235 = vmatpush.xpose.msra.mxu0 0.0
    %3236 = vmatpush.xpose.msra.mxu0 0.0
    %3237 = vmatpush.xpose.msra.mxu0 0.0
    %3238 = vmatpush.xpose.msra.mxu0 0.0
    %3239 = vmatpush.xpose.msra.mxu0 0.0
    %3240 = vmatpush.xpose.msra.mxu0 0.0
    %3241 = vmatpush.xpose.msra.mxu0 0.0
    %3242 = vmatpush.xpose.msra.mxu0 0.0
    %3243 = vmatpush.xpose.msra.mxu0 0.0
    %3244 = vmatpush.xpose.msra.mxu0 0.0
    %3245 = vmatpush.xpose.msra.mxu0 0.0
    %3246 = vmatpush.xpose.msra.mxu0 %v3229
    %3247 = vmatmul.f32.gmra.mxu0 %v3227
    %v3248 = vpop.f32.mrf.mxu0
    %v3249 = vadd.f32 0.0, %v3248
    %3250 = vdwg.mxu0
    %v3251 = vmul.f32 %v3249, 0.17677669
    %v3252 = vsel %vm994, %v3251, -inf
    %3253 = vmax.xlane.f32.xlu0 %v3252
    %v3254 = vpop.xlane.xlu0 %3253
    %v3255 = vsub.f32 %v3251, %v3254
    %v3256 = vmul.f32 %v3255, 1.442695
    %v3257 = vpow.pop %v3256
    %v3258 = vsel %vm994, %v3257, 0.0
    %3259 = vadd.xlane.f32.xlu0 %v3258
    %v3260 = vpop.xlane.xlu0 %3259
    %v3261 = vrcp.pop %v3260
    %v3262 = vmul.f32 %v3257, %v3261
    %3264 = vrot.lane.b32.xlu0 %v2866, 96
    %v3265 = vpop.permute.xlu0 %3264
    %v3268 = vsel %vm994, %v3262, 0
    %3270 = vmatpush.msra.mxu0 0.0
    %3271 = vmatpush.msra.mxu0 0.0
    %3272 = vmatpush.msra.mxu0 0.0
    %3273 = vmatpush.msra.mxu0 0.0
    %3274 = vmatpush.msra.mxu0 0.0
    %3275 = vmatpush.msra.mxu0 0.0
    %3276 = vmatpush.msra.mxu0 0.0
    %3277 = vmatpush.msra.mxu0 0.0
    %3278 = vmatpush.msra.mxu0 0.0
    %3279 = vmatpush.msra.mxu0 0.0
    %3280 = vmatpush.msra.mxu0 0.0
    %3281 = vmatpush.msra.mxu0 0.0
    %3282 = vmatpush.msra.mxu0 0.0
    %3283 = vmatpush.msra.mxu0 0.0
    %3284 = vmatpush.msra.mxu0 0.0
    %3285 = vmatpush.msra.mxu0 %v3265
    %3286 = vmatmul.f32.gmra.mxu0 %v3268
    %v3287 = vpop.f32.mrf.mxu0
    %v3288 = vadd.f32 0.0, %v3287
    %3289 = vdwg.mxu0
    %3291 = vrot.lane.b32.xlu0 %v3288, 32
    %v3292 = vpop.permute.xlu0 %3291
    %3294 = vst.msk [vmem:[#allocation2 + $0x8] sm:$0xff] %vm1102, %v3292
    %3295 = vrot.lane.b32.xlu0 %v2820, 64
    %v3296 = vpop.permute.xlu0 %3295
    %3297 = vrot.lane.b32.xlu0 %v2843, 64
    %v3298 = vpop.permute.xlu0 %3297
    %v3299 = vsel %vm964, %v3296, 0
    %v3301 = vsel %vm964, %v3298, 0
    %3303 = vmatpush.xpose.msra.mxu0 0.0
    %3304 = vmatpush.xpose.msra.mxu0 0.0
    %3305 = vmatpush.xpose.msra.mxu0 0.0
    %3306 = vmatpush.xpose.msra.mxu0 0.0
    %3307 = vmatpush.xpose.msra.mxu0 0.0
    %3308 = vmatpush.xpose.msra.mxu0 0.0
    %3309 = vmatpush.xpose.msra.mxu0 0.0
    %3310 = vmatpush.xpose.msra.mxu0 0.0
    %3311 = vmatpush.xpose.msra.mxu0 0.0
    %3312 = vmatpush.xpose.msra.mxu0 0.0
    %3313 = vmatpush.xpose.msra.mxu0 0.0
    %3314 = vmatpush.xpose.msra.mxu0 0.0
    %3315 = vmatpush.xpose.msra.mxu0 0.0
    %3316 = vmatpush.xpose.msra.mxu0 0.0
    %3317 = vmatpush.xpose.msra.mxu0 0.0
    %3318 = vmatpush.xpose.msra.mxu0 %v3301
    %3319 = vmatmul.f32.gmra.mxu0 %v3299
    %v3320 = vpop.f32.mrf.mxu0
    %v3321 = vadd.f32 0.0, %v3320
    %3322 = vdwg.mxu0
    %v3323 = vmul.f32 %v3321, 0.17677669
    %v3324 = vsel %vm994, %v3323, -inf
    %3325 = vmax.xlane.f32.xlu0 %v3324
    %v3326 = vpop.xlane.xlu0 %3325
    %v3327 = vsub.f32 %v3323, %v3326
    %v3328 = vmul.f32 %v3327, 1.442695
    %v3329 = vpow.pop %v3328
    %v3330 = vsel %vm994, %v3329, 0.0
    %3331 = vadd.xlane.f32.xlu0 %v3330
    %v3332 = vpop.xlane.xlu0 %3331
    %v3333 = vrcp.pop %v3332
    %v3334 = vmul.f32 %v3329, %v3333
    %3335 = vrot.lane.b32.xlu0 %v2866, 64
    %v3336 = vpop.permute.xlu0 %3335
    %v3339 = vsel %vm994, %v3334, 0
    %3341 = vmatpush.msra.mxu0 0.0
    %3342 = vmatpush.msra.mxu0 0.0
    %3343 = vmatpush.msra.mxu0 0.0
    %3344 = vmatpush.msra.mxu0 0.0
    %3345 = vmatpush.msra.mxu0 0.0
    %3346 = vmatpush.msra.mxu0 0.0
    %3347 = vmatpush.msra.mxu0 0.0
    %3348 = vmatpush.msra.mxu0 0.0
    %3349 = vmatpush.msra.mxu0 0.0
    %3350 = vmatpush.msra.mxu0 0.0
    %3351 = vmatpush.msra.mxu0 0.0
    %3352 = vmatpush.msra.mxu0 0.0
    %3353 = vmatpush.msra.mxu0 0.0
    %3354 = vmatpush.msra.mxu0 0.0
    %3355 = vmatpush.msra.mxu0 0.0
    %3356 = vmatpush.msra.mxu0 %v3336
    %3357 = vmatmul.f32.gmra.mxu0 %v3339
    %v3358 = vpop.f32.mrf.mxu0
    %v3359 = vadd.f32 0.0, %v3358
    %3360 = vdwg.mxu0
    %3362 = vrot.lane.b32.xlu0 %v3359, 64
    %v3363 = vpop.permute.xlu0 %3362
    %3365 = vst.msk [vmem:[#allocation2 + $0x8] sm:$0xff] %vm1175, %v3363
    %3366 = vrot.lane.b32.xlu0 %v2820, 32
    %v3367 = vpop.permute.xlu0 %3366
    %3368 = vrot.lane.b32.xlu0 %v2843, 32
    %v3369 = vpop.permute.xlu0 %3368
    %v3370 = vsel %vm964, %v3367, 0
    %v3372 = vsel %vm964, %v3369, 0
    %3374 = vmatpush.xpose.msra.mxu0 0.0
    %3375 = vmatpush.xpose.msra.mxu0 0.0
    %3376 = vmatpush.xpose.msra.mxu0 0.0
    %3377 = vmatpush.xpose.msra.mxu0 0.0
    %3378 = vmatpush.xpose.msra.mxu0 0.0
    %3379 = vmatpush.xpose.msra.mxu0 0.0
    %3380 = vmatpush.xpose.msra.mxu0 0.0
    %3381 = vmatpush.xpose.msra.mxu0 0.0
    %3382 = vmatpush.xpose.msra.mxu0 0.0
    %3383 = vmatpush.xpose.msra.mxu0 0.0
    %3384 = vmatpush.xpose.msra.mxu0 0.0
    %3385 = vmatpush.xpose.msra.mxu0 0.0
    %3386 = vmatpush.xpose.msra.mxu0 0.0
    %3387 = vmatpush.xpose.msra.mxu0 0.0
    %3388 = vmatpush.xpose.msra.mxu0 0.0
    %3389 = vmatpush.xpose.msra.mxu0 %v3372
    %3390 = vmatmul.f32.gmra.mxu0 %v3370
    %v3391 = vpop.f32.mrf.mxu0
    %v3392 = vadd.f32 0.0, %v3391
    %3393 = vdwg.mxu0
    %v3394 = vmul.f32 %v3392, 0.17677669
    %v3395 = vsel %vm994, %v3394, -inf
    %3396 = vmax.xlane.f32.xlu0 %v3395
    %v3397 = vpop.xlane.xlu0 %3396
    %v3398 = vsub.f32 %v3394, %v3397
    %v3399 = vmul.f32 %v3398, 1.442695
    %v3400 = vpow.pop %v3399
    %v3401 = vsel %vm994, %v3400, 0.0
    %3402 = vadd.xlane.f32.xlu0 %v3401
    %v3403 = vpop.xlane.xlu0 %3402
    %v3404 = vrcp.pop %v3403
    %v3405 = vmul.f32 %v3400, %v3404
    %3406 = vrot.lane.b32.xlu0 %v2866, 32
    %v3407 = vpop.permute.xlu0 %3406
    %v3410 = vsel %vm994, %v3405, 0
    %3412 = vmatpush.msra.mxu0 0.0
    %3413 = vmatpush.msra.mxu0 0.0
    %3414 = vmatpush.msra.mxu0 0.0
    %3415 = vmatpush.msra.mxu0 0.0
    %3416 = vmatpush.msra.mxu0 0.0
    %3417 = vmatpush.msra.mxu0 0.0
    %3418 = vmatpush.msra.mxu0 0.0
    %3419 = vmatpush.msra.mxu0 0.0
    %3420 = vmatpush.msra.mxu0 0.0
    %3421 = vmatpush.msra.mxu0 0.0
    %3422 = vmatpush.msra.mxu0 0.0
    %3423 = vmatpush.msra.mxu0 0.0
    %3424 = vmatpush.msra.mxu0 0.0
    %3425 = vmatpush.msra.mxu0 0.0
    %3426 = vmatpush.msra.mxu0 0.0
    %3427 = vmatpush.msra.mxu0 %v3407
    %3428 = vmatmul.f32.gmra.mxu0 %v3410
    %v3429 = vpop.f32.mrf.mxu0
    %v3430 = vadd.f32 0.0, %v3429
    %3431 = vdwg.mxu0
    %3433 = vrot.lane.b32.xlu0 %v3430, 96
    %v3434 = vpop.permute.xlu0 %3433
    %3436 = vst.msk [vmem:[#allocation2 + $0x8] sm:$0xff] %vm1248, %v3434
    %v3437 = vld [vmem:[#allocation2] sm:$0xff]
    %v3438 = vld [vmem:[#allocation2 + $0x8] sm:$0xff]
    %v3440 = vperm.slane %v2884, 0
    %3442 = vmatpush.msra.mxu0 %v2883
    %3443 = vmatpush.msra.mxu0 %v2882
    %3444 = vmatpush.msra.mxu0 %v2881
    %3445 = vmatpush.msra.mxu0 %v2880
    %3446 = vmatpush.msra.mxu0 %v2879
    %3447 = vmatpush.msra.mxu0 %v2878
    %3448 = vmatpush.msra.mxu0 %v2877
    %3449 = vmatpush.msra.mxu0 %v2876
    %3450 = vmatpush.msra.mxu0 %v2875
    %3451 = vmatpush.msra.mxu0 %v2874
    %3452 = vmatpush.msra.mxu0 %v2873
    %3453 = vmatpush.msra.mxu0 %v2872
    %3454 = vmatpush.msra.mxu0 %v2871
    %3455 = vmatpush.msra.mxu0 %v2870
    %3456 = vmatpush.msra.mxu0 %v2869
    %3457 = vmatpush.msra.mxu0 %v2868
    %3458 = vmatmul.f32.gmra.mxu0 %v3437
    %v3459 = vpop.f32.mrf.mxu0
    %v3460 = vadd.f32 %v3440, %v3459
    %3461 = vmatmul.f32.gmra.mxu0 %v3438
    %v3462 = vpop.f32.mrf.mxu0
    %v3463 = vadd.f32 %v3440, %v3462
    %3464 = vdwg.mxu0
    %v3465 = vadd.f32 %v2738, %v3460
    %v3466 = vadd.f32 %v2741, %v3463
    %v3467 = vld [vmem:[#allocation36] sm:$0x1]
    %v3468 = vld [vmem:[#allocation38] sm:$0x1]
    %3469 = vadd.xlane.f32.xlu0 %v3465
    %v3470 = vpop.xlane.xlu0 %3469
    %3471 = vadd.xlane.f32.xlu0 %v3466
    %v3472 = vpop.xlane.xlu0 %3471
    %v3473 = vmul.f32 %v3470, %v1573
    %v3474 = vmul.f32 %v3472, %v1573
    %v3475 = vsub.f32 %v3465, %v3473
    %v3476 = vsub.f32 %v3466, %v3474
    %v3477 = vmul.f32 %v3475, %v3475
    %v3478 = vmul.f32 %v3476, %v3476
    %3479 = vadd.xlane.f32.xlu0 %v3477
    %v3480 = vpop.xlane.xlu0 %3479
    %3481 = vadd.xlane.f32.xlu0 %v3478
    %v3482 = vpop.xlane.xlu0 %3481
    %v3483 = vmul.f32 %v3480, %v1573
    %v3484 = vmul.f32 %v3482, %v1573
    %v3485 = vadd.f32 %v3483, 1e-05
    %v3486 = vadd.f32 %v3484, 1e-05
    %v3487 = vrsqrt.pop %v3485
    %v3488 = vmul.f32 %v3487, %v3485
    %v3489 = vmul.f32 %v3488, %v3487
    %v3490 = vmul.f32 0.5, %v3489
    %v3491 = vsub.f32 1.5, %v3490
    %v3492 = vmul.f32 %v3487, %v3491
    %vm3493 = vweird.f32 %v3485
    %vm3494 = vweird.f32 %v3487
    %vm3495 = vmor %vm3493, %vm3494
    %v3496 = vsel %vm3495, %v3487, %v3492
    %v3497 = vrsqrt.pop %v3486
    %v3498 = vmul.f32 %v3497, %v3486
    %v3499 = vmul.f32 %v3498, %v3497
    %v3500 = vmul.f32 0.5, %v3499
    %v3501 = vsub.f32 1.5, %v3500
    %v3502 = vmul.f32 %v3497, %v3501
    %vm3503 = vweird.f32 %v3486
    %vm3504 = vweird.f32 %v3497
    %vm3505 = vmor %vm3503, %vm3504
    %v3506 = vsel %vm3505, %v3497, %v3502
    %v3507 = vmul.f32 %v3475, %v3496
    %v3508 = vmul.f32 %v3476, %v3506
    %v3510 = vperm.slane %v3467, 0
    %v3512 = vmul.f32 %v3507, %v3510
    %v3513 = vmul.f32 %v3508, %v3510
    %v3515 = vperm.slane %v3468, 0
    %v3517 = vadd.f32 %v3512, %v3515
    %v3518 = vadd.f32 %v3513, %v3515
    %v3519 = vld [vmem:[#allocation39] sm:$0xff]
    %v3520 = vld [vmem:[#allocation39 + $0x8] sm:$0xff]
    %v3521 = vld [vmem:[#allocation39 + $0x10] sm:$0xff]
    %v3522 = vld [vmem:[#allocation39 + $0x18] sm:$0xff]
    %v3523 = vld [vmem:[#allocation39 + $0x20] sm:$0xff]
    %v3524 = vld [vmem:[#allocation39 + $0x28] sm:$0xff]
    %v3525 = vld [vmem:[#allocation39 + $0x30] sm:$0xff]
    %v3526 = vld [vmem:[#allocation39 + $0x38] sm:$0xff]
    %v3527 = vld [vmem:[#allocation39 + $0x40] sm:$0xff]
    %v3528 = vld [vmem:[#allocation39 + $0x48] sm:$0xff]
    %v3529 = vld [vmem:[#allocation39 + $0x50] sm:$0xff]
    %v3530 = vld [vmem:[#allocation39 + $0x58] sm:$0xff]
    %v3531 = vld [vmem:[#allocation39 + $0x60] sm:$0xff]
    %v3532 = vld [vmem:[#allocation39 + $0x68] sm:$0xff]
    %v3533 = vld [vmem:[#allocation39 + $0x70] sm:$0xff]
    %v3534 = vld [vmem:[#allocation39 + $0x78] sm:$0xff]
    %v3535 = vld [vmem:[#allocation41] sm:$0x1]
    %v3537 = vperm.slane %v3535, 0
    %3539 = vmatpush.msra.mxu0 %v3534
    %3540 = vmatpush.msra.mxu0 %v3533
    %3541 = vmatpush.msra.mxu0 %v3532
    %3542 = vmatpush.msra.mxu0 %v3531
    %3543 = vmatpush.msra.mxu0 %v3530
    %3544 = vmatpush.msra.mxu0 %v3529
    %3545 = vmatpush.msra.mxu0 %v3528
    %3546 = vmatpush.msra.mxu0 %v3527
    %3547 = vmatpush.msra.mxu0 %v3526
    %3548 = vmatpush.msra.mxu0 %v3525
    %3549 = vmatpush.msra.mxu0 %v3524
    %3550 = vmatpush.msra.mxu0 %v3523
    %3551 = vmatpush.msra.mxu0 %v3522
    %3552 = vmatpush.msra.mxu0 %v3521
    %3553 = vmatpush.msra.mxu0 %v3520
    %3554 = vmatpush.msra.mxu0 %v3519
    %3555 = vmatmul.f32.gmra.mxu0 %v3517
    %v3556 = vpop.f32.mrf.mxu0
    %v3557 = vadd.f32 %v3537, %v3556
    %3558 = vmatmul.f32.gmra.mxu0 %v3518
    %v3559 = vpop.f32.mrf.mxu0
    %v3560 = vadd.f32 %v3537, %v3559
    %3561 = vdwg.mxu0
    %v3562 = vld [vmem:[#allocation42] sm:$0xff]
    %v3563 = vld [vmem:[#allocation42 + $0x8] sm:$0xff]
    %v3564 = vld [vmem:[#allocation42 + $0x10] sm:$0xff]
    %v3565 = vld [vmem:[#allocation42 + $0x18] sm:$0xff]
    %v3566 = vld [vmem:[#allocation42 + $0x20] sm:$0xff]
    %v3567 = vld [vmem:[#allocation42 + $0x28] sm:$0xff]
    %v3568 = vld [vmem:[#allocation42 + $0x30] sm:$0xff]
    %v3569 = vld [vmem:[#allocation42 + $0x38] sm:$0xff]
    %v3570 = vld [vmem:[#allocation42 + $0x40] sm:$0xff]
    %v3571 = vld [vmem:[#allocation42 + $0x48] sm:$0xff]
    %v3572 = vld [vmem:[#allocation42 + $0x50] sm:$0xff]
    %v3573 = vld [vmem:[#allocation42 + $0x58] sm:$0xff]
    %v3574 = vld [vmem:[#allocation42 + $0x60] sm:$0xff]
    %v3575 = vld [vmem:[#allocation42 + $0x68] sm:$0xff]
    %v3576 = vld [vmem:[#allocation42 + $0x70] sm:$0xff]
    %v3577 = vld [vmem:[#allocation42 + $0x78] sm:$0xff]
    %v3578 = vld [vmem:[#allocation42 + $0x80] sm:$0xff]
    %v3579 = vld [vmem:[#allocation42 + $0x88] sm:$0xff]
    %v3580 = vld [vmem:[#allocation42 + $0x90] sm:$0xff]
    %v3581 = vld [vmem:[#allocation42 + $0x98] sm:$0xff]
    %v3582 = vld [vmem:[#allocation42 + $0xa0] sm:$0xff]
    %v3583 = vld [vmem:[#allocation42 + $0xa8] sm:$0xff]
    %v3584 = vld [vmem:[#allocation42 + $0xb0] sm:$0xff]
    %v3585 = vld [vmem:[#allocation42 + $0xb8] sm:$0xff]
    %v3586 = vld [vmem:[#allocation42 + $0xc0] sm:$0xff]
    %v3587 = vld [vmem:[#allocation42 + $0xc8] sm:$0xff]
    %v3588 = vld [vmem:[#allocation42 + $0xd0] sm:$0xff]
    %v3589 = vld [vmem:[#allocation42 + $0xd8] sm:$0xff]
    %v3590 = vld [vmem:[#allocation42 + $0xe0] sm:$0xff]
    %v3591 = vld [vmem:[#allocation42 + $0xe8] sm:$0xff]
    %v3592 = vld [vmem:[#allocation42 + $0xf0] sm:$0xff]
    %v3593 = vld [vmem:[#allocation42 + $0xf8] sm:$0xff]
    %v3594 = vld [vmem:[#allocation44] sm:$0x3]
    %v3596 = vperm.slane %v3594, 0
    %v3597 = vperm.slane %v3594, 1
    %3600 = vmatpush.msra.mxu0 %v3592
    %3601 = vmatpush.msra.mxu0 %v3590
    %3602 = vmatpush.msra.mxu0 %v3588
    %3603 = vmatpush.msra.mxu0 %v3586
    %3604 = vmatpush.msra.mxu0 %v3584
    %3605 = vmatpush.msra.mxu0 %v3582
    %3606 = vmatpush.msra.mxu0 %v3580
    %3607 = vmatpush.msra.mxu0 %v3578
    %3608 = vmatpush.msra.mxu0 %v3576
    %3609 = vmatpush.msra.mxu0 %v3574
    %3610 = vmatpush.msra.mxu0 %v3572
    %3611 = vmatpush.msra.mxu0 %v3570
    %3612 = vmatpush.msra.mxu0 %v3568
    %3613 = vmatpush.msra.mxu0 %v3566
    %3614 = vmatpush.msra.mxu0 %v3564
    %3615 = vmatpush.msra.mxu0 %v3562
    %3616 = vmatmul.f32.gmra.mxu0 %v2698
    %v3617 = vpop.f32.mrf.mxu0
    %v3618 = vadd.f32 %v3596, %v3617
    %3619 = vmatmul.f32.gmra.mxu0 %v2699
    %v3620 = vpop.f32.mrf.mxu0
    %v3621 = vadd.f32 %v3596, %v3620
    %3622 = vdwg.mxu0
    %3623 = vmatpush.msra.mxu0 %v3593
    %3624 = vmatpush.msra.mxu0 %v3591
    %3625 = vmatpush.msra.mxu0 %v3589
    %3626 = vmatpush.msra.mxu0 %v3587
    %3627 = vmatpush.msra.mxu0 %v3585
    %3628 = vmatpush.msra.mxu0 %v3583
    %3629 = vmatpush.msra.mxu0 %v3581
    %3630 = vmatpush.msra.mxu0 %v3579
    %3631 = vmatpush.msra.mxu0 %v3577
    %3632 = vmatpush.msra.mxu0 %v3575
    %3633 = vmatpush.msra.mxu0 %v3573
    %3634 = vmatpush.msra.mxu0 %v3571
    %3635 = vmatpush.msra.mxu0 %v3569
    %3636 = vmatpush.msra.mxu0 %v3567
    %3637 = vmatpush.msra.mxu0 %v3565
    %3638 = vmatpush.msra.mxu0 %v3563
    %3639 = vmatmul.f32.gmra.mxu0 %v2698
    %v3640 = vpop.f32.mrf.mxu0
    %v3641 = vadd.f32 %v3597, %v3640
    %3642 = vmatmul.f32.gmra.mxu0 %v2699
    %v3643 = vpop.f32.mrf.mxu0
    %v3644 = vadd.f32 %v3597, %v3643
    %3645 = vdwg.mxu0
    %v3646 = vld [vmem:[#allocation45] sm:$0xff]
    %v3647 = vld [vmem:[#allocation45 + $0x8] sm:$0xff]
    %v3648 = vld [vmem:[#allocation45 + $0x10] sm:$0xff]
    %v3649 = vld [vmem:[#allocation45 + $0x18] sm:$0xff]
    %v3650 = vld [vmem:[#allocation45 + $0x20] sm:$0xff]
    %v3651 = vld [vmem:[#allocation45 + $0x28] sm:$0xff]
    %v3652 = vld [vmem:[#allocation45 + $0x30] sm:$0xff]
    %v3653 = vld [vmem:[#allocation45 + $0x38] sm:$0xff]
    %v3654 = vld [vmem:[#allocation45 + $0x40] sm:$0xff]
    %v3655 = vld [vmem:[#allocation45 + $0x48] sm:$0xff]
    %v3656 = vld [vmem:[#allocation45 + $0x50] sm:$0xff]
    %v3657 = vld [vmem:[#allocation45 + $0x58] sm:$0xff]
    %v3658 = vld [vmem:[#allocation45 + $0x60] sm:$0xff]
    %v3659 = vld [vmem:[#allocation45 + $0x68] sm:$0xff]
    %v3660 = vld [vmem:[#allocation45 + $0x70] sm:$0xff]
    %v3661 = vld [vmem:[#allocation45 + $0x78] sm:$0xff]
    %v3662 = vld [vmem:[#allocation47] sm:$0x1]
    %v3664 = vsel %vm964, %v3557, 0
    %v3667 = vsel %vm964, %v3618, 0
    %3669 = vmatpush.xpose.msra.mxu0 0.0
    %3670 = vmatpush.xpose.msra.mxu0 0.0
    %3671 = vmatpush.xpose.msra.mxu0 0.0
    %3672 = vmatpush.xpose.msra.mxu0 0.0
    %3673 = vmatpush.xpose.msra.mxu0 0.0
    %3674 = vmatpush.xpose.msra.mxu0 0.0
    %3675 = vmatpush.xpose.msra.mxu0 0.0
    %3676 = vmatpush.xpose.msra.mxu0 0.0
    %3677 = vmatpush.xpose.msra.mxu0 0.0
    %3678 = vmatpush.xpose.msra.mxu0 0.0
    %3679 = vmatpush.xpose.msra.mxu0 0.0
    %3680 = vmatpush.xpose.msra.mxu0 0.0
    %3681 = vmatpush.xpose.msra.mxu0 0.0
    %3682 = vmatpush.xpose.msra.mxu0 0.0
    %3683 = vmatpush.xpose.msra.mxu0 0.0
    %3684 = vmatpush.xpose.msra.mxu0 %v3667
    %3685 = vmatmul.f32.gmra.mxu0 %v3664
    %v3686 = vpop.f32.mrf.mxu0
    %v3687 = vadd.f32 0.0, %v3686
    %3688 = vdwg.mxu0
    %v3689 = vmul.f32 %v3687, 0.17677669
    %v3690 = vsel %vm994, %v3689, -inf
    %3691 = vmax.xlane.f32.xlu0 %v3690
    %v3692 = vpop.xlane.xlu0 %3691
    %v3693 = vsub.f32 %v3689, %v3692
    %v3694 = vmul.f32 %v3693, 1.442695
    %v3695 = vpow.pop %v3694
    %v3696 = vsel %vm994, %v3695, 0.0
    %3697 = vadd.xlane.f32.xlu0 %v3696
    %v3698 = vpop.xlane.xlu0 %3697
    %v3699 = vrcp.pop %v3698
    %v3700 = vmul.f32 %v3695, %v3699
    %v3702 = vsel %vm994, %v3700, 0
    %3704 = vmatpush.msra.mxu0 0.0
    %3705 = vmatpush.msra.mxu0 0.0
    %3706 = vmatpush.msra.mxu0 0.0
    %3707 = vmatpush.msra.mxu0 0.0
    %3708 = vmatpush.msra.mxu0 0.0
    %3709 = vmatpush.msra.mxu0 0.0
    %3710 = vmatpush.msra.mxu0 0.0
    %3711 = vmatpush.msra.mxu0 0.0
    %3712 = vmatpush.msra.mxu0 0.0
    %3713 = vmatpush.msra.mxu0 0.0
    %3714 = vmatpush.msra.mxu0 0.0
    %3715 = vmatpush.msra.mxu0 0.0
    %3716 = vmatpush.msra.mxu0 0.0
    %3717 = vmatpush.msra.mxu0 0.0
    %3718 = vmatpush.msra.mxu0 0.0
    %3719 = vmatpush.msra.mxu0 %v3641
    %3720 = vmatmul.f32.gmra.mxu0 %v3702
    %v3721 = vpop.f32.mrf.mxu0
    %v3722 = vadd.f32 0.0, %v3721
    %3723 = vdwg.mxu0
    %3724 = vst.msk [vmem:[#allocation2] sm:$0xff] %vm964, %v3722
    %3725 = vrot.lane.b32.xlu0 %v3557, 96
    %v3726 = vpop.permute.xlu0 %3725
    %3727 = vrot.lane.b32.xlu0 %v3618, 96
    %v3728 = vpop.permute.xlu0 %3727
    %v3729 = vsel %vm964, %v3726, 0
    %v3731 = vsel %vm964, %v3728, 0
    %3733 = vmatpush.xpose.msra.mxu0 0.0
    %3734 = vmatpush.xpose.msra.mxu0 0.0
    %3735 = vmatpush.xpose.msra.mxu0 0.0
    %3736 = vmatpush.xpose.msra.mxu0 0.0
    %3737 = vmatpush.xpose.msra.mxu0 0.0
    %3738 = vmatpush.xpose.msra.mxu0 0.0
    %3739 = vmatpush.xpose.msra.mxu0 0.0
    %3740 = vmatpush.xpose.msra.mxu0 0.0
    %3741 = vmatpush.xpose.msra.mxu0 0.0
    %3742 = vmatpush.xpose.msra.mxu0 0.0
    %3743 = vmatpush.xpose.msra.mxu0 0.0
    %3744 = vmatpush.xpose.msra.mxu0 0.0
    %3745 = vmatpush.xpose.msra.mxu0 0.0
    %3746 = vmatpush.xpose.msra.mxu0 0.0
    %3747 = vmatpush.xpose.msra.mxu0 0.0
    %3748 = vmatpush.xpose.msra.mxu0 %v3731
    %3749 = vmatmul.f32.gmra.mxu0 %v3729
    %v3750 = vpop.f32.mrf.mxu0
    %v3751 = vadd.f32 0.0, %v3750
    %3752 = vdwg.mxu0
    %v3753 = vmul.f32 %v3751, 0.17677669
    %v3754 = vsel %vm994, %v3753, -inf
    %3755 = vmax.xlane.f32.xlu0 %v3754
    %v3756 = vpop.xlane.xlu0 %3755
    %v3757 = vsub.f32 %v3753, %v3756
    %v3758 = vmul.f32 %v3757, 1.442695
    %v3759 = vpow.pop %v3758
    %v3760 = vsel %vm994, %v3759, 0.0
    %3761 = vadd.xlane.f32.xlu0 %v3760
    %v3762 = vpop.xlane.xlu0 %3761
    %v3763 = vrcp.pop %v3762
    %v3764 = vmul.f32 %v3759, %v3763
    %3766 = vrot.lane.b32.xlu0 %v3641, 96
    %v3767 = vpop.permute.xlu0 %3766
    %v3770 = vsel %vm994, %v3764, 0
    %3772 = vmatpush.msra.mxu0 0.0
    %3773 = vmatpush.msra.mxu0 0.0
    %3774 = vmatpush.msra.mxu0 0.0
    %3775 = vmatpush.msra.mxu0 0.0
    %3776 = vmatpush.msra.mxu0 0.0
    %3777 = vmatpush.msra.mxu0 0.0
    %3778 = vmatpush.msra.mxu0 0.0
    %3779 = vmatpush.msra.mxu0 0.0
    %3780 = vmatpush.msra.mxu0 0.0
    %3781 = vmatpush.msra.mxu0 0.0
    %3782 = vmatpush.msra.mxu0 0.0
    %3783 = vmatpush.msra.mxu0 0.0
    %3784 = vmatpush.msra.mxu0 0.0
    %3785 = vmatpush.msra.mxu0 0.0
    %3786 = vmatpush.msra.mxu0 0.0
    %3787 = vmatpush.msra.mxu0 %v3767
    %3788 = vmatmul.f32.gmra.mxu0 %v3770
    %v3789 = vpop.f32.mrf.mxu0
    %v3790 = vadd.f32 0.0, %v3789
    %3791 = vdwg.mxu0
    %3793 = vrot.lane.b32.xlu0 %v3790, 32
    %v3794 = vpop.permute.xlu0 %3793
    %3796 = vst.msk [vmem:[#allocation2] sm:$0xff] %vm1102, %v3794
    %3797 = vrot.lane.b32.xlu0 %v3557, 64
    %v3798 = vpop.permute.xlu0 %3797
    %3799 = vrot.lane.b32.xlu0 %v3618, 64
    %v3800 = vpop.permute.xlu0 %3799
    %v3801 = vsel %vm964, %v3798, 0
    %v3803 = vsel %vm964, %v3800, 0
    %3805 = vmatpush.xpose.msra.mxu0 0.0
    %3806 = vmatpush.xpose.msra.mxu0 0.0
    %3807 = vmatpush.xpose.msra.mxu0 0.0
    %3808 = vmatpush.xpose.msra.mxu0 0.0
    %3809 = vmatpush.xpose.msra.mxu0 0.0
    %3810 = vmatpush.xpose.msra.mxu0 0.0
    %3811 = vmatpush.xpose.msra.mxu0 0.0
    %3812 = vmatpush.xpose.msra.mxu0 0.0
    %3813 = vmatpush.xpose.msra.mxu0 0.0
    %3814 = vmatpush.xpose.msra.mxu0 0.0
    %3815 = vmatpush.xpose.msra.mxu0 0.0
    %3816 = vmatpush.xpose.msra.mxu0 0.0
    %3817 = vmatpush.xpose.msra.mxu0 0.0
    %3818 = vmatpush.xpose.msra.mxu0 0.0
    %3819 = vmatpush.xpose.msra.mxu0 0.0
    %3820 = vmatpush.xpose.msra.mxu0 %v3803
    %3821 = vmatmul.f32.gmra.mxu0 %v3801
    %v3822 = vpop.f32.mrf.mxu0
    %v3823 = vadd.f32 0.0, %v3822
    %3824 = vdwg.mxu0
    %v3825 = vmul.f32 %v3823, 0.17677669
    %v3826 = vsel %vm994, %v3825, -inf
    %3827 = vmax.xlane.f32.xlu0 %v3826
    %v3828 = vpop.xlane.xlu0 %3827
    %v3829 = vsub.f32 %v3825, %v3828
    %v3830 = vmul.f32 %v3829, 1.442695
    %v3831 = vpow.pop %v3830
    %v3832 = vsel %vm994, %v3831, 0.0
    %3833 = vadd.xlane.f32.xlu0 %v3832
    %v3834 = vpop.xlane.xlu0 %3833
    %v3835 = vrcp.pop %v3834
    %v3836 = vmul.f32 %v3831, %v3835
    %3837 = vrot.lane.b32.xlu0 %v3641, 64
    %v3838 = vpop.permute.xlu0 %3837
    %v3841 = vsel %vm994, %v3836, 0
    %3843 = vmatpush.msra.mxu0 0.0
    %3844 = vmatpush.msra.mxu0 0.0
    %3845 = vmatpush.msra.mxu0 0.0
    %3846 = vmatpush.msra.mxu0 0.0
    %3847 = vmatpush.msra.mxu0 0.0
    %3848 = vmatpush.msra.mxu0 0.0
    %3849 = vmatpush.msra.mxu0 0.0
    %3850 = vmatpush.msra.mxu0 0.0
    %3851 = vmatpush.msra.mxu0 0.0
    %3852 = vmatpush.msra.mxu0 0.0
    %3853 = vmatpush.msra.mxu0 0.0
    %3854 = vmatpush.msra.mxu0 0.0
    %3855 = vmatpush.msra.mxu0 0.0
    %3856 = vmatpush.msra.mxu0 0.0
    %3857 = vmatpush.msra.mxu0 0.0
    %3858 = vmatpush.msra.mxu0 %v3838
    %3859 = vmatmul.f32.gmra.mxu0 %v3841
    %v3860 = vpop.f32.mrf.mxu0
    %v3861 = vadd.f32 0.0, %v3860
    %3862 = vdwg.mxu0
    %3864 = vrot.lane.b32.xlu0 %v3861, 64
    %v3865 = vpop.permute.xlu0 %3864
    %3867 = vst.msk [vmem:[#allocation2] sm:$0xff] %vm1175, %v3865
    %3868 = vrot.lane.b32.xlu0 %v3557, 32
    %v3869 = vpop.permute.xlu0 %3868
    %3870 = vrot.lane.b32.xlu0 %v3618, 32
    %v3871 = vpop.permute.xlu0 %3870
    %v3872 = vsel %vm964, %v3869, 0
    %v3874 = vsel %vm964, %v3871, 0
    %3876 = vmatpush.xpose.msra.mxu0 0.0
    %3877 = vmatpush.xpose.msra.mxu0 0.0
    %3878 = vmatpush.xpose.msra.mxu0 0.0
    %3879 = vmatpush.xpose.msra.mxu0 0.0
    %3880 = vmatpush.xpose.msra.mxu0 0.0
    %3881 = vmatpush.xpose.msra.mxu0 0.0
    %3882 = vmatpush.xpose.msra.mxu0 0.0
    %3883 = vmatpush.xpose.msra.mxu0 0.0
    %3884 = vmatpush.xpose.msra.mxu0 0.0
    %3885 = vmatpush.xpose.msra.mxu0 0.0
    %3886 = vmatpush.xpose.msra.mxu0 0.0
    %3887 = vmatpush.xpose.msra.mxu0 0.0
    %3888 = vmatpush.xpose.msra.mxu0 0.0
    %3889 = vmatpush.xpose.msra.mxu0 0.0
    %3890 = vmatpush.xpose.msra.mxu0 0.0
    %3891 = vmatpush.xpose.msra.mxu0 %v3874
    %3892 = vmatmul.f32.gmra.mxu0 %v3872
    %v3893 = vpop.f32.mrf.mxu0
    %v3894 = vadd.f32 0.0, %v3893
    %3895 = vdwg.mxu0
    %v3896 = vmul.f32 %v3894, 0.17677669
    %v3897 = vsel %vm994, %v3896, -inf
    %3898 = vmax.xlane.f32.xlu0 %v3897
    %v3899 = vpop.xlane.xlu0 %3898
    %v3900 = vsub.f32 %v3896, %v3899
    %v3901 = vmul.f32 %v3900, 1.442695
    %v3902 = vpow.pop %v3901
    %v3903 = vsel %vm994, %v3902, 0.0
    %3904 = vadd.xlane.f32.xlu0 %v3903
    %v3905 = vpop.xlane.xlu0 %3904
    %v3906 = vrcp.pop %v3905
    %v3907 = vmul.f32 %v3902, %v3906
    %3908 = vrot.lane.b32.xlu0 %v3641, 32
    %v3909 = vpop.permute.xlu0 %3908
    %v3912 = vsel %vm994, %v3907, 0
    %3914 = vmatpush.msra.mxu0 0.0
    %3915 = vmatpush.msra.mxu0 0.0
    %3916 = vmatpush.msra.mxu0 0.0
    %3917 = vmatpush.msra.mxu0 0.0
    %3918 = vmatpush.msra.mxu0 0.0
    %3919 = vmatpush.msra.mxu0 0.0
    %3920 = vmatpush.msra.mxu0 0.0
    %3921 = vmatpush.msra.mxu0 0.0
    %3922 = vmatpush.msra.mxu0 0.0
    %3923 = vmatpush.msra.mxu0 0.0
    %3924 = vmatpush.msra.mxu0 0.0
    %3925 = vmatpush.msra.mxu0 0.0
    %3926 = vmatpush.msra.mxu0 0.0
    %3927 = vmatpush.msra.mxu0 0.0
    %3928 = vmatpush.msra.mxu0 0.0
    %3929 = vmatpush.msra.mxu0 %v3909
    %3930 = vmatmul.f32.gmra.mxu0 %v3912
    %v3931 = vpop.f32.mrf.mxu0
    %v3932 = vadd.f32 0.0, %v3931
    %3933 = vdwg.mxu0
    %3935 = vrot.lane.b32.xlu0 %v3932, 96
    %v3936 = vpop.permute.xlu0 %3935
    %3938 = vst.msk [vmem:[#allocation2] sm:$0xff] %vm1248, %v3936
    %v3940 = vsel %vm964, %v3560, 0
    %v3943 = vsel %vm964, %v3621, 0
    %3945 = vmatpush.xpose.msra.mxu0 0.0
    %3946 = vmatpush.xpose.msra.mxu0 0.0
    %3947 = vmatpush.xpose.msra.mxu0 0.0
    %3948 = vmatpush.xpose.msra.mxu0 0.0
    %3949 = vmatpush.xpose.msra.mxu0 0.0
    %3950 = vmatpush.xpose.msra.mxu0 0.0
    %3951 = vmatpush.xpose.msra.mxu0 0.0
    %3952 = vmatpush.xpose.msra.mxu0 0.0
    %3953 = vmatpush.xpose.msra.mxu0 0.0
    %3954 = vmatpush.xpose.msra.mxu0 0.0
    %3955 = vmatpush.xpose.msra.mxu0 0.0
    %3956 = vmatpush.xpose.msra.mxu0 0.0
    %3957 = vmatpush.xpose.msra.mxu0 0.0
    %3958 = vmatpush.xpose.msra.mxu0 0.0
    %3959 = vmatpush.xpose.msra.mxu0 0.0
    %3960 = vmatpush.xpose.msra.mxu0 %v3943
    %3961 = vmatmul.f32.gmra.mxu0 %v3940
    %v3962 = vpop.f32.mrf.mxu0
    %v3963 = vadd.f32 0.0, %v3962
    %3964 = vdwg.mxu0
    %v3965 = vmul.f32 %v3963, 0.17677669
    %v3966 = vsel %vm994, %v3965, -inf
    %3967 = vmax.xlane.f32.xlu0 %v3966
    %v3968 = vpop.xlane.xlu0 %3967
    %v3969 = vsub.f32 %v3965, %v3968
    %v3970 = vmul.f32 %v3969, 1.442695
    %v3971 = vpow.pop %v3970
    %v3972 = vsel %vm994, %v3971, 0.0
    %3973 = vadd.xlane.f32.xlu0 %v3972
    %v3974 = vpop.xlane.xlu0 %3973
    %v3975 = vrcp.pop %v3974
    %v3976 = vmul.f32 %v3971, %v3975
    %v3978 = vsel %vm994, %v3976, 0
    %3980 = vmatpush.msra.mxu0 0.0
    %3981 = vmatpush.msra.mxu0 0.0
    %3982 = vmatpush.msra.mxu0 0.0
    %3983 = vmatpush.msra.mxu0 0.0
    %3984 = vmatpush.msra.mxu0 0.0
    %3985 = vmatpush.msra.mxu0 0.0
    %3986 = vmatpush.msra.mxu0 0.0
    %3987 = vmatpush.msra.mxu0 0.0
    %3988 = vmatpush.msra.mxu0 0.0
    %3989 = vmatpush.msra.mxu0 0.0
    %3990 = vmatpush.msra.mxu0 0.0
    %3991 = vmatpush.msra.mxu0 0.0
    %3992 = vmatpush.msra.mxu0 0.0
    %3993 = vmatpush.msra.mxu0 0.0
    %3994 = vmatpush.msra.mxu0 0.0
    %3995 = vmatpush.msra.mxu0 %v3644
    %3996 = vmatmul.f32.gmra.mxu0 %v3978
    %v3997 = vpop.f32.mrf.mxu0
    %v3998 = vadd.f32 0.0, %v3997
    %3999 = vdwg.mxu0
    %4000 = vst.msk [vmem:[#allocation2 + $0x8] sm:$0xff] %vm964, %v3998
    %4001 = vrot.lane.b32.xlu0 %v3560, 96
    %v4002 = vpop.permute.xlu0 %4001
    %4003 = vrot.lane.b32.xlu0 %v3621, 96
    %v4004 = vpop.permute.xlu0 %4003
    %v4005 = vsel %vm964, %v4002, 0
    %v4007 = vsel %vm964, %v4004, 0
    %4009 = vmatpush.xpose.msra.mxu0 0.0
    %4010 = vmatpush.xpose.msra.mxu0 0.0
    %4011 = vmatpush.xpose.msra.mxu0 0.0
    %4012 = vmatpush.xpose.msra.mxu0 0.0
    %4013 = vmatpush.xpose.msra.mxu0 0.0
    %4014 = vmatpush.xpose.msra.mxu0 0.0
    %4015 = vmatpush.xpose.msra.mxu0 0.0
    %4016 = vmatpush.xpose.msra.mxu0 0.0
    %4017 = vmatpush.xpose.msra.mxu0 0.0
    %4018 = vmatpush.xpose.msra.mxu0 0.0
    %4019 = vmatpush.xpose.msra.mxu0 0.0
    %4020 = vmatpush.xpose.msra.mxu0 0.0
    %4021 = vmatpush.xpose.msra.mxu0 0.0
    %4022 = vmatpush.xpose.msra.mxu0 0.0
    %4023 = vmatpush.xpose.msra.mxu0 0.0
    %4024 = vmatpush.xpose.msra.mxu0 %v4007
    %4025 = vmatmul.f32.gmra.mxu0 %v4005
    %v4026 = vpop.f32.mrf.mxu0
    %v4027 = vadd.f32 0.0, %v4026
    %4028 = vdwg.mxu0
    %v4029 = vmul.f32 %v4027, 0.17677669
    %v4030 = vsel %vm994, %v4029, -inf
    %4031 = vmax.xlane.f32.xlu0 %v4030
    %v4032 = vpop.xlane.xlu0 %4031
    %v4033 = vsub.f32 %v4029, %v4032
    %v4034 = vmul.f32 %v4033, 1.442695
    %v4035 = vpow.pop %v4034
    %v4036 = vsel %vm994, %v4035, 0.0
    %4037 = vadd.xlane.f32.xlu0 %v4036
    %v4038 = vpop.xlane.xlu0 %4037
    %v4039 = vrcp.pop %v4038
    %v4040 = vmul.f32 %v4035, %v4039
    %4042 = vrot.lane.b32.xlu0 %v3644, 96
    %v4043 = vpop.permute.xlu0 %4042
    %v4046 = vsel %vm994, %v4040, 0
    %4048 = vmatpush.msra.mxu0 0.0
    %4049 = vmatpush.msra.mxu0 0.0
    %4050 = vmatpush.msra.mxu0 0.0
    %4051 = vmatpush.msra.mxu0 0.0
    %4052 = vmatpush.msra.mxu0 0.0
    %4053 = vmatpush.msra.mxu0 0.0
    %4054 = vmatpush.msra.mxu0 0.0
    %4055 = vmatpush.msra.mxu0 0.0
    %4056 = vmatpush.msra.mxu0 0.0
    %4057 = vmatpush.msra.mxu0 0.0
    %4058 = vmatpush.msra.mxu0 0.0
    %4059 = vmatpush.msra.mxu0 0.0
    %4060 = vmatpush.msra.mxu0 0.0
    %4061 = vmatpush.msra.mxu0 0.0
    %4062 = vmatpush.msra.mxu0 0.0
    %4063 = vmatpush.msra.mxu0 %v4043
    %4064 = vmatmul.f32.gmra.mxu0 %v4046
    %v4065 = vpop.f32.mrf.mxu0
    %v4066 = vadd.f32 0.0, %v4065
    %4067 = vdwg.mxu0
    %4069 = vrot.lane.b32.xlu0 %v4066, 32
    %v4070 = vpop.permute.xlu0 %4069
    %4072 = vst.msk [vmem:[#allocation2 + $0x8] sm:$0xff] %vm1102, %v4070
    %4073 = vrot.lane.b32.xlu0 %v3560, 64
    %v4074 = vpop.permute.xlu0 %4073
    %4075 = vrot.lane.b32.xlu0 %v3621, 64
    %v4076 = vpop.permute.xlu0 %4075
    %v4077 = vsel %vm964, %v4074, 0
    %v4079 = vsel %vm964, %v4076, 0
    %4081 = vmatpush.xpose.msra.mxu0 0.0
    %4082 = vmatpush.xpose.msra.mxu0 0.0
    %4083 = vmatpush.xpose.msra.mxu0 0.0
    %4084 = vmatpush.xpose.msra.mxu0 0.0
    %4085 = vmatpush.xpose.msra.mxu0 0.0
    %4086 = vmatpush.xpose.msra.mxu0 0.0
    %4087 = vmatpush.xpose.msra.mxu0 0.0
    %4088 = vmatpush.xpose.msra.mxu0 0.0
    %4089 = vmatpush.xpose.msra.mxu0 0.0
    %4090 = vmatpush.xpose.msra.mxu0 0.0
    %4091 = vmatpush.xpose.msra.mxu0 0.0
    %4092 = vmatpush.xpose.msra.mxu0 0.0
    %4093 = vmatpush.xpose.msra.mxu0 0.0
    %4094 = vmatpush.xpose.msra.mxu0 0.0
    %4095 = vmatpush.xpose.msra.mxu0 0.0
    %4096 = vmatpush.xpose.msra.mxu0 %v4079
    %4097 = vmatmul.f32.gmra.mxu0 %v4077
    %v4098 = vpop.f32.mrf.mxu0
    %v4099 = vadd.f32 0.0, %v4098
    %4100 = vdwg.mxu0
    %v4101 = vmul.f32 %v4099, 0.17677669
    %v4102 = vsel %vm994, %v4101, -inf
    %4103 = vmax.xlane.f32.xlu0 %v4102
    %v4104 = vpop.xlane.xlu0 %4103
    %v4105 = vsub.f32 %v4101, %v4104
    %v4106 = vmul.f32 %v4105, 1.442695
    %v4107 = vpow.pop %v4106
    %v4108 = vsel %vm994, %v4107, 0.0
    %4109 = vadd.xlane.f32.xlu0 %v4108
    %v4110 = vpop.xlane.xlu0 %4109
    %v4111 = vrcp.pop %v4110
    %v4112 = vmul.f32 %v4107, %v4111
    %4113 = vrot.lane.b32.xlu0 %v3644, 64
    %v4114 = vpop.permute.xlu0 %4113
    %v4117 = vsel %vm994, %v4112, 0
    %4119 = vmatpush.msra.mxu0 0.0
    %4120 = vmatpush.msra.mxu0 0.0
    %4121 = vmatpush.msra.mxu0 0.0
    %4122 = vmatpush.msra.mxu0 0.0
    %4123 = vmatpush.msra.mxu0 0.0
    %4124 = vmatpush.msra.mxu0 0.0
    %4125 = vmatpush.msra.mxu0 0.0
    %4126 = vmatpush.msra.mxu0 0.0
    %4127 = vmatpush.msra.mxu0 0.0
    %4128 = vmatpush.msra.mxu0 0.0
    %4129 = vmatpush.msra.mxu0 0.0
    %4130 = vmatpush.msra.mxu0 0.0
    %4131 = vmatpush.msra.mxu0 0.0
    %4132 = vmatpush.msra.mxu0 0.0
    %4133 = vmatpush.msra.mxu0 0.0
    %4134 = vmatpush.msra.mxu0 %v4114
    %4135 = vmatmul.f32.gmra.mxu0 %v4117
    %v4136 = vpop.f32.mrf.mxu0
    %v4137 = vadd.f32 0.0, %v4136
    %4138 = vdwg.mxu0
    %4140 = vrot.lane.b32.xlu0 %v4137, 64
    %v4141 = vpop.permute.xlu0 %4140
    %4143 = vst.msk [vmem:[#allocation2 + $0x8] sm:$0xff] %vm1175, %v4141
    %4144 = vrot.lane.b32.xlu0 %v3560, 32
    %v4145 = vpop.permute.xlu0 %4144
    %4146 = vrot.lane.b32.xlu0 %v3621, 32
    %v4147 = vpop.permute.xlu0 %4146
    %v4148 = vsel %vm964, %v4145, 0
    %v4150 = vsel %vm964, %v4147, 0
    %4152 = vmatpush.xpose.msra.mxu0 0.0
    %4153 = vmatpush.xpose.msra.mxu0 0.0
    %4154 = vmatpush.xpose.msra.mxu0 0.0
    %4155 = vmatpush.xpose.msra.mxu0 0.0
    %4156 = vmatpush.xpose.msra.mxu0 0.0
    %4157 = vmatpush.xpose.msra.mxu0 0.0
    %4158 = vmatpush.xpose.msra.mxu0 0.0
    %4159 = vmatpush.xpose.msra.mxu0 0.0
    %4160 = vmatpush.xpose.msra.mxu0 0.0
    %4161 = vmatpush.xpose.msra.mxu0 0.0
    %4162 = vmatpush.xpose.msra.mxu0 0.0
    %4163 = vmatpush.xpose.msra.mxu0 0.0
    %4164 = vmatpush.xpose.msra.mxu0 0.0
    %4165 = vmatpush.xpose.msra.mxu0 0.0
    %4166 = vmatpush.xpose.msra.mxu0 0.0
    %4167 = vmatpush.xpose.msra.mxu0 %v4150
    %4168 = vmatmul.f32.gmra.mxu0 %v4148
    %v4169 = vpop.f32.mrf.mxu0
    %v4170 = vadd.f32 0.0, %v4169
    %4171 = vdwg.mxu0
    %v4172 = vmul.f32 %v4170, 0.17677669
    %v4173 = vsel %vm994, %v4172, -inf
    %4174 = vmax.xlane.f32.xlu0 %v4173
    %v4175 = vpop.xlane.xlu0 %4174
    %v4176 = vsub.f32 %v4172, %v4175
    %v4177 = vmul.f32 %v4176, 1.442695
    %v4178 = vpow.pop %v4177
    %v4179 = vsel %vm994, %v4178, 0.0
    %4180 = vadd.xlane.f32.xlu0 %v4179
    %v4181 = vpop.xlane.xlu0 %4180
    %v4182 = vrcp.pop %v4181
    %v4183 = vmul.f32 %v4178, %v4182
    %4184 = vrot.lane.b32.xlu0 %v3644, 32
    %v4185 = vpop.permute.xlu0 %4184
    %v4188 = vsel %vm994, %v4183, 0
    %4190 = vmatpush.msra.mxu0 0.0
    %4191 = vmatpush.msra.mxu0 0.0
    %4192 = vmatpush.msra.mxu0 0.0
    %4193 = vmatpush.msra.mxu0 0.0
    %4194 = vmatpush.msra.mxu0 0.0
    %4195 = vmatpush.msra.mxu0 0.0
    %4196 = vmatpush.msra.mxu0 0.0
    %4197 = vmatpush.msra.mxu0 0.0
    %4198 = vmatpush.msra.mxu0 0.0
    %4199 = vmatpush.msra.mxu0 0.0
    %4200 = vmatpush.msra.mxu0 0.0
    %4201 = vmatpush.msra.mxu0 0.0
    %4202 = vmatpush.msra.mxu0 0.0
    %4203 = vmatpush.msra.mxu0 0.0
    %4204 = vmatpush.msra.mxu0 0.0
    %4205 = vmatpush.msra.mxu0 %v4185
    %4206 = vmatmul.f32.gmra.mxu0 %v4188
    %v4207 = vpop.f32.mrf.mxu0
    %v4208 = vadd.f32 0.0, %v4207
    %4209 = vdwg.mxu0
    %4211 = vrot.lane.b32.xlu0 %v4208, 96
    %v4212 = vpop.permute.xlu0 %4211
    %4214 = vst.msk [vmem:[#allocation2 + $0x8] sm:$0xff] %vm1248, %v4212
    %v4215 = vld [vmem:[#allocation2] sm:$0xff]
    %v4216 = vld [vmem:[#allocation2 + $0x8] sm:$0xff]
    %v4218 = vperm.slane %v3662, 0
    %4220 = vmatpush.msra.mxu0 %v3661
    %4221 = vmatpush.msra.mxu0 %v3660
    %4222 = vmatpush.msra.mxu0 %v3659
    %4223 = vmatpush.msra.mxu0 %v3658
    %4224 = vmatpush.msra.mxu0 %v3657
    %4225 = vmatpush.msra.mxu0 %v3656
    %4226 = vmatpush.msra.mxu0 %v3655
    %4227 = vmatpush.msra.mxu0 %v3654
    %4228 = vmatpush.msra.mxu0 %v3653
    %4229 = vmatpush.msra.mxu0 %v3652
    %4230 = vmatpush.msra.mxu0 %v3651
    %4231 = vmatpush.msra.mxu0 %v3650
    %4232 = vmatpush.msra.mxu0 %v3649
    %4233 = vmatpush.msra.mxu0 %v3648
    %4234 = vmatpush.msra.mxu0 %v3647
    %4235 = vmatpush.msra.mxu0 %v3646
    %4236 = vmatmul.f32.gmra.mxu0 %v4215
    %v4237 = vpop.f32.mrf.mxu0
    %v4238 = vadd.f32 %v4218, %v4237
    %4239 = vmatmul.f32.gmra.mxu0 %v4216
    %v4240 = vpop.f32.mrf.mxu0
    %v4241 = vadd.f32 %v4218, %v4240
    %4242 = vdwg.mxu0
    %v4243 = vadd.f32 %v3517, %v4238
    %v4244 = vadd.f32 %v3518, %v4241
    %v4245 = vld [vmem:[#allocation48] sm:$0x1]
    %v4246 = vld [vmem:[#allocation50] sm:$0x1]
    %4247 = vadd.xlane.f32.xlu0 %v4243
    %v4248 = vpop.xlane.xlu0 %4247
    %4249 = vadd.xlane.f32.xlu0 %v4244
    %v4250 = vpop.xlane.xlu0 %4249
    %v4251 = vmul.f32 %v4248, %v1573
    %v4252 = vmul.f32 %v4250, %v1573
    %v4253 = vsub.f32 %v4243, %v4251
    %v4254 = vsub.f32 %v4244, %v4252
    %v4255 = vmul.f32 %v4253, %v4253
    %v4256 = vmul.f32 %v4254, %v4254
    %4257 = vadd.xlane.f32.xlu0 %v4255
    %v4258 = vpop.xlane.xlu0 %4257
    %4259 = vadd.xlane.f32.xlu0 %v4256
    %v4260 = vpop.xlane.xlu0 %4259
    %v4261 = vmul.f32 %v4258, %v1573
    %v4262 = vmul.f32 %v4260, %v1573
    %v4263 = vadd.f32 %v4261, 1e-05
    %v4264 = vadd.f32 %v4262, 1e-05
    %v4265 = vrsqrt.pop %v4263
    %v4266 = vmul.f32 %v4265, %v4263
    %v4267 = vmul.f32 %v4266, %v4265
    %v4268 = vmul.f32 0.5, %v4267
    %v4269 = vsub.f32 1.5, %v4268
    %v4270 = vmul.f32 %v4265, %v4269
    %vm4271 = vweird.f32 %v4263
    %vm4272 = vweird.f32 %v4265
    %vm4273 = vmor %vm4271, %vm4272
    %v4274 = vsel %vm4273, %v4265, %v4270
    %v4275 = vrsqrt.pop %v4264
    %v4276 = vmul.f32 %v4275, %v4264
    %v4277 = vmul.f32 %v4276, %v4275
    %v4278 = vmul.f32 0.5, %v4277
    %v4279 = vsub.f32 1.5, %v4278
    %v4280 = vmul.f32 %v4275, %v4279
    %vm4281 = vweird.f32 %v4264
    %vm4282 = vweird.f32 %v4275
    %vm4283 = vmor %vm4281, %vm4282
    %v4284 = vsel %vm4283, %v4275, %v4280
    %v4285 = vmul.f32 %v4253, %v4274
    %v4286 = vmul.f32 %v4254, %v4284
    %v4288 = vperm.slane %v4245, 0
    %v4290 = vmul.f32 %v4285, %v4288
    %v4291 = vmul.f32 %v4286, %v4288
    %v4293 = vperm.slane %v4246, 0
    %v4295 = vadd.f32 %v4290, %v4293
    %v4296 = vadd.f32 %v4291, %v4293
    %v4297 = vld [vmem:[#allocation51] sm:$0xff]
    %v4298 = vld [vmem:[#allocation51 + $0x8] sm:$0xff]
    %v4299 = vld [vmem:[#allocation51 + $0x10] sm:$0xff]
    %v4300 = vld [vmem:[#allocation51 + $0x18] sm:$0xff]
    %v4301 = vld [vmem:[#allocation51 + $0x20] sm:$0xff]
    %v4302 = vld [vmem:[#allocation51 + $0x28] sm:$0xff]
    %v4303 = vld [vmem:[#allocation51 + $0x30] sm:$0xff]
    %v4304 = vld [vmem:[#allocation51 + $0x38] sm:$0xff]
    %v4305 = vld [vmem:[#allocation51 + $0x40] sm:$0xff]
    %v4306 = vld [vmem:[#allocation51 + $0x48] sm:$0xff]
    %v4307 = vld [vmem:[#allocation51 + $0x50] sm:$0xff]
    %v4308 = vld [vmem:[#allocation51 + $0x58] sm:$0xff]
    %v4309 = vld [vmem:[#allocation51 + $0x60] sm:$0xff]
    %v4310 = vld [vmem:[#allocation51 + $0x68] sm:$0xff]
    %v4311 = vld [vmem:[#allocation51 + $0x70] sm:$0xff]
    %v4312 = vld [vmem:[#allocation51 + $0x78] sm:$0xff]
    %v4313 = vld [vmem:[#allocation53] sm:$0x1]
    %v4315 = vperm.slane %v4313, 0
    %4317 = vmatpush.msra.mxu0 %v4312
    %4318 = vmatpush.msra.mxu0 %v4311
    %4319 = vmatpush.msra.mxu0 %v4310
    %4320 = vmatpush.msra.mxu0 %v4309
    %4321 = vmatpush.msra.mxu0 %v4308
    %4322 = vmatpush.msra.mxu0 %v4307
    %4323 = vmatpush.msra.mxu0 %v4306
    %4324 = vmatpush.msra.mxu0 %v4305
    %4325 = vmatpush.msra.mxu0 %v4304
    %4326 = vmatpush.msra.mxu0 %v4303
    %4327 = vmatpush.msra.mxu0 %v4302
    %4328 = vmatpush.msra.mxu0 %v4301
    %4329 = vmatpush.msra.mxu0 %v4300
    %4330 = vmatpush.msra.mxu0 %v4299
    %4331 = vmatpush.msra.mxu0 %v4298
    %4332 = vmatpush.msra.mxu0 %v4297
    %4333 = vmatmul.f32.gmra.mxu0 %v4295
    %v4334 = vpop.f32.mrf.mxu0
    %v4335 = vadd.f32 %v4315, %v4334
    %4336 = vmatmul.f32.gmra.mxu0 %v4296
    %v4337 = vpop.f32.mrf.mxu0
    %v4338 = vadd.f32 %v4315, %v4337
    %4339 = vdwg.mxu0
    %v4340 = vmax.f32 %v4335, 0.0
    %v4341 = vmax.f32 %v4338, 0.0
    %v4342 = vld [vmem:[#allocation54] sm:$0xff]
    %v4343 = vld [vmem:[#allocation54 + $0x8] sm:$0xff]
    %v4344 = vld [vmem:[#allocation54 + $0x10] sm:$0xff]
    %v4345 = vld [vmem:[#allocation54 + $0x18] sm:$0xff]
    %v4346 = vld [vmem:[#allocation54 + $0x20] sm:$0xff]
    %v4347 = vld [vmem:[#allocation54 + $0x28] sm:$0xff]
    %v4348 = vld [vmem:[#allocation54 + $0x30] sm:$0xff]
    %v4349 = vld [vmem:[#allocation54 + $0x38] sm:$0xff]
    %v4350 = vld [vmem:[#allocation54 + $0x40] sm:$0xff]
    %v4351 = vld [vmem:[#allocation54 + $0x48] sm:$0xff]
    %v4352 = vld [vmem:[#allocation54 + $0x50] sm:$0xff]
    %v4353 = vld [vmem:[#allocation54 + $0x58] sm:$0xff]
    %v4354 = vld [vmem:[#allocation54 + $0x60] sm:$0xff]
    %v4355 = vld [vmem:[#allocation54 + $0x68] sm:$0xff]
    %v4356 = vld [vmem:[#allocation54 + $0x70] sm:$0xff]
    %v4357 = vld [vmem:[#allocation54 + $0x78] sm:$0xff]
    %v4358 = vld [vmem:[#allocation56] sm:$0x1]
    %v4360 = vperm.slane %v4358, 0
    %4362 = vmatpush.msra.mxu0 %v4357
    %4363 = vmatpush.msra.mxu0 %v4356
    %4364 = vmatpush.msra.mxu0 %v4355
    %4365 = vmatpush.msra.mxu0 %v4354
    %4366 = vmatpush.msra.mxu0 %v4353
    %4367 = vmatpush.msra.mxu0 %v4352
    %4368 = vmatpush.msra.mxu0 %v4351
    %4369 = vmatpush.msra.mxu0 %v4350
    %4370 = vmatpush.msra.mxu0 %v4349
    %4371 = vmatpush.msra.mxu0 %v4348
    %4372 = vmatpush.msra.mxu0 %v4347
    %4373 = vmatpush.msra.mxu0 %v4346
    %4374 = vmatpush.msra.mxu0 %v4345
    %4375 = vmatpush.msra.mxu0 %v4344
    %4376 = vmatpush.msra.mxu0 %v4343
    %4377 = vmatpush.msra.mxu0 %v4342
    %4378 = vmatmul.f32.gmra.mxu0 %v4340
    %v4379 = vpop.f32.mrf.mxu0
    %v4380 = vadd.f32 %v4360, %v4379
    %4381 = vmatmul.f32.gmra.mxu0 %v4341
    %v4382 = vpop.f32.mrf.mxu0
    %v4383 = vadd.f32 %v4360, %v4382
    %4384 = vdwg.mxu0
    %v4385 = vadd.f32 %v4295, %v4380
    %v4386 = vadd.f32 %v4296, %v4383
    %v4387 = vld [vmem:[#allocation57] sm:$0x1]
    %v4388 = vld [vmem:[#allocation59] sm:$0x1]
    %4389 = vadd.xlane.f32.xlu0 %v4385
    %v4390 = vpop.xlane.xlu0 %4389
    %4391 = vadd.xlane.f32.xlu0 %v4386
    %v4392 = vpop.xlane.xlu0 %4391
    %v4393 = vmul.f32 %v4390, %v1573
    %v4394 = vmul.f32 %v4392, %v1573
    %v4395 = vsub.f32 %v4385, %v4393
    %v4396 = vsub.f32 %v4386, %v4394
    %v4397 = vmul.f32 %v4395, %v4395
    %v4398 = vmul.f32 %v4396, %v4396
    %4399 = vadd.xlane.f32.xlu0 %v4397
    %v4400 = vpop.xlane.xlu0 %4399
    %4401 = vadd.xlane.f32.xlu0 %v4398
    %v4402 = vpop.xlane.xlu0 %4401
    %v4403 = vmul.f32 %v4400, %v1573
    %v4404 = vmul.f32 %v4402, %v1573
    %v4405 = vadd.f32 %v4403, 1e-05
    %v4406 = vadd.f32 %v4404, 1e-05
    %v4407 = vrsqrt.pop %v4405
    %v4408 = vmul.f32 %v4407, %v4405
    %v4409 = vmul.f32 %v4408, %v4407
    %v4410 = vmul.f32 0.5, %v4409
    %v4411 = vsub.f32 1.5, %v4410
    %v4412 = vmul.f32 %v4407, %v4411
    %vm4413 = vweird.f32 %v4405
    %vm4414 = vweird.f32 %v4407
    %vm4415 = vmor %vm4413, %vm4414
    %v4416 = vsel %vm4415, %v4407, %v4412
    %v4417 = vrsqrt.pop %v4406
    %v4418 = vmul.f32 %v4417, %v4406
    %v4419 = vmul.f32 %v4418, %v4417
    %v4420 = vmul.f32 0.5, %v4419
    %v4421 = vsub.f32 1.5, %v4420
    %v4422 = vmul.f32 %v4417, %v4421
    %vm4423 = vweird.f32 %v4406
    %vm4424 = vweird.f32 %v4417
    %vm4425 = vmor %vm4423, %vm4424
    %v4426 = vsel %vm4425, %v4417, %v4422
    %v4427 = vmul.f32 %v4395, %v4416
    %v4428 = vmul.f32 %v4396, %v4426
    %v4430 = vperm.slane %v4387, 0
    %v4432 = vmul.f32 %v4427, %v4430
    %v4433 = vmul.f32 %v4428, %v4430
    %v4435 = vperm.slane %v4388, 0
    %v4437 = vadd.f32 %v4432, %v4435
    %v4438 = vadd.f32 %v4433, %v4435
    %s4439 = scalar_lea.vmem [#allocation30], 384
    %v4440 = vld [vmem:[%s4439] sm:$0xff]
    %v4441 = vld [vmem:[%s4439 + $0x8] sm:$0xff]
    %v4442 = vld [vmem:[%s4439 + $0x10] sm:$0xff]
    %v4443 = vld [vmem:[%s4439 + $0x18] sm:$0xff]
    %v4444 = vld [vmem:[%s4439 + $0x20] sm:$0xff]
    %v4445 = vld [vmem:[%s4439 + $0x28] sm:$0xff]
    %v4446 = vld [vmem:[%s4439 + $0x30] sm:$0xff]
    %v4447 = vld [vmem:[%s4439 + $0x38] sm:$0xff]
    %v4448 = vld [vmem:[%s4439 + $0x40] sm:$0xff]
    %v4449 = vld [vmem:[%s4439 + $0x48] sm:$0xff]
    %v4450 = vld [vmem:[%s4439 + $0x50] sm:$0xff]
    %v4451 = vld [vmem:[%s4439 + $0x58] sm:$0xff]
    %v4452 = vld [vmem:[%s4439 + $0x60] sm:$0xff]
    %v4453 = vld [vmem:[%s4439 + $0x68] sm:$0xff]
    %v4454 = vld [vmem:[%s4439 + $0x70] sm:$0xff]
    %v4455 = vld [vmem:[%s4439 + $0x78] sm:$0xff]
    %v4456 = vld [vmem:[%s4439 + $0x80] sm:$0xff]
    %v4457 = vld [vmem:[%s4439 + $0x88] sm:$0xff]
    %v4458 = vld [vmem:[%s4439 + $0x90] sm:$0xff]
    %v4459 = vld [vmem:[%s4439 + $0x98] sm:$0xff]
    %v4460 = vld [vmem:[%s4439 + $0xa0] sm:$0xff]
    %v4461 = vld [vmem:[%s4439 + $0xa8] sm:$0xff]
    %v4462 = vld [vmem:[%s4439 + $0xb0] sm:$0xff]
    %v4463 = vld [vmem:[%s4439 + $0xb8] sm:$0xff]
    %v4464 = vld [vmem:[%s4439 + $0xc0] sm:$0xff]
    %v4465 = vld [vmem:[%s4439 + $0xc8] sm:$0xff]
    %v4466 = vld [vmem:[%s4439 + $0xd0] sm:$0xff]
    %v4467 = vld [vmem:[%s4439 + $0xd8] sm:$0xff]
    %v4468 = vld [vmem:[%s4439 + $0xe0] sm:$0xff]
    %v4469 = vld [vmem:[%s4439 + $0xe8] sm:$0xff]
    %v4470 = vld [vmem:[%s4439 + $0xf0] sm:$0xff]
    %v4471 = vld [vmem:[%s4439 + $0xf8] sm:$0xff]
    %v4472 = vld [vmem:[%s4439 + $0x100] sm:$0xff]
    %v4473 = vld [vmem:[%s4439 + $0x108] sm:$0xff]
    %v4474 = vld [vmem:[%s4439 + $0x110] sm:$0xff]
    %v4475 = vld [vmem:[%s4439 + $0x118] sm:$0xff]
    %v4476 = vld [vmem:[%s4439 + $0x120] sm:$0xff]
    %v4477 = vld [vmem:[%s4439 + $0x128] sm:$0xff]
    %v4478 = vld [vmem:[%s4439 + $0x130] sm:$0xff]
    %v4479 = vld [vmem:[%s4439 + $0x138] sm:$0xff]
    %v4480 = vld [vmem:[%s4439 + $0x140] sm:$0xff]
    %v4481 = vld [vmem:[%s4439 + $0x148] sm:$0xff]
    %v4482 = vld [vmem:[%s4439 + $0x150] sm:$0xff]
    %v4483 = vld [vmem:[%s4439 + $0x158] sm:$0xff]
    %v4484 = vld [vmem:[%s4439 + $0x160] sm:$0xff]
    %v4485 = vld [vmem:[%s4439 + $0x168] sm:$0xff]
    %v4486 = vld [vmem:[%s4439 + $0x170] sm:$0xff]
    %v4487 = vld [vmem:[%s4439 + $0x178] sm:$0xff]
    %s4488 = scalar_lea.vmem [#allocation32], 3
    %v4489 = vld [vmem:[%s4488] sm:$0x7]
    %v4491 = vperm.slane %v4489, 0
    %v4492 = vperm.slane %v4489, 1
    %v4493 = vperm.slane %v4489, 2
    %4497 = vmatpush.msra.mxu0 %v4485
    %4498 = vmatpush.msra.mxu0 %v4482
    %4499 = vmatpush.msra.mxu0 %v4479
    %4500 = vmatpush.msra.mxu0 %v4476
    %4501 = vmatpush.msra.mxu0 %v4473
    %4502 = vmatpush.msra.mxu0 %v4470
    %4503 = vmatpush.msra.mxu0 %v4467
    %4504 = vmatpush.msra.mxu0 %v4464
    %4505 = vmatpush.msra.mxu0 %v4461
    %4506 = vmatpush.msra.mxu0 %v4458
    %4507 = vmatpush.msra.mxu0 %v4455
    %4508 = vmatpush.msra.mxu0 %v4452
    %4509 = vmatpush.msra.mxu0 %v4449
    %4510 = vmatpush.msra.mxu0 %v4446
    %4511 = vmatpush.msra.mxu0 %v4443
    %4512 = vmatpush.msra.mxu0 %v4440
    %4513 = vmatmul.f32.gmra.mxu0 %v4437
    %v4514 = vpop.f32.mrf.mxu0
    %v4515 = vadd.f32 %v4491, %v4514
    %4516 = vmatmul.f32.gmra.mxu0 %v4438
    %v4517 = vpop.f32.mrf.mxu0
    %v4518 = vadd.f32 %v4491, %v4517
    %4519 = vdwg.mxu0
    %4520 = vmatpush.msra.mxu0 %v4486
    %4521 = vmatpush.msra.mxu0 %v4483
    %4522 = vmatpush.msra.mxu0 %v4480
    %4523 = vmatpush.msra.mxu0 %v4477
    %4524 = vmatpush.msra.mxu0 %v4474
    %4525 = vmatpush.msra.mxu0 %v4471
    %4526 = vmatpush.msra.mxu0 %v4468
    %4527 = vmatpush.msra.mxu0 %v4465
    %4528 = vmatpush.msra.mxu0 %v4462
    %4529 = vmatpush.msra.mxu0 %v4459
    %4530 = vmatpush.msra.mxu0 %v4456
    %4531 = vmatpush.msra.mxu0 %v4453
    %4532 = vmatpush.msra.mxu0 %v4450
    %4533 = vmatpush.msra.mxu0 %v4447
    %4534 = vmatpush.msra.mxu0 %v4444
    %4535 = vmatpush.msra.mxu0 %v4441
    %4536 = vmatmul.f32.gmra.mxu0 %v4437
    %v4537 = vpop.f32.mrf.mxu0
    %v4538 = vadd.f32 %v4492, %v4537
    %4539 = vmatmul.f32.gmra.mxu0 %v4438
    %v4540 = vpop.f32.mrf.mxu0
    %v4541 = vadd.f32 %v4492, %v4540
    %4542 = vdwg.mxu0
    %4543 = vmatpush.msra.mxu0 %v4487
    %4544 = vmatpush.msra.mxu0 %v4484
    %4545 = vmatpush.msra.mxu0 %v4481
    %4546 = vmatpush.msra.mxu0 %v4478
    %4547 = vmatpush.msra.mxu0 %v4475
    %4548 = vmatpush.msra.mxu0 %v4472
    %4549 = vmatpush.msra.mxu0 %v4469
    %4550 = vmatpush.msra.mxu0 %v4466
    %4551 = vmatpush.msra.mxu0 %v4463
    %4552 = vmatpush.msra.mxu0 %v4460
    %4553 = vmatpush.msra.mxu0 %v4457
    %4554 = vmatpush.msra.mxu0 %v4454
    %4555 = vmatpush.msra.mxu0 %v4451
    %4556 = vmatpush.msra.mxu0 %v4448
    %4557 = vmatpush.msra.mxu0 %v4445
    %4558 = vmatpush.msra.mxu0 %v4442
    %4559 = vmatmul.f32.gmra.mxu0 %v4437
    %v4560 = vpop.f32.mrf.mxu0
    %v4561 = vadd.f32 %v4493, %v4560
    %4562 = vmatmul.f32.gmra.mxu0 %v4438
    %v4563 = vpop.f32.mrf.mxu0
    %v4564 = vadd.f32 %v4493, %v4563
    %4565 = vdwg.mxu0
    %s4566 = scalar_lea.vmem [#allocation33], 128
    %v4567 = vld [vmem:[%s4566] sm:$0xff]
    %v4568 = vld [vmem:[%s4566 + $0x8] sm:$0xff]
    %v4569 = vld [vmem:[%s4566 + $0x10] sm:$0xff]
    %v4570 = vld [vmem:[%s4566 + $0x18] sm:$0xff]
    %v4571 = vld [vmem:[%s4566 + $0x20] sm:$0xff]
    %v4572 = vld [vmem:[%s4566 + $0x28] sm:$0xff]
    %v4573 = vld [vmem:[%s4566 + $0x30] sm:$0xff]
    %v4574 = vld [vmem:[%s4566 + $0x38] sm:$0xff]
    %v4575 = vld [vmem:[%s4566 + $0x40] sm:$0xff]
    %v4576 = vld [vmem:[%s4566 + $0x48] sm:$0xff]
    %v4577 = vld [vmem:[%s4566 + $0x50] sm:$0xff]
    %v4578 = vld [vmem:[%s4566 + $0x58] sm:$0xff]
    %v4579 = vld [vmem:[%s4566 + $0x60] sm:$0xff]
    %v4580 = vld [vmem:[%s4566 + $0x68] sm:$0xff]
    %v4581 = vld [vmem:[%s4566 + $0x70] sm:$0xff]
    %v4582 = vld [vmem:[%s4566 + $0x78] sm:$0xff]
    %s4583 = scalar_lea.vmem [#allocation35], 1
    %v4584 = vld [vmem:[%s4583] sm:$0x1]
    %v4586 = vsel %vm964, %v4515, 0
    %v4589 = vsel %vm964, %v4538, 0
    %4591 = vmatpush.xpose.msra.mxu0 0.0
    %4592 = vmatpush.xpose.msra.mxu0 0.0
    %4593 = vmatpush.xpose.msra.mxu0 0.0
    %4594 = vmatpush.xpose.msra.mxu0 0.0
    %4595 = vmatpush.xpose.msra.mxu0 0.0
    %4596 = vmatpush.xpose.msra.mxu0 0.0
    %4597 = vmatpush.xpose.msra.mxu0 0.0
    %4598 = vmatpush.xpose.msra.mxu0 0.0
    %4599 = vmatpush.xpose.msra.mxu0 0.0
    %4600 = vmatpush.xpose.msra.mxu0 0.0
    %4601 = vmatpush.xpose.msra.mxu0 0.0
    %4602 = vmatpush.xpose.msra.mxu0 0.0
    %4603 = vmatpush.xpose.msra.mxu0 0.0
    %4604 = vmatpush.xpose.msra.mxu0 0.0
    %4605 = vmatpush.xpose.msra.mxu0 0.0
    %4606 = vmatpush.xpose.msra.mxu0 %v4589
    %4607 = vmatmul.f32.gmra.mxu0 %v4586
    %v4608 = vpop.f32.mrf.mxu0
    %v4609 = vadd.f32 0.0, %v4608
    %4610 = vdwg.mxu0
    %v4611 = vmul.f32 %v4609, 0.17677669
    %v4612 = vsel %vm994, %v4611, -inf
    %4613 = vmax.xlane.f32.xlu0 %v4612
    %v4614 = vpop.xlane.xlu0 %4613
    %v4615 = vsub.f32 %v4611, %v4614
    %v4616 = vmul.f32 %v4615, 1.442695
    %v4617 = vpow.pop %v4616
    %v4618 = vsel %vm994, %v4617, 0.0
    %4619 = vadd.xlane.f32.xlu0 %v4618
    %v4620 = vpop.xlane.xlu0 %4619
    %v4621 = vrcp.pop %v4620
    %v4622 = vmul.f32 %v4617, %v4621
    %v4624 = vsel %vm994, %v4622, 0
    %4626 = vmatpush.msra.mxu0 0.0
    %4627 = vmatpush.msra.mxu0 0.0
    %4628 = vmatpush.msra.mxu0 0.0
    %4629 = vmatpush.msra.mxu0 0.0
    %4630 = vmatpush.msra.mxu0 0.0
    %4631 = vmatpush.msra.mxu0 0.0
    %4632 = vmatpush.msra.mxu0 0.0
    %4633 = vmatpush.msra.mxu0 0.0
    %4634 = vmatpush.msra.mxu0 0.0
    %4635 = vmatpush.msra.mxu0 0.0
    %4636 = vmatpush.msra.mxu0 0.0
    %4637 = vmatpush.msra.mxu0 0.0
    %4638 = vmatpush.msra.mxu0 0.0
    %4639 = vmatpush.msra.mxu0 0.0
    %4640 = vmatpush.msra.mxu0 0.0
    %4641 = vmatpush.msra.mxu0 %v4561
    %4642 = vmatmul.f32.gmra.mxu0 %v4624
    %v4643 = vpop.f32.mrf.mxu0
    %v4644 = vadd.f32 0.0, %v4643
    %4645 = vdwg.mxu0
    %4646 = vst.msk [vmem:[#allocation2] sm:$0xff] %vm964, %v4644
    %4647 = vrot.lane.b32.xlu0 %v4515, 96
    %v4648 = vpop.permute.xlu0 %4647
    %4649 = vrot.lane.b32.xlu0 %v4538, 96
    %v4650 = vpop.permute.xlu0 %4649
    %v4651 = vsel %vm964, %v4648, 0
    %v4653 = vsel %vm964, %v4650, 0
    %4655 = vmatpush.xpose.msra.mxu0 0.0
    %4656 = vmatpush.xpose.msra.mxu0 0.0
    %4657 = vmatpush.xpose.msra.mxu0 0.0
    %4658 = vmatpush.xpose.msra.mxu0 0.0
    %4659 = vmatpush.xpose.msra.mxu0 0.0
    %4660 = vmatpush.xpose.msra.mxu0 0.0
    %4661 = vmatpush.xpose.msra.mxu0 0.0
    %4662 = vmatpush.xpose.msra.mxu0 0.0
    %4663 = vmatpush.xpose.msra.mxu0 0.0
    %4664 = vmatpush.xpose.msra.mxu0 0.0
    %4665 = vmatpush.xpose.msra.mxu0 0.0
    %4666 = vmatpush.xpose.msra.mxu0 0.0
    %4667 = vmatpush.xpose.msra.mxu0 0.0
    %4668 = vmatpush.xpose.msra.mxu0 0.0
    %4669 = vmatpush.xpose.msra.mxu0 0.0
    %4670 = vmatpush.xpose.msra.mxu0 %v4653
    %4671 = vmatmul.f32.gmra.mxu0 %v4651
    %v4672 = vpop.f32.mrf.mxu0
    %v4673 = vadd.f32 0.0, %v4672
    %4674 = vdwg.mxu0
    %v4675 = vmul.f32 %v4673, 0.17677669
    %v4676 = vsel %vm994, %v4675, -inf
    %4677 = vmax.xlane.f32.xlu0 %v4676
    %v4678 = vpop.xlane.xlu0 %4677
    %v4679 = vsub.f32 %v4675, %v4678
    %v4680 = vmul.f32 %v4679, 1.442695
    %v4681 = vpow.pop %v4680
    %v4682 = vsel %vm994, %v4681, 0.0
    %4683 = vadd.xlane.f32.xlu0 %v4682
    %v4684 = vpop.xlane.xlu0 %4683
    %v4685 = vrcp.pop %v4684
    %v4686 = vmul.f32 %v4681, %v4685
    %4688 = vrot.lane.b32.xlu0 %v4561, 96
    %v4689 = vpop.permute.xlu0 %4688
    %v4692 = vsel %vm994, %v4686, 0
    %4694 = vmatpush.msra.mxu0 0.0
    %4695 = vmatpush.msra.mxu0 0.0
    %4696 = vmatpush.msra.mxu0 0.0
    %4697 = vmatpush.msra.mxu0 0.0
    %4698 = vmatpush.msra.mxu0 0.0
    %4699 = vmatpush.msra.mxu0 0.0
    %4700 = vmatpush.msra.mxu0 0.0
    %4701 = vmatpush.msra.mxu0 0.0
    %4702 = vmatpush.msra.mxu0 0.0
    %4703 = vmatpush.msra.mxu0 0.0
    %4704 = vmatpush.msra.mxu0 0.0
    %4705 = vmatpush.msra.mxu0 0.0
    %4706 = vmatpush.msra.mxu0 0.0
    %4707 = vmatpush.msra.mxu0 0.0
    %4708 = vmatpush.msra.mxu0 0.0
    %4709 = vmatpush.msra.mxu0 %v4689
    %4710 = vmatmul.f32.gmra.mxu0 %v4692
    %v4711 = vpop.f32.mrf.mxu0
    %v4712 = vadd.f32 0.0, %v4711
    %4713 = vdwg.mxu0
    %4715 = vrot.lane.b32.xlu0 %v4712, 32
    %v4716 = vpop.permute.xlu0 %4715
    %4718 = vst.msk [vmem:[#allocation2] sm:$0xff] %vm1102, %v4716
    %4719 = vrot.lane.b32.xlu0 %v4515, 64
    %v4720 = vpop.permute.xlu0 %4719
    %4721 = vrot.lane.b32.xlu0 %v4538, 64
    %v4722 = vpop.permute.xlu0 %4721
    %v4723 = vsel %vm964, %v4720, 0
    %v4725 = vsel %vm964, %v4722, 0
    %4727 = vmatpush.xpose.msra.mxu0 0.0
    %4728 = vmatpush.xpose.msra.mxu0 0.0
    %4729 = vmatpush.xpose.msra.mxu0 0.0
    %4730 = vmatpush.xpose.msra.mxu0 0.0
    %4731 = vmatpush.xpose.msra.mxu0 0.0
    %4732 = vmatpush.xpose.msra.mxu0 0.0
    %4733 = vmatpush.xpose.msra.mxu0 0.0
    %4734 = vmatpush.xpose.msra.mxu0 0.0
    %4735 = vmatpush.xpose.msra.mxu0 0.0
    %4736 = vmatpush.xpose.msra.mxu0 0.0
    %4737 = vmatpush.xpose.msra.mxu0 0.0
    %4738 = vmatpush.xpose.msra.mxu0 0.0
    %4739 = vmatpush.xpose.msra.mxu0 0.0
    %4740 = vmatpush.xpose.msra.mxu0 0.0
    %4741 = vmatpush.xpose.msra.mxu0 0.0
    %4742 = vmatpush.xpose.msra.mxu0 %v4725
    %4743 = vmatmul.f32.gmra.mxu0 %v4723
    %v4744 = vpop.f32.mrf.mxu0
    %v4745 = vadd.f32 0.0, %v4744
    %4746 = vdwg.mxu0
    %v4747 = vmul.f32 %v4745, 0.17677669
    %v4748 = vsel %vm994, %v4747, -inf
    %4749 = vmax.xlane.f32.xlu0 %v4748
    %v4750 = vpop.xlane.xlu0 %4749
    %v4751 = vsub.f32 %v4747, %v4750
    %v4752 = vmul.f32 %v4751, 1.442695
    %v4753 = vpow.pop %v4752
    %v4754 = vsel %vm994, %v4753, 0.0
    %4755 = vadd.xlane.f32.xlu0 %v4754
    %v4756 = vpop.xlane.xlu0 %4755
    %v4757 = vrcp.pop %v4756
    %v4758 = vmul.f32 %v4753, %v4757
    %4759 = vrot.lane.b32.xlu0 %v4561, 64
    %v4760 = vpop.permute.xlu0 %4759
    %v4763 = vsel %vm994, %v4758, 0
    %4765 = vmatpush.msra.mxu0 0.0
    %4766 = vmatpush.msra.mxu0 0.0
    %4767 = vmatpush.msra.mxu0 0.0
    %4768 = vmatpush.msra.mxu0 0.0
    %4769 = vmatpush.msra.mxu0 0.0
    %4770 = vmatpush.msra.mxu0 0.0
    %4771 = vmatpush.msra.mxu0 0.0
    %4772 = vmatpush.msra.mxu0 0.0
    %4773 = vmatpush.msra.mxu0 0.0
    %4774 = vmatpush.msra.mxu0 0.0
    %4775 = vmatpush.msra.mxu0 0.0
    %4776 = vmatpush.msra.mxu0 0.0
    %4777 = vmatpush.msra.mxu0 0.0
    %4778 = vmatpush.msra.mxu0 0.0
    %4779 = vmatpush.msra.mxu0 0.0
    %4780 = vmatpush.msra.mxu0 %v4760
    %4781 = vmatmul.f32.gmra.mxu0 %v4763
    %v4782 = vpop.f32.mrf.mxu0
    %v4783 = vadd.f32 0.0, %v4782
    %4784 = vdwg.mxu0
    %4786 = vrot.lane.b32.xlu0 %v4783, 64
    %v4787 = vpop.permute.xlu0 %4786
    %4789 = vst.msk [vmem:[#allocation2] sm:$0xff] %vm1175, %v4787
    %4790 = vrot.lane.b32.xlu0 %v4515, 32
    %v4791 = vpop.permute.xlu0 %4790
    %4792 = vrot.lane.b32.xlu0 %v4538, 32
    %v4793 = vpop.permute.xlu0 %4792
    %v4794 = vsel %vm964, %v4791, 0
    %v4796 = vsel %vm964, %v4793, 0
    %4798 = vmatpush.xpose.msra.mxu0 0.0
    %4799 = vmatpush.xpose.msra.mxu0 0.0
    %4800 = vmatpush.xpose.msra.mxu0 0.0
    %4801 = vmatpush.xpose.msra.mxu0 0.0
    %4802 = vmatpush.xpose.msra.mxu0 0.0
    %4803 = vmatpush.xpose.msra.mxu0 0.0
    %4804 = vmatpush.xpose.msra.mxu0 0.0
    %4805 = vmatpush.xpose.msra.mxu0 0.0
    %4806 = vmatpush.xpose.msra.mxu0 0.0
    %4807 = vmatpush.xpose.msra.mxu0 0.0
    %4808 = vmatpush.xpose.msra.mxu0 0.0
    %4809 = vmatpush.xpose.msra.mxu0 0.0
    %4810 = vmatpush.xpose.msra.mxu0 0.0
    %4811 = vmatpush.xpose.msra.mxu0 0.0
    %4812 = vmatpush.xpose.msra.mxu0 0.0
    %4813 = vmatpush.xpose.msra.mxu0 %v4796
    %4814 = vmatmul.f32.gmra.mxu0 %v4794
    %v4815 = vpop.f32.mrf.mxu0
    %v4816 = vadd.f32 0.0, %v4815
    %4817 = vdwg.mxu0
    %v4818 = vmul.f32 %v4816, 0.17677669
    %v4819 = vsel %vm994, %v4818, -inf
    %4820 = vmax.xlane.f32.xlu0 %v4819
    %v4821 = vpop.xlane.xlu0 %4820
    %v4822 = vsub.f32 %v4818, %v4821
    %v4823 = vmul.f32 %v4822, 1.442695
    %v4824 = vpow.pop %v4823
    %v4825 = vsel %vm994, %v4824, 0.0
    %4826 = vadd.xlane.f32.xlu0 %v4825
    %v4827 = vpop.xlane.xlu0 %4826
    %v4828 = vrcp.pop %v4827
    %v4829 = vmul.f32 %v4824, %v4828
    %4830 = vrot.lane.b32.xlu0 %v4561, 32
    %v4831 = vpop.permute.xlu0 %4830
    %v4834 = vsel %vm994, %v4829, 0
    %4836 = vmatpush.msra.mxu0 0.0
    %4837 = vmatpush.msra.mxu0 0.0
    %4838 = vmatpush.msra.mxu0 0.0
    %4839 = vmatpush.msra.mxu0 0.0
    %4840 = vmatpush.msra.mxu0 0.0
    %4841 = vmatpush.msra.mxu0 0.0
    %4842 = vmatpush.msra.mxu0 0.0
    %4843 = vmatpush.msra.mxu0 0.0
    %4844 = vmatpush.msra.mxu0 0.0
    %4845 = vmatpush.msra.mxu0 0.0
    %4846 = vmatpush.msra.mxu0 0.0
    %4847 = vmatpush.msra.mxu0 0.0
    %4848 = vmatpush.msra.mxu0 0.0
    %4849 = vmatpush.msra.mxu0 0.0
    %4850 = vmatpush.msra.mxu0 0.0
    %4851 = vmatpush.msra.mxu0 %v4831
    %4852 = vmatmul.f32.gmra.mxu0 %v4834
    %v4853 = vpop.f32.mrf.mxu0
    %v4854 = vadd.f32 0.0, %v4853
    %4855 = vdwg.mxu0
    %4857 = vrot.lane.b32.xlu0 %v4854, 96
    %v4858 = vpop.permute.xlu0 %4857
    %4860 = vst.msk [vmem:[#allocation2] sm:$0xff] %vm1248, %v4858
    %v4862 = vsel %vm964, %v4518, 0
    %v4865 = vsel %vm964, %v4541, 0
    %4867 = vmatpush.xpose.msra.mxu0 0.0
    %4868 = vmatpush.xpose.msra.mxu0 0.0
    %4869 = vmatpush.xpose.msra.mxu0 0.0
    %4870 = vmatpush.xpose.msra.mxu0 0.0
    %4871 = vmatpush.xpose.msra.mxu0 0.0
    %4872 = vmatpush.xpose.msra.mxu0 0.0
    %4873 = vmatpush.xpose.msra.mxu0 0.0
    %4874 = vmatpush.xpose.msra.mxu0 0.0
    %4875 = vmatpush.xpose.msra.mxu0 0.0
    %4876 = vmatpush.xpose.msra.mxu0 0.0
    %4877 = vmatpush.xpose.msra.mxu0 0.0
    %4878 = vmatpush.xpose.msra.mxu0 0.0
    %4879 = vmatpush.xpose.msra.mxu0 0.0
    %4880 = vmatpush.xpose.msra.mxu0 0.0
    %4881 = vmatpush.xpose.msra.mxu0 0.0
    %4882 = vmatpush.xpose.msra.mxu0 %v4865
    %4883 = vmatmul.f32.gmra.mxu0 %v4862
    %v4884 = vpop.f32.mrf.mxu0
    %v4885 = vadd.f32 0.0, %v4884
    %4886 = vdwg.mxu0
    %v4887 = vmul.f32 %v4885, 0.17677669
    %v4888 = vsel %vm994, %v4887, -inf
    %4889 = vmax.xlane.f32.xlu0 %v4888
    %v4890 = vpop.xlane.xlu0 %4889
    %v4891 = vsub.f32 %v4887, %v4890
    %v4892 = vmul.f32 %v4891, 1.442695
    %v4893 = vpow.pop %v4892
    %v4894 = vsel %vm994, %v4893, 0.0
    %4895 = vadd.xlane.f32.xlu0 %v4894
    %v4896 = vpop.xlane.xlu0 %4895
    %v4897 = vrcp.pop %v4896
    %v4898 = vmul.f32 %v4893, %v4897
    %v4900 = vsel %vm994, %v4898, 0
    %4902 = vmatpush.msra.mxu0 0.0
    %4903 = vmatpush.msra.mxu0 0.0
    %4904 = vmatpush.msra.mxu0 0.0
    %4905 = vmatpush.msra.mxu0 0.0
    %4906 = vmatpush.msra.mxu0 0.0
    %4907 = vmatpush.msra.mxu0 0.0
    %4908 = vmatpush.msra.mxu0 0.0
    %4909 = vmatpush.msra.mxu0 0.0
    %4910 = vmatpush.msra.mxu0 0.0
    %4911 = vmatpush.msra.mxu0 0.0
    %4912 = vmatpush.msra.mxu0 0.0
    %4913 = vmatpush.msra.mxu0 0.0
    %4914 = vmatpush.msra.mxu0 0.0
    %4915 = vmatpush.msra.mxu0 0.0
    %4916 = vmatpush.msra.mxu0 0.0
    %4917 = vmatpush.msra.mxu0 %v4564
    %4918 = vmatmul.f32.gmra.mxu0 %v4900
    %v4919 = vpop.f32.mrf.mxu0
    %v4920 = vadd.f32 0.0, %v4919
    %4921 = vdwg.mxu0
    %4922 = vst.msk [vmem:[#allocation2 + $0x8] sm:$0xff] %vm964, %v4920
    %4923 = vrot.lane.b32.xlu0 %v4518, 96
    %v4924 = vpop.permute.xlu0 %4923
    %4925 = vrot.lane.b32.xlu0 %v4541, 96
    %v4926 = vpop.permute.xlu0 %4925
    %v4927 = vsel %vm964, %v4924, 0
    %v4929 = vsel %vm964, %v4926, 0
    %4931 = vmatpush.xpose.msra.mxu0 0.0
    %4932 = vmatpush.xpose.msra.mxu0 0.0
    %4933 = vmatpush.xpose.msra.mxu0 0.0
    %4934 = vmatpush.xpose.msra.mxu0 0.0
    %4935 = vmatpush.xpose.msra.mxu0 0.0
    %4936 = vmatpush.xpose.msra.mxu0 0.0
    %4937 = vmatpush.xpose.msra.mxu0 0.0
    %4938 = vmatpush.xpose.msra.mxu0 0.0
    %4939 = vmatpush.xpose.msra.mxu0 0.0
    %4940 = vmatpush.xpose.msra.mxu0 0.0
    %4941 = vmatpush.xpose.msra.mxu0 0.0
    %4942 = vmatpush.xpose.msra.mxu0 0.0
    %4943 = vmatpush.xpose.msra.mxu0 0.0
    %4944 = vmatpush.xpose.msra.mxu0 0.0
    %4945 = vmatpush.xpose.msra.mxu0 0.0
    %4946 = vmatpush.xpose.msra.mxu0 %v4929
    %4947 = vmatmul.f32.gmra.mxu0 %v4927
    %v4948 = vpop.f32.mrf.mxu0
    %v4949 = vadd.f32 0.0, %v4948
    %4950 = vdwg.mxu0
    %v4951 = vmul.f32 %v4949, 0.17677669
    %v4952 = vsel %vm994, %v4951, -inf
    %4953 = vmax.xlane.f32.xlu0 %v4952
    %v4954 = vpop.xlane.xlu0 %4953
    %v4955 = vsub.f32 %v4951, %v4954
    %v4956 = vmul.f32 %v4955, 1.442695
    %v4957 = vpow.pop %v4956
    %v4958 = vsel %vm994, %v4957, 0.0
    %4959 = vadd.xlane.f32.xlu0 %v4958
    %v4960 = vpop.xlane.xlu0 %4959
    %v4961 = vrcp.pop %v4960
    %v4962 = vmul.f32 %v4957, %v4961
    %4964 = vrot.lane.b32.xlu0 %v4564, 96
    %v4965 = vpop.permute.xlu0 %4964
    %v4968 = vsel %vm994, %v4962, 0
    %4970 = vmatpush.msra.mxu0 0.0
    %4971 = vmatpush.msra.mxu0 0.0
    %4972 = vmatpush.msra.mxu0 0.0
    %4973 = vmatpush.msra.mxu0 0.0
    %4974 = vmatpush.msra.mxu0 0.0
    %4975 = vmatpush.msra.mxu0 0.0
    %4976 = vmatpush.msra.mxu0 0.0
    %4977 = vmatpush.msra.mxu0 0.0
    %4978 = vmatpush.msra.mxu0 0.0
    %4979 = vmatpush.msra.mxu0 0.0
    %4980 = vmatpush.msra.mxu0 0.0
    %4981 = vmatpush.msra.mxu0 0.0
    %4982 = vmatpush.msra.mxu0 0.0
    %4983 = vmatpush.msra.mxu0 0.0
    %4984 = vmatpush.msra.mxu0 0.0
    %4985 = vmatpush.msra.mxu0 %v4965
    %4986 = vmatmul.f32.gmra.mxu0 %v4968
    %v4987 = vpop.f32.mrf.mxu0
    %v4988 = vadd.f32 0.0, %v4987
    %4989 = vdwg.mxu0
    %4991 = vrot.lane.b32.xlu0 %v4988, 32
    %v4992 = vpop.permute.xlu0 %4991
    %4994 = vst.msk [vmem:[#allocation2 + $0x8] sm:$0xff] %vm1102, %v4992
    %4995 = vrot.lane.b32.xlu0 %v4518, 64
    %v4996 = vpop.permute.xlu0 %4995
    %4997 = vrot.lane.b32.xlu0 %v4541, 64
    %v4998 = vpop.permute.xlu0 %4997
    %v4999 = vsel %vm964, %v4996, 0
    %v5001 = vsel %vm964, %v4998, 0
    %5003 = vmatpush.xpose.msra.mxu0 0.0
    %5004 = vmatpush.xpose.msra.mxu0 0.0
    %5005 = vmatpush.xpose.msra.mxu0 0.0
    %5006 = vmatpush.xpose.msra.mxu0 0.0
    %5007 = vmatpush.xpose.msra.mxu0 0.0
    %5008 = vmatpush.xpose.msra.mxu0 0.0
    %5009 = vmatpush.xpose.msra.mxu0 0.0
    %5010 = vmatpush.xpose.msra.mxu0 0.0
    %5011 = vmatpush.xpose.msra.mxu0 0.0
    %5012 = vmatpush.xpose.msra.mxu0 0.0
    %5013 = vmatpush.xpose.msra.mxu0 0.0
    %5014 = vmatpush.xpose.msra.mxu0 0.0
    %5015 = vmatpush.xpose.msra.mxu0 0.0
    %5016 = vmatpush.xpose.msra.mxu0 0.0
    %5017 = vmatpush.xpose.msra.mxu0 0.0
    %5018 = vmatpush.xpose.msra.mxu0 %v5001
    %5019 = vmatmul.f32.gmra.mxu0 %v4999
    %v5020 = vpop.f32.mrf.mxu0
    %v5021 = vadd.f32 0.0, %v5020
    %5022 = vdwg.mxu0
    %v5023 = vmul.f32 %v5021, 0.17677669
    %v5024 = vsel %vm994, %v5023, -inf
    %5025 = vmax.xlane.f32.xlu0 %v5024
    %v5026 = vpop.xlane.xlu0 %5025
    %v5027 = vsub.f32 %v5023, %v5026
    %v5028 = vmul.f32 %v5027, 1.442695
    %v5029 = vpow.pop %v5028
    %v5030 = vsel %vm994, %v5029, 0.0
    %5031 = vadd.xlane.f32.xlu0 %v5030
    %v5032 = vpop.xlane.xlu0 %5031
    %v5033 = vrcp.pop %v5032
    %v5034 = vmul.f32 %v5029, %v5033
    %5035 = vrot.lane.b32.xlu0 %v4564, 64
    %v5036 = vpop.permute.xlu0 %5035
    %v5039 = vsel %vm994, %v5034, 0
    %5041 = vmatpush.msra.mxu0 0.0
    %5042 = vmatpush.msra.mxu0 0.0
    %5043 = vmatpush.msra.mxu0 0.0
    %5044 = vmatpush.msra.mxu0 0.0
    %5045 = vmatpush.msra.mxu0 0.0
    %5046 = vmatpush.msra.mxu0 0.0
    %5047 = vmatpush.msra.mxu0 0.0
    %5048 = vmatpush.msra.mxu0 0.0
    %5049 = vmatpush.msra.mxu0 0.0
    %5050 = vmatpush.msra.mxu0 0.0
    %5051 = vmatpush.msra.mxu0 0.0
    %5052 = vmatpush.msra.mxu0 0.0
    %5053 = vmatpush.msra.mxu0 0.0
    %5054 = vmatpush.msra.mxu0 0.0
    %5055 = vmatpush.msra.mxu0 0.0
    %5056 = vmatpush.msra.mxu0 %v5036
    %5057 = vmatmul.f32.gmra.mxu0 %v5039
    %v5058 = vpop.f32.mrf.mxu0
    %v5059 = vadd.f32 0.0, %v5058
    %5060 = vdwg.mxu0
    %5062 = vrot.lane.b32.xlu0 %v5059, 64
    %v5063 = vpop.permute.xlu0 %5062
    %5065 = vst.msk [vmem:[#allocation2 + $0x8] sm:$0xff] %vm1175, %v5063
    %5066 = vrot.lane.b32.xlu0 %v4518, 32
    %v5067 = vpop.permute.xlu0 %5066
    %5068 = vrot.lane.b32.xlu0 %v4541, 32
    %v5069 = vpop.permute.xlu0 %5068
    %v5070 = vsel %vm964, %v5067, 0
    %v5072 = vsel %vm964, %v5069, 0
    %5074 = vmatpush.xpose.msra.mxu0 0.0
    %5075 = vmatpush.xpose.msra.mxu0 0.0
    %5076 = vmatpush.xpose.msra.mxu0 0.0
    %5077 = vmatpush.xpose.msra.mxu0 0.0
    %5078 = vmatpush.xpose.msra.mxu0 0.0
    %5079 = vmatpush.xpose.msra.mxu0 0.0
    %5080 = vmatpush.xpose.msra.mxu0 0.0
    %5081 = vmatpush.xpose.msra.mxu0 0.0
    %5082 = vmatpush.xpose.msra.mxu0 0.0
    %5083 = vmatpush.xpose.msra.mxu0 0.0
    %5084 = vmatpush.xpose.msra.mxu0 0.0
    %5085 = vmatpush.xpose.msra.mxu0 0.0
    %5086 = vmatpush.xpose.msra.mxu0 0.0
    %5087 = vmatpush.xpose.msra.mxu0 0.0
    %5088 = vmatpush.xpose.msra.mxu0 0.0
    %5089 = vmatpush.xpose.msra.mxu0 %v5072
    %5090 = vmatmul.f32.gmra.mxu0 %v5070
    %v5091 = vpop.f32.mrf.mxu0
    %v5092 = vadd.f32 0.0, %v5091
    %5093 = vdwg.mxu0
    %v5094 = vmul.f32 %v5092, 0.17677669
    %v5095 = vsel %vm994, %v5094, -inf
    %5096 = vmax.xlane.f32.xlu0 %v5095
    %v5097 = vpop.xlane.xlu0 %5096
    %v5098 = vsub.f32 %v5094, %v5097
    %v5099 = vmul.f32 %v5098, 1.442695
    %v5100 = vpow.pop %v5099
    %v5101 = vsel %vm994, %v5100, 0.0
    %5102 = vadd.xlane.f32.xlu0 %v5101
    %v5103 = vpop.xlane.xlu0 %5102
    %v5104 = vrcp.pop %v5103
    %v5105 = vmul.f32 %v5100, %v5104
    %5106 = vrot.lane.b32.xlu0 %v4564, 32
    %v5107 = vpop.permute.xlu0 %5106
    %v5110 = vsel %vm994, %v5105, 0
    %5112 = vmatpush.msra.mxu0 0.0
    %5113 = vmatpush.msra.mxu0 0.0
    %5114 = vmatpush.msra.mxu0 0.0
    %5115 = vmatpush.msra.mxu0 0.0
    %5116 = vmatpush.msra.mxu0 0.0
    %5117 = vmatpush.msra.mxu0 0.0
    %5118 = vmatpush.msra.mxu0 0.0
    %5119 = vmatpush.msra.mxu0 0.0
    %5120 = vmatpush.msra.mxu0 0.0
    %5121 = vmatpush.msra.mxu0 0.0
    %5122 = vmatpush.msra.mxu0 0.0
    %5123 = vmatpush.msra.mxu0 0.0
    %5124 = vmatpush.msra.mxu0 0.0
    %5125 = vmatpush.msra.mxu0 0.0
    %5126 = vmatpush.msra.mxu0 0.0
    %5127 = vmatpush.msra.mxu0 %v5107
    %5128 = vmatmul.f32.gmra.mxu0 %v5110
    %v5129 = vpop.f32.mrf.mxu0
    %v5130 = vadd.f32 0.0, %v5129
    %5131 = vdwg.mxu0
    %5133 = vrot.lane.b32.xlu0 %v5130, 96
    %v5134 = vpop.permute.xlu0 %5133
    %5136 = vst.msk [vmem:[#allocation2 + $0x8] sm:$0xff] %vm1248, %v5134
    %v5137 = vld [vmem:[#allocation2] sm:$0xff]
    %v5138 = vld [vmem:[#allocation2 + $0x8] sm:$0xff]
    %v5140 = vperm.slane %v4584, 0
    %5142 = vmatpush.msra.mxu0 %v4582
    %5143 = vmatpush.msra.mxu0 %v4581
    %5144 = vmatpush.msra.mxu0 %v4580
    %5145 = vmatpush.msra.mxu0 %v4579
    %5146 = vmatpush.msra.mxu0 %v4578
    %5147 = vmatpush.msra.mxu0 %v4577
    %5148 = vmatpush.msra.mxu0 %v4576
    %5149 = vmatpush.msra.mxu0 %v4575
    %5150 = vmatpush.msra.mxu0 %v4574
    %5151 = vmatpush.msra.mxu0 %v4573
    %5152 = vmatpush.msra.mxu0 %v4572
    %5153 = vmatpush.msra.mxu0 %v4571
    %5154 = vmatpush.msra.mxu0 %v4570
    %5155 = vmatpush.msra.mxu0 %v4569
    %5156 = vmatpush.msra.mxu0 %v4568
    %5157 = vmatpush.msra.mxu0 %v4567
    %5158 = vmatmul.f32.gmra.mxu0 %v5137
    %v5159 = vpop.f32.mrf.mxu0
    %v5160 = vadd.f32 %v5140, %v5159
    %5161 = vmatmul.f32.gmra.mxu0 %v5138
    %v5162 = vpop.f32.mrf.mxu0
    %v5163 = vadd.f32 %v5140, %v5162
    %5164 = vdwg.mxu0
    %v5165 = vadd.f32 %v4437, %v5160
    %v5166 = vadd.f32 %v4438, %v5163
    %s5167 = scalar_lea.vmem [#allocation36], 1
    %v5168 = vld [vmem:[%s5167] sm:$0x1]
    %s5169 = scalar_lea.vmem [#allocation38], 1
    %v5170 = vld [vmem:[%s5169] sm:$0x1]
    %5171 = vadd.xlane.f32.xlu0 %v5165
    %v5172 = vpop.xlane.xlu0 %5171
    %5173 = vadd.xlane.f32.xlu0 %v5166
    %v5174 = vpop.xlane.xlu0 %5173
    %v5175 = vmul.f32 %v5172, %v1573
    %v5176 = vmul.f32 %v5174, %v1573
    %v5177 = vsub.f32 %v5165, %v5175
    %v5178 = vsub.f32 %v5166, %v5176
    %v5179 = vmul.f32 %v5177, %v5177
    %v5180 = vmul.f32 %v5178, %v5178
    %5181 = vadd.xlane.f32.xlu0 %v5179
    %v5182 = vpop.xlane.xlu0 %5181
    %5183 = vadd.xlane.f32.xlu0 %v5180
    %v5184 = vpop.xlane.xlu0 %5183
    %v5185 = vmul.f32 %v5182, %v1573
    %v5186 = vmul.f32 %v5184, %v1573
    %v5187 = vadd.f32 %v5185, 1e-05
    %v5188 = vadd.f32 %v5186, 1e-05
    %v5189 = vrsqrt.pop %v5187
    %v5190 = vmul.f32 %v5189, %v5187
    %v5191 = vmul.f32 %v5190, %v5189
    %v5192 = vmul.f32 0.5, %v5191
    %v5193 = vsub.f32 1.5, %v5192
    %v5194 = vmul.f32 %v5189, %v5193
    %vm5195 = vweird.f32 %v5187
    %vm5196 = vweird.f32 %v5189
    %vm5197 = vmor %vm5195, %vm5196
    %v5198 = vsel %vm5197, %v5189, %v5194
    %v5199 = vrsqrt.pop %v5188
    %v5200 = vmul.f32 %v5199, %v5188
    %v5201 = vmul.f32 %v5200, %v5199
    %v5202 = vmul.f32 0.5, %v5201
    %v5203 = vsub.f32 1.5, %v5202
    %v5204 = vmul.f32 %v5199, %v5203
    %vm5205 = vweird.f32 %v5188
    %vm5206 = vweird.f32 %v5199
    %vm5207 = vmor %vm5205, %vm5206
    %v5208 = vsel %vm5207, %v5199, %v5204
    %v5209 = vmul.f32 %v5177, %v5198
    %v5210 = vmul.f32 %v5178, %v5208
    %v5212 = vperm.slane %v5168, 0
    %v5214 = vmul.f32 %v5209, %v5212
    %v5215 = vmul.f32 %v5210, %v5212
    %v5217 = vperm.slane %v5170, 0
    %v5219 = vadd.f32 %v5214, %v5217
    %v5220 = vadd.f32 %v5215, %v5217
    %s5221 = scalar_lea.vmem [#allocation39], 128
    %v5222 = vld [vmem:[%s5221] sm:$0xff]
    %v5223 = vld [vmem:[%s5221 + $0x8] sm:$0xff]
    %v5224 = vld [vmem:[%s5221 + $0x10] sm:$0xff]
    %v5225 = vld [vmem:[%s5221 + $0x18] sm:$0xff]
    %v5226 = vld [vmem:[%s5221 + $0x20] sm:$0xff]
    %v5227 = vld [vmem:[%s5221 + $0x28] sm:$0xff]
    %v5228 = vld [vmem:[%s5221 + $0x30] sm:$0xff]
    %v5229 = vld [vmem:[%s5221 + $0x38] sm:$0xff]
    %v5230 = vld [vmem:[%s5221 + $0x40] sm:$0xff]
    %v5231 = vld [vmem:[%s5221 + $0x48] sm:$0xff]
    %v5232 = vld [vmem:[%s5221 + $0x50] sm:$0xff]
    %v5233 = vld [vmem:[%s5221 + $0x58] sm:$0xff]
    %v5234 = vld [vmem:[%s5221 + $0x60] sm:$0xff]
    %v5235 = vld [vmem:[%s5221 + $0x68] sm:$0xff]
    %v5236 = vld [vmem:[%s5221 + $0x70] sm:$0xff]
    %v5237 = vld [vmem:[%s5221 + $0x78] sm:$0xff]
    %s5238 = scalar_lea.vmem [#allocation41], 1
    %v5239 = vld [vmem:[%s5238] sm:$0x1]
    %v5241 = vperm.slane %v5239, 0
    %5243 = vmatpush.msra.mxu0 %v5237
    %5244 = vmatpush.msra.mxu0 %v5236
    %5245 = vmatpush.msra.mxu0 %v5235
    %5246 = vmatpush.msra.mxu0 %v5234
    %5247 = vmatpush.msra.mxu0 %v5233
    %5248 = vmatpush.msra.mxu0 %v5232
    %5249 = vmatpush.msra.mxu0 %v5231
    %5250 = vmatpush.msra.mxu0 %v5230
    %5251 = vmatpush.msra.mxu0 %v5229
    %5252 = vmatpush.msra.mxu0 %v5228
    %5253 = vmatpush.msra.mxu0 %v5227
    %5254 = vmatpush.msra.mxu0 %v5226
    %5255 = vmatpush.msra.mxu0 %v5225
    %5256 = vmatpush.msra.mxu0 %v5224
    %5257 = vmatpush.msra.mxu0 %v5223
    %5258 = vmatpush.msra.mxu0 %v5222
    %5259 = vmatmul.f32.gmra.mxu0 %v5219
    %v5260 = vpop.f32.mrf.mxu0
    %v5261 = vadd.f32 %v5241, %v5260
    %5262 = vmatmul.f32.gmra.mxu0 %v5220
    %v5263 = vpop.f32.mrf.mxu0
    %v5264 = vadd.f32 %v5241, %v5263
    %5265 = vdwg.mxu0
    %s5266 = scalar_lea.vmem [#allocation42], 256
    %v5267 = vld [vmem:[%s5266] sm:$0xff]
    %v5268 = vld [vmem:[%s5266 + $0x8] sm:$0xff]
    %v5269 = vld [vmem:[%s5266 + $0x10] sm:$0xff]
    %v5270 = vld [vmem:[%s5266 + $0x18] sm:$0xff]
    %v5271 = vld [vmem:[%s5266 + $0x20] sm:$0xff]
    %v5272 = vld [vmem:[%s5266 + $0x28] sm:$0xff]
    %v5273 = vld [vmem:[%s5266 + $0x30] sm:$0xff]
    %v5274 = vld [vmem:[%s5266 + $0x38] sm:$0xff]
    %v5275 = vld [vmem:[%s5266 + $0x40] sm:$0xff]
    %v5276 = vld [vmem:[%s5266 + $0x48] sm:$0xff]
    %v5277 = vld [vmem:[%s5266 + $0x50] sm:$0xff]
    %v5278 = vld [vmem:[%s5266 + $0x58] sm:$0xff]
    %v5279 = vld [vmem:[%s5266 + $0x60] sm:$0xff]
    %v5280 = vld [vmem:[%s5266 + $0x68] sm:$0xff]
    %v5281 = vld [vmem:[%s5266 + $0x70] sm:$0xff]
    %v5282 = vld [vmem:[%s5266 + $0x78] sm:$0xff]
    %v5283 = vld [vmem:[%s5266 + $0x80] sm:$0xff]
    %v5284 = vld [vmem:[%s5266 + $0x88] sm:$0xff]
    %v5285 = vld [vmem:[%s5266 + $0x90] sm:$0xff]
    %v5286 = vld [vmem:[%s5266 + $0x98] sm:$0xff]
    %v5287 = vld [vmem:[%s5266 + $0xa0] sm:$0xff]
    %v5288 = vld [vmem:[%s5266 + $0xa8] sm:$0xff]
    %v5289 = vld [vmem:[%s5266 + $0xb0] sm:$0xff]
    %v5290 = vld [vmem:[%s5266 + $0xb8] sm:$0xff]
    %v5291 = vld [vmem:[%s5266 + $0xc0] sm:$0xff]
    %v5292 = vld [vmem:[%s5266 + $0xc8] sm:$0xff]
    %v5293 = vld [vmem:[%s5266 + $0xd0] sm:$0xff]
    %v5294 = vld [vmem:[%s5266 + $0xd8] sm:$0xff]
    %v5295 = vld [vmem:[%s5266 + $0xe0] sm:$0xff]
    %v5296 = vld [vmem:[%s5266 + $0xe8] sm:$0xff]
    %v5297 = vld [vmem:[%s5266 + $0xf0] sm:$0xff]
    %v5298 = vld [vmem:[%s5266 + $0xf8] sm:$0xff]
    %s5299 = scalar_lea.vmem [#allocation44], 2
    %v5300 = vld [vmem:[%s5299] sm:$0x3]
    %v5302 = vperm.slane %v5300, 0
    %v5303 = vperm.slane %v5300, 1
    %5306 = vmatpush.msra.mxu0 %v5297
    %5307 = vmatpush.msra.mxu0 %v5295
    %5308 = vmatpush.msra.mxu0 %v5293
    %5309 = vmatpush.msra.mxu0 %v5291
    %5310 = vmatpush.msra.mxu0 %v5289
    %5311 = vmatpush.msra.mxu0 %v5287
    %5312 = vmatpush.msra.mxu0 %v5285
    %5313 = vmatpush.msra.mxu0 %v5283
    %5314 = vmatpush.msra.mxu0 %v5281
    %5315 = vmatpush.msra.mxu0 %v5279
    %5316 = vmatpush.msra.mxu0 %v5277
    %5317 = vmatpush.msra.mxu0 %v5275
    %5318 = vmatpush.msra.mxu0 %v5273
    %5319 = vmatpush.msra.mxu0 %v5271
    %5320 = vmatpush.msra.mxu0 %v5269
    %5321 = vmatpush.msra.mxu0 %v5267
    %5322 = vmatmul.f32.gmra.mxu0 %v2698
    %v5323 = vpop.f32.mrf.mxu0
    %v5324 = vadd.f32 %v5302, %v5323
    %5325 = vmatmul.f32.gmra.mxu0 %v2699
    %v5326 = vpop.f32.mrf.mxu0
    %v5327 = vadd.f32 %v5302, %v5326
    %5328 = vdwg.mxu0
    %5329 = vmatpush.msra.mxu0 %v5298
    %5330 = vmatpush.msra.mxu0 %v5296
    %5331 = vmatpush.msra.mxu0 %v5294
    %5332 = vmatpush.msra.mxu0 %v5292
    %5333 = vmatpush.msra.mxu0 %v5290
    %5334 = vmatpush.msra.mxu0 %v5288
    %5335 = vmatpush.msra.mxu0 %v5286
    %5336 = vmatpush.msra.mxu0 %v5284
    %5337 = vmatpush.msra.mxu0 %v5282
    %5338 = vmatpush.msra.mxu0 %v5280
    %5339 = vmatpush.msra.mxu0 %v5278
    %5340 = vmatpush.msra.mxu0 %v5276
    %5341 = vmatpush.msra.mxu0 %v5274
    %5342 = vmatpush.msra.mxu0 %v5272
    %5343 = vmatpush.msra.mxu0 %v5270
    %5344 = vmatpush.msra.mxu0 %v5268
    %5345 = vmatmul.f32.gmra.mxu0 %v2698
    %v5346 = vpop.f32.mrf.mxu0
    %v5347 = vadd.f32 %v5303, %v5346
    %5348 = vmatmul.f32.gmra.mxu0 %v2699
    %v5349 = vpop.f32.mrf.mxu0
    %v5350 = vadd.f32 %v5303, %v5349
    %5351 = vdwg.mxu0
    %s5352 = scalar_lea.vmem [#allocation45], 128
    %v5353 = vld [vmem:[%s5352] sm:$0xff]
    %v5354 = vld [vmem:[%s5352 + $0x8] sm:$0xff]
    %v5355 = vld [vmem:[%s5352 + $0x10] sm:$0xff]
    %v5356 = vld [vmem:[%s5352 + $0x18] sm:$0xff]
    %v5357 = vld [vmem:[%s5352 + $0x20] sm:$0xff]
    %v5358 = vld [vmem:[%s5352 + $0x28] sm:$0xff]
    %v5359 = vld [vmem:[%s5352 + $0x30] sm:$0xff]
    %v5360 = vld [vmem:[%s5352 + $0x38] sm:$0xff]
    %v5361 = vld [vmem:[%s5352 + $0x40] sm:$0xff]
    %v5362 = vld [vmem:[%s5352 + $0x48] sm:$0xff]
    %v5363 = vld [vmem:[%s5352 + $0x50] sm:$0xff]
    %v5364 = vld [vmem:[%s5352 + $0x58] sm:$0xff]
    %v5365 = vld [vmem:[%s5352 + $0x60] sm:$0xff]
    %v5366 = vld [vmem:[%s5352 + $0x68] sm:$0xff]
    %v5367 = vld [vmem:[%s5352 + $0x70] sm:$0xff]
    %v5368 = vld [vmem:[%s5352 + $0x78] sm:$0xff]
    %s5369 = scalar_lea.vmem [#allocation47], 1
    %v5370 = vld [vmem:[%s5369] sm:$0x1]
    %v5372 = vsel %vm964, %v5261, 0
    %v5375 = vsel %vm964, %v5324, 0
    %5377 = vmatpush.xpose.msra.mxu0 0.0
    %5378 = vmatpush.xpose.msra.mxu0 0.0
    %5379 = vmatpush.xpose.msra.mxu0 0.0
    %5380 = vmatpush.xpose.msra.mxu0 0.0
    %5381 = vmatpush.xpose.msra.mxu0 0.0
    %5382 = vmatpush.xpose.msra.mxu0 0.0
    %5383 = vmatpush.xpose.msra.mxu0 0.0
    %5384 = vmatpush.xpose.msra.mxu0 0.0
    %5385 = vmatpush.xpose.msra.mxu0 0.0
    %5386 = vmatpush.xpose.msra.mxu0 0.0
    %5387 = vmatpush.xpose.msra.mxu0 0.0
    %5388 = vmatpush.xpose.msra.mxu0 0.0
    %5389 = vmatpush.xpose.msra.mxu0 0.0
    %5390 = vmatpush.xpose.msra.mxu0 0.0
    %5391 = vmatpush.xpose.msra.mxu0 0.0
    %5392 = vmatpush.xpose.msra.mxu0 %v5375
    %5393 = vmatmul.f32.gmra.mxu0 %v5372
    %v5394 = vpop.f32.mrf.mxu0
    %v5395 = vadd.f32 0.0, %v5394
    %5396 = vdwg.mxu0
    %v5397 = vmul.f32 %v5395, 0.17677669
    %v5398 = vsel %vm994, %v5397, -inf
    %5399 = vmax.xlane.f32.xlu0 %v5398
    %v5400 = vpop.xlane.xlu0 %5399
    %v5401 = vsub.f32 %v5397, %v5400
    %v5402 = vmul.f32 %v5401, 1.442695
    %v5403 = vpow.pop %v5402
    %v5404 = vsel %vm994, %v5403, 0.0
    %5405 = vadd.xlane.f32.xlu0 %v5404
    %v5406 = vpop.xlane.xlu0 %5405
    %v5407 = vrcp.pop %v5406
    %v5408 = vmul.f32 %v5403, %v5407
    %v5410 = vsel %vm994, %v5408, 0
    %5412 = vmatpush.msra.mxu0 0.0
    %5413 = vmatpush.msra.mxu0 0.0
    %5414 = vmatpush.msra.mxu0 0.0
    %5415 = vmatpush.msra.mxu0 0.0
    %5416 = vmatpush.msra.mxu0 0.0
    %5417 = vmatpush.msra.mxu0 0.0
    %5418 = vmatpush.msra.mxu0 0.0
    %5419 = vmatpush.msra.mxu0 0.0
    %5420 = vmatpush.msra.mxu0 0.0
    %5421 = vmatpush.msra.mxu0 0.0
    %5422 = vmatpush.msra.mxu0 0.0
    %5423 = vmatpush.msra.mxu0 0.0
    %5424 = vmatpush.msra.mxu0 0.0
    %5425 = vmatpush.msra.mxu0 0.0
    %5426 = vmatpush.msra.mxu0 0.0
    %5427 = vmatpush.msra.mxu0 %v5347
    %5428 = vmatmul.f32.gmra.mxu0 %v5410
    %v5429 = vpop.f32.mrf.mxu0
    %v5430 = vadd.f32 0.0, %v5429
    %5431 = vdwg.mxu0
    %5432 = vst.msk [vmem:[#allocation2] sm:$0xff] %vm964, %v5430
    %5433 = vrot.lane.b32.xlu0 %v5261, 96
    %v5434 = vpop.permute.xlu0 %5433
    %5435 = vrot.lane.b32.xlu0 %v5324, 96
    %v5436 = vpop.permute.xlu0 %5435
    %v5437 = vsel %vm964, %v5434, 0
    %v5439 = vsel %vm964, %v5436, 0
    %5441 = vmatpush.xpose.msra.mxu0 0.0
    %5442 = vmatpush.xpose.msra.mxu0 0.0
    %5443 = vmatpush.xpose.msra.mxu0 0.0
    %5444 = vmatpush.xpose.msra.mxu0 0.0
    %5445 = vmatpush.xpose.msra.mxu0 0.0
    %5446 = vmatpush.xpose.msra.mxu0 0.0
    %5447 = vmatpush.xpose.msra.mxu0 0.0
    %5448 = vmatpush.xpose.msra.mxu0 0.0
    %5449 = vmatpush.xpose.msra.mxu0 0.0
    %5450 = vmatpush.xpose.msra.mxu0 0.0
    %5451 = vmatpush.xpose.msra.mxu0 0.0
    %5452 = vmatpush.xpose.msra.mxu0 0.0
    %5453 = vmatpush.xpose.msra.mxu0 0.0
    %5454 = vmatpush.xpose.msra.mxu0 0.0
    %5455 = vmatpush.xpose.msra.mxu0 0.0
    %5456 = vmatpush.xpose.msra.mxu0 %v5439
    %5457 = vmatmul.f32.gmra.mxu0 %v5437
    %v5458 = vpop.f32.mrf.mxu0
    %v5459 = vadd.f32 0.0, %v5458
    %5460 = vdwg.mxu0
    %v5461 = vmul.f32 %v5459, 0.17677669
    %v5462 = vsel %vm994, %v5461, -inf
    %5463 = vmax.xlane.f32.xlu0 %v5462
    %v5464 = vpop.xlane.xlu0 %5463
    %v5465 = vsub.f32 %v5461, %v5464
    %v5466 = vmul.f32 %v5465, 1.442695
    %v5467 = vpow.pop %v5466
    %v5468 = vsel %vm994, %v5467, 0.0
    %5469 = vadd.xlane.f32.xlu0 %v5468
    %v5470 = vpop.xlane.xlu0 %5469
    %v5471 = vrcp.pop %v5470
    %v5472 = vmul.f32 %v5467, %v5471
    %5474 = vrot.lane.b32.xlu0 %v5347, 96
    %v5475 = vpop.permute.xlu0 %5474
    %v5478 = vsel %vm994, %v5472, 0
    %5480 = vmatpush.msra.mxu0 0.0
    %5481 = vmatpush.msra.mxu0 0.0
    %5482 = vmatpush.msra.mxu0 0.0
    %5483 = vmatpush.msra.mxu0 0.0
    %5484 = vmatpush.msra.mxu0 0.0
    %5485 = vmatpush.msra.mxu0 0.0
    %5486 = vmatpush.msra.mxu0 0.0
    %5487 = vmatpush.msra.mxu0 0.0
    %5488 = vmatpush.msra.mxu0 0.0
    %5489 = vmatpush.msra.mxu0 0.0
    %5490 = vmatpush.msra.mxu0 0.0
    %5491 = vmatpush.msra.mxu0 0.0
    %5492 = vmatpush.msra.mxu0 0.0
    %5493 = vmatpush.msra.mxu0 0.0
    %5494 = vmatpush.msra.mxu0 0.0
    %5495 = vmatpush.msra.mxu0 %v5475
    %5496 = vmatmul.f32.gmra.mxu0 %v5478
    %v5497 = vpop.f32.mrf.mxu0
    %v5498 = vadd.f32 0.0, %v5497
    %5499 = vdwg.mxu0
    %5501 = vrot.lane.b32.xlu0 %v5498, 32
    %v5502 = vpop.permute.xlu0 %5501
    %5504 = vst.msk [vmem:[#allocation2] sm:$0xff] %vm1102, %v5502
    %5505 = vrot.lane.b32.xlu0 %v5261, 64
    %v5506 = vpop.permute.xlu0 %5505
    %5507 = vrot.lane.b32.xlu0 %v5324, 64
    %v5508 = vpop.permute.xlu0 %5507
    %v5509 = vsel %vm964, %v5506, 0
    %v5511 = vsel %vm964, %v5508, 0
    %5513 = vmatpush.xpose.msra.mxu0 0.0
    %5514 = vmatpush.xpose.msra.mxu0 0.0
    %5515 = vmatpush.xpose.msra.mxu0 0.0
    %5516 = vmatpush.xpose.msra.mxu0 0.0
    %5517 = vmatpush.xpose.msra.mxu0 0.0
    %5518 = vmatpush.xpose.msra.mxu0 0.0
    %5519 = vmatpush.xpose.msra.mxu0 0.0
    %5520 = vmatpush.xpose.msra.mxu0 0.0
    %5521 = vmatpush.xpose.msra.mxu0 0.0
    %5522 = vmatpush.xpose.msra.mxu0 0.0
    %5523 = vmatpush.xpose.msra.mxu0 0.0
    %5524 = vmatpush.xpose.msra.mxu0 0.0
    %5525 = vmatpush.xpose.msra.mxu0 0.0
    %5526 = vmatpush.xpose.msra.mxu0 0.0
    %5527 = vmatpush.xpose.msra.mxu0 0.0
    %5528 = vmatpush.xpose.msra.mxu0 %v5511
    %5529 = vmatmul.f32.gmra.mxu0 %v5509
    %v5530 = vpop.f32.mrf.mxu0
    %v5531 = vadd.f32 0.0, %v5530
    %5532 = vdwg.mxu0
    %v5533 = vmul.f32 %v5531, 0.17677669
    %v5534 = vsel %vm994, %v5533, -inf
    %5535 = vmax.xlane.f32.xlu0 %v5534
    %v5536 = vpop.xlane.xlu0 %5535
    %v5537 = vsub.f32 %v5533, %v5536
    %v5538 = vmul.f32 %v5537, 1.442695
    %v5539 = vpow.pop %v5538
    %v5540 = vsel %vm994, %v5539, 0.0
    %5541 = vadd.xlane.f32.xlu0 %v5540
    %v5542 = vpop.xlane.xlu0 %5541
    %v5543 = vrcp.pop %v5542
    %v5544 = vmul.f32 %v5539, %v5543
    %5545 = vrot.lane.b32.xlu0 %v5347, 64
    %v5546 = vpop.permute.xlu0 %5545
    %v5549 = vsel %vm994, %v5544, 0
    %5551 = vmatpush.msra.mxu0 0.0
    %5552 = vmatpush.msra.mxu0 0.0
    %5553 = vmatpush.msra.mxu0 0.0
    %5554 = vmatpush.msra.mxu0 0.0
    %5555 = vmatpush.msra.mxu0 0.0
    %5556 = vmatpush.msra.mxu0 0.0
    %5557 = vmatpush.msra.mxu0 0.0
    %5558 = vmatpush.msra.mxu0 0.0
    %5559 = vmatpush.msra.mxu0 0.0
    %5560 = vmatpush.msra.mxu0 0.0
    %5561 = vmatpush.msra.mxu0 0.0
    %5562 = vmatpush.msra.mxu0 0.0
    %5563 = vmatpush.msra.mxu0 0.0
    %5564 = vmatpush.msra.mxu0 0.0
    %5565 = vmatpush.msra.mxu0 0.0
    %5566 = vmatpush.msra.mxu0 %v5546
    %5567 = vmatmul.f32.gmra.mxu0 %v5549
    %v5568 = vpop.f32.mrf.mxu0
    %v5569 = vadd.f32 0.0, %v5568
    %5570 = vdwg.mxu0
    %5572 = vrot.lane.b32.xlu0 %v5569, 64
    %v5573 = vpop.permute.xlu0 %5572
    %5575 = vst.msk [vmem:[#allocation2] sm:$0xff] %vm1175, %v5573
    %5576 = vrot.lane.b32.xlu0 %v5261, 32
    %v5577 = vpop.permute.xlu0 %5576
    %5578 = vrot.lane.b32.xlu0 %v5324, 32
    %v5579 = vpop.permute.xlu0 %5578
    %v5580 = vsel %vm964, %v5577, 0
    %v5582 = vsel %vm964, %v5579, 0
    %5584 = vmatpush.xpose.msra.mxu0 0.0
    %5585 = vmatpush.xpose.msra.mxu0 0.0
    %5586 = vmatpush.xpose.msra.mxu0 0.0
    %5587 = vmatpush.xpose.msra.mxu0 0.0
    %5588 = vmatpush.xpose.msra.mxu0 0.0
    %5589 = vmatpush.xpose.msra.mxu0 0.0
    %5590 = vmatpush.xpose.msra.mxu0 0.0
    %5591 = vmatpush.xpose.msra.mxu0 0.0
    %5592 = vmatpush.xpose.msra.mxu0 0.0
    %5593 = vmatpush.xpose.msra.mxu0 0.0
    %5594 = vmatpush.xpose.msra.mxu0 0.0
    %5595 = vmatpush.xpose.msra.mxu0 0.0
    %5596 = vmatpush.xpose.msra.mxu0 0.0
    %5597 = vmatpush.xpose.msra.mxu0 0.0
    %5598 = vmatpush.xpose.msra.mxu0 0.0
    %5599 = vmatpush.xpose.msra.mxu0 %v5582
    %5600 = vmatmul.f32.gmra.mxu0 %v5580
    %v5601 = vpop.f32.mrf.mxu0
    %v5602 = vadd.f32 0.0, %v5601
    %5603 = vdwg.mxu0
    %v5604 = vmul.f32 %v5602, 0.17677669
    %v5605 = vsel %vm994, %v5604, -inf
    %5606 = vmax.xlane.f32.xlu0 %v5605
    %v5607 = vpop.xlane.xlu0 %5606
    %v5608 = vsub.f32 %v5604, %v5607
    %v5609 = vmul.f32 %v5608, 1.442695
    %v5610 = vpow.pop %v5609
    %v5611 = vsel %vm994, %v5610, 0.0
    %5612 = vadd.xlane.f32.xlu0 %v5611
    %v5613 = vpop.xlane.xlu0 %5612
    %v5614 = vrcp.pop %v5613
    %v5615 = vmul.f32 %v5610, %v5614
    %5616 = vrot.lane.b32.xlu0 %v5347, 32
    %v5617 = vpop.permute.xlu0 %5616
    %v5620 = vsel %vm994, %v5615, 0
    %5622 = vmatpush.msra.mxu0 0.0
    %5623 = vmatpush.msra.mxu0 0.0
    %5624 = vmatpush.msra.mxu0 0.0
    %5625 = vmatpush.msra.mxu0 0.0
    %5626 = vmatpush.msra.mxu0 0.0
    %5627 = vmatpush.msra.mxu0 0.0
    %5628 = vmatpush.msra.mxu0 0.0
    %5629 = vmatpush.msra.mxu0 0.0
    %5630 = vmatpush.msra.mxu0 0.0
    %5631 = vmatpush.msra.mxu0 0.0
    %5632 = vmatpush.msra.mxu0 0.0
    %5633 = vmatpush.msra.mxu0 0.0
    %5634 = vmatpush.msra.mxu0 0.0
    %5635 = vmatpush.msra.mxu0 0.0
    %5636 = vmatpush.msra.mxu0 0.0
    %5637 = vmatpush.msra.mxu0 %v5617
    %5638 = vmatmul.f32.gmra.mxu0 %v5620
    %v5639 = vpop.f32.mrf.mxu0
    %v5640 = vadd.f32 0.0, %v5639
    %5641 = vdwg.mxu0
    %5643 = vrot.lane.b32.xlu0 %v5640, 96
    %v5644 = vpop.permute.xlu0 %5643
    %5646 = vst.msk [vmem:[#allocation2] sm:$0xff] %vm1248, %v5644
    %v5648 = vsel %vm964, %v5264, 0
    %v5651 = vsel %vm964, %v5327, 0
    %5653 = vmatpush.xpose.msra.mxu0 0.0
    %5654 = vmatpush.xpose.msra.mxu0 0.0
    %5655 = vmatpush.xpose.msra.mxu0 0.0
    %5656 = vmatpush.xpose.msra.mxu0 0.0
    %5657 = vmatpush.xpose.msra.mxu0 0.0
    %5658 = vmatpush.xpose.msra.mxu0 0.0
    %5659 = vmatpush.xpose.msra.mxu0 0.0
    %5660 = vmatpush.xpose.msra.mxu0 0.0
    %5661 = vmatpush.xpose.msra.mxu0 0.0
    %5662 = vmatpush.xpose.msra.mxu0 0.0
    %5663 = vmatpush.xpose.msra.mxu0 0.0
    %5664 = vmatpush.xpose.msra.mxu0 0.0
    %5665 = vmatpush.xpose.msra.mxu0 0.0
    %5666 = vmatpush.xpose.msra.mxu0 0.0
    %5667 = vmatpush.xpose.msra.mxu0 0.0
    %5668 = vmatpush.xpose.msra.mxu0 %v5651
    %5669 = vmatmul.f32.gmra.mxu0 %v5648
    %v5670 = vpop.f32.mrf.mxu0
    %v5671 = vadd.f32 0.0, %v5670
    %5672 = vdwg.mxu0
    %v5673 = vmul.f32 %v5671, 0.17677669
    %v5674 = vsel %vm994, %v5673, -inf
    %5675 = vmax.xlane.f32.xlu0 %v5674
    %v5676 = vpop.xlane.xlu0 %5675
    %v5677 = vsub.f32 %v5673, %v5676
    %v5678 = vmul.f32 %v5677, 1.442695
    %v5679 = vpow.pop %v5678
    %v5680 = vsel %vm994, %v5679, 0.0
    %5681 = vadd.xlane.f32.xlu0 %v5680
    %v5682 = vpop.xlane.xlu0 %5681
    %v5683 = vrcp.pop %v5682
    %v5684 = vmul.f32 %v5679, %v5683
    %v5686 = vsel %vm994, %v5684, 0
    %5688 = vmatpush.msra.mxu0 0.0
    %5689 = vmatpush.msra.mxu0 0.0
    %5690 = vmatpush.msra.mxu0 0.0
    %5691 = vmatpush.msra.mxu0 0.0
    %5692 = vmatpush.msra.mxu0 0.0
    %5693 = vmatpush.msra.mxu0 0.0
    %5694 = vmatpush.msra.mxu0 0.0
    %5695 = vmatpush.msra.mxu0 0.0
    %5696 = vmatpush.msra.mxu0 0.0
    %5697 = vmatpush.msra.mxu0 0.0
    %5698 = vmatpush.msra.mxu0 0.0
    %5699 = vmatpush.msra.mxu0 0.0
    %5700 = vmatpush.msra.mxu0 0.0
    %5701 = vmatpush.msra.mxu0 0.0
    %5702 = vmatpush.msra.mxu0 0.0
    %5703 = vmatpush.msra.mxu0 %v5350
    %5704 = vmatmul.f32.gmra.mxu0 %v5686
    %v5705 = vpop.f32.mrf.mxu0
    %v5706 = vadd.f32 0.0, %v5705
    %5707 = vdwg.mxu0
    %5708 = vst.msk [vmem:[#allocation2 + $0x8] sm:$0xff] %vm964, %v5706
    %5709 = vrot.lane.b32.xlu0 %v5264, 96
    %v5710 = vpop.permute.xlu0 %5709
    %5711 = vrot.lane.b32.xlu0 %v5327, 96
    %v5712 = vpop.permute.xlu0 %5711
    %v5713 = vsel %vm964, %v5710, 0
    %v5715 = vsel %vm964, %v5712, 0
    %5717 = vmatpush.xpose.msra.mxu0 0.0
    %5718 = vmatpush.xpose.msra.mxu0 0.0
    %5719 = vmatpush.xpose.msra.mxu0 0.0
    %5720 = vmatpush.xpose.msra.mxu0 0.0
    %5721 = vmatpush.xpose.msra.mxu0 0.0
    %5722 = vmatpush.xpose.msra.mxu0 0.0
    %5723 = vmatpush.xpose.msra.mxu0 0.0
    %5724 = vmatpush.xpose.msra.mxu0 0.0
    %5725 = vmatpush.xpose.msra.mxu0 0.0
    %5726 = vmatpush.xpose.msra.mxu0 0.0
    %5727 = vmatpush.xpose.msra.mxu0 0.0
    %5728 = vmatpush.xpose.msra.mxu0 0.0
    %5729 = vmatpush.xpose.msra.mxu0 0.0
    %5730 = vmatpush.xpose.msra.mxu0 0.0
    %5731 = vmatpush.xpose.msra.mxu0 0.0
    %5732 = vmatpush.xpose.msra.mxu0 %v5715
    %5733 = vmatmul.f32.gmra.mxu0 %v5713
    %v5734 = vpop.f32.mrf.mxu0
    %v5735 = vadd.f32 0.0, %v5734
    %5736 = vdwg.mxu0
    %v5737 = vmul.f32 %v5735, 0.17677669
    %v5738 = vsel %vm994, %v5737, -inf
    %5739 = vmax.xlane.f32.xlu0 %v5738
    %v5740 = vpop.xlane.xlu0 %5739
    %v5741 = vsub.f32 %v5737, %v5740
    %v5742 = vmul.f32 %v5741, 1.442695
    %v5743 = vpow.pop %v5742
    %v5744 = vsel %vm994, %v5743, 0.0
    %5745 = vadd.xlane.f32.xlu0 %v5744
    %v5746 = vpop.xlane.xlu0 %5745
    %v5747 = vrcp.pop %v5746
    %v5748 = vmul.f32 %v5743, %v5747
    %5750 = vrot.lane.b32.xlu0 %v5350, 96
    %v5751 = vpop.permute.xlu0 %5750
    %v5754 = vsel %vm994, %v5748, 0
    %5756 = vmatpush.msra.mxu0 0.0
    %5757 = vmatpush.msra.mxu0 0.0
    %5758 = vmatpush.msra.mxu0 0.0
    %5759 = vmatpush.msra.mxu0 0.0
    %5760 = vmatpush.msra.mxu0 0.0
    %5761 = vmatpush.msra.mxu0 0.0
    %5762 = vmatpush.msra.mxu0 0.0
    %5763 = vmatpush.msra.mxu0 0.0
    %5764 = vmatpush.msra.mxu0 0.0
    %5765 = vmatpush.msra.mxu0 0.0
    %5766 = vmatpush.msra.mxu0 0.0
    %5767 = vmatpush.msra.mxu0 0.0
    %5768 = vmatpush.msra.mxu0 0.0
    %5769 = vmatpush.msra.mxu0 0.0
    %5770 = vmatpush.msra.mxu0 0.0
    %5771 = vmatpush.msra.mxu0 %v5751
    %5772 = vmatmul.f32.gmra.mxu0 %v5754
    %v5773 = vpop.f32.mrf.mxu0
    %v5774 = vadd.f32 0.0, %v5773
    %5775 = vdwg.mxu0
    %5777 = vrot.lane.b32.xlu0 %v5774, 32
    %v5778 = vpop.permute.xlu0 %5777
    %5780 = vst.msk [vmem:[#allocation2 + $0x8] sm:$0xff] %vm1102, %v5778
    %5781 = vrot.lane.b32.xlu0 %v5264, 64
    %v5782 = vpop.permute.xlu0 %5781
    %5783 = vrot.lane.b32.xlu0 %v5327, 64
    %v5784 = vpop.permute.xlu0 %5783
    %v5785 = vsel %vm964, %v5782, 0
    %v5787 = vsel %vm964, %v5784, 0
    %5789 = vmatpush.xpose.msra.mxu0 0.0
    %5790 = vmatpush.xpose.msra.mxu0 0.0
    %5791 = vmatpush.xpose.msra.mxu0 0.0
    %5792 = vmatpush.xpose.msra.mxu0 0.0
    %5793 = vmatpush.xpose.msra.mxu0 0.0
    %5794 = vmatpush.xpose.msra.mxu0 0.0
    %5795 = vmatpush.xpose.msra.mxu0 0.0
    %5796 = vmatpush.xpose.msra.mxu0 0.0
    %5797 = vmatpush.xpose.msra.mxu0 0.0
    %5798 = vmatpush.xpose.msra.mxu0 0.0
    %5799 = vmatpush.xpose.msra.mxu0 0.0
    %5800 = vmatpush.xpose.msra.mxu0 0.0
    %5801 = vmatpush.xpose.msra.mxu0 0.0
    %5802 = vmatpush.xpose.msra.mxu0 0.0
    %5803 = vmatpush.xpose.msra.mxu0 0.0
    %5804 = vmatpush.xpose.msra.mxu0 %v5787
    %5805 = vmatmul.f32.gmra.mxu0 %v5785
    %v5806 = vpop.f32.mrf.mxu0
    %v5807 = vadd.f32 0.0, %v5806
    %5808 = vdwg.mxu0
    %v5809 = vmul.f32 %v5807, 0.17677669
    %v5810 = vsel %vm994, %v5809, -inf
    %5811 = vmax.xlane.f32.xlu0 %v5810
    %v5812 = vpop.xlane.xlu0 %5811
    %v5813 = vsub.f32 %v5809, %v5812
    %v5814 = vmul.f32 %v5813, 1.442695
    %v5815 = vpow.pop %v5814
    %v5816 = vsel %vm994, %v5815, 0.0
    %5817 = vadd.xlane.f32.xlu0 %v5816
    %v5818 = vpop.xlane.xlu0 %5817
    %v5819 = vrcp.pop %v5818
    %v5820 = vmul.f32 %v5815, %v5819
    %5821 = vrot.lane.b32.xlu0 %v5350, 64
    %v5822 = vpop.permute.xlu0 %5821
    %v5825 = vsel %vm994, %v5820, 0
    %5827 = vmatpush.msra.mxu0 0.0
    %5828 = vmatpush.msra.mxu0 0.0
    %5829 = vmatpush.msra.mxu0 0.0
    %5830 = vmatpush.msra.mxu0 0.0
    %5831 = vmatpush.msra.mxu0 0.0
    %5832 = vmatpush.msra.mxu0 0.0
    %5833 = vmatpush.msra.mxu0 0.0
    %5834 = vmatpush.msra.mxu0 0.0
    %5835 = vmatpush.msra.mxu0 0.0
    %5836 = vmatpush.msra.mxu0 0.0
    %5837 = vmatpush.msra.mxu0 0.0
    %5838 = vmatpush.msra.mxu0 0.0
    %5839 = vmatpush.msra.mxu0 0.0
    %5840 = vmatpush.msra.mxu0 0.0
    %5841 = vmatpush.msra.mxu0 0.0
    %5842 = vmatpush.msra.mxu0 %v5822
    %5843 = vmatmul.f32.gmra.mxu0 %v5825
    %v5844 = vpop.f32.mrf.mxu0
    %v5845 = vadd.f32 0.0, %v5844
    %5846 = vdwg.mxu0
    %5848 = vrot.lane.b32.xlu0 %v5845, 64
    %v5849 = vpop.permute.xlu0 %5848
    %5851 = vst.msk [vmem:[#allocation2 + $0x8] sm:$0xff] %vm1175, %v5849
    %5852 = vrot.lane.b32.xlu0 %v5264, 32
    %v5853 = vpop.permute.xlu0 %5852
    %5854 = vrot.lane.b32.xlu0 %v5327, 32
    %v5855 = vpop.permute.xlu0 %5854
    %v5856 = vsel %vm964, %v5853, 0
    %v5858 = vsel %vm964, %v5855, 0
    %5860 = vmatpush.xpose.msra.mxu0 0.0
    %5861 = vmatpush.xpose.msra.mxu0 0.0
    %5862 = vmatpush.xpose.msra.mxu0 0.0
    %5863 = vmatpush.xpose.msra.mxu0 0.0
    %5864 = vmatpush.xpose.msra.mxu0 0.0
    %5865 = vmatpush.xpose.msra.mxu0 0.0
    %5866 = vmatpush.xpose.msra.mxu0 0.0
    %5867 = vmatpush.xpose.msra.mxu0 0.0
    %5868 = vmatpush.xpose.msra.mxu0 0.0
    %5869 = vmatpush.xpose.msra.mxu0 0.0
    %5870 = vmatpush.xpose.msra.mxu0 0.0
    %5871 = vmatpush.xpose.msra.mxu0 0.0
    %5872 = vmatpush.xpose.msra.mxu0 0.0
    %5873 = vmatpush.xpose.msra.mxu0 0.0
    %5874 = vmatpush.xpose.msra.mxu0 0.0
    %5875 = vmatpush.xpose.msra.mxu0 %v5858
    %5876 = vmatmul.f32.gmra.mxu0 %v5856
    %v5877 = vpop.f32.mrf.mxu0
    %v5878 = vadd.f32 0.0, %v5877
    %5879 = vdwg.mxu0
    %v5880 = vmul.f32 %v5878, 0.17677669
    %v5881 = vsel %vm994, %v5880, -inf
    %5882 = vmax.xlane.f32.xlu0 %v5881
    %v5883 = vpop.xlane.xlu0 %5882
    %v5884 = vsub.f32 %v5880, %v5883
    %v5885 = vmul.f32 %v5884, 1.442695
    %v5886 = vpow.pop %v5885
    %v5887 = vsel %vm994, %v5886, 0.0
    %5888 = vadd.xlane.f32.xlu0 %v5887
    %v5889 = vpop.xlane.xlu0 %5888
    %v5890 = vrcp.pop %v5889
    %v5891 = vmul.f32 %v5886, %v5890
    %5892 = vrot.lane.b32.xlu0 %v5350, 32
    %v5893 = vpop.permute.xlu0 %5892
    %v5896 = vsel %vm994, %v5891, 0
    %5898 = vmatpush.msra.mxu0 0.0
    %5899 = vmatpush.msra.mxu0 0.0
    %5900 = vmatpush.msra.mxu0 0.0
    %5901 = vmatpush.msra.mxu0 0.0
    %5902 = vmatpush.msra.mxu0 0.0
    %5903 = vmatpush.msra.mxu0 0.0
    %5904 = vmatpush.msra.mxu0 0.0
    %5905 = vmatpush.msra.mxu0 0.0
    %5906 = vmatpush.msra.mxu0 0.0
    %5907 = vmatpush.msra.mxu0 0.0
    %5908 = vmatpush.msra.mxu0 0.0
    %5909 = vmatpush.msra.mxu0 0.0
    %5910 = vmatpush.msra.mxu0 0.0
    %5911 = vmatpush.msra.mxu0 0.0
    %5912 = vmatpush.msra.mxu0 0.0
    %5913 = vmatpush.msra.mxu0 %v5893
    %5914 = vmatmul.f32.gmra.mxu0 %v5896
    %v5915 = vpop.f32.mrf.mxu0
    %v5916 = vadd.f32 0.0, %v5915
    %5917 = vdwg.mxu0
    %5919 = vrot.lane.b32.xlu0 %v5916, 96
    %v5920 = vpop.permute.xlu0 %5919
    %5922 = vst.msk [vmem:[#allocation2 + $0x8] sm:$0xff] %vm1248, %v5920
    %v5923 = vld [vmem:[#allocation2] sm:$0xff]
    %v5924 = vld [vmem:[#allocation2 + $0x8] sm:$0xff]
    %v5926 = vperm.slane %v5370, 0
    %5928 = vmatpush.msra.mxu0 %v5368
    %5929 = vmatpush.msra.mxu0 %v5367
    %5930 = vmatpush.msra.mxu0 %v5366
    %5931 = vmatpush.msra.mxu0 %v5365
    %5932 = vmatpush.msra.mxu0 %v5364
    %5933 = vmatpush.msra.mxu0 %v5363
    %5934 = vmatpush.msra.mxu0 %v5362
    %5935 = vmatpush.msra.mxu0 %v5361
    %5936 = vmatpush.msra.mxu0 %v5360
    %5937 = vmatpush.msra.mxu0 %v5359
    %5938 = vmatpush.msra.mxu0 %v5358
    %5939 = vmatpush.msra.mxu0 %v5357
    %5940 = vmatpush.msra.mxu0 %v5356
    %5941 = vmatpush.msra.mxu0 %v5355
    %5942 = vmatpush.msra.mxu0 %v5354
    %5943 = vmatpush.msra.mxu0 %v5353
    %5944 = vmatmul.f32.gmra.mxu0 %v5923
    %v5945 = vpop.f32.mrf.mxu0
    %v5946 = vadd.f32 %v5926, %v5945
    %5947 = vmatmul.f32.gmra.mxu0 %v5924
    %v5948 = vpop.f32.mrf.mxu0
    %v5949 = vadd.f32 %v5926, %v5948
    %5950 = vdwg.mxu0
    %v5951 = vadd.f32 %v5219, %v5946
    %v5952 = vadd.f32 %v5220, %v5949
    %s5953 = scalar_lea.vmem [#allocation48], 1
    %v5954 = vld [vmem:[%s5953] sm:$0x1]
    %s5955 = scalar_lea.vmem [#allocation50], 1
    %v5956 = vld [vmem:[%s5955] sm:$0x1]
    %5957 = vadd.xlane.f32.xlu0 %v5951
    %v5958 = vpop.xlane.xlu0 %5957
    %5959 = vadd.xlane.f32.xlu0 %v5952
    %v5960 = vpop.xlane.xlu0 %5959
    %v5961 = vmul.f32 %v5958, %v1573
    %v5962 = vmul.f32 %v5960, %v1573
    %v5963 = vsub.f32 %v5951, %v5961
    %v5964 = vsub.f32 %v5952, %v5962
    %v5965 = vmul.f32 %v5963, %v5963
    %v5966 = vmul.f32 %v5964, %v5964
    %5967 = vadd.xlane.f32.xlu0 %v5965
    %v5968 = vpop.xlane.xlu0 %5967
    %5969 = vadd.xlane.f32.xlu0 %v5966
    %v5970 = vpop.xlane.xlu0 %5969
    %v5971 = vmul.f32 %v5968, %v1573
    %v5972 = vmul.f32 %v5970, %v1573
    %v5973 = vadd.f32 %v5971, 1e-05
    %v5974 = vadd.f32 %v5972, 1e-05
    %v5975 = vrsqrt.pop %v5973
    %v5976 = vmul.f32 %v5975, %v5973
    %v5977 = vmul.f32 %v5976, %v5975
    %v5978 = vmul.f32 0.5, %v5977
    %v5979 = vsub.f32 1.5, %v5978
    %v5980 = vmul.f32 %v5975, %v5979
    %vm5981 = vweird.f32 %v5973
    %vm5982 = vweird.f32 %v5975
    %vm5983 = vmor %vm5981, %vm5982
    %v5984 = vsel %vm5983, %v5975, %v5980
    %v5985 = vrsqrt.pop %v5974
    %v5986 = vmul.f32 %v5985, %v5974
    %v5987 = vmul.f32 %v5986, %v5985
    %v5988 = vmul.f32 0.5, %v5987
    %v5989 = vsub.f32 1.5, %v5988
    %v5990 = vmul.f32 %v5985, %v5989
    %vm5991 = vweird.f32 %v5974
    %vm5992 = vweird.f32 %v5985
    %vm5993 = vmor %vm5991, %vm5992
    %v5994 = vsel %vm5993, %v5985, %v5990
    %v5995 = vmul.f32 %v5963, %v5984
    %v5996 = vmul.f32 %v5964, %v5994
    %v5998 = vperm.slane %v5954, 0
    %v6000 = vmul.f32 %v5995, %v5998
    %v6001 = vmul.f32 %v5996, %v5998
    %v6003 = vperm.slane %v5956, 0
    %v6005 = vadd.f32 %v6000, %v6003
    %v6006 = vadd.f32 %v6001, %v6003
    %s6007 = scalar_lea.vmem [#allocation51], 128
    %v6008 = vld [vmem:[%s6007] sm:$0xff]
    %v6009 = vld [vmem:[%s6007 + $0x8] sm:$0xff]
    %v6010 = vld [vmem:[%s6007 + $0x10] sm:$0xff]
    %v6011 = vld [vmem:[%s6007 + $0x18] sm:$0xff]
    %v6012 = vld [vmem:[%s6007 + $0x20] sm:$0xff]
    %v6013 = vld [vmem:[%s6007 + $0x28] sm:$0xff]
    %v6014 = vld [vmem:[%s6007 + $0x30] sm:$0xff]
    %v6015 = vld [vmem:[%s6007 + $0x38] sm:$0xff]
    %v6016 = vld [vmem:[%s6007 + $0x40] sm:$0xff]
    %v6017 = vld [vmem:[%s6007 + $0x48] sm:$0xff]
    %v6018 = vld [vmem:[%s6007 + $0x50] sm:$0xff]
    %v6019 = vld [vmem:[%s6007 + $0x58] sm:$0xff]
    %v6020 = vld [vmem:[%s6007 + $0x60] sm:$0xff]
    %v6021 = vld [vmem:[%s6007 + $0x68] sm:$0xff]
    %v6022 = vld [vmem:[%s6007 + $0x70] sm:$0xff]
    %v6023 = vld [vmem:[%s6007 + $0x78] sm:$0xff]
    %s6024 = scalar_lea.vmem [#allocation53], 1
    %v6025 = vld [vmem:[%s6024] sm:$0x1]
    %v6027 = vperm.slane %v6025, 0
    %6029 = vmatpush.msra.mxu0 %v6023
    %6030 = vmatpush.msra.mxu0 %v6022
    %6031 = vmatpush.msra.mxu0 %v6021
    %6032 = vmatpush.msra.mxu0 %v6020
    %6033 = vmatpush.msra.mxu0 %v6019
    %6034 = vmatpush.msra.mxu0 %v6018
    %6035 = vmatpush.msra.mxu0 %v6017
    %6036 = vmatpush.msra.mxu0 %v6016
    %6037 = vmatpush.msra.mxu0 %v6015
    %6038 = vmatpush.msra.mxu0 %v6014
    %6039 = vmatpush.msra.mxu0 %v6013
    %6040 = vmatpush.msra.mxu0 %v6012
    %6041 = vmatpush.msra.mxu0 %v6011
    %6042 = vmatpush.msra.mxu0 %v6010
    %6043 = vmatpush.msra.mxu0 %v6009
    %6044 = vmatpush.msra.mxu0 %v6008
    %6045 = vmatmul.f32.gmra.mxu0 %v6005
    %v6046 = vpop.f32.mrf.mxu0
    %v6047 = vadd.f32 %v6027, %v6046
    %6048 = vmatmul.f32.gmra.mxu0 %v6006
    %v6049 = vpop.f32.mrf.mxu0
    %v6050 = vadd.f32 %v6027, %v6049
    %6051 = vdwg.mxu0
    %v6052 = vmax.f32 %v6047, 0.0
    %v6053 = vmax.f32 %v6050, 0.0
    %s6054 = scalar_lea.vmem [#allocation54], 128
    %v6055 = vld [vmem:[%s6054] sm:$0xff]
    %v6056 = vld [vmem:[%s6054 + $0x8] sm:$0xff]
    %v6057 = vld [vmem:[%s6054 + $0x10] sm:$0xff]
    %v6058 = vld [vmem:[%s6054 + $0x18] sm:$0xff]
    %v6059 = vld [vmem:[%s6054 + $0x20] sm:$0xff]
    %v6060 = vld [vmem:[%s6054 + $0x28] sm:$0xff]
    %v6061 = vld [vmem:[%s6054 + $0x30] sm:$0xff]
    %v6062 = vld [vmem:[%s6054 + $0x38] sm:$0xff]
    %v6063 = vld [vmem:[%s6054 + $0x40] sm:$0xff]
    %v6064 = vld [vmem:[%s6054 + $0x48] sm:$0xff]
    %v6065 = vld [vmem:[%s6054 + $0x50] sm:$0xff]
    %v6066 = vld [vmem:[%s6054 + $0x58] sm:$0xff]
    %v6067 = vld [vmem:[%s6054 + $0x60] sm:$0xff]
    %v6068 = vld [vmem:[%s6054 + $0x68] sm:$0xff]
    %v6069 = vld [vmem:[%s6054 + $0x70] sm:$0xff]
    %v6070 = vld [vmem:[%s6054 + $0x78] sm:$0xff]
    %s6071 = scalar_lea.vmem [#allocation56], 1
    %v6072 = vld [vmem:[%s6071] sm:$0x1]
    %v6074 = vperm.slane %v6072, 0
    %6076 = vmatpush.msra.mxu0 %v6070
    %6077 = vmatpush.msra.mxu0 %v6069
    %6078 = vmatpush.msra.mxu0 %v6068
    %6079 = vmatpush.msra.mxu0 %v6067
    %6080 = vmatpush.msra.mxu0 %v6066
    %6081 = vmatpush.msra.mxu0 %v6065
    %6082 = vmatpush.msra.mxu0 %v6064
    %6083 = vmatpush.msra.mxu0 %v6063
    %6084 = vmatpush.msra.mxu0 %v6062
    %6085 = vmatpush.msra.mxu0 %v6061
    %6086 = vmatpush.msra.mxu0 %v6060
    %6087 = vmatpush.msra.mxu0 %v6059
    %6088 = vmatpush.msra.mxu0 %v6058
    %6089 = vmatpush.msra.mxu0 %v6057
    %6090 = vmatpush.msra.mxu0 %v6056
    %6091 = vmatpush.msra.mxu0 %v6055
    %6092 = vmatmul.f32.gmra.mxu0 %v6052
    %v6093 = vpop.f32.mrf.mxu0
    %v6094 = vadd.f32 %v6074, %v6093
    %6095 = vmatmul.f32.gmra.mxu0 %v6053
    %v6096 = vpop.f32.mrf.mxu0
    %v6097 = vadd.f32 %v6074, %v6096
    %6098 = vdwg.mxu0
    %v6099 = vadd.f32 %v6005, %v6094
    %v6100 = vadd.f32 %v6006, %v6097
    %s6101 = scalar_lea.vmem [#allocation57], 1
    %v6102 = vld [vmem:[%s6101] sm:$0x1]
    %s6103 = scalar_lea.vmem [#allocation59], 1
    %v6104 = vld [vmem:[%s6103] sm:$0x1]
    %6105 = vadd.xlane.f32.xlu0 %v6099
    %v6106 = vpop.xlane.xlu0 %6105
    %6107 = vadd.xlane.f32.xlu0 %v6100
    %v6108 = vpop.xlane.xlu0 %6107
    %v6109 = vmul.f32 %v6106, %v1573
    %v6110 = vmul.f32 %v6108, %v1573
    %v6111 = vsub.f32 %v6099, %v6109
    %v6112 = vsub.f32 %v6100, %v6110
    %v6113 = vmul.f32 %v6111, %v6111
    %v6114 = vmul.f32 %v6112, %v6112
    %6115 = vadd.xlane.f32.xlu0 %v6113
    %v6116 = vpop.xlane.xlu0 %6115
    %6117 = vadd.xlane.f32.xlu0 %v6114
    %v6118 = vpop.xlane.xlu0 %6117
    %v6119 = vmul.f32 %v6116, %v1573
    %v6120 = vmul.f32 %v6118, %v1573
    %v6121 = vadd.f32 %v6119, 1e-05
    %v6122 = vadd.f32 %v6120, 1e-05
    %v6123 = vrsqrt.pop %v6121
    %v6124 = vmul.f32 %v6123, %v6121
    %v6125 = vmul.f32 %v6124, %v6123
    %v6126 = vmul.f32 0.5, %v6125
    %v6127 = vsub.f32 1.5, %v6126
    %v6128 = vmul.f32 %v6123, %v6127
    %vm6129 = vweird.f32 %v6121
    %vm6130 = vweird.f32 %v6123
    %vm6131 = vmor %vm6129, %vm6130
    %v6132 = vsel %vm6131, %v6123, %v6128
    %v6133 = vrsqrt.pop %v6122
    %v6134 = vmul.f32 %v6133, %v6122
    %v6135 = vmul.f32 %v6134, %v6133
    %v6136 = vmul.f32 0.5, %v6135
    %v6137 = vsub.f32 1.5, %v6136
    %v6138 = vmul.f32 %v6133, %v6137
    %vm6139 = vweird.f32 %v6122
    %vm6140 = vweird.f32 %v6133
    %vm6141 = vmor %vm6139, %vm6140
    %v6142 = vsel %vm6141, %v6133, %v6138
    %v6143 = vmul.f32 %v6111, %v6132
    %v6144 = vmul.f32 %v6112, %v6142
    %v6146 = vperm.slane %v6102, 0
    %v6148 = vmul.f32 %v6143, %v6146
    %v6149 = vmul.f32 %v6144, %v6146
    %v6151 = vperm.slane %v6104, 0
    %v6153 = vadd.f32 %v6148, %v6151
    %v6154 = vadd.f32 %v6149, %v6151
    %v6155 = vld [vmem:[#allocation60] sm:$0xff]
    %v6156 = vld [vmem:[#allocation60 + $0x8] sm:$0xff]
    %v6157 = vld [vmem:[#allocation60 + $0x10] sm:$0xff]
    %v6158 = vld [vmem:[#allocation60 + $0x18] sm:$0xff]
    %v6159 = vld [vmem:[#allocation60 + $0x20] sm:$0xff]
    %v6160 = vld [vmem:[#allocation60 + $0x28] sm:$0xff]
    %v6161 = vld [vmem:[#allocation60 + $0x30] sm:$0xff]
    %v6162 = vld [vmem:[#allocation60 + $0x38] sm:$0xff]
    %v6163 = vld [vmem:[#allocation60 + $0x40] sm:$0xff]
    %v6164 = vld [vmem:[#allocation60 + $0x48] sm:$0xff]
    %v6165 = vld [vmem:[#allocation60 + $0x50] sm:$0xff]
    %v6166 = vld [vmem:[#allocation60 + $0x58] sm:$0xff]
    %v6167 = vld [vmem:[#allocation60 + $0x60] sm:$0xff]
    %v6168 = vld [vmem:[#allocation60 + $0x68] sm:$0xff]
    %v6169 = vld [vmem:[#allocation60 + $0x70] sm:$0xff]
    %v6170 = vld [vmem:[#allocation60 + $0x78] sm:$0xff]
    %v6171 = vld [vmem:[#allocation60 + $0x80] sm:$0xff]
    %v6172 = vld [vmem:[#allocation60 + $0x88] sm:$0xff]
    %v6173 = vld [vmem:[#allocation60 + $0x90] sm:$0xff]
    %v6174 = vld [vmem:[#allocation60 + $0x98] sm:$0xff]
    %v6175 = vld [vmem:[#allocation60 + $0xa0] sm:$0xff]
    %v6176 = vld [vmem:[#allocation60 + $0xa8] sm:$0xff]
    %v6177 = vld [vmem:[#allocation60 + $0xb0] sm:$0xff]
    %v6178 = vld [vmem:[#allocation60 + $0xb8] sm:$0xff]
    %v6179 = vld [vmem:[#allocation60 + $0xc0] sm:$0xff]
    %v6180 = vld [vmem:[#allocation60 + $0xc8] sm:$0xff]
    %v6181 = vld [vmem:[#allocation60 + $0xd0] sm:$0xff]
    %v6182 = vld [vmem:[#allocation60 + $0xd8] sm:$0xff]
    %v6183 = vld [vmem:[#allocation60 + $0xe0] sm:$0xff]
    %v6184 = vld [vmem:[#allocation60 + $0xe8] sm:$0xff]
    %v6185 = vld [vmem:[#allocation60 + $0xf0] sm:$0xff]
    %v6186 = vld [vmem:[#allocation60 + $0xf8] sm:$0xff]
    %v6187 = vld [vmem:[#allocation60 + $0x100] sm:$0xff]
    %v6188 = vld [vmem:[#allocation60 + $0x108] sm:$0xff]
    %v6189 = vld [vmem:[#allocation60 + $0x110] sm:$0xff]
    %v6190 = vld [vmem:[#allocation60 + $0x118] sm:$0xff]
    %v6191 = vld [vmem:[#allocation60 + $0x120] sm:$0xff]
    %v6192 = vld [vmem:[#allocation60 + $0x128] sm:$0xff]
    %v6193 = vld [vmem:[#allocation60 + $0x130] sm:$0xff]
    %v6194 = vld [vmem:[#allocation60 + $0x138] sm:$0xff]
    %v6195 = vld [vmem:[#allocation60 + $0x140] sm:$0xff]
    %v6196 = vld [vmem:[#allocation60 + $0x148] sm:$0xff]
    %v6197 = vld [vmem:[#allocation60 + $0x150] sm:$0xff]
    %v6198 = vld [vmem:[#allocation60 + $0x158] sm:$0xff]
    %v6199 = vld [vmem:[#allocation60 + $0x160] sm:$0xff]
    %v6200 = vld [vmem:[#allocation60 + $0x168] sm:$0xff]
    %v6201 = vld [vmem:[#allocation60 + $0x170] sm:$0xff]
    %v6202 = vld [vmem:[#allocation60 + $0x178] sm:$0xff]
    %v6203 = vld [vmem:[#allocation60 + $0x180] sm:$0xff]
    %v6204 = vld [vmem:[#allocation60 + $0x188] sm:$0xff]
    %v6205 = vld [vmem:[#allocation60 + $0x190] sm:$0xff]
    %v6206 = vld [vmem:[#allocation60 + $0x198] sm:$0xff]
    %v6207 = vld [vmem:[#allocation60 + $0x1a0] sm:$0xff]
    %v6208 = vld [vmem:[#allocation60 + $0x1a8] sm:$0xff]
    %v6209 = vld [vmem:[#allocation60 + $0x1b0] sm:$0xff]
    %v6210 = vld [vmem:[#allocation60 + $0x1b8] sm:$0xff]
    %v6211 = vld [vmem:[#allocation60 + $0x1c0] sm:$0xff]
    %v6212 = vld [vmem:[#allocation60 + $0x1c8] sm:$0xff]
    %v6213 = vld [vmem:[#allocation60 + $0x1d0] sm:$0xff]
    %v6214 = vld [vmem:[#allocation60 + $0x1d8] sm:$0xff]
    %v6215 = vld [vmem:[#allocation60 + $0x1e0] sm:$0xff]
    %v6216 = vld [vmem:[#allocation60 + $0x1e8] sm:$0xff]
    %v6217 = vld [vmem:[#allocation60 + $0x1f0] sm:$0xff]
    %v6218 = vld [vmem:[#allocation60 + $0x1f8] sm:$0xff]
    %v6219 = vld [vmem:[#allocation60 + $0x200] sm:$0xff]
    %v6220 = vld [vmem:[#allocation60 + $0x208] sm:$0xff]
    %v6221 = vld [vmem:[#allocation60 + $0x210] sm:$0xff]
    %v6222 = vld [vmem:[#allocation60 + $0x218] sm:$0xff]
    %v6223 = vld [vmem:[#allocation60 + $0x220] sm:$0xff]
    %v6224 = vld [vmem:[#allocation60 + $0x228] sm:$0xff]
    %v6225 = vld [vmem:[#allocation60 + $0x230] sm:$0xff]
    %v6226 = vld [vmem:[#allocation60 + $0x238] sm:$0xff]
    %v6227 = vld [vmem:[#allocation60 + $0x240] sm:$0xff]
    %v6228 = vld [vmem:[#allocation60 + $0x248] sm:$0xff]
    %v6229 = vld [vmem:[#allocation60 + $0x250] sm:$0xff]
    %v6230 = vld [vmem:[#allocation60 + $0x258] sm:$0xff]
    %v6231 = vld [vmem:[#allocation60 + $0x260] sm:$0xff]
    %v6232 = vld [vmem:[#allocation60 + $0x268] sm:$0xff]
    %v6233 = vld [vmem:[#allocation60 + $0x270] sm:$0xff]
    %v6234 = vld [vmem:[#allocation60 + $0x278] sm:$0xff]
    %v6235 = vld [vmem:[#allocation60 + $0x280] sm:$0xff]
    %v6236 = vld [vmem:[#allocation60 + $0x288] sm:$0xff]
    %v6237 = vld [vmem:[#allocation60 + $0x290] sm:$0xff]
    %v6238 = vld [vmem:[#allocation60 + $0x298] sm:$0xff]
    %v6239 = vld [vmem:[#allocation60 + $0x2a0] sm:$0xff]
    %v6240 = vld [vmem:[#allocation60 + $0x2a8] sm:$0xff]
    %v6241 = vld [vmem:[#allocation60 + $0x2b0] sm:$0xff]
    %v6242 = vld [vmem:[#allocation60 + $0x2b8] sm:$0xff]
    %v6243 = vld [vmem:[#allocation60 + $0x2c0] sm:$0xff]
    %v6244 = vld [vmem:[#allocation60 + $0x2c8] sm:$0xff]
    %v6245 = vld [vmem:[#allocation60 + $0x2d0] sm:$0xff]
    %v6246 = vld [vmem:[#allocation60 + $0x2d8] sm:$0xff]
    %v6247 = vld [vmem:[#allocation60 + $0x2e0] sm:$0xff]
    %v6248 = vld [vmem:[#allocation60 + $0x2e8] sm:$0xff]
    %v6249 = vld [vmem:[#allocation60 + $0x2f0] sm:$0xff]
    %v6250 = vld [vmem:[#allocation60 + $0x2f8] sm:$0xff]
    %v6251 = vld [vmem:[#allocation62] sm:$0x3f]
    %v6253 = vperm.slane %v6251, 0
    %v6254 = vperm.slane %v6251, 1
    %v6255 = vperm.slane %v6251, 2
    %v6256 = vperm.slane %v6251, 3
    %v6257 = vperm.slane %v6251, 4
    %v6258 = vperm.slane %v6251, 5
    %6265 = vmatpush.msra.mxu0 %v6245
    %6266 = vmatpush.msra.mxu0 %v6239
    %6267 = vmatpush.msra.mxu0 %v6233
    %6268 = vmatpush.msra.mxu0 %v6227
    %6269 = vmatpush.msra.mxu0 %v6221
    %6270 = vmatpush.msra.mxu0 %v6215
    %6271 = vmatpush.msra.mxu0 %v6209
    %6272 = vmatpush.msra.mxu0 %v6203
    %6273 = vmatpush.msra.mxu0 %v6197
    %6274 = vmatpush.msra.mxu0 %v6191
    %6275 = vmatpush.msra.mxu0 %v6185
    %6276 = vmatpush.msra.mxu0 %v6179
    %6277 = vmatpush.msra.mxu0 %v6173
    %6278 = vmatpush.msra.mxu0 %v6167
    %6279 = vmatpush.msra.mxu0 %v6161
    %6280 = vmatpush.msra.mxu0 %v6155
    %6281 = vmatmul.f32.gmra.mxu0 %v6153
    %v6282 = vpop.f32.mrf.mxu0
    %v6283 = vadd.f32 %v6253, %v6282
    %6284 = vmatmul.f32.gmra.mxu0 %v6154
    %v6285 = vpop.f32.mrf.mxu0
    %v6286 = vadd.f32 %v6253, %v6285
    %6287 = vdwg.mxu0
    %6288 = vmatpush.msra.mxu0 %v6246
    %6289 = vmatpush.msra.mxu0 %v6240
    %6290 = vmatpush.msra.mxu0 %v6234
    %6291 = vmatpush.msra.mxu0 %v6228
    %6292 = vmatpush.msra.mxu0 %v6222
    %6293 = vmatpush.msra.mxu0 %v6216
    %6294 = vmatpush.msra.mxu0 %v6210
    %6295 = vmatpush.msra.mxu0 %v6204
    %6296 = vmatpush.msra.mxu0 %v6198
    %6297 = vmatpush.msra.mxu0 %v6192
    %6298 = vmatpush.msra.mxu0 %v6186
    %6299 = vmatpush.msra.mxu0 %v6180
    %6300 = vmatpush.msra.mxu0 %v6174
    %6301 = vmatpush.msra.mxu0 %v6168
    %6302 = vmatpush.msra.mxu0 %v6162
    %6303 = vmatpush.msra.mxu0 %v6156
    %6304 = vmatmul.f32.gmra.mxu0 %v6153
    %v6305 = vpop.f32.mrf.mxu0
    %v6306 = vadd.f32 %v6254, %v6305
    %6307 = vmatmul.f32.gmra.mxu0 %v6154
    %v6308 = vpop.f32.mrf.mxu0
    %v6309 = vadd.f32 %v6254, %v6308
    %6310 = vdwg.mxu0
    %6311 = vmatpush.msra.mxu0 %v6247
    %6312 = vmatpush.msra.mxu0 %v6241
    %6313 = vmatpush.msra.mxu0 %v6235
    %6314 = vmatpush.msra.mxu0 %v6229
    %6315 = vmatpush.msra.mxu0 %v6223
    %6316 = vmatpush.msra.mxu0 %v6217
    %6317 = vmatpush.msra.mxu0 %v6211
    %6318 = vmatpush.msra.mxu0 %v6205
    %6319 = vmatpush.msra.mxu0 %v6199
    %6320 = vmatpush.msra.mxu0 %v6193
    %6321 = vmatpush.msra.mxu0 %v6187
    %6322 = vmatpush.msra.mxu0 %v6181
    %6323 = vmatpush.msra.mxu0 %v6175
    %6324 = vmatpush.msra.mxu0 %v6169
    %6325 = vmatpush.msra.mxu0 %v6163
    %6326 = vmatpush.msra.mxu0 %v6157
    %6327 = vmatmul.f32.gmra.mxu0 %v6153
    %v6328 = vpop.f32.mrf.mxu0
    %v6329 = vadd.f32 %v6255, %v6328
    %6330 = vmatmul.f32.gmra.mxu0 %v6154
    %v6331 = vpop.f32.mrf.mxu0
    %v6332 = vadd.f32 %v6255, %v6331
    %6333 = vdwg.mxu0
    %6334 = vmatpush.msra.mxu0 %v6248
    %6335 = vmatpush.msra.mxu0 %v6242
    %6336 = vmatpush.msra.mxu0 %v6236
    %6337 = vmatpush.msra.mxu0 %v6230
    %6338 = vmatpush.msra.mxu0 %v6224
    %6339 = vmatpush.msra.mxu0 %v6218
    %6340 = vmatpush.msra.mxu0 %v6212
    %6341 = vmatpush.msra.mxu0 %v6206
    %6342 = vmatpush.msra.mxu0 %v6200
    %6343 = vmatpush.msra.mxu0 %v6194
    %6344 = vmatpush.msra.mxu0 %v6188
    %6345 = vmatpush.msra.mxu0 %v6182
    %6346 = vmatpush.msra.mxu0 %v6176
    %6347 = vmatpush.msra.mxu0 %v6170
    %6348 = vmatpush.msra.mxu0 %v6164
    %6349 = vmatpush.msra.mxu0 %v6158
    %6350 = vmatmul.f32.gmra.mxu0 %v6153
    %v6351 = vpop.f32.mrf.mxu0
    %v6352 = vadd.f32 %v6256, %v6351
    %6353 = vmatmul.f32.gmra.mxu0 %v6154
    %v6354 = vpop.f32.mrf.mxu0
    %v6355 = vadd.f32 %v6256, %v6354
    %6356 = vdwg.mxu0
    %6357 = vmatpush.msra.mxu0 %v6249
    %6358 = vmatpush.msra.mxu0 %v6243
    %6359 = vmatpush.msra.mxu0 %v6237
    %6360 = vmatpush.msra.mxu0 %v6231
    %6361 = vmatpush.msra.mxu0 %v6225
    %6362 = vmatpush.msra.mxu0 %v6219
    %6363 = vmatpush.msra.mxu0 %v6213
    %6364 = vmatpush.msra.mxu0 %v6207
    %6365 = vmatpush.msra.mxu0 %v6201
    %6366 = vmatpush.msra.mxu0 %v6195
    %6367 = vmatpush.msra.mxu0 %v6189
    %6368 = vmatpush.msra.mxu0 %v6183
    %6369 = vmatpush.msra.mxu0 %v6177
    %6370 = vmatpush.msra.mxu0 %v6171
    %6371 = vmatpush.msra.mxu0 %v6165
    %6372 = vmatpush.msra.mxu0 %v6159
    %6373 = vmatmul.f32.gmra.mxu0 %v6153
    %v6374 = vpop.f32.mrf.mxu0
    %v6375 = vadd.f32 %v6257, %v6374
    %6376 = vmatmul.f32.gmra.mxu0 %v6154
    %v6377 = vpop.f32.mrf.mxu0
    %v6378 = vadd.f32 %v6257, %v6377
    %6379 = vdwg.mxu0
    %6380 = vmatpush.msra.mxu0 %v6250
    %6381 = vmatpush.msra.mxu0 %v6244
    %6382 = vmatpush.msra.mxu0 %v6238
    %6383 = vmatpush.msra.mxu0 %v6232
    %6384 = vmatpush.msra.mxu0 %v6226
    %6385 = vmatpush.msra.mxu0 %v6220
    %6386 = vmatpush.msra.mxu0 %v6214
    %6387 = vmatpush.msra.mxu0 %v6208
    %6388 = vmatpush.msra.mxu0 %v6202
    %6389 = vmatpush.msra.mxu0 %v6196
    %6390 = vmatpush.msra.mxu0 %v6190
    %6391 = vmatpush.msra.mxu0 %v6184
    %6392 = vmatpush.msra.mxu0 %v6178
    %6393 = vmatpush.msra.mxu0 %v6172
    %6394 = vmatpush.msra.mxu0 %v6166
    %6395 = vmatpush.msra.mxu0 %v6160
    %6396 = vmatmul.f32.gmra.mxu0 %v6153
    %v6397 = vpop.f32.mrf.mxu0
    %v6398 = vadd.f32 %v6258, %v6397
    %6399 = vmatmul.f32.gmra.mxu0 %v6154
    %v6400 = vpop.f32.mrf.mxu0
    %v6401 = vadd.f32 %v6258, %v6400
    %6402 = vdwg.mxu0
    %6403 = vst [vmem:[#allocation63] sm:$0xff] %v6283
    %6404 = vst [vmem:[#allocation63 + $0x8] sm:$0xff] %v6306
    %6405 = vst [vmem:[#allocation63 + $0x10] sm:$0xff] %v6329
    %6406 = vst [vmem:[#allocation63 + $0x18] sm:$0xff] %v6352
    %6407 = vst [vmem:[#allocation63 + $0x20] sm:$0xff] %v6375
    %6408 = vst [vmem:[#allocation63 + $0x28] sm:$0xff] %v6398
    %6409 = vst [vmem:[#allocation63 + $0x30] sm:$0xff] %v6286
    %6410 = vst [vmem:[#allocation63 + $0x38] sm:$0xff] %v6309
    %6411 = vst [vmem:[#allocation63 + $0x40] sm:$0xff] %v6332
    %6412 = vst [vmem:[#allocation63 + $0x48] sm:$0xff] %v6355
    %6413 = vst [vmem:[#allocation63 + $0x50] sm:$0xff] %v6378
    %6414 = vst [vmem:[#allocation63 + $0x58] sm:$0xff] %v6401
    // Predicated region
    $region322: #{_lambda_.1} parent=1 // pred_check
      _
    $region323: #{_lambda_.1} parent=1 // pred_check_branch
      %6416 = sbr.rel (0) target = $region325
    $region324: #{_lambda_.1} parent=1 // pred_region
      %6418 = vsyncadd [#allocation5], 0
      %s6419 = sshll.u32 [#allocation63], 4
      %s6420 = int_to_ptr.vmem [resolvable:$true] %s6419
      %s6421 = sshll.u32 %s83, 4
      %s6422 = int_to_ptr.hbm [resolvable:$true] %s6421
      %6427 = dma.vmem_to_hbm [thread:$0]  %s6420, 1536, %s6422, [#allocation5], 768, 768, 48
    $region325: #{_lambda_.1} parent=1 // pred_fallthru
      _
    // Predicated region
    $region326: #{_lambda_.1} parent=1 // pred_check
      _
    $region327: #{_lambda_.1} parent=1 // pred_check_branch
      %6429 = sbr.rel (0) target = $region329
    $region328: #{_lambda_.1} parent=1 // pred_region
      %6431 = dma.done [#allocation5], 1536
    $region329: #{_lambda_.1} parent=1 // pred_fallthru
      _
    %6432 = vsyncpa [#allocation4], 1
    %6433 = vsyncpa [#allocation7], 1
    %6434 = vsyncpa [#allocation10], 1
    %6435 = vsyncpa [#allocation13], 1
    %6436 = vsyncpa [#allocation16], 1
    %6437 = vsyncpa [#allocation19], 1
    %6438 = vsyncpa [#allocation22], 1
    %6439 = vsyncpa [#allocation25], 1
    %6440 = vsyncpa [#allocation28], 1
    %6441 = vsyncpa [#allocation31], 1
    %6442 = vsyncpa [#allocation34], 1
    %6443 = vsyncpa [#allocation37], 1
    %6444 = vsyncpa [#allocation40], 1
    %6445 = vsyncpa [#allocation43], 1
    %6446 = vsyncpa [#allocation46], 1
    %6447 = vsyncpa [#allocation49], 1
    %6448 = vsyncpa [#allocation52], 1
    %6449 = vsyncpa [#allocation55], 1
    %6450 = vsyncpa [#allocation58], 1
    %6451 = vsyncpa [#allocation61], 1
    %6452 = vsyncpa [#allocation5], 1

</llo_original>
